<compile_context>
chip_gen: v5e
topology: v5e:2x2
jax: 0.10.0
libtpu: 0.0.40
codegen_flags: <defaults>
</compile_context>

<pallas_src>
import functools

import jax
import jax.numpy as jnp
from jax.experimental import pallas as pl
from jax.experimental.pallas import tpu as pltpu

_VMEM_LIMIT = 32 * 1024 * 1024  # explicit scoped-VMEM request (safe on v5e/v6e/v7x)


def _round_up(x, m):
    return (x + m - 1) // m * m


# ---------------------------------------------------------------------------
# Pallas kernels
# ---------------------------------------------------------------------------

def _pw_kernel(x_ref, w_ref, b_ref, scale_ref, shift_ref, alpha_ref,
               o_ref, *stat_refs, act, pre_act, with_norm, with_stats,
               t_tile, m_real, mask_tail):
    """Pointwise conv tile: o = act(W @ prologue(x) + b), channel-major.

    Optional fused prologue: gLN apply (x*scale + shift) and/or PReLU.
    Optional streaming (sum, sumsq) stats accumulated across the T-tile axis.
    """
    t = pl.program_id(1)
    x = x_ref[0]                                            # (Cin, tT) f32
    if with_norm:                                           # fused gLN apply
        x = x * scale_ref[0] + shift_ref[0]
    if pre_act == "prelu":
        a = alpha_ref[...]
        x = jnp.where(x >= 0, x, a * x)
    acc = jnp.dot(w_ref[...], x.astype(jnp.bfloat16),
                  preferred_element_type=jnp.float32)
    acc = acc + b_ref[...]
    if act == "prelu":
        a = alpha_ref[...]
        acc = jnp.where(acc >= 0, acc, a * acc)
    elif act == "sigmoid":
        acc = jax.nn.sigmoid(acc)
    if mask_tail:                                           # zero padded frames
        col = t * t_tile + jax.lax.broadcasted_iota(jnp.int32, acc.shape, 1)
        acc = jnp.where(col < m_real, acc, 0.0)
    o_ref[0] = acc
    if with_stats:                                          # streaming gLN stats
        s = jnp.sum(acc)
        q = jnp.sum(acc * acc)
        row = jax.lax.broadcasted_iota(jnp.int32, (1, 2, 128), 1)
        vec = jnp.where(row == 0, s, q)
        stat_ref = stat_refs[0]

        @pl.when(t == 0)
        def _():
            stat_ref[...] = vec

        @pl.when(t > 0)
        def _():
            stat_ref[...] = stat_ref[...] + vec


def _dw_kernel(x_ref, w_ref, b_ref, scale_ref, shift_ref, alpha_ref,
               o_ref, stat_ref, *, ks, dilation, mp, m_real, mask_tail):
    """Depthwise dilated conv tile (channel-tiled) with fused gLN apply,
    PReLU epilogue and streaming stats (accumulated across channel tiles)."""
    h = pl.program_id(1)
    x = x_ref[0]                                            # (cH, Mp + 2*d)
    xn = x * scale_ref[0] + shift_ref[0]                    # fused gLN apply
    # Re-zero the conv padding / alignment-padding columns so the dilated conv
    # sees the same zero padding as PyTorch (the norm maps 0 -> shift != 0).
    col = jax.lax.broadcasted_iota(jnp.int32, xn.shape, 1)
    xn = jnp.where((col >= dilation) & (col < dilation + m_real), xn, 0.0)
    acc = xn[:, 0:mp] * w_ref[:, 0:1]
    for j in range(1, ks):
        off = j * dilation
        acc = acc + xn[:, off:off + mp] * w_ref[:, j:j + 1]
    acc = acc + b_ref[...]
    a = alpha_ref[...]
    acc = jnp.where(acc >= 0, acc, a * acc)                 # fused PReLU
    if mask_tail:
        ocol = jax.lax.broadcasted_iota(jnp.int32, acc.shape, 1)
        acc = jnp.where(ocol < m_real, acc, 0.0)
    o_ref[0] = acc
    s = jnp.sum(acc)
    q = jnp.sum(acc * acc)
    row = jax.lax.broadcasted_iota(jnp.int32, (1, 2, 128), 1)
    vec = jnp.where(row == 0, s, q)

    @pl.when(h == 0)
    def _():
        stat_ref[...] = vec

    @pl.when(h > 0)
    def _():
        stat_ref[...] = stat_ref[...] + vec


def _dec_kernel(mask_ref, feats_ref, w_ref, o_ref):
    # Fused mask multiply + decoder frame projection on the MXU.
    masked = mask_ref[0] * feats_ref[0]                     # (F, tT)
    o_ref[0] = jnp.dot(w_ref[...], masked.astype(jnp.bfloat16),
                       preferred_element_type=jnp.float32)


# ---------------------------------------------------------------------------
# Kernel wrappers
# ---------------------------------------------------------------------------

def pw_conv(x, w, b, *, scale=None, shift=None, alpha=None, act="none",
            pre_act="none", with_stats=False, m_real, t_tile):
    """Channel-major pointwise conv with fused prologue/epilogue.

    x: (B, Cin, Mp) f32, w: (Cout, Cin), b: (Cout,) or None.
    Returns y (B, Cout, Mp) f32 [, stats (B, 2, 128)].
    """
    B, Cin, Mp = x.shape
    Cout = w.shape[0]
    tT = min(t_tile, Mp)
    assert Mp % tT == 0
    nT = Mp // tT

    with_norm = scale is not None
    if scale is None:
        scale = jnp.ones((B, Cin, 1), jnp.float32)
        shift = jnp.zeros((B, Cin, 1), jnp.float32)
    if alpha is None:
        alpha = jnp.zeros((1, 1), jnp.float32)
    else:
        alpha = jnp.asarray(alpha, jnp.float32).reshape(1, 1)
    if b is None:
        b = jnp.zeros((Cout,), jnp.float32)

    kern = functools.partial(
        _pw_kernel, act=act, pre_act=pre_act, with_norm=with_norm,
        with_stats=with_stats, t_tile=tT, m_real=m_real,
        mask_tail=(Mp > m_real))

    out_shape = [jax.ShapeDtypeStruct((B, Cout, Mp), jnp.float32)]
    out_specs = [pl.BlockSpec((1, Cout, tT), lambda bi, ti: (bi, 0, ti))]
    if with_stats:
        out_shape.append(jax.ShapeDtypeStruct((B, 2, 128), jnp.float32))
        out_specs.append(pl.BlockSpec((1, 2, 128), lambda bi, ti: (bi, 0, 0)))
        dims = ("parallel", "arbitrary")      # stats accumulate over T tiles
    else:
        dims = ("parallel", "parallel")

    outs = pl.pallas_call(
        kern,
        out_shape=out_shape,
        grid=(B, nT),
        in_specs=[
            pl.BlockSpec((1, Cin, tT), lambda bi, ti: (bi, 0, ti)),
            pl.BlockSpec((Cout, Cin), lambda bi, ti: (0, 0)),
            pl.BlockSpec((Cout, 1), lambda bi, ti: (0, 0)),
            pl.BlockSpec((1, Cin, 1), lambda bi, ti: (bi, 0, 0)),
            pl.BlockSpec((1, Cin, 1), lambda bi, ti: (bi, 0, 0)),
            pl.BlockSpec((1, 1), lambda bi, ti: (0, 0)),
        ],
        out_specs=out_specs,
        compiler_params=pltpu.CompilerParams(
            dimension_semantics=dims, vmem_limit_bytes=_VMEM_LIMIT),
    )(
        x.astype(jnp.float32),
        w.astype(jnp.bfloat16),
        b.reshape(Cout, 1).astype(jnp.float32),
        scale.astype(jnp.float32),
        shift.astype(jnp.float32),
        alpha,
    )
    return tuple(outs) if with_stats else outs[0]


def dw_conv(x, w, b, scale, shift, alpha, *, dilation, m_real, c_tile=128):
    """Depthwise dilated conv (stride 1, pad = dilation) with fused gLN apply,
    PReLU and streaming stats.  x: (B, H, Mp) f32 (cols >= m_real are zero)."""
    B, H, Mp = x.shape
    ks = w.shape[1]
    d = int(dilation)
    xp = jnp.pad(x, ((0, 0), (0, 0), (d, d)))
    cH = min(c_tile, H)
    assert H % cH == 0
    nH = H // cH
    kern = functools.partial(_dw_kernel, ks=ks, dilation=d, mp=Mp,
                             m_real=m_real, mask_tail=(Mp > m_real))
    y, stats = pl.pallas_call(
        kern,
        out_shape=[jax.ShapeDtypeStruct((B, H, Mp), jnp.float32),
                   jax.ShapeDtypeStruct((B, 2, 128), jnp.float32)],
        grid=(B, nH),
        in_specs=[
            pl.BlockSpec((1, cH, Mp + 2 * d), lambda bi, hi: (bi, hi, 0)),
            pl.BlockSpec((cH, ks), lambda bi, hi: (hi, 0)),
            pl.BlockSpec((cH, 1), lambda bi, hi: (hi, 0)),
            pl.BlockSpec((1, cH, 1), lambda bi, hi: (bi, hi, 0)),
            pl.BlockSpec((1, cH, 1), lambda bi, hi: (bi, hi, 0)),
            pl.BlockSpec((1, 1), lambda bi, hi: (0, 0)),
        ],
        out_specs=[
            pl.BlockSpec((1, cH, Mp), lambda bi, hi: (bi, hi, 0)),
            pl.BlockSpec((1, 2, 128), lambda bi, hi: (bi, 0, 0)),
        ],
        compiler_params=pltpu.CompilerParams(
            dimension_semantics=("parallel", "arbitrary"),
            vmem_limit_bytes=_VMEM_LIMIT),
    )(
        xp,
        w.astype(jnp.float32),
        b.reshape(H, 1).astype(jnp.float32),
        scale.astype(jnp.float32),
        shift.astype(jnp.float32),
        jnp.asarray(alpha, jnp.float32).reshape(1, 1),
    )
    return y, stats


def decode_frames(mask_cm, feats, dec_w, *, num_sources, t_tile):
    """(mask * feats) followed by the decoder frame projection (channel-major).

    mask_cm: (B, Ns*F, Mp), feats: (B, F, Mp), dec_w: (F, K).
    Returns (B, Ns*K, Mp) decoder frames.
    """
    B, FNs, Mp = mask_cm.shape
    F = FNs // num_sources
    K = dec_w.shape[1]
    tT = min(t_tile, Mp)
    nT = Mp // tT
    return pl.pallas_call(
        _dec_kernel,
        out_shape=jax.ShapeDtypeStruct((B, num_sources * K, Mp), jnp.float32),
        grid=(B, num_sources, nT),
        in_specs=[
            pl.BlockSpec((1, F, tT), lambda bi, si, ti: (bi, si, ti)),
            pl.BlockSpec((1, F, tT), lambda bi, si, ti: (bi, 0, ti)),
            pl.BlockSpec((K, F), lambda bi, si, ti: (0, 0)),
        ],
        out_specs=pl.BlockSpec((1, K, tT), lambda bi, si, ti: (bi, si, ti)),
        compiler_params=pltpu.CompilerParams(
            dimension_semantics=("parallel", "parallel", "parallel"),
            vmem_limit_bytes=_VMEM_LIMIT),
    )(mask_cm, feats, dec_w.T.astype(jnp.bfloat16))


def _gln_scale_shift(stats, gamma, beta, num_channels, m_real, eps=1e-8):
    """Convert streaming (sum, sumsq) stats into per-(sample, channel) affine
    so gLN can be applied fused inside the *next* conv kernel."""
    n = float(num_channels * m_real)
    s = stats[:, 0, 0]
    q = stats[:, 1, 0]
    mean = s / n
    var = jnp.maximum(q / n - mean * mean, 0.0)              # biased variance
    inv = jax.lax.rsqrt(var + eps)
    scale = inv[:, None] * gamma[None, :].astype(jnp.float32)          # (B, C)
    shift = beta[None, :].astype(jnp.float32) - mean[:, None] * scale  # (B, C)
    return scale[:, :, None], shift[:, :, None]


# ---------------------------------------------------------------------------
# Parameters (deterministic synthetic init, matching module __init__ shapes)
# ---------------------------------------------------------------------------

def init_params(key, cfg):
    F = cfg["enc_num_feats"]
    K = cfg["enc_kernel_size"]
    Bn = cfg["msk_num_feats"]
    H = cfg["msk_num_hidden_feats"]
    ks = cfg["msk_kernel_size"]
    Ns = cfg["num_sources"]
    nL = cfg["msk_num_layers"]
    nS = cfg["msk_num_stacks"]

    def w(key, shape, scale=0.1):
        return scale * jax.random.normal(key, shape, jnp.float32)

    keys = iter(jax.random.split(key, 16 + 16 * nL * nS))
    params = {
        "enc_w": w(next(keys), (F, K)),          # Conv1d(1, F, K) weight squeezed
        "dec_w": w(next(keys), (F, K)),          # ConvTranspose1d(F, 1, K) squeezed
        "in_norm_g": jnp.ones((F,), jnp.float32),
        "in_norm_b": jnp.zeros((F,), jnp.float32),
        "in_conv_w": w(next(keys), (Bn, F)),
        "in_conv_b": w(next(keys), (Bn,)),
        "out_prelu": jnp.float32(0.25),
        "out_conv_w": w(next(keys), (Ns * F, Bn)),
        "out_conv_b": w(next(keys), (Ns * F,)),
        "blocks": [],
    }
    for s in range(nS):
        for l in range(nL):
            no_res = (l == nL - 1) and (s == nS - 1)
            blk = {
                "dilation": 2 ** l,              # static Python int
                "c1_w": w(next(keys), (H, Bn)),
                "c1_b": w(next(keys), (H,)),
                "p1": jnp.float32(0.25),
                "gn1_g": jnp.ones((H,), jnp.float32),
                "gn1_b": jnp.zeros((H,), jnp.float32),
                "dw_w": w(next(keys), (H, ks)),
                "dw_b": w(next(keys), (H,)),
                "p2": jnp.float32(0.25),
                "gn2_g": jnp.ones((H,), jnp.float32),
                "gn2_b": jnp.zeros((H,), jnp.float32),
                "res_w": None if no_res else w(next(keys), (Bn, H)),
                "res_b": None if no_res else w(next(keys), (Bn,)),
                "skip_w": w(next(keys), (Bn, H)),
                "skip_b": w(next(keys), (Bn,)),
            }
            params["blocks"].append(blk)
    return params


# ---------------------------------------------------------------------------
# ConvTasNet separator forward
# ---------------------------------------------------------------------------

def convtasnet_separator_forward(wav, params, cfg):
    """wav: (B, T) or (T,) -> (B, num_sources, T)."""
    if wav.ndim == 1:
        wav = wav[None]
    wav = wav.astype(jnp.float32)
    B, T = wav.shape
    K = cfg["enc_kernel_size"]
    S = K // 2                               # enc_stride
    F = cfg["enc_num_feats"]
    Bn = cfg["msk_num_feats"]
    H = cfg["msk_num_hidden_feats"]
    Ns = cfg["num_sources"]
    eps = 1e-8

    # --- align num frames with strides (ConvTasNet._align_num_frames_with_strides)
    is_odd = K % 2
    num_strides = (T - is_odd) // S
    num_rem = T - (is_odd + num_strides * S)
    num_pads = 0 if num_rem == 0 else S - num_rem
    L = T + num_pads
    x = wav if num_pads == 0 else jnp.pad(wav, ((0, 0), (0, num_pads)))

    # --- encoder framing: Conv1d(1, F, K, stride=S, padding=S, bias=False).
    # Frames are built channel-major (B, K, M) with K static strided slices
    # (no gather), then zero-padded along frames to a tile multiple.
    xp = jnp.pad(x, ((0, 0), (S, S)))                         # (B, L + 2S)
    M = (L + 2 * S - K) // S + 1
    frames_T = jnp.stack(
        [xp[:, k: k + (M - 1) * S + 1: S] for k in range(K)], axis=1)   # (B, K, M)
    Mp = _round_up(M, 128)
    if Mp % 512 == 0:
        tT = 512
    elif Mp % 256 == 0:
        tT = 256
    else:
        tT = 128
    frames_T = jnp.pad(frames_T, ((0, 0), (0, 0), (0, Mp - M)))

    # encoder matmul + streaming stats for the mask generator's input gLN
    feats, feat_stats = pw_conv(frames_T, params["enc_w"], None,
                                with_stats=True, m_real=M, t_tile=tT)   # (B, F, Mp)

    # --- mask generator (TCN); gLN apply fused into the next conv's prologue
    sc, sh = _gln_scale_shift(feat_stats, params["in_norm_g"],
                              params["in_norm_b"], F, M, eps)
    h = pw_conv(feats, params["in_conv_w"], params["in_conv_b"],
                scale=sc, shift=sh, m_real=M, t_tile=tT)                # (B, Bn, Mp)

    skip_sum = jnp.zeros_like(h)
    for blk in params["blocks"]:
        # 1x1 conv + PReLU (+ gLN stats of its output)
        y1, st1 = pw_conv(h, blk["c1_w"], blk["c1_b"], alpha=blk["p1"],
                          act="prelu", with_stats=True, m_real=M, t_tile=tT)
        sc1, sh1 = _gln_scale_shift(st1, blk["gn1_g"], blk["gn1_b"], H, M, eps)
        # gLN apply + depthwise dilated conv + PReLU (+ stats)
        y2, st2 = dw_conv(y1, blk["dw_w"], blk["dw_b"], sc1, sh1, blk["p2"],
                          dilation=blk["dilation"], m_real=M)
        sc2, sh2 = _gln_scale_shift(st2, blk["gn2_g"], blk["gn2_b"], H, M, eps)
        # gLN apply + fused residual/skip 1x1 convs (single matmul)
        if blk["res_w"] is not None:
            w_cat = jnp.concatenate([blk["res_w"], blk["skip_w"]], axis=0)
            b_cat = jnp.concatenate([blk["res_b"], blk["skip_b"]], axis=0)
            rs = pw_conv(y2, w_cat, b_cat, scale=sc2, shift=sh2,
                         m_real=M, t_tile=tT)                           # (B, 2Bn, Mp)
            h = h + rs[:, :Bn]
            skip_sum = skip_sum + rs[:, Bn:]
        else:
            sk = pw_conv(y2, blk["skip_w"], blk["skip_b"], scale=sc2, shift=sh2,
                         m_real=M, t_tile=tT)
            skip_sum = skip_sum + sk

    # output PReLU + output conv + sigmoid, all fused into one kernel
    mask_cm = pw_conv(skip_sum, params["out_conv_w"], params["out_conv_b"],
                      alpha=params["out_prelu"], pre_act="prelu", act="sigmoid",
                      m_real=M, t_tile=tT)                              # (B, Ns*F, Mp)

    # --- mask multiply + decoder frame projection (fused kernel)
    dframes = decode_frames(mask_cm, feats, params["dec_w"],
                            num_sources=Ns, t_tile=tT)                  # (B, Ns*K, Mp)

    # --- ConvTranspose1d(F, 1, K, stride=S, padding=S) overlap-add.  Since
    # S == K/2 every output sample receives exactly two frame taps, so the
    # K-step scatter-add collapses to one shifted add (pure layout glue).
    df = dframes[:, :, :M].reshape(B, Ns, K, M).transpose(0, 1, 3, 2)   # (B,Ns,M,K)
    head = df[..., :S]                                                  # taps k <  S
    tail = df[..., S:]                                                  # taps k >= S
    z = jnp.zeros((B, Ns, 1, S), jnp.float32)
    full = (jnp.concatenate([head, z], axis=2)
            + jnp.concatenate([z, tail], axis=2))                       # (B,Ns,M+1,S)
    out = full.reshape(B, Ns, (M + 1) * S)[..., S:S + L]                # trim conv-T pad
    if num_pads:
        out = out[..., :T]
    return out


# ---------------------------------------------------------------------------
# Demo
# ---------------------------------------------------------------------------

if __name__ == "__main__":
    # Small (but structurally faithful) hyper-parameters.
    cfg = dict(
        num_sources=4,
        enc_kernel_size=16,
        enc_num_feats=64,
        msk_kernel_size=3,
        msk_num_feats=32,
        msk_num_hidden_feats=64,
        msk_num_layers=2,
        msk_num_stacks=2,
        msk_activate="sigmoid",
    )
    key = jax.random.PRNGKey(0)
    kp, kx = jax.random.split(key)
    params = init_params(kp, cfg)

    B, T = 2, 160
    wav = jax.random.normal(kx, (B, T), jnp.float32)

    fwd = jax.jit(functools.partial(convtasnet_separator_forward,
                                    params=params, cfg=cfg))
    est_sources = jax.block_until_ready(fwd(wav))

    assert est_sources.shape == (B, cfg["num_sources"], T), est_sources.shape
    assert est_sources.dtype == jnp.float32
    assert bool(jnp.all(jnp.isfinite(est_sources)))
    print("KERNEL_OK")
</pallas_src>

<mosaic_0001>
module attributes {stable_mosaic.version = 11 : i64} {
  func.func @_pw_kernel(%arg0: i32, %arg1: i32, %arg2: memref<1x16x128xf32, #tpu.memory_space<vmem>>, %arg3: memref<64x16xbf16, #tpu.memory_space<vmem>>, %arg4: memref<64x1xf32, #tpu.memory_space<vmem>>, %arg5: memref<1x16x1xf32, #tpu.memory_space<vmem>>, %arg6: memref<1x16x1xf32, #tpu.memory_space<vmem>>, %arg7: memref<1x1xf32, #tpu.memory_space<vmem>>, %arg8: memref<1x64x128xf32, #tpu.memory_space<vmem>>, %arg9: memref<1x2x128xf32, #tpu.memory_space<vmem>>) attributes {dimension_semantics = [#tpu.dimension_semantics<parallel>, #tpu.dimension_semantics<arbitrary>], iteration_bounds = array<i64: 2, 1>, scalar_prefetch = 0 : i64, scratch_operands = 0 : i64, tpu.core_type = #tpu.core_type<tc>, window_params = [{transform_indices = @transform_0, window_bounds = array<i64: 1, 16, 128>}, {pipeline_mode = #tpu.pipeline_mode<synchronous>, transform_indices = @transform_1, window_bounds = array<i64: 64, 16>}, {pipeline_mode = #tpu.pipeline_mode<synchronous>, transform_indices = @transform_2, window_bounds = array<i64: 64, 1>}, {transform_indices = @transform_3, window_bounds = array<i64: 1, 16, 1>}, {transform_indices = @transform_4, window_bounds = array<i64: 1, 16, 1>}, {pipeline_mode = #tpu.pipeline_mode<synchronous>, transform_indices = @transform_5, window_bounds = array<i64: 1, 1>}, {transform_indices = @transform_6, window_bounds = array<i64: 1, 64, 128>}, {transform_indices = @transform_7, window_bounds = array<i64: 1, 2, 128>}]} {
    %c0 = arith.constant 0 : index
    %c0_0 = arith.constant 0 : index
    %c0_1 = arith.constant 0 : index
    %0 = vector.load %arg2[%c0, %c0_0, %c0_1] : memref<1x16x128xf32, #tpu.memory_space<vmem>>, vector<1x16x128xf32>
    %1 = vector.shape_cast %0 : vector<1x16x128xf32> to vector<16x128xf32>
    %c0_2 = arith.constant 0 : index
    %c0_3 = arith.constant 0 : index
    %2 = vector.load %arg3[%c0_2, %c0_3] : memref<64x16xbf16, #tpu.memory_space<vmem>>, vector<64x16xbf16>
    %3 = arith.truncf %1 : vector<16x128xf32> to vector<16x128xbf16>
    %cst = arith.constant dense<0.000000e+00> : vector<64x128xf32>
    %4 = tpu.matmul %2, %3, %cst {dimension_numbers = #tpu.dot_dimension_numbers<[1], [0], [0], [1], [0, 0, 1, 1], [], []>} : vector<64x16xbf16>, vector<16x128xbf16>, vector<64x128xf32> -> vector<64x128xf32>
    %c0_4 = arith.constant 0 : index
    %c0_5 = arith.constant 0 : index
    %5 = vector.load %arg4[%c0_4, %c0_5] : memref<64x1xf32, #tpu.memory_space<vmem>>, vector<64x1xf32>
    %6 = vector.broadcast %5 : vector<64x1xf32> to vector<64x128xf32>
    %7 = arith.addf %4, %6 : vector<64x128xf32>
    %c128_i32 = arith.constant 128 : i32
    %8 = arith.muli %arg1, %c128_i32 : i32
    %9 = tpu.iota {dimensions = array<i32: 1>} : vector<64x128xi32>
    %10 = vector.broadcast %8 : i32 to vector<64x128xi32>
    %11 = arith.addi %10, %9 : vector<64x128xi32>
    %c21_i32 = arith.constant 21 : i32
    %12 = vector.broadcast %c21_i32 : i32 to vector<64x128xi32>
    %13 = arith.cmpi slt, %11, %12 : vector<64x128xi32>
    %cst_6 = arith.constant 0.000000e+00 : f32
    %14 = vector.broadcast %cst_6 : f32 to vector<64x128xf32>
    %15 = arith.select %13, %7, %14 : vector<64x128xi1>, vector<64x128xf32>
    %c0_7 = arith.constant 0 : index
    %c0_8 = arith.constant 0 : index
    %c0_9 = arith.constant 0 : index
    %16 = vector.load %arg8[%c0_7, %c0_8, %c0_9] : memref<1x64x128xf32, #tpu.memory_space<vmem>>, vector<1x64x128xf32>
    %17 = vector.shape_cast %16 : vector<1x64x128xf32> to vector<64x128xf32>
    %18 = vector.shape_cast %15 : vector<64x128xf32> to vector<1x64x128xf32>
    tpu.vector_store %arg8[%c0_7, %c0_8, %c0_9], %18 {strides = array<i32>} : memref<1x64x128xf32, #tpu.memory_space<vmem>>, vector<1x64x128xf32>,
    %19 = vector.shape_cast %15 : vector<64x128xf32> to vector<1x64x128xf32>
    %cst_10 = arith.constant dense<0.000000e+00> : vector<1xf32>
    %20 = vector.multi_reduction <add>, %19, %cst_10 [1, 2] : vector<1x64x128xf32> to vector<1xf32>
    %21 = vector.shape_cast %20 : vector<1xf32> to vector<1x1x1xf32>
    %22 = vector.extract %21[0, 0, 0] : f32 from vector<1x1x1xf32>
    %23 = arith.mulf %15, %15 : vector<64x128xf32>
    %24 = vector.shape_cast %23 : vector<64x128xf32> to vector<1x64x128xf32>
    %cst_11 = arith.constant dense<0.000000e+00> : vector<1xf32>
    %25 = vector.multi_reduction <add>, %24, %cst_11 [1, 2] : vector<1x64x128xf32> to vector<1xf32>
    %26 = vector.shape_cast %25 : vector<1xf32> to vector<1x1x1xf32>
    %27 = vector.extract %26[0, 0, 0] : f32 from vector<1x1x1xf32>
    %28 = tpu.iota {dimensions = array<i32: 1>} : vector<1x2x128xi32>
    %c0_i32 = arith.constant 0 : i32
    %29 = vector.broadcast %c0_i32 : i32 to vector<1x2x128xi32>
    %30 = arith.cmpi eq, %28, %29 : vector<1x2x128xi32>
    %31 = vector.broadcast %22 : f32 to vector<1x2x128xf32>
    %32 = vector.broadcast %27 : f32 to vector<1x2x128xf32>
    %33 = arith.select %30, %31, %32 : vector<1x2x128xi1>, vector<1x2x128xf32>
    %c0_i32_12 = arith.constant 0 : i32
    %34 = arith.cmpi eq, %arg1, %c0_i32_12 : i32
    %35 = arith.extui %34 : i1 to i32
    %c0_i32_13 = arith.constant 0 : i32
    %36 = arith.cmpi ne, %35, %c0_i32_13 : i32
    scf.if %36 {
      %c0_16 = arith.constant 0 : index
      %c0_17 = arith.constant 0 : index
      %c0_18 = arith.constant 0 : index
      %40 = vector.load %arg9[%c0_16, %c0_17, %c0_18] : memref<1x2x128xf32, #tpu.memory_space<vmem>>, vector<1x2x128xf32>
      tpu.vector_store %arg9[%c0_16, %c0_17, %c0_18], %33 {strides = array<i32>} : memref<1x2x128xf32, #tpu.memory_space<vmem>>, vector<1x2x128xf32>,
    } else {
    }
    %c0_i32_14 = arith.constant 0 : i32
    %37 = arith.cmpi sgt, %arg1, %c0_i32_14 : i32
    %38 = arith.extui %37 : i1 to i32
    %c0_i32_15 = arith.constant 0 : i32
    %39 = arith.cmpi ne, %38, %c0_i32_15 : i32
    scf.if %39 {
      %c0_16 = arith.constant 0 : index
      %c0_17 = arith.constant 0 : index
      %c0_18 = arith.constant 0 : index
      %40 = vector.load %arg9[%c0_16, %c0_17, %c0_18] : memref<1x2x128xf32, #tpu.memory_space<vmem>>, vector<1x2x128xf32>
      %41 = arith.addf %40, %33 : vector<1x2x128xf32>
      %c0_19 = arith.constant 0 : index
      %c0_20 = arith.constant 0 : index
      %c0_21 = arith.constant 0 : index
      %42 = vector.load %arg9[%c0_19, %c0_20, %c0_21] : memref<1x2x128xf32, #tpu.memory_space<vmem>>, vector<1x2x128xf32>
      tpu.vector_store %arg9[%c0_19, %c0_20, %c0_21], %41 {strides = array<i32>} : memref<1x2x128xf32, #tpu.memory_space<vmem>>, vector<1x2x128xf32>,
    } else {
    }
    return
  }
  func.func @transform_0(%arg0: i32, %arg1: i32) -> (i32, i32, i32) {
    %c0_i32 = arith.constant 0 : i32
    %c0_i32_0 = arith.constant 0 : i32
    return %arg0, %c0_i32, %arg1 : i32, i32, i32
  }
  func.func @transform_1(%arg0: i32, %arg1: i32) -> (i32, i32) {
    %c0_i32 = arith.constant 0 : i32
    %c0_i32_0 = arith.constant 0 : i32
    %c0_i32_1 = arith.constant 0 : i32
    return %c0_i32, %c0_i32_0 : i32, i32
  }
  func.func @transform_2(%arg0: i32, %arg1: i32) -> (i32, i32) {
    %c0_i32 = arith.constant 0 : i32
    %c0_i32_0 = arith.constant 0 : i32
    %c0_i32_1 = arith.constant 0 : i32
    return %c0_i32, %c0_i32_0 : i32, i32
  }
  func.func @transform_3(%arg0: i32, %arg1: i32) -> (i32, i32, i32) {
    %c0_i32 = arith.constant 0 : i32
    %c0_i32_0 = arith.constant 0 : i32
    %c0_i32_1 = arith.constant 0 : i32
    return %arg0, %c0_i32, %c0_i32_0 : i32, i32, i32
  }
  func.func @transform_4(%arg0: i32, %arg1: i32) -> (i32, i32, i32) {
    %c0_i32 = arith.constant 0 : i32
    %c0_i32_0 = arith.constant 0 : i32
    %c0_i32_1 = arith.constant 0 : i32
    return %arg0, %c0_i32, %c0_i32_0 : i32, i32, i32
  }
  func.func @transform_5(%arg0: i32, %arg1: i32) -> (i32, i32) {
    %c0_i32 = arith.constant 0 : i32
    %c0_i32_0 = arith.constant 0 : i32
    %c0_i32_1 = arith.constant 0 : i32
    return %c0_i32, %c0_i32_0 : i32, i32
  }
  func.func @transform_6(%arg0: i32, %arg1: i32) -> (i32, i32, i32) {
    %c0_i32 = arith.constant 0 : i32
    %c0_i32_0 = arith.constant 0 : i32
    return %arg0, %c0_i32, %arg1 : i32, i32, i32
  }
  func.func @transform_7(%arg0: i32, %arg1: i32) -> (i32, i32, i32) {
    %c0_i32 = arith.constant 0 : i32
    %c0_i32_0 = arith.constant 0 : i32
    %c0_i32_1 = arith.constant 0 : i32
    return %arg0, %c0_i32, %c0_i32_0 : i32, i32, i32
  }
}

module attributes {stable_mosaic.version = 11 : i64} {
  func.func @_pw_kernel(%arg0: i32, %arg1: i32, %arg2: memref<1x64x128xf32, #tpu.memory_space<vmem>>, %arg3: memref<32x64xbf16, #tpu.memory_space<vmem>>, %arg4: memref<32x1xf32, #tpu.memory_space<vmem>>, %arg5: memref<1x64x1xf32, #tpu.memory_space<vmem>>, %arg6: memref<1x64x1xf32, #tpu.memory_space<vmem>>, %arg7: memref<1x1xf32, #tpu.memory_space<vmem>>, %arg8: memref<1x32x128xf32, #tpu.memory_space<vmem>>) attributes {dimension_semantics = [#tpu.dimension_semantics<parallel>, #tpu.dimension_semantics<parallel>], iteration_bounds = array<i64: 2, 1>, scalar_prefetch = 0 : i64, scratch_operands = 0 : i64, tpu.core_type = #tpu.core_type<tc>, window_params = [{transform_indices = @transform_0, window_bounds = array<i64: 1, 64, 128>}, {pipeline_mode = #tpu.pipeline_mode<synchronous>, transform_indices = @transform_1, window_bounds = array<i64: 32, 64>}, {pipeline_mode = #tpu.pipeline_mode<synchronous>, transform_indices = @transform_2, window_bounds = array<i64: 32, 1>}, {transform_indices = @transform_3, window_bounds = array<i64: 1, 64, 1>}, {transform_indices = @transform_4, window_bounds = array<i64: 1, 64, 1>}, {pipeline_mode = #tpu.pipeline_mode<synchronous>, transform_indices = @transform_5, window_bounds = array<i64: 1, 1>}, {transform_indices = @transform_6, window_bounds = array<i64: 1, 32, 128>}]} {
    %c0 = arith.constant 0 : index
    %c0_0 = arith.constant 0 : index
    %c0_1 = arith.constant 0 : index
    %0 = vector.load %arg2[%c0, %c0_0, %c0_1] : memref<1x64x128xf32, #tpu.memory_space<vmem>>, vector<1x64x128xf32>
    %1 = vector.shape_cast %0 : vector<1x64x128xf32> to vector<64x128xf32>
    %c0_2 = arith.constant 0 : index
    %c0_3 = arith.constant 0 : index
    %c0_4 = arith.constant 0 : index
    %2 = vector.load %arg5[%c0_2, %c0_3, %c0_4] : memref<1x64x1xf32, #tpu.memory_space<vmem>>, vector<1x64x1xf32>
    %3 = vector.shape_cast %2 : vector<1x64x1xf32> to vector<64x1xf32>
    %4 = vector.broadcast %3 : vector<64x1xf32> to vector<64x128xf32>
    %5 = arith.mulf %1, %4 : vector<64x128xf32>
    %c0_5 = arith.constant 0 : index
    %c0_6 = arith.constant 0 : index
    %c0_7 = arith.constant 0 : index
    %6 = vector.load %arg6[%c0_5, %c0_6, %c0_7] : memref<1x64x1xf32, #tpu.memory_space<vmem>>, vector<1x64x1xf32>
    %7 = vector.shape_cast %6 : vector<1x64x1xf32> to vector<64x1xf32>
    %8 = vector.broadcast %7 : vector<64x1xf32> to vector<64x128xf32>
    %9 = arith.addf %5, %8 : vector<64x128xf32>
    %c0_8 = arith.constant 0 : index
    %c0_9 = arith.constant 0 : index
    %10 = vector.load %arg3[%c0_8, %c0_9] : memref<32x64xbf16, #tpu.memory_space<vmem>>, vector<32x64xbf16>
    %11 = arith.truncf %9 : vector<64x128xf32> to vector<64x128xbf16>
    %cst = arith.constant dense<0.000000e+00> : vector<32x128xf32>
    %12 = tpu.matmul %10, %11, %cst {dimension_numbers = #tpu.dot_dimension_numbers<[1], [0], [0], [1], [0, 0, 1, 1], [], []>} : vector<32x64xbf16>, vector<64x128xbf16>, vector<32x128xf32> -> vector<32x128xf32>
    %c0_10 = arith.constant 0 : index
    %c0_11 = arith.constant 0 : index
    %13 = vector.load %arg4[%c0_10, %c0_11] : memref<32x1xf32, #tpu.memory_space<vmem>>, vector<32x1xf32>
    %14 = vector.broadcast %13 : vector<32x1xf32> to vector<32x128xf32>
    %15 = arith.addf %12, %14 : vector<32x128xf32>
    %c128_i32 = arith.constant 128 : i32
    %16 = arith.muli %arg1, %c128_i32 : i32
    %17 = tpu.iota {dimensions = array<i32: 1>} : vector<32x128xi32>
    %18 = vector.broadcast %16 : i32 to vector<32x128xi32>
    %19 = arith.addi %18, %17 : vector<32x128xi32>
    %c21_i32 = arith.constant 21 : i32
    %20 = vector.broadcast %c21_i32 : i32 to vector<32x128xi32>
    %21 = arith.cmpi slt, %19, %20 : vector<32x128xi32>
    %cst_12 = arith.constant 0.000000e+00 : f32
    %22 = vector.broadcast %cst_12 : f32 to vector<32x128xf32>
    %23 = arith.select %21, %15, %22 : vector<32x128xi1>, vector<32x128xf32>
    %c0_13 = arith.constant 0 : index
    %c0_14 = arith.constant 0 : index
    %c0_15 = arith.constant 0 : index
    %24 = vector.load %arg8[%c0_13, %c0_14, %c0_15] : memref<1x32x128xf32, #tpu.memory_space<vmem>>, vector<1x32x128xf32>
    %25 = vector.shape_cast %24 : vector<1x32x128xf32> to vector<32x128xf32>
    %26 = vector.shape_cast %23 : vector<32x128xf32> to vector<1x32x128xf32>
    tpu.vector_store %arg8[%c0_13, %c0_14, %c0_15], %26 {strides = array<i32>} : memref<1x32x128xf32, #tpu.memory_space<vmem>>, vector<1x32x128xf32>,
    return
  }
  func.func @transform_0(%arg0: i32, %arg1: i32) -> (i32, i32, i32) {
    %c0_i32 = arith.constant 0 : i32
    %c0_i32_0 = arith.constant 0 : i32
    return %arg0, %c0_i32, %arg1 : i32, i32, i32
  }
  func.func @transform_1(%arg0: i32, %arg1: i32) -> (i32, i32) {
    %c0_i32 = arith.constant 0 : i32
    %c0_i32_0 = arith.constant 0 : i32
    %c0_i32_1 = arith.constant 0 : i32
    return %c0_i32, %c0_i32_0 : i32, i32
  }
  func.func @transform_2(%arg0: i32, %arg1: i32) -> (i32, i32) {
    %c0_i32 = arith.constant 0 : i32
    %c0_i32_0 = arith.constant 0 : i32
    %c0_i32_1 = arith.constant 0 : i32
    return %c0_i32, %c0_i32_0 : i32, i32
  }
  func.func @transform_3(%arg0: i32, %arg1: i32) -> (i32, i32, i32) {
    %c0_i32 = arith.constant 0 : i32
    %c0_i32_0 = arith.constant 0 : i32
    %c0_i32_1 = arith.constant 0 : i32
    return %arg0, %c0_i32, %c0_i32_0 : i32, i32, i32
  }
  func.func @transform_4(%arg0: i32, %arg1: i32) -> (i32, i32, i32) {
    %c0_i32 = arith.constant 0 : i32
    %c0_i32_0 = arith.constant 0 : i32
    %c0_i32_1 = arith.constant 0 : i32
    return %arg0, %c0_i32, %c0_i32_0 : i32, i32, i32
  }
  func.func @transform_5(%arg0: i32, %arg1: i32) -> (i32, i32) {
    %c0_i32 = arith.constant 0 : i32
    %c0_i32_0 = arith.constant 0 : i32
    %c0_i32_1 = arith.constant 0 : i32
    return %c0_i32, %c0_i32_0 : i32, i32
  }
  func.func @transform_6(%arg0: i32, %arg1: i32) -> (i32, i32, i32) {
    %c0_i32 = arith.constant 0 : i32
    %c0_i32_0 = arith.constant 0 : i32
    return %arg0, %c0_i32, %arg1 : i32, i32, i32
  }
}

module attributes {stable_mosaic.version = 11 : i64} {
  func.func @_pw_kernel(%arg0: i32, %arg1: i32, %arg2: memref<1x32x128xf32, #tpu.memory_space<vmem>>, %arg3: memref<64x32xbf16, #tpu.memory_space<vmem>>, %arg4: memref<64x1xf32, #tpu.memory_space<vmem>>, %arg5: memref<1x32x1xf32, #tpu.memory_space<vmem>>, %arg6: memref<1x32x1xf32, #tpu.memory_space<vmem>>, %arg7: memref<1x1xf32, #tpu.memory_space<vmem>>, %arg8: memref<1x64x128xf32, #tpu.memory_space<vmem>>, %arg9: memref<1x2x128xf32, #tpu.memory_space<vmem>>) attributes {dimension_semantics = [#tpu.dimension_semantics<parallel>, #tpu.dimension_semantics<arbitrary>], iteration_bounds = array<i64: 2, 1>, scalar_prefetch = 0 : i64, scratch_operands = 0 : i64, tpu.core_type = #tpu.core_type<tc>, window_params = [{transform_indices = @transform_0, window_bounds = array<i64: 1, 32, 128>}, {pipeline_mode = #tpu.pipeline_mode<synchronous>, transform_indices = @transform_1, window_bounds = array<i64: 64, 32>}, {pipeline_mode = #tpu.pipeline_mode<synchronous>, transform_indices = @transform_2, window_bounds = array<i64: 64, 1>}, {transform_indices = @transform_3, window_bounds = array<i64: 1, 32, 1>}, {transform_indices = @transform_4, window_bounds = array<i64: 1, 32, 1>}, {pipeline_mode = #tpu.pipeline_mode<synchronous>, transform_indices = @transform_5, window_bounds = array<i64: 1, 1>}, {transform_indices = @transform_6, window_bounds = array<i64: 1, 64, 128>}, {transform_indices = @transform_7, window_bounds = array<i64: 1, 2, 128>}]} {
    %c0 = arith.constant 0 : index
    %c0_0 = arith.constant 0 : index
    %c0_1 = arith.constant 0 : index
    %0 = vector.load %arg2[%c0, %c0_0, %c0_1] : memref<1x32x128xf32, #tpu.memory_space<vmem>>, vector<1x32x128xf32>
    %1 = vector.shape_cast %0 : vector<1x32x128xf32> to vector<32x128xf32>
    %c0_2 = arith.constant 0 : index
    %c0_3 = arith.constant 0 : index
    %2 = vector.load %arg3[%c0_2, %c0_3] : memref<64x32xbf16, #tpu.memory_space<vmem>>, vector<64x32xbf16>
    %3 = arith.truncf %1 : vector<32x128xf32> to vector<32x128xbf16>
    %cst = arith.constant dense<0.000000e+00> : vector<64x128xf32>
    %4 = tpu.matmul %2, %3, %cst {dimension_numbers = #tpu.dot_dimension_numbers<[1], [0], [0], [1], [0, 0, 1, 1], [], []>} : vector<64x32xbf16>, vector<32x128xbf16>, vector<64x128xf32> -> vector<64x128xf32>
    %c0_4 = arith.constant 0 : index
    %c0_5 = arith.constant 0 : index
    %5 = vector.load %arg4[%c0_4, %c0_5] : memref<64x1xf32, #tpu.memory_space<vmem>>, vector<64x1xf32>
    %6 = vector.broadcast %5 : vector<64x1xf32> to vector<64x128xf32>
    %7 = arith.addf %4, %6 : vector<64x128xf32>
    %c0_6 = arith.constant 0 : index
    %c0_7 = arith.constant 0 : index
    %8 = vector.load %arg7[%c0_6, %c0_7] : memref<1x1xf32, #tpu.memory_space<vmem>>, vector<1x1xf32>
    %cst_8 = arith.constant 0.000000e+00 : f32
    %9 = vector.broadcast %cst_8 : f32 to vector<64x128xf32>
    %10 = arith.cmpf oge, %7, %9 : vector<64x128xf32>
    %11 = vector.broadcast %8 : vector<1x1xf32> to vector<64x128xf32>
    %12 = arith.mulf %11, %7 : vector<64x128xf32>
    %13 = arith.select %10, %7, %12 : vector<64x128xi1>, vector<64x128xf32>
    %c128_i32 = arith.constant 128 : i32
    %14 = arith.muli %arg1, %c128_i32 : i32
    %15 = tpu.iota {dimensions = array<i32: 1>} : vector<64x128xi32>
    %16 = vector.broadcast %14 : i32 to vector<64x128xi32>
    %17 = arith.addi %16, %15 : vector<64x128xi32>
    %c21_i32 = arith.constant 21 : i32
    %18 = vector.broadcast %c21_i32 : i32 to vector<64x128xi32>
    %19 = arith.cmpi slt, %17, %18 : vector<64x128xi32>
    %cst_9 = arith.constant 0.000000e+00 : f32
    %20 = vector.broadcast %cst_9 : f32 to vector<64x128xf32>
    %21 = arith.select %19, %13, %20 : vector<64x128xi1>, vector<64x128xf32>
    %c0_10 = arith.constant 0 : index
    %c0_11 = arith.constant 0 : index
    %c0_12 = arith.constant 0 : index
    %22 = vector.load %arg8[%c0_10, %c0_11, %c0_12] : memref<1x64x128xf32, #tpu.memory_space<vmem>>, vector<1x64x128xf32>
    %23 = vector.shape_cast %22 : vector<1x64x128xf32> to vector<64x128xf32>
    %24 = vector.shape_cast %21 : vector<64x128xf32> to vector<1x64x128xf32>
    tpu.vector_store %arg8[%c0_10, %c0_11, %c0_12], %24 {strides = array<i32>} : memref<1x64x128xf32, #tpu.memory_space<vmem>>, vector<1x64x128xf32>,
    %25 = vector.shape_cast %21 : vector<64x128xf32> to vector<1x64x128xf32>
    %cst_13 = arith.constant dense<0.000000e+00> : vector<1xf32>
    %26 = vector.multi_reduction <add>, %25, %cst_13 [1, 2] : vector<1x64x128xf32> to vector<1xf32>
    %27 = vector.shape_cast %26 : vector<1xf32> to vector<1x1x1xf32>
    %28 = vector.extract %27[0, 0, 0] : f32 from vector<1x1x1xf32>
    %29 = arith.mulf %21, %21 : vector<64x128xf32>
    %30 = vector.shape_cast %29 : vector<64x128xf32> to vector<1x64x128xf32>
    %cst_14 = arith.constant dense<0.000000e+00> : vector<1xf32>
    %31 = vector.multi_reduction <add>, %30, %cst_14 [1, 2] : vector<1x64x128xf32> to vector<1xf32>
    %32 = vector.shape_cast %31 : vector<1xf32> to vector<1x1x1xf32>
    %33 = vector.extract %32[0, 0, 0] : f32 from vector<1x1x1xf32>
    %34 = tpu.iota {dimensions = array<i32: 1>} : vector<1x2x128xi32>
    %c0_i32 = arith.constant 0 : i32
    %35 = vector.broadcast %c0_i32 : i32 to vector<1x2x128xi32>
    %36 = arith.cmpi eq, %34, %35 : vector<1x2x128xi32>
    %37 = vector.broadcast %28 : f32 to vector<1x2x128xf32>
    %38 = vector.broadcast %33 : f32 to vector<1x2x128xf32>
    %39 = arith.select %36, %37, %38 : vector<1x2x128xi1>, vector<1x2x128xf32>
    %c0_i32_15 = arith.constant 0 : i32
    %40 = arith.cmpi eq, %arg1, %c0_i32_15 : i32
    %41 = arith.extui %40 : i1 to i32
    %c0_i32_16 = arith.constant 0 : i32
    %42 = arith.cmpi ne, %41, %c0_i32_16 : i32
    scf.if %42 {
      %c0_19 = arith.constant 0 : index
      %c0_20 = arith.constant 0 : index
      %c0_21 = arith.constant 0 : index
      %46 = vector.load %arg9[%c0_19, %c0_20, %c0_21] : memref<1x2x128xf32, #tpu.memory_space<vmem>>, vector<1x2x128xf32>
      tpu.vector_store %arg9[%c0_19, %c0_20, %c0_21], %39 {strides = array<i32>} : memref<1x2x128xf32, #tpu.memory_space<vmem>>, vector<1x2x128xf32>,
    } else {
    }
    %c0_i32_17 = arith.constant 0 : i32
    %43 = arith.cmpi sgt, %arg1, %c0_i32_17 : i32
    %44 = arith.extui %43 : i1 to i32
    %c0_i32_18 = arith.constant 0 : i32
    %45 = arith.cmpi ne, %44, %c0_i32_18 : i32
    scf.if %45 {
      %c0_19 = arith.constant 0 : index
      %c0_20 = arith.constant 0 : index
      %c0_21 = arith.constant 0 : index
      %46 = vector.load %arg9[%c0_19, %c0_20, %c0_21] : memref<1x2x128xf32, #tpu.memory_space<vmem>>, vector<1x2x128xf32>
      %47 = arith.addf %46, %39 : vector<1x2x128xf32>
      %c0_22 = arith.constant 0 : index
      %c0_23 = arith.constant 0 : index
      %c0_24 = arith.constant 0 : index
      %48 = vector.load %arg9[%c0_22, %c0_23, %c0_24] : memref<1x2x128xf32, #tpu.memory_space<vmem>>, vector<1x2x128xf32>
      tpu.vector_store %arg9[%c0_22, %c0_23, %c0_24], %47 {strides = array<i32>} : memref<1x2x128xf32, #tpu.memory_space<vmem>>, vector<1x2x128xf32>,
    } else {
    }
    return
  }
  func.func @transform_0(%arg0: i32, %arg1: i32) -> (i32, i32, i32) {
    %c0_i32 = arith.constant 0 : i32
    %c0_i32_0 = arith.constant 0 : i32
    return %arg0, %c0_i32, %arg1 : i32, i32, i32
  }
  func.func @transform_1(%arg0: i32, %arg1: i32) -> (i32, i32) {
    %c0_i32 = arith.constant 0 : i32
    %c0_i32_0 = arith.constant 0 : i32
    %c0_i32_1 = arith.constant 0 : i32
    return %c0_i32, %c0_i32_0 : i32, i32
  }
  func.func @transform_2(%arg0: i32, %arg1: i32) -> (i32, i32) {
    %c0_i32 = arith.constant 0 : i32
    %c0_i32_0 = arith.constant 0 : i32
    %c0_i32_1 = arith.constant 0 : i32
    return %c0_i32, %c0_i32_0 : i32, i32
  }
  func.func @transform_3(%arg0: i32, %arg1: i32) -> (i32, i32, i32) {
    %c0_i32 = arith.constant 0 : i32
    %c0_i32_0 = arith.constant 0 : i32
    %c0_i32_1 = arith.constant 0 : i32
    return %arg0, %c0_i32, %c0_i32_0 : i32, i32, i32
  }
  func.func @transform_4(%arg0: i32, %arg1: i32) -> (i32, i32, i32) {
    %c0_i32 = arith.constant 0 : i32
    %c0_i32_0 = arith.constant 0 : i32
    %c0_i32_1 = arith.constant 0 : i32
    return %arg0, %c0_i32, %c0_i32_0 : i32, i32, i32
  }
  func.func @transform_5(%arg0: i32, %arg1: i32) -> (i32, i32) {
    %c0_i32 = arith.constant 0 : i32
    %c0_i32_0 = arith.constant 0 : i32
    %c0_i32_1 = arith.constant 0 : i32
    return %c0_i32, %c0_i32_0 : i32, i32
  }
  func.func @transform_6(%arg0: i32, %arg1: i32) -> (i32, i32, i32) {
    %c0_i32 = arith.constant 0 : i32
    %c0_i32_0 = arith.constant 0 : i32
    return %arg0, %c0_i32, %arg1 : i32, i32, i32
  }
  func.func @transform_7(%arg0: i32, %arg1: i32) -> (i32, i32, i32) {
    %c0_i32 = arith.constant 0 : i32
    %c0_i32_0 = arith.constant 0 : i32
    %c0_i32_1 = arith.constant 0 : i32
    return %arg0, %c0_i32, %c0_i32_0 : i32, i32, i32
  }
}

module attributes {stable_mosaic.version = 11 : i64} {
  func.func @_dw_kernel(%arg0: i32, %arg1: i32, %arg2: memref<1x64x130xf32, #tpu.memory_space<vmem>>, %arg3: memref<64x3xf32, #tpu.memory_space<vmem>>, %arg4: memref<64x1xf32, #tpu.memory_space<vmem>>, %arg5: memref<1x64x1xf32, #tpu.memory_space<vmem>>, %arg6: memref<1x64x1xf32, #tpu.memory_space<vmem>>, %arg7: memref<1x1xf32, #tpu.memory_space<vmem>>, %arg8: memref<1x64x128xf32, #tpu.memory_space<vmem>>, %arg9: memref<1x2x128xf32, #tpu.memory_space<vmem>>) attributes {dimension_semantics = [#tpu.dimension_semantics<parallel>, #tpu.dimension_semantics<arbitrary>], iteration_bounds = array<i64: 2, 1>, scalar_prefetch = 0 : i64, scratch_operands = 0 : i64, tpu.core_type = #tpu.core_type<tc>, window_params = [{transform_indices = @transform_0, window_bounds = array<i64: 1, 64, 130>}, {transform_indices = @transform_1, window_bounds = array<i64: 64, 3>}, {transform_indices = @transform_2, window_bounds = array<i64: 64, 1>}, {transform_indices = @transform_3, window_bounds = array<i64: 1, 64, 1>}, {transform_indices = @transform_4, window_bounds = array<i64: 1, 64, 1>}, {pipeline_mode = #tpu.pipeline_mode<synchronous>, transform_indices = @transform_5, window_bounds = array<i64: 1, 1>}, {transform_indices = @transform_6, window_bounds = array<i64: 1, 64, 128>}, {transform_indices = @transform_7, window_bounds = array<i64: 1, 2, 128>}]} {
    %c0 = arith.constant 0 : index
    %c0_0 = arith.constant 0 : index
    %c0_1 = arith.constant 0 : index
    %0 = vector.load %arg2[%c0, %c0_0, %c0_1] : memref<1x64x130xf32, #tpu.memory_space<vmem>>, vector<1x64x130xf32>
    %1 = vector.shape_cast %0 : vector<1x64x130xf32> to vector<64x130xf32>
    %c0_2 = arith.constant 0 : index
    %c0_3 = arith.constant 0 : index
    %c0_4 = arith.constant 0 : index
    %2 = vector.load %arg5[%c0_2, %c0_3, %c0_4] : memref<1x64x1xf32, #tpu.memory_space<vmem>>, vector<1x64x1xf32>
    %3 = vector.shape_cast %2 : vector<1x64x1xf32> to vector<64x1xf32>
    %4 = vector.broadcast %3 : vector<64x1xf32> to vector<64x130xf32>
    %5 = arith.mulf %1, %4 : vector<64x130xf32>
    %c0_5 = arith.constant 0 : index
    %c0_6 = arith.constant 0 : index
    %c0_7 = arith.constant 0 : index
    %6 = vector.load %arg6[%c0_5, %c0_6, %c0_7] : memref<1x64x1xf32, #tpu.memory_space<vmem>>, vector<1x64x1xf32>
    %7 = vector.shape_cast %6 : vector<1x64x1xf32> to vector<64x1xf32>
    %8 = vector.broadcast %7 : vector<64x1xf32> to vector<64x130xf32>
    %9 = arith.addf %5, %8 : vector<64x130xf32>
    %10 = tpu.iota {dimensions = array<i32: 1>} : vector<64x130xi32>
    %c1_i32 = arith.constant 1 : i32
    %11 = vector.broadcast %c1_i32 : i32 to vector<64x130xi32>
    %12 = arith.cmpi sge, %10, %11 : vector<64x130xi32>
    %c22_i32 = arith.constant 22 : i32
    %13 = vector.broadcast %c22_i32 : i32 to vector<64x130xi32>
    %14 = arith.cmpi slt, %10, %13 : vector<64x130xi32>
    %15 = arith.andi %12, %14 : vector<64x130xi1>
    %cst = arith.constant 0.000000e+00 : f32
    %16 = vector.broadcast %cst : f32 to vector<64x130xf32>
    %17 = arith.select %15, %9, %16 : vector<64x130xi1>, vector<64x130xf32>
    %18 = vector.extract_strided_slice %17 {offsets = [0, 0], sizes = [64, 128], strides = [1, 1]} : vector<64x130xf32> to vector<64x128xf32>
    %c0_8 = arith.constant 0 : index
    %c0_9 = arith.constant 0 : index
    %19 = vector.load %arg3[%c0_8, %c0_9] : memref<64x3xf32, #tpu.memory_space<vmem>>, vector<64x1xf32>
    %20 = vector.broadcast %19 : vector<64x1xf32> to vector<64x128xf32>
    %21 = arith.mulf %18, %20 : vector<64x128xf32>
    %22 = vector.extract_strided_slice %17 {offsets = [0, 1], sizes = [64, 128], strides = [1, 1]} : vector<64x130xf32> to vector<64x128xf32>
    %c0_10 = arith.constant 0 : index
    %c1 = arith.constant 1 : index
    %23 = vector.load %arg3[%c0_10, %c1] : memref<64x3xf32, #tpu.memory_space<vmem>>, vector<64x1xf32>
    %24 = vector.broadcast %23 : vector<64x1xf32> to vector<64x128xf32>
    %25 = arith.mulf %22, %24 : vector<64x128xf32>
    %26 = arith.addf %21, %25 : vector<64x128xf32>
    %27 = vector.extract_strided_slice %17 {offsets = [0, 2], sizes = [64, 128], strides = [1, 1]} : vector<64x130xf32> to vector<64x128xf32>
    %c0_11 = arith.constant 0 : index
    %c2 = arith.constant 2 : index
    %28 = vector.load %arg3[%c0_11, %c2] : memref<64x3xf32, #tpu.memory_space<vmem>>, vector<64x1xf32>
    %29 = vector.broadcast %28 : vector<64x1xf32> to vector<64x128xf32>
    %30 = arith.mulf %27, %29 : vector<64x128xf32>
    %31 = arith.addf %26, %30 : vector<64x128xf32>
    %c0_12 = arith.constant 0 : index
    %c0_13 = arith.constant 0 : index
    %32 = vector.load %arg4[%c0_12, %c0_13] : memref<64x1xf32, #tpu.memory_space<vmem>>, vector<64x1xf32>
    %33 = vector.broadcast %32 : vector<64x1xf32> to vector<64x128xf32>
    %34 = arith.addf %31, %33 : vector<64x128xf32>
    %c0_14 = arith.constant 0 : index
    %c0_15 = arith.constant 0 : index
    %35 = vector.load %arg7[%c0_14, %c0_15] : memref<1x1xf32, #tpu.memory_space<vmem>>, vector<1x1xf32>
    %cst_16 = arith.constant 0.000000e+00 : f32
    %36 = vector.broadcast %cst_16 : f32 to vector<64x128xf32>
    %37 = arith.cmpf oge, %34, %36 : vector<64x128xf32>
    %38 = vector.broadcast %35 : vector<1x1xf32> to vector<64x128xf32>
    %39 = arith.mulf %38, %34 : vector<64x128xf32>
    %40 = arith.select %37, %34, %39 : vector<64x128xi1>, vector<64x128xf32>
    %41 = tpu.iota {dimensions = array<i32: 1>} : vector<64x128xi32>
    %c21_i32 = arith.constant 21 : i32
    %42 = vector.broadcast %c21_i32 : i32 to vector<64x128xi32>
    %43 = arith.cmpi slt, %41, %42 : vector<64x128xi32>
    %cst_17 = arith.constant 0.000000e+00 : f32
    %44 = vector.broadcast %cst_17 : f32 to vector<64x128xf32>
    %45 = arith.select %43, %40, %44 : vector<64x128xi1>, vector<64x128xf32>
    %c0_18 = arith.constant 0 : index
    %c0_19 = arith.constant 0 : index
    %c0_20 = arith.constant 0 : index
    %46 = vector.load %arg8[%c0_18, %c0_19, %c0_20] : memref<1x64x128xf32, #tpu.memory_space<vmem>>, vector<1x64x128xf32>
    %47 = vector.shape_cast %46 : vector<1x64x128xf32> to vector<64x128xf32>
    %48 = vector.shape_cast %45 : vector<64x128xf32> to vector<1x64x128xf32>
    tpu.vector_store %arg8[%c0_18, %c0_19, %c0_20], %48 {strides = array<i32>} : memref<1x64x128xf32, #tpu.memory_space<vmem>>, vector<1x64x128xf32>,
    %49 = vector.shape_cast %45 : vector<64x128xf32> to vector<1x64x128xf32>
    %cst_21 = arith.constant dense<0.000000e+00> : vector<1xf32>
    %50 = vector.multi_reduction <add>, %49, %cst_21 [1, 2] : vector<1x64x128xf32> to vector<1xf32>
    %51 = vector.shape_cast %50 : vector<1xf32> to vector<1x1x1xf32>
    %52 = vector.extract %51[0, 0, 0] : f32 from vector<1x1x1xf32>
    %53 = arith.mulf %45, %45 : vector<64x128xf32>
    %54 = vector.shape_cast %53 : vector<64x128xf32> to vector<1x64x128xf32>
    %cst_22 = arith.constant dense<0.000000e+00> : vector<1xf32>
    %55 = vector.multi_reduction <add>, %54, %cst_22 [1, 2] : vector<1x64x128xf32> to vector<1xf32>
    %56 = vector.shape_cast %55 : vector<1xf32> to vector<1x1x1xf32>
    %57 = vector.extract %56[0, 0, 0] : f32 from vector<1x1x1xf32>
    %58 = tpu.iota {dimensions = array<i32: 1>} : vector<1x2x128xi32>
    %c0_i32 = arith.constant 0 : i32
    %59 = vector.broadcast %c0_i32 : i32 to vector<1x2x128xi32>
    %60 = arith.cmpi eq, %58, %59 : vector<1x2x128xi32>
    %61 = vector.broadcast %52 : f32 to vector<1x2x128xf32>
    %62 = vector.broadcast %57 : f32 to vector<1x2x128xf32>
    %63 = arith.select %60, %61, %62 : vector<1x2x128xi1>, vector<1x2x128xf32>
    %c0_i32_23 = arith.constant 0 : i32
    %64 = arith.cmpi eq, %arg1, %c0_i32_23 : i32
    %65 = arith.extui %64 : i1 to i32
    %c0_i32_24 = arith.constant 0 : i32
    %66 = arith.cmpi ne, %65, %c0_i32_24 : i32
    scf.if %66 {
      %c0_27 = arith.constant 0 : index
      %c0_28 = arith.constant 0 : index
      %c0_29 = arith.constant 0 : index
      %70 = vector.load %arg9[%c0_27, %c0_28, %c0_29] : memref<1x2x128xf32, #tpu.memory_space<vmem>>, vector<1x2x128xf32>
      tpu.vector_store %arg9[%c0_27, %c0_28, %c0_29], %63 {strides = array<i32>} : memref<1x2x128xf32, #tpu.memory_space<vmem>>, vector<1x2x128xf32>,
    } else {
    }
    %c0_i32_25 = arith.constant 0 : i32
    %67 = arith.cmpi sgt, %arg1, %c0_i32_25 : i32
    %68 = arith.extui %67 : i1 to i32
    %c0_i32_26 = arith.constant 0 : i32
    %69 = arith.cmpi ne, %68, %c0_i32_26 : i32
    scf.if %69 {
      %c0_27 = arith.constant 0 : index
      %c0_28 = arith.constant 0 : index
      %c0_29 = arith.constant 0 : index
      %70 = vector.load %arg9[%c0_27, %c0_28, %c0_29] : memref<1x2x128xf32, #tpu.memory_space<vmem>>, vector<1x2x128xf32>
      %71 = arith.addf %70, %63 : vector<1x2x128xf32>
      %c0_30 = arith.constant 0 : index
      %c0_31 = arith.constant 0 : index
      %c0_32 = arith.constant 0 : index
      %72 = vector.load %arg9[%c0_30, %c0_31, %c0_32] : memref<1x2x128xf32, #tpu.memory_space<vmem>>, vector<1x2x128xf32>
      tpu.vector_store %arg9[%c0_30, %c0_31, %c0_32], %71 {strides = array<i32>} : memref<1x2x128xf32, #tpu.memory_space<vmem>>, vector<1x2x128xf32>,
    } else {
    }
    return
  }
  func.func @transform_0(%arg0: i32, %arg1: i32) -> (i32, i32, i32) {
    %c0_i32 = arith.constant 0 : i32
    %c0_i32_0 = arith.constant 0 : i32
    return %arg0, %arg1, %c0_i32 : i32, i32, i32
  }
  func.func @transform_1(%arg0: i32, %arg1: i32) -> (i32, i32) {
    %c0_i32 = arith.constant 0 : i32
    %c0_i32_0 = arith.constant 0 : i32
    return %arg1, %c0_i32 : i32, i32
  }
  func.func @transform_2(%arg0: i32, %arg1: i32) -> (i32, i32) {
    %c0_i32 = arith.constant 0 : i32
    %c0_i32_0 = arith.constant 0 : i32
    return %arg1, %c0_i32 : i32, i32
  }
  func.func @transform_3(%arg0: i32, %arg1: i32) -> (i32, i32, i32) {
    %c0_i32 = arith.constant 0 : i32
    %c0_i32_0 = arith.constant 0 : i32
    return %arg0, %arg1, %c0_i32 : i32, i32, i32
  }
  func.func @transform_4(%arg0: i32, %arg1: i32) -> (i32, i32, i32) {
    %c0_i32 = arith.constant 0 : i32
    %c0_i32_0 = arith.constant 0 : i32
    return %arg0, %arg1, %c0_i32 : i32, i32, i32
  }
  func.func @transform_5(%arg0: i32, %arg1: i32) -> (i32, i32) {
    %c0_i32 = arith.constant 0 : i32
    %c0_i32_0 = arith.constant 0 : i32
    %c0_i32_1 = arith.constant 0 : i32
    return %c0_i32, %c0_i32_0 : i32, i32
  }
  func.func @transform_6(%arg0: i32, %arg1: i32) -> (i32, i32, i32) {
    %c0_i32 = arith.constant 0 : i32
    %c0_i32_0 = arith.constant 0 : i32
    return %arg0, %arg1, %c0_i32 : i32, i32, i32
  }
  func.func @transform_7(%arg0: i32, %arg1: i32) -> (i32, i32, i32) {
    %c0_i32 = arith.constant 0 : i32
    %c0_i32_0 = arith.constant 0 : i32
    %c0_i32_1 = arith.constant 0 : i32
    return %arg0, %c0_i32, %c0_i32_0 : i32, i32, i32
  }
}

module attributes {stable_mosaic.version = 11 : i64} {
  func.func @_pw_kernel(%arg0: i32, %arg1: i32, %arg2: memref<1x64x128xf32, #tpu.memory_space<vmem>>, %arg3: memref<64x64xbf16, #tpu.memory_space<vmem>>, %arg4: memref<64x1xf32, #tpu.memory_space<vmem>>, %arg5: memref<1x64x1xf32, #tpu.memory_space<vmem>>, %arg6: memref<1x64x1xf32, #tpu.memory_space<vmem>>, %arg7: memref<1x1xf32, #tpu.memory_space<vmem>>, %arg8: memref<1x64x128xf32, #tpu.memory_space<vmem>>) attributes {dimension_semantics = [#tpu.dimension_semantics<parallel>, #tpu.dimension_semantics<parallel>], iteration_bounds = array<i64: 2, 1>, scalar_prefetch = 0 : i64, scratch_operands = 0 : i64, tpu.core_type = #tpu.core_type<tc>, window_params = [{transform_indices = @transform_0, window_bounds = array<i64: 1, 64, 128>}, {pipeline_mode = #tpu.pipeline_mode<synchronous>, transform_indices = @transform_1, window_bounds = array<i64: 64, 64>}, {pipeline_mode = #tpu.pipeline_mode<synchronous>, transform_indices = @transform_2, window_bounds = array<i64: 64, 1>}, {transform_indices = @transform_3, window_bounds = array<i64: 1, 64, 1>}, {transform_indices = @transform_4, window_bounds = array<i64: 1, 64, 1>}, {pipeline_mode = #tpu.pipeline_mode<synchronous>, transform_indices = @transform_5, window_bounds = array<i64: 1, 1>}, {transform_indices = @transform_6, window_bounds = array<i64: 1, 64, 128>}]} {
    %c0 = arith.constant 0 : index
    %c0_0 = arith.constant 0 : index
    %c0_1 = arith.constant 0 : index
    %0 = vector.load %arg2[%c0, %c0_0, %c0_1] : memref<1x64x128xf32, #tpu.memory_space<vmem>>, vector<1x64x128xf32>
    %1 = vector.shape_cast %0 : vector<1x64x128xf32> to vector<64x128xf32>
    %c0_2 = arith.constant 0 : index
    %c0_3 = arith.constant 0 : index
    %c0_4 = arith.constant 0 : index
    %2 = vector.load %arg5[%c0_2, %c0_3, %c0_4] : memref<1x64x1xf32, #tpu.memory_space<vmem>>, vector<1x64x1xf32>
    %3 = vector.shape_cast %2 : vector<1x64x1xf32> to vector<64x1xf32>
    %4 = vector.broadcast %3 : vector<64x1xf32> to vector<64x128xf32>
    %5 = arith.mulf %1, %4 : vector<64x128xf32>
    %c0_5 = arith.constant 0 : index
    %c0_6 = arith.constant 0 : index
    %c0_7 = arith.constant 0 : index
    %6 = vector.load %arg6[%c0_5, %c0_6, %c0_7] : memref<1x64x1xf32, #tpu.memory_space<vmem>>, vector<1x64x1xf32>
    %7 = vector.shape_cast %6 : vector<1x64x1xf32> to vector<64x1xf32>
    %8 = vector.broadcast %7 : vector<64x1xf32> to vector<64x128xf32>
    %9 = arith.addf %5, %8 : vector<64x128xf32>
    %c0_8 = arith.constant 0 : index
    %c0_9 = arith.constant 0 : index
    %10 = vector.load %arg3[%c0_8, %c0_9] : memref<64x64xbf16, #tpu.memory_space<vmem>>, vector<64x64xbf16>
    %11 = arith.truncf %9 : vector<64x128xf32> to vector<64x128xbf16>
    %cst = arith.constant dense<0.000000e+00> : vector<64x128xf32>
    %12 = tpu.matmul %10, %11, %cst {dimension_numbers = #tpu.dot_dimension_numbers<[1], [0], [0], [1], [0, 0, 1, 1], [], []>} : vector<64x64xbf16>, vector<64x128xbf16>, vector<64x128xf32> -> vector<64x128xf32>
    %c0_10 = arith.constant 0 : index
    %c0_11 = arith.constant 0 : index
    %13 = vector.load %arg4[%c0_10, %c0_11] : memref<64x1xf32, #tpu.memory_space<vmem>>, vector<64x1xf32>
    %14 = vector.broadcast %13 : vector<64x1xf32> to vector<64x128xf32>
    %15 = arith.addf %12, %14 : vector<64x128xf32>
    %c128_i32 = arith.constant 128 : i32
    %16 = arith.muli %arg1, %c128_i32 : i32
    %17 = tpu.iota {dimensions = array<i32: 1>} : vector<64x128xi32>
    %18 = vector.broadcast %16 : i32 to vector<64x128xi32>
    %19 = arith.addi %18, %17 : vector<64x128xi32>
    %c21_i32 = arith.constant 21 : i32
    %20 = vector.broadcast %c21_i32 : i32 to vector<64x128xi32>
    %21 = arith.cmpi slt, %19, %20 : vector<64x128xi32>
    %cst_12 = arith.constant 0.000000e+00 : f32
    %22 = vector.broadcast %cst_12 : f32 to vector<64x128xf32>
    %23 = arith.select %21, %15, %22 : vector<64x128xi1>, vector<64x128xf32>
    %c0_13 = arith.constant 0 : index
    %c0_14 = arith.constant 0 : index
    %c0_15 = arith.constant 0 : index
    %24 = vector.load %arg8[%c0_13, %c0_14, %c0_15] : memref<1x64x128xf32, #tpu.memory_space<vmem>>, vector<1x64x128xf32>
    %25 = vector.shape_cast %24 : vector<1x64x128xf32> to vector<64x128xf32>
    %26 = vector.shape_cast %23 : vector<64x128xf32> to vector<1x64x128xf32>
    tpu.vector_store %arg8[%c0_13, %c0_14, %c0_15], %26 {strides = array<i32>} : memref<1x64x128xf32, #tpu.memory_space<vmem>>, vector<1x64x128xf32>,
    return
  }
  func.func @transform_0(%arg0: i32, %arg1: i32) -> (i32, i32, i32) {
    %c0_i32 = arith.constant 0 : i32
    %c0_i32_0 = arith.constant 0 : i32
    return %arg0, %c0_i32, %arg1 : i32, i32, i32
  }
  func.func @transform_1(%arg0: i32, %arg1: i32) -> (i32, i32) {
    %c0_i32 = arith.constant 0 : i32
    %c0_i32_0 = arith.constant 0 : i32
    %c0_i32_1 = arith.constant 0 : i32
    return %c0_i32, %c0_i32_0 : i32, i32
  }
  func.func @transform_2(%arg0: i32, %arg1: i32) -> (i32, i32) {
    %c0_i32 = arith.constant 0 : i32
    %c0_i32_0 = arith.constant 0 : i32
    %c0_i32_1 = arith.constant 0 : i32
    return %c0_i32, %c0_i32_0 : i32, i32
  }
  func.func @transform_3(%arg0: i32, %arg1: i32) -> (i32, i32, i32) {
    %c0_i32 = arith.constant 0 : i32
    %c0_i32_0 = arith.constant 0 : i32
    %c0_i32_1 = arith.constant 0 : i32
    return %arg0, %c0_i32, %c0_i32_0 : i32, i32, i32
  }
  func.func @transform_4(%arg0: i32, %arg1: i32) -> (i32, i32, i32) {
    %c0_i32 = arith.constant 0 : i32
    %c0_i32_0 = arith.constant 0 : i32
    %c0_i32_1 = arith.constant 0 : i32
    return %arg0, %c0_i32, %c0_i32_0 : i32, i32, i32
  }
  func.func @transform_5(%arg0: i32, %arg1: i32) -> (i32, i32) {
    %c0_i32 = arith.constant 0 : i32
    %c0_i32_0 = arith.constant 0 : i32
    %c0_i32_1 = arith.constant 0 : i32
    return %c0_i32, %c0_i32_0 : i32, i32
  }
  func.func @transform_6(%arg0: i32, %arg1: i32) -> (i32, i32, i32) {
    %c0_i32 = arith.constant 0 : i32
    %c0_i32_0 = arith.constant 0 : i32
    return %arg0, %c0_i32, %arg1 : i32, i32, i32
  }
}

module attributes {stable_mosaic.version = 11 : i64} {
  func.func @_dw_kernel(%arg0: i32, %arg1: i32, %arg2: memref<1x64x132xf32, #tpu.memory_space<vmem>>, %arg3: memref<64x3xf32, #tpu.memory_space<vmem>>, %arg4: memref<64x1xf32, #tpu.memory_space<vmem>>, %arg5: memref<1x64x1xf32, #tpu.memory_space<vmem>>, %arg6: memref<1x64x1xf32, #tpu.memory_space<vmem>>, %arg7: memref<1x1xf32, #tpu.memory_space<vmem>>, %arg8: memref<1x64x128xf32, #tpu.memory_space<vmem>>, %arg9: memref<1x2x128xf32, #tpu.memory_space<vmem>>) attributes {dimension_semantics = [#tpu.dimension_semantics<parallel>, #tpu.dimension_semantics<arbitrary>], iteration_bounds = array<i64: 2, 1>, scalar_prefetch = 0 : i64, scratch_operands = 0 : i64, tpu.core_type = #tpu.core_type<tc>, window_params = [{transform_indices = @transform_0, window_bounds = array<i64: 1, 64, 132>}, {transform_indices = @transform_1, window_bounds = array<i64: 64, 3>}, {transform_indices = @transform_2, window_bounds = array<i64: 64, 1>}, {transform_indices = @transform_3, window_bounds = array<i64: 1, 64, 1>}, {transform_indices = @transform_4, window_bounds = array<i64: 1, 64, 1>}, {pipeline_mode = #tpu.pipeline_mode<synchronous>, transform_indices = @transform_5, window_bounds = array<i64: 1, 1>}, {transform_indices = @transform_6, window_bounds = array<i64: 1, 64, 128>}, {transform_indices = @transform_7, window_bounds = array<i64: 1, 2, 128>}]} {
    %c0 = arith.constant 0 : index
    %c0_0 = arith.constant 0 : index
    %c0_1 = arith.constant 0 : index
    %0 = vector.load %arg2[%c0, %c0_0, %c0_1] : memref<1x64x132xf32, #tpu.memory_space<vmem>>, vector<1x64x132xf32>
    %1 = vector.shape_cast %0 : vector<1x64x132xf32> to vector<64x132xf32>
    %c0_2 = arith.constant 0 : index
    %c0_3 = arith.constant 0 : index
    %c0_4 = arith.constant 0 : index
    %2 = vector.load %arg5[%c0_2, %c0_3, %c0_4] : memref<1x64x1xf32, #tpu.memory_space<vmem>>, vector<1x64x1xf32>
    %3 = vector.shape_cast %2 : vector<1x64x1xf32> to vector<64x1xf32>
    %4 = vector.broadcast %3 : vector<64x1xf32> to vector<64x132xf32>
    %5 = arith.mulf %1, %4 : vector<64x132xf32>
    %c0_5 = arith.constant 0 : index
    %c0_6 = arith.constant 0 : index
    %c0_7 = arith.constant 0 : index
    %6 = vector.load %arg6[%c0_5, %c0_6, %c0_7] : memref<1x64x1xf32, #tpu.memory_space<vmem>>, vector<1x64x1xf32>
    %7 = vector.shape_cast %6 : vector<1x64x1xf32> to vector<64x1xf32>
    %8 = vector.broadcast %7 : vector<64x1xf32> to vector<64x132xf32>
    %9 = arith.addf %5, %8 : vector<64x132xf32>
    %10 = tpu.iota {dimensions = array<i32: 1>} : vector<64x132xi32>
    %c2_i32 = arith.constant 2 : i32
    %11 = vector.broadcast %c2_i32 : i32 to vector<64x132xi32>
    %12 = arith.cmpi sge, %10, %11 : vector<64x132xi32>
    %c23_i32 = arith.constant 23 : i32
    %13 = vector.broadcast %c23_i32 : i32 to vector<64x132xi32>
    %14 = arith.cmpi slt, %10, %13 : vector<64x132xi32>
    %15 = arith.andi %12, %14 : vector<64x132xi1>
    %cst = arith.constant 0.000000e+00 : f32
    %16 = vector.broadcast %cst : f32 to vector<64x132xf32>
    %17 = arith.select %15, %9, %16 : vector<64x132xi1>, vector<64x132xf32>
    %18 = vector.extract_strided_slice %17 {offsets = [0, 0], sizes = [64, 128], strides = [1, 1]} : vector<64x132xf32> to vector<64x128xf32>
    %c0_8 = arith.constant 0 : index
    %c0_9 = arith.constant 0 : index
    %19 = vector.load %arg3[%c0_8, %c0_9] : memref<64x3xf32, #tpu.memory_space<vmem>>, vector<64x1xf32>
    %20 = vector.broadcast %19 : vector<64x1xf32> to vector<64x128xf32>
    %21 = arith.mulf %18, %20 : vector<64x128xf32>
    %22 = vector.extract_strided_slice %17 {offsets = [0, 2], sizes = [64, 128], strides = [1, 1]} : vector<64x132xf32> to vector<64x128xf32>
    %c0_10 = arith.constant 0 : index
    %c1 = arith.constant 1 : index
    %23 = vector.load %arg3[%c0_10, %c1] : memref<64x3xf32, #tpu.memory_space<vmem>>, vector<64x1xf32>
    %24 = vector.broadcast %23 : vector<64x1xf32> to vector<64x128xf32>
    %25 = arith.mulf %22, %24 : vector<64x128xf32>
    %26 = arith.addf %21, %25 : vector<64x128xf32>
    %27 = vector.extract_strided_slice %17 {offsets = [0, 4], sizes = [64, 128], strides = [1, 1]} : vector<64x132xf32> to vector<64x128xf32>
    %c0_11 = arith.constant 0 : index
    %c2 = arith.constant 2 : index
    %28 = vector.load %arg3[%c0_11, %c2] : memref<64x3xf32, #tpu.memory_space<vmem>>, vector<64x1xf32>
    %29 = vector.broadcast %28 : vector<64x1xf32> to vector<64x128xf32>
    %30 = arith.mulf %27, %29 : vector<64x128xf32>
    %31 = arith.addf %26, %30 : vector<64x128xf32>
    %c0_12 = arith.constant 0 : index
    %c0_13 = arith.constant 0 : index
    %32 = vector.load %arg4[%c0_12, %c0_13] : memref<64x1xf32, #tpu.memory_space<vmem>>, vector<64x1xf32>
    %33 = vector.broadcast %32 : vector<64x1xf32> to vector<64x128xf32>
    %34 = arith.addf %31, %33 : vector<64x128xf32>
    %c0_14 = arith.constant 0 : index
    %c0_15 = arith.constant 0 : index
    %35 = vector.load %arg7[%c0_14, %c0_15] : memref<1x1xf32, #tpu.memory_space<vmem>>, vector<1x1xf32>
    %cst_16 = arith.constant 0.000000e+00 : f32
    %36 = vector.broadcast %cst_16 : f32 to vector<64x128xf32>
    %37 = arith.cmpf oge, %34, %36 : vector<64x128xf32>
    %38 = vector.broadcast %35 : vector<1x1xf32> to vector<64x128xf32>
    %39 = arith.mulf %38, %34 : vector<64x128xf32>
    %40 = arith.select %37, %34, %39 : vector<64x128xi1>, vector<64x128xf32>
    %41 = tpu.iota {dimensions = array<i32: 1>} : vector<64x128xi32>
    %c21_i32 = arith.constant 21 : i32
    %42 = vector.broadcast %c21_i32 : i32 to vector<64x128xi32>
    %43 = arith.cmpi slt, %41, %42 : vector<64x128xi32>
    %cst_17 = arith.constant 0.000000e+00 : f32
    %44 = vector.broadcast %cst_17 : f32 to vector<64x128xf32>
    %45 = arith.select %43, %40, %44 : vector<64x128xi1>, vector<64x128xf32>
    %c0_18 = arith.constant 0 : index
    %c0_19 = arith.constant 0 : index
    %c0_20 = arith.constant 0 : index
    %46 = vector.load %arg8[%c0_18, %c0_19, %c0_20] : memref<1x64x128xf32, #tpu.memory_space<vmem>>, vector<1x64x128xf32>
    %47 = vector.shape_cast %46 : vector<1x64x128xf32> to vector<64x128xf32>
    %48 = vector.shape_cast %45 : vector<64x128xf32> to vector<1x64x128xf32>
    tpu.vector_store %arg8[%c0_18, %c0_19, %c0_20], %48 {strides = array<i32>} : memref<1x64x128xf32, #tpu.memory_space<vmem>>, vector<1x64x128xf32>,
    %49 = vector.shape_cast %45 : vector<64x128xf32> to vector<1x64x128xf32>
    %cst_21 = arith.constant dense<0.000000e+00> : vector<1xf32>
    %50 = vector.multi_reduction <add>, %49, %cst_21 [1, 2] : vector<1x64x128xf32> to vector<1xf32>
    %51 = vector.shape_cast %50 : vector<1xf32> to vector<1x1x1xf32>
    %52 = vector.extract %51[0, 0, 0] : f32 from vector<1x1x1xf32>
    %53 = arith.mulf %45, %45 : vector<64x128xf32>
    %54 = vector.shape_cast %53 : vector<64x128xf32> to vector<1x64x128xf32>
    %cst_22 = arith.constant dense<0.000000e+00> : vector<1xf32>
    %55 = vector.multi_reduction <add>, %54, %cst_22 [1, 2] : vector<1x64x128xf32> to vector<1xf32>
    %56 = vector.shape_cast %55 : vector<1xf32> to vector<1x1x1xf32>
    %57 = vector.extract %56[0, 0, 0] : f32 from vector<1x1x1xf32>
    %58 = tpu.iota {dimensions = array<i32: 1>} : vector<1x2x128xi32>
    %c0_i32 = arith.constant 0 : i32
    %59 = vector.broadcast %c0_i32 : i32 to vector<1x2x128xi32>
    %60 = arith.cmpi eq, %58, %59 : vector<1x2x128xi32>
    %61 = vector.broadcast %52 : f32 to vector<1x2x128xf32>
    %62 = vector.broadcast %57 : f32 to vector<1x2x128xf32>
    %63 = arith.select %60, %61, %62 : vector<1x2x128xi1>, vector<1x2x128xf32>
    %c0_i32_23 = arith.constant 0 : i32
    %64 = arith.cmpi eq, %arg1, %c0_i32_23 : i32
    %65 = arith.extui %64 : i1 to i32
    %c0_i32_24 = arith.constant 0 : i32
    %66 = arith.cmpi ne, %65, %c0_i32_24 : i32
    scf.if %66 {
      %c0_27 = arith.constant 0 : index
      %c0_28 = arith.constant 0 : index
      %c0_29 = arith.constant 0 : index
      %70 = vector.load %arg9[%c0_27, %c0_28, %c0_29] : memref<1x2x128xf32, #tpu.memory_space<vmem>>, vector<1x2x128xf32>
      tpu.vector_store %arg9[%c0_27, %c0_28, %c0_29], %63 {strides = array<i32>} : memref<1x2x128xf32, #tpu.memory_space<vmem>>, vector<1x2x128xf32>,
    } else {
    }
    %c0_i32_25 = arith.constant 0 : i32
    %67 = arith.cmpi sgt, %arg1, %c0_i32_25 : i32
    %68 = arith.extui %67 : i1 to i32
    %c0_i32_26 = arith.constant 0 : i32
    %69 = arith.cmpi ne, %68, %c0_i32_26 : i32
    scf.if %69 {
      %c0_27 = arith.constant 0 : index
      %c0_28 = arith.constant 0 : index
      %c0_29 = arith.constant 0 : index
      %70 = vector.load %arg9[%c0_27, %c0_28, %c0_29] : memref<1x2x128xf32, #tpu.memory_space<vmem>>, vector<1x2x128xf32>
      %71 = arith.addf %70, %63 : vector<1x2x128xf32>
      %c0_30 = arith.constant 0 : index
      %c0_31 = arith.constant 0 : index
      %c0_32 = arith.constant 0 : index
      %72 = vector.load %arg9[%c0_30, %c0_31, %c0_32] : memref<1x2x128xf32, #tpu.memory_space<vmem>>, vector<1x2x128xf32>
      tpu.vector_store %arg9[%c0_30, %c0_31, %c0_32], %71 {strides = array<i32>} : memref<1x2x128xf32, #tpu.memory_space<vmem>>, vector<1x2x128xf32>,
    } else {
    }
    return
  }
  func.func @transform_0(%arg0: i32, %arg1: i32) -> (i32, i32, i32) {
    %c0_i32 = arith.constant 0 : i32
    %c0_i32_0 = arith.constant 0 : i32
    return %arg0, %arg1, %c0_i32 : i32, i32, i32
  }
  func.func @transform_1(%arg0: i32, %arg1: i32) -> (i32, i32) {
    %c0_i32 = arith.constant 0 : i32
    %c0_i32_0 = arith.constant 0 : i32
    return %arg1, %c0_i32 : i32, i32
  }
  func.func @transform_2(%arg0: i32, %arg1: i32) -> (i32, i32) {
    %c0_i32 = arith.constant 0 : i32
    %c0_i32_0 = arith.constant 0 : i32
    return %arg1, %c0_i32 : i32, i32
  }
  func.func @transform_3(%arg0: i32, %arg1: i32) -> (i32, i32, i32) {
    %c0_i32 = arith.constant 0 : i32
    %c0_i32_0 = arith.constant 0 : i32
    return %arg0, %arg1, %c0_i32 : i32, i32, i32
  }
  func.func @transform_4(%arg0: i32, %arg1: i32) -> (i32, i32, i32) {
    %c0_i32 = arith.constant 0 : i32
    %c0_i32_0 = arith.constant 0 : i32
    return %arg0, %arg1, %c0_i32 : i32, i32, i32
  }
  func.func @transform_5(%arg0: i32, %arg1: i32) -> (i32, i32) {
    %c0_i32 = arith.constant 0 : i32
    %c0_i32_0 = arith.constant 0 : i32
    %c0_i32_1 = arith.constant 0 : i32
    return %c0_i32, %c0_i32_0 : i32, i32
  }
  func.func @transform_6(%arg0: i32, %arg1: i32) -> (i32, i32, i32) {
    %c0_i32 = arith.constant 0 : i32
    %c0_i32_0 = arith.constant 0 : i32
    return %arg0, %arg1, %c0_i32 : i32, i32, i32
  }
  func.func @transform_7(%arg0: i32, %arg1: i32) -> (i32, i32, i32) {
    %c0_i32 = arith.constant 0 : i32
    %c0_i32_0 = arith.constant 0 : i32
    %c0_i32_1 = arith.constant 0 : i32
    return %arg0, %c0_i32, %c0_i32_0 : i32, i32, i32
  }
}

module attributes {stable_mosaic.version = 11 : i64} {
  func.func @_pw_kernel(%arg0: i32, %arg1: i32, %arg2: memref<1x32x128xf32, #tpu.memory_space<vmem>>, %arg3: memref<256x32xbf16, #tpu.memory_space<vmem>>, %arg4: memref<256x1xf32, #tpu.memory_space<vmem>>, %arg5: memref<1x32x1xf32, #tpu.memory_space<vmem>>, %arg6: memref<1x32x1xf32, #tpu.memory_space<vmem>>, %arg7: memref<1x1xf32, #tpu.memory_space<vmem>>, %arg8: memref<1x256x128xf32, #tpu.memory_space<vmem>>) attributes {dimension_semantics = [#tpu.dimension_semantics<parallel>, #tpu.dimension_semantics<parallel>], iteration_bounds = array<i64: 2, 1>, scalar_prefetch = 0 : i64, scratch_operands = 0 : i64, tpu.core_type = #tpu.core_type<tc>, window_params = [{transform_indices = @transform_0, window_bounds = array<i64: 1, 32, 128>}, {pipeline_mode = #tpu.pipeline_mode<synchronous>, transform_indices = @transform_1, window_bounds = array<i64: 256, 32>}, {pipeline_mode = #tpu.pipeline_mode<synchronous>, transform_indices = @transform_2, window_bounds = array<i64: 256, 1>}, {transform_indices = @transform_3, window_bounds = array<i64: 1, 32, 1>}, {transform_indices = @transform_4, window_bounds = array<i64: 1, 32, 1>}, {pipeline_mode = #tpu.pipeline_mode<synchronous>, transform_indices = @transform_5, window_bounds = array<i64: 1, 1>}, {transform_indices = @transform_6, window_bounds = array<i64: 1, 256, 128>}]} {
    %c0 = arith.constant 0 : index
    %c0_0 = arith.constant 0 : index
    %c0_1 = arith.constant 0 : index
    %0 = vector.load %arg2[%c0, %c0_0, %c0_1] : memref<1x32x128xf32, #tpu.memory_space<vmem>>, vector<1x32x128xf32>
    %1 = vector.shape_cast %0 : vector<1x32x128xf32> to vector<32x128xf32>
    %c0_2 = arith.constant 0 : index
    %c0_3 = arith.constant 0 : index
    %2 = vector.load %arg7[%c0_2, %c0_3] : memref<1x1xf32, #tpu.memory_space<vmem>>, vector<1x1xf32>
    %cst = arith.constant 0.000000e+00 : f32
    %3 = vector.broadcast %cst : f32 to vector<32x128xf32>
    %4 = arith.cmpf oge, %1, %3 : vector<32x128xf32>
    %5 = vector.broadcast %2 : vector<1x1xf32> to vector<32x128xf32>
    %6 = arith.mulf %5, %1 : vector<32x128xf32>
    %7 = arith.select %4, %1, %6 : vector<32x128xi1>, vector<32x128xf32>
    %c0_4 = arith.constant 0 : index
    %c0_5 = arith.constant 0 : index
    %8 = vector.load %arg3[%c0_4, %c0_5] : memref<256x32xbf16, #tpu.memory_space<vmem>>, vector<256x32xbf16>
    %9 = arith.truncf %7 : vector<32x128xf32> to vector<32x128xbf16>
    %cst_6 = arith.constant dense<0.000000e+00> : vector<256x128xf32>
    %10 = tpu.matmul %8, %9, %cst_6 {dimension_numbers = #tpu.dot_dimension_numbers<[1], [0], [0], [1], [0, 0, 1, 1], [], []>} : vector<256x32xbf16>, vector<32x128xbf16>, vector<256x128xf32> -> vector<256x128xf32>
    %c0_7 = arith.constant 0 : index
    %c0_8 = arith.constant 0 : index
    %11 = vector.load %arg4[%c0_7, %c0_8] : memref<256x1xf32, #tpu.memory_space<vmem>>, vector<256x1xf32>
    %12 = vector.broadcast %11 : vector<256x1xf32> to vector<256x128xf32>
    %13 = arith.addf %10, %12 : vector<256x128xf32>
    %14 = arith.negf %13 : vector<256x128xf32>
    %15 = math.exp %14 : vector<256x128xf32>
    %cst_9 = arith.constant 1.000000e+00 : f32
    %16 = vector.broadcast %cst_9 : f32 to vector<256x128xf32>
    %17 = arith.addf %16, %15 : vector<256x128xf32>
    %18 = arith.divf %16, %17 : vector<256x128xf32>
    %c128_i32 = arith.constant 128 : i32
    %19 = arith.muli %arg1, %c128_i32 : i32
    %20 = tpu.iota {dimensions = array<i32: 1>} : vector<256x128xi32>
    %21 = vector.broadcast %19 : i32 to vector<256x128xi32>
    %22 = arith.addi %21, %20 : vector<256x128xi32>
    %c21_i32 = arith.constant 21 : i32
    %23 = vector.broadcast %c21_i32 : i32 to vector<256x128xi32>
    %24 = arith.cmpi slt, %22, %23 : vector<256x128xi32>
    %cst_10 = arith.constant 0.000000e+00 : f32
    %25 = vector.broadcast %cst_10 : f32 to vector<256x128xf32>
    %26 = arith.select %24, %18, %25 : vector<256x128xi1>, vector<256x128xf32>
    %c0_11 = arith.constant 0 : index
    %c0_12 = arith.constant 0 : index
    %c0_13 = arith.constant 0 : index
    %27 = vector.load %arg8[%c0_11, %c0_12, %c0_13] : memref<1x256x128xf32, #tpu.memory_space<vmem>>, vector<1x256x128xf32>
    %28 = vector.shape_cast %27 : vector<1x256x128xf32> to vector<256x128xf32>
    %29 = vector.shape_cast %26 : vector<256x128xf32> to vector<1x256x128xf32>
    tpu.vector_store %arg8[%c0_11, %c0_12, %c0_13], %29 {strides = array<i32>} : memref<1x256x128xf32, #tpu.memory_space<vmem>>, vector<1x256x128xf32>,
    return
  }
  func.func @transform_0(%arg0: i32, %arg1: i32) -> (i32, i32, i32) {
    %c0_i32 = arith.constant 0 : i32
    %c0_i32_0 = arith.constant 0 : i32
    return %arg0, %c0_i32, %arg1 : i32, i32, i32
  }
  func.func @transform_1(%arg0: i32, %arg1: i32) -> (i32, i32) {
    %c0_i32 = arith.constant 0 : i32
    %c0_i32_0 = arith.constant 0 : i32
    %c0_i32_1 = arith.constant 0 : i32
    return %c0_i32, %c0_i32_0 : i32, i32
  }
  func.func @transform_2(%arg0: i32, %arg1: i32) -> (i32, i32) {
    %c0_i32 = arith.constant 0 : i32
    %c0_i32_0 = arith.constant 0 : i32
    %c0_i32_1 = arith.constant 0 : i32
    return %c0_i32, %c0_i32_0 : i32, i32
  }
  func.func @transform_3(%arg0: i32, %arg1: i32) -> (i32, i32, i32) {
    %c0_i32 = arith.constant 0 : i32
    %c0_i32_0 = arith.constant 0 : i32
    %c0_i32_1 = arith.constant 0 : i32
    return %arg0, %c0_i32, %c0_i32_0 : i32, i32, i32
  }
  func.func @transform_4(%arg0: i32, %arg1: i32) -> (i32, i32, i32) {
    %c0_i32 = arith.constant 0 : i32
    %c0_i32_0 = arith.constant 0 : i32
    %c0_i32_1 = arith.constant 0 : i32
    return %arg0, %c0_i32, %c0_i32_0 : i32, i32, i32
  }
  func.func @transform_5(%arg0: i32, %arg1: i32) -> (i32, i32) {
    %c0_i32 = arith.constant 0 : i32
    %c0_i32_0 = arith.constant 0 : i32
    %c0_i32_1 = arith.constant 0 : i32
    return %c0_i32, %c0_i32_0 : i32, i32
  }
  func.func @transform_6(%arg0: i32, %arg1: i32) -> (i32, i32, i32) {
    %c0_i32 = arith.constant 0 : i32
    %c0_i32_0 = arith.constant 0 : i32
    return %arg0, %c0_i32, %arg1 : i32, i32, i32
  }
}

module attributes {stable_mosaic.version = 11 : i64} {
  func.func @_dec_kernel(%arg0: i32, %arg1: i32, %arg2: i32, %arg3: memref<1x64x128xf32, #tpu.memory_space<vmem>>, %arg4: memref<1x64x128xf32, #tpu.memory_space<vmem>>, %arg5: memref<16x64xbf16, #tpu.memory_space<vmem>>, %arg6: memref<1x16x128xf32, #tpu.memory_space<vmem>>) attributes {dimension_semantics = [#tpu.dimension_semantics<parallel>, #tpu.dimension_semantics<parallel>, #tpu.dimension_semantics<parallel>], iteration_bounds = array<i64: 2, 4, 1>, scalar_prefetch = 0 : i64, scratch_operands = 0 : i64, tpu.core_type = #tpu.core_type<tc>, window_params = [{transform_indices = @transform_0, window_bounds = array<i64: 1, 64, 128>}, {transform_indices = @transform_1, window_bounds = array<i64: 1, 64, 128>}, {pipeline_mode = #tpu.pipeline_mode<synchronous>, transform_indices = @transform_2, window_bounds = array<i64: 16, 64>}, {transform_indices = @transform_3, window_bounds = array<i64: 1, 16, 128>}]} {
    %c0 = arith.constant 0 : index
    %c0_0 = arith.constant 0 : index
    %c0_1 = arith.constant 0 : index
    %0 = vector.load %arg3[%c0, %c0_0, %c0_1] : memref<1x64x128xf32, #tpu.memory_space<vmem>>, vector<1x64x128xf32>
    %1 = vector.shape_cast %0 : vector<1x64x128xf32> to vector<64x128xf32>
    %c0_2 = arith.constant 0 : index
    %c0_3 = arith.constant 0 : index
    %c0_4 = arith.constant 0 : index
    %2 = vector.load %arg4[%c0_2, %c0_3, %c0_4] : memref<1x64x128xf32, #tpu.memory_space<vmem>>, vector<1x64x128xf32>
    %3 = vector.shape_cast %2 : vector<1x64x128xf32> to vector<64x128xf32>
    %4 = arith.mulf %1, %3 : vector<64x128xf32>
    %c0_5 = arith.constant 0 : index
    %c0_6 = arith.constant 0 : index
    %5 = vector.load %arg5[%c0_5, %c0_6] : memref<16x64xbf16, #tpu.memory_space<vmem>>, vector<16x64xbf16>
    %6 = arith.truncf %4 : vector<64x128xf32> to vector<64x128xbf16>
    %cst = arith.constant dense<0.000000e+00> : vector<16x128xf32>
    %7 = tpu.matmul %5, %6, %cst {dimension_numbers = #tpu.dot_dimension_numbers<[1], [0], [0], [1], [0, 0, 1, 1], [], []>} : vector<16x64xbf16>, vector<64x128xbf16>, vector<16x128xf32> -> vector<16x128xf32>
    %c0_7 = arith.constant 0 : index
    %c0_8 = arith.constant 0 : index
    %c0_9 = arith.constant 0 : index
    %8 = vector.load %arg6[%c0_7, %c0_8, %c0_9] : memref<1x16x128xf32, #tpu.memory_space<vmem>>, vector<1x16x128xf32>
    %9 = vector.shape_cast %8 : vector<1x16x128xf32> to vector<16x128xf32>
    %10 = vector.shape_cast %7 : vector<16x128xf32> to vector<1x16x128xf32>
    tpu.vector_store %arg6[%c0_7, %c0_8, %c0_9], %10 {strides = array<i32>} : memref<1x16x128xf32, #tpu.memory_space<vmem>>, vector<1x16x128xf32>,
    return
  }
  func.func @transform_0(%arg0: i32, %arg1: i32, %arg2: i32) -> (i32, i32, i32) {
    %c0_i32 = arith.constant 0 : i32
    return %arg0, %arg1, %arg2 : i32, i32, i32
  }
  func.func @transform_1(%arg0: i32, %arg1: i32, %arg2: i32) -> (i32, i32, i32) {
    %c0_i32 = arith.constant 0 : i32
    %c0_i32_0 = arith.constant 0 : i32
    return %arg0, %c0_i32, %arg2 : i32, i32, i32
  }
  func.func @transform_2(%arg0: i32, %arg1: i32, %arg2: i32) -> (i32, i32) {
    %c0_i32 = arith.constant 0 : i32
    %c0_i32_0 = arith.constant 0 : i32
    %c0_i32_1 = arith.constant 0 : i32
    return %c0_i32, %c0_i32_0 : i32, i32
  }
  func.func @transform_3(%arg0: i32, %arg1: i32, %arg2: i32) -> (i32, i32, i32) {
    %c0_i32 = arith.constant 0 : i32
    return %arg0, %arg1, %arg2 : i32, i32, i32
  }
}

</mosaic_0001>

<llo_original>
// kernel: convtasnet_separator_forward.17
$region0: #{convtasnet_separator_forward.17}
  #allocation0 [shape = 'u32[]', space=smem, size = 0x4, offset = 0x4, fixed_abs, tag = 'smem constant byte address 0x4 - core index']
  #allocation1 [shape = 'u32[72,128]{1,0:T(1,128)}', space=vmem, size = 0x9000, scoped, tag = 'internal scratch']
  #allocation2 [shape = 'f32[1,1]{1,0:T(1,128)S(1)}', space=vmem, size = 0x200, scoped, tag = 'scoped memory for convtasnet_separator_forward.17']
  %s0 = inlined_call_operand.vmem [shape: f32[2,64,128], index: 0, kind: input, shape index: {}]
  %s1 = inlined_call_operand.vmem [shape: bf16[32,64], index: 1, kind: input, shape index: {}]
  %s2 = inlined_call_operand.vmem [shape: f32[32,1], index: 2, kind: input, shape index: {}]
  %s3 = inlined_call_operand.vmem [shape: f32[2,64,1], index: 3, kind: input, shape index: {}]
  %s4 = inlined_call_operand.vmem [shape: f32[2,64,1], index: 4, kind: input, shape index: {}]
  %s5 = inlined_call_operand.<no memory space> [shape: f32[1,1], index: 5, kind: input, shape index: {}]
  %s6 = inlined_call_operand.vmem [shape: f32[2,32,128], index: 6, kind: output, shape index: {}]
  %s7 = sld [smem:[#allocation0]]
  $region57: #{convtasnet_separator_forward.17} parent=0
    _
  %s9 = ssub.s32 1, %s7
  %s10 = scalar_select 0, %s9, %s7
  %v11 = vstv %s5
  %12 = vst [vmem:[#allocation2] sm:$0x1] %v11
  loop: start=0, step=1, limit=4
  $region2: #{convtasnet_separator_forward.17} parent=0 // loop_pre_header
    _
  $region3: #{convtasnet_separator_forward.17} parent=0 // loop_header
    %s14 = sphi 0, %s18
    %p15 = scmp.ge.s32.totalorder %s14, 4
    %s21 = sphi 0, %s33
    %s22 = sphi 0, %s29
    %s23 = sphi 0, %s21
    %s24 = sphi 0, %s22
    %s25 = sphi 0, %s23
    %s26 = sphi 0, %s24
    %s38 = sphi 0, %s40
    %s41 = sphi 0, %s38
    %s42 = sphi 0, %s41
    %s58 = sphi 0, %s42
    %s62 = sphi 0, %s62
    %s64 = sphi 0, %s62
    %s65 = sphi 0, %s64
    %s79 = sphi 0, %s65
    %s83 = sphi 0, %s83
    %s85 = sphi 0, %s83
    %s86 = sphi 0, %s85
    %s100 = sphi 0, %s86
    %s106 = sphi 0, %s108
    %s109 = sphi 0, %s106
    %s110 = sphi 0, %s109
    %s126 = sphi 0, %s110
    %s132 = sphi 0, %s134
    %s135 = sphi 0, %s132
    %s136 = sphi 0, %s135
    %s152 = sphi 0, %s136
    %s156 = sphi 0, %s156
    %s158 = sphi 0, %s156
    %s159 = sphi 0, %s158
    %s173 = sphi 0, %s159
    %s181 = sphi 0, %s183
    %s184 = sphi 0, %s181
    %s185 = sphi 0, %s184
    %s201 = sphi 0, %s185
  $region4: #{convtasnet_separator_forward.17} parent=0 // loop_header_branch
    %17 = sbr.rel (%p15) target = $region8
  $region5: #{convtasnet_separator_forward.17} parent=0 // loop_body
    %s19 = ssub.s32 %s14, 1
    %s20 = ssub.s32 %s14, 2
    %s27 = sadd.s32 1, %s22
    %p28 = scmp.ge.s32.totalorder %s27, 1
    %s29 = scalar_select %p28, 0, %s27
    %s30 = sadd.s32 1, %s21
    %s31 = scalar_select %p28, %s30, %s21
    %p32 = scmp.ge.s32.totalorder %s31, 2
    %s33 = scalar_select %p32, 0, %s31
    %s34 = ssub.s32 %s21, %s33
    %s35 = ssub.s32 %s22, %s29
    %s36 = sor.u32 %s34, %s35
    %p37 = scmp.eq.s32.totalorder %s36, 0
    %s39 = sadd.s32 %s38, 1
    %s40 = scalar_select %p37, %s38, %s39
    %p43 = pneg %p37
    %p44 = scmp.eq.s32.totalorder %s14, 1
    %p45 = por %p43, %p44
    %p46 = scmp.ne.s32.totalorder %s38, %s41
    %p47 = scmp.eq.s32.totalorder %s14, 0
    %p48 = por %p46, %p47
    %p49 = scmp.ne.s32.totalorder %s38, %s41
    %p50 = scmp.eq.s32.totalorder %s19, 1
    %p51 = por %p49, %p50
    %p52 = scmp.ne.s32.totalorder %s41, %s42
    %p53 = scmp.eq.s32.totalorder %s19, 0
    %p54 = por %p52, %p53
    %p55 = scmp.ne.s32.totalorder %s41, %s42
    %p56 = scmp.eq.s32.totalorder %s20, 1
    %p57 = por %p55, %p56
    %p59 = scmp.ne.s32.totalorder %s42, %s58
    %p60 = scmp.eq.s32.totalorder %s20, 0
    %p61 = por %p59, %p60
    %s63 = sadd.s32 %s62, 1
    %p66 = scmp.eq.s32.totalorder %s14, 1
    %p67 = scmp.ne.s32.totalorder %s62, %s64
    %p68 = scmp.eq.s32.totalorder %s14, 0
    %p69 = por %p67, %p68
    %p70 = scmp.ne.s32.totalorder %s62, %s64
    %p71 = scmp.eq.s32.totalorder %s19, 1
    %p72 = por %p70, %p71
    %p73 = scmp.ne.s32.totalorder %s64, %s65
    %p74 = scmp.eq.s32.totalorder %s19, 0
    %p75 = por %p73, %p74
    %p76 = scmp.ne.s32.totalorder %s64, %s65
    %p77 = scmp.eq.s32.totalorder %s20, 1
    %p78 = por %p76, %p77
    %p80 = scmp.ne.s32.totalorder %s65, %s79
    %p81 = scmp.eq.s32.totalorder %s20, 0
    %p82 = por %p80, %p81
    %s84 = sadd.s32 %s83, 1
    %p87 = scmp.eq.s32.totalorder %s14, 1
    %p88 = scmp.ne.s32.totalorder %s83, %s85
    %p89 = scmp.eq.s32.totalorder %s14, 0
    %p90 = por %p88, %p89
    %p91 = scmp.ne.s32.totalorder %s83, %s85
    %p92 = scmp.eq.s32.totalorder %s19, 1
    %p93 = por %p91, %p92
    %p94 = scmp.ne.s32.totalorder %s85, %s86
    %p95 = scmp.eq.s32.totalorder %s19, 0
    %p96 = por %p94, %p95
    %p97 = scmp.ne.s32.totalorder %s85, %s86
    %p98 = scmp.eq.s32.totalorder %s20, 1
    %p99 = por %p97, %p98
    %p101 = scmp.ne.s32.totalorder %s86, %s100
    %p102 = scmp.eq.s32.totalorder %s20, 0
    %p103 = por %p101, %p102
    %s104 = ssub.s32 %s21, %s33
    %p105 = scmp.eq.s32.totalorder %s104, 0
    %s107 = sadd.s32 %s106, 1
    %s108 = scalar_select %p105, %s106, %s107
    %p111 = pneg %p105
    %p112 = scmp.eq.s32.totalorder %s14, 1
    %p113 = por %p111, %p112
    %p114 = scmp.ne.s32.totalorder %s106, %s109
    %p115 = scmp.eq.s32.totalorder %s14, 0
    %p116 = por %p114, %p115
    %p117 = scmp.ne.s32.totalorder %s106, %s109
    %p118 = scmp.eq.s32.totalorder %s19, 1
    %p119 = por %p117, %p118
    %p120 = scmp.ne.s32.totalorder %s109, %s110
    %p121 = scmp.eq.s32.totalorder %s19, 0
    %p122 = por %p120, %p121
    %p123 = scmp.ne.s32.totalorder %s109, %s110
    %p124 = scmp.eq.s32.totalorder %s20, 1
    %p125 = por %p123, %p124
    %p127 = scmp.ne.s32.totalorder %s110, %s126
    %p128 = scmp.eq.s32.totalorder %s20, 0
    %p129 = por %p127, %p128
    %s130 = ssub.s32 %s21, %s33
    %p131 = scmp.eq.s32.totalorder %s130, 0
    %s133 = sadd.s32 %s132, 1
    %s134 = scalar_select %p131, %s132, %s133
    %p137 = pneg %p131
    %p138 = scmp.eq.s32.totalorder %s14, 1
    %p139 = por %p137, %p138
    %p140 = scmp.ne.s32.totalorder %s132, %s135
    %p141 = scmp.eq.s32.totalorder %s14, 0
    %p142 = por %p140, %p141
    %p143 = scmp.ne.s32.totalorder %s132, %s135
    %p144 = scmp.eq.s32.totalorder %s19, 1
    %p145 = por %p143, %p144
    %p146 = scmp.ne.s32.totalorder %s135, %s136
    %p147 = scmp.eq.s32.totalorder %s19, 0
    %p148 = por %p146, %p147
    %p149 = scmp.ne.s32.totalorder %s135, %s136
    %p150 = scmp.eq.s32.totalorder %s20, 1
    %p151 = por %p149, %p150
    %p153 = scmp.ne.s32.totalorder %s136, %s152
    %p154 = scmp.eq.s32.totalorder %s20, 0
    %p155 = por %p153, %p154
    %s157 = sadd.s32 %s156, 1
    %p160 = scmp.eq.s32.totalorder %s14, 1
    %p161 = scmp.ne.s32.totalorder %s156, %s158
    %p162 = scmp.eq.s32.totalorder %s14, 0
    %p163 = por %p161, %p162
    %p164 = scmp.ne.s32.totalorder %s156, %s158
    %p165 = scmp.eq.s32.totalorder %s19, 1
    %p166 = por %p164, %p165
    %p167 = scmp.ne.s32.totalorder %s158, %s159
    %p168 = scmp.eq.s32.totalorder %s19, 0
    %p169 = por %p167, %p168
    %p170 = scmp.ne.s32.totalorder %s158, %s159
    %p171 = scmp.eq.s32.totalorder %s20, 1
    %p172 = por %p170, %p171
    %p174 = scmp.ne.s32.totalorder %s159, %s173
    %p175 = scmp.eq.s32.totalorder %s20, 0
    %p176 = por %p174, %p175
    %s177 = ssub.s32 %s21, %s33
    %s178 = ssub.s32 %s22, %s29
    %s179 = sor.u32 %s177, %s178
    %p180 = scmp.eq.s32.totalorder %s179, 0
    %s182 = sadd.s32 %s181, 1
    %s183 = scalar_select %p180, %s181, %s182
    %p186 = pneg %p180
    %p187 = scmp.eq.s32.totalorder %s14, 1
    %p188 = por %p186, %p187
    %p189 = scmp.ne.s32.totalorder %s181, %s184
    %p190 = scmp.eq.s32.totalorder %s14, 0
    %p191 = por %p189, %p190
    %p192 = scmp.ne.s32.totalorder %s181, %s184
    %p193 = scmp.eq.s32.totalorder %s19, 1
    %p194 = por %p192, %p193
    %p195 = scmp.ne.s32.totalorder %s184, %s185
    %p196 = scmp.eq.s32.totalorder %s19, 0
    %p197 = por %p195, %p196
    %p198 = scmp.ne.s32.totalorder %s184, %s185
    %p199 = scmp.eq.s32.totalorder %s20, 1
    %p200 = por %p198, %p199
    %p202 = scmp.ne.s32.totalorder %s185, %s201
    %p203 = scmp.eq.s32.totalorder %s20, 0
    %p204 = por %p202, %p203
    %p205 = scmp.le.s32.totalorder 1, %s14
    %p206 = scmp.lt.s32.totalorder %s14, 3
    %p207 = pnand %p205, %p206
    %p208 = pneg %p207
    // Predicated region
    $region9: #{convtasnet_separator_forward.17} parent=5 // pred_check
      _
    $region10: #{convtasnet_separator_forward.17} parent=5 // pred_check_branch
      %210 = sbr.rel (%p207) target = $region12
    $region11: #{convtasnet_separator_forward.17} parent=5 // pred_region
      %s211 = ssub.s32 %s14, 1
      // Predicated region
      $region13: #{convtasnet_separator_forward.17} parent=11 // pred_check
        %p212 = pneg %p75
      $region14: #{convtasnet_separator_forward.17} parent=11 // pred_check_branch
        %214 = sbr.rel (%p212) target = $region16
      $region15: #{convtasnet_separator_forward.17} parent=11 // pred_region
        _
      $region16: #{convtasnet_separator_forward.17} parent=11 // pred_fallthru
        _
      // Predicated region
      $region17: #{convtasnet_separator_forward.17} parent=11 // pred_check
        %p215 = pneg %p96
      $region18: #{convtasnet_separator_forward.17} parent=11 // pred_check_branch
        %217 = sbr.rel (%p215) target = $region20
      $region19: #{convtasnet_separator_forward.17} parent=11 // pred_region
        _
      $region20: #{convtasnet_separator_forward.17} parent=11 // pred_fallthru
        _
      // Predicated region
      $region21: #{convtasnet_separator_forward.17} parent=11 // pred_check
        %p218 = pneg %p169
      $region22: #{convtasnet_separator_forward.17} parent=11 // pred_check_branch
        %220 = sbr.rel (%p218) target = $region24
      $region23: #{convtasnet_separator_forward.17} parent=11 // pred_region
        _
      $region24: #{convtasnet_separator_forward.17} parent=11 // pred_fallthru
        _
    $region12: #{convtasnet_separator_forward.17} parent=5 // pred_fallthru
      _
    %p221 = scmp.lt.s32.totalorder %s14, 2
    // Predicated region
    $region25: #{convtasnet_separator_forward.17} parent=5 // pred_check
      %p222 = pneg %p221
    $region26: #{convtasnet_separator_forward.17} parent=5 // pred_check_branch
      %224 = sbr.rel (%p222) target = $region28
    $region27: #{convtasnet_separator_forward.17} parent=5 // pred_region
      // Predicated region
      $region29: #{convtasnet_separator_forward.17} parent=27 // pred_check
        %p225 = pneg %p48
      $region30: #{convtasnet_separator_forward.17} parent=27 // pred_check_branch
        %227 = sbr.rel (%p225) target = $region32
      $region31: #{convtasnet_separator_forward.17} parent=27 // pred_region
        %p228 = scmp.lt.s32.totalorder %s21, 1
        %s229 = scalar_select %p228, %s21, 1
        %p230 = scmp.lt.s32.totalorder %s22, 0
        %s231 = scalar_select %p230, %s22, 0
        %s232 = smul.addr %s229, 8
        %s233 = sadd.s32 %s231, %s232
        %s234 = smul.addr %s233, 8
        %s235 = scalar_lea.vmem %s0, %s234
      $region32: #{convtasnet_separator_forward.17} parent=27 // pred_fallthru
        _
      // Predicated region
      $region33: #{convtasnet_separator_forward.17} parent=27 // pred_check
        %p236 = pneg %p116
      $region34: #{convtasnet_separator_forward.17} parent=27 // pred_check_branch
        %238 = sbr.rel (%p236) target = $region36
      $region35: #{convtasnet_separator_forward.17} parent=27 // pred_region
        %p239 = scmp.lt.s32.totalorder %s21, 1
        %s240 = scalar_select %p239, %s21, 1
        %s241 = smul.addr %s240, 8
        %s242 = smul.addr %s241, 8
        %s243 = scalar_lea.vmem %s3, %s242
      $region36: #{convtasnet_separator_forward.17} parent=27 // pred_fallthru
        _
      // Predicated region
      $region37: #{convtasnet_separator_forward.17} parent=27 // pred_check
        %p244 = pneg %p142
      $region38: #{convtasnet_separator_forward.17} parent=27 // pred_check_branch
        %246 = sbr.rel (%p244) target = $region40
      $region39: #{convtasnet_separator_forward.17} parent=27 // pred_region
        %p247 = scmp.lt.s32.totalorder %s21, 1
        %s248 = scalar_select %p247, %s21, 1
        %s249 = smul.addr %s248, 8
        %s250 = smul.addr %s249, 8
        %s251 = scalar_lea.vmem %s4, %s250
      $region40: #{convtasnet_separator_forward.17} parent=27 // pred_fallthru
        _
    $region28: #{convtasnet_separator_forward.17} parent=5 // pred_fallthru
      _
    %p252 = scmp.le.s32.totalorder 1, %s14
    %p253 = scmp.lt.s32.totalorder %s14, 3
    %p254 = pnand %p252, %p253
    %p255 = pneg %p254
    // Predicated region
    $region41: #{convtasnet_separator_forward.17} parent=5 // pred_check
      _
    $region42: #{convtasnet_separator_forward.17} parent=5 // pred_check_branch
      %257 = sbr.rel (%p254) target = $region44
    $region43: #{convtasnet_separator_forward.17} parent=5 // pred_region
      %s258 = ssub.s32 %s14, 1
      %p259 = scmp.lt.s32.totalorder %s23, 1
      %s260 = scalar_select %p259, %s23, 1
      %p261 = scmp.lt.s32.totalorder %s24, 0
      %s262 = scalar_select %p261, %s24, 0
      %s263 = smul.addr %s260, 8
      %s264 = sadd.s32 %s262, %s263
      %s265 = smul.addr %s264, 8
      %s266 = scalar_lea.vmem %s0, %s265
      %p267 = pneg %p54
      %p268 = pneg %p51
      %p269 = pneg %p75
      %p270 = pneg %p72
      %p271 = pneg %p96
      %p272 = pneg %p93
      %p273 = scmp.lt.s32.totalorder %s23, 1
      %s274 = scalar_select %p273, %s23, 1
      %s275 = smul.addr %s274, 8
      %s276 = smul.addr %s275, 8
      %s277 = scalar_lea.vmem %s3, %s276
      %p278 = pneg %p122
      %p279 = pneg %p119
      %p280 = scmp.lt.s32.totalorder %s23, 1
      %s281 = scalar_select %p280, %s23, 1
      %s282 = smul.addr %s281, 8
      %s283 = smul.addr %s282, 8
      %s284 = scalar_lea.vmem %s4, %s283
      %p285 = pneg %p148
      %p286 = pneg %p145
      %p287 = pneg %p169
      %p288 = pneg %p166
      %p289 = pneg %p197
      %p290 = pneg %p194
      %p291 = scmp.lt.s32.totalorder %s23, 1
      %s292 = scalar_select %p291, %s23, 1
      %p293 = scmp.lt.s32.totalorder %s24, 0
      %s294 = scalar_select %p293, %s24, 0
      %s295 = smul.addr %s292, 4
      %s296 = sadd.s32 %s294, %s295
      %s297 = smul.addr %s296, 8
      %s298 = scalar_lea.vmem %s6, %s297
      %p299 = scmp.lt.s32.totalorder %s23, 1
      %s300 = scalar_select %p299, %s23, 1
      %p301 = scmp.lt.s32.totalorder %s24, 0
      %s302 = scalar_select %p301, %s24, 0
      %s303 = smul.addr %s300, 8
      %s304 = sadd.s32 %s302, %s303
      %s305 = smul.addr %s304, 8
      %s306 = scalar_lea.vmem %s0, %s305
      %p307 = scmp.lt.s32.totalorder %s23, 1
      %s308 = scalar_select %p307, %s23, 1
      %s309 = smul.addr %s308, 8
      %s310 = smul.addr %s309, 8
      %s311 = scalar_lea.vmem %s3, %s310
      %p312 = scmp.lt.s32.totalorder %s23, 1
      %s313 = scalar_select %p312, %s23, 1
      %s314 = smul.addr %s313, 8
      %s315 = smul.addr %s314, 8
      %s316 = scalar_lea.vmem %s4, %s315
      %p317 = scmp.lt.s32.totalorder %s23, 1
      %s318 = scalar_select %p317, %s23, 1
      %p319 = scmp.lt.s32.totalorder %s24, 0
      %s320 = scalar_select %p319, %s24, 0
      %s321 = smul.addr %s318, 4
      %s322 = sadd.s32 %s320, %s321
      %s323 = smul.addr %s322, 8
      %s324 = scalar_lea.vmem %s6, %s323
      %v326 = vld [vmem:[%s306] sm:$0xff]
      %v327 = vld [vmem:[%s306 + $0x8] sm:$0xff]
      %v328 = vld [vmem:[%s306 + $0x10] sm:$0xff]
      %v329 = vld [vmem:[%s306 + $0x18] sm:$0xff]
      %v330 = vld [vmem:[%s306 + $0x20] sm:$0xff]
      %v331 = vld [vmem:[%s306 + $0x28] sm:$0xff]
      %v332 = vld [vmem:[%s306 + $0x30] sm:$0xff]
      %v333 = vld [vmem:[%s306 + $0x38] sm:$0xff]
      %v334 = vld [vmem:[%s311] sm:$0xff]
      %v335 = vld [vmem:[%s311 + $0x8] sm:$0xff]
      %v336 = vld [vmem:[%s311 + $0x10] sm:$0xff]
      %v337 = vld [vmem:[%s311 + $0x18] sm:$0xff]
      %v338 = vld [vmem:[%s311 + $0x20] sm:$0xff]
      %v339 = vld [vmem:[%s311 + $0x28] sm:$0xff]
      %v340 = vld [vmem:[%s311 + $0x30] sm:$0xff]
      %v341 = vld [vmem:[%s311 + $0x38] sm:$0xff]
      %343 = vset.pattern.permute.xlu0 0
      %344 = vperm.xlu0 %343, %v334
      %v345 = vpop.permute.xlu0 %344
      %348 = vset.pattern.permute.xlu0 0
      %349 = vperm.xlu0 %348, %v335
      %v350 = vpop.permute.xlu0 %349
      %353 = vset.pattern.permute.xlu0 0
      %354 = vperm.xlu0 %353, %v336
      %v355 = vpop.permute.xlu0 %354
      %358 = vset.pattern.permute.xlu0 0
      %359 = vperm.xlu0 %358, %v337
      %v360 = vpop.permute.xlu0 %359
      %363 = vset.pattern.permute.xlu0 0
      %364 = vperm.xlu0 %363, %v338
      %v365 = vpop.permute.xlu0 %364
      %368 = vset.pattern.permute.xlu0 0
      %369 = vperm.xlu0 %368, %v339
      %v370 = vpop.permute.xlu0 %369
      %373 = vset.pattern.permute.xlu0 0
      %374 = vperm.xlu0 %373, %v340
      %v375 = vpop.permute.xlu0 %374
      %378 = vset.pattern.permute.xlu0 0
      %379 = vperm.xlu0 %378, %v341
      %v380 = vpop.permute.xlu0 %379
      %v382 = vmul.f32 %v326, %v345
      %v383 = vmul.f32 %v327, %v350
      %v384 = vmul.f32 %v328, %v355
      %v385 = vmul.f32 %v329, %v360
      %v386 = vmul.f32 %v330, %v365
      %v387 = vmul.f32 %v331, %v370
      %v388 = vmul.f32 %v332, %v375
      %v389 = vmul.f32 %v333, %v380
      %v390 = vld [vmem:[%s316] sm:$0xff]
      %v391 = vld [vmem:[%s316 + $0x8] sm:$0xff]
      %v392 = vld [vmem:[%s316 + $0x10] sm:$0xff]
      %v393 = vld [vmem:[%s316 + $0x18] sm:$0xff]
      %v394 = vld [vmem:[%s316 + $0x20] sm:$0xff]
      %v395 = vld [vmem:[%s316 + $0x28] sm:$0xff]
      %v396 = vld [vmem:[%s316 + $0x30] sm:$0xff]
      %v397 = vld [vmem:[%s316 + $0x38] sm:$0xff]
      %399 = vset.pattern.permute.xlu0 0
      %400 = vperm.xlu0 %399, %v390
      %v401 = vpop.permute.xlu0 %400
      %404 = vset.pattern.permute.xlu0 0
      %405 = vperm.xlu0 %404, %v391
      %v406 = vpop.permute.xlu0 %405
      %409 = vset.pattern.permute.xlu0 0
      %410 = vperm.xlu0 %409, %v392
      %v411 = vpop.permute.xlu0 %410
      %414 = vset.pattern.permute.xlu0 0
      %415 = vperm.xlu0 %414, %v393
      %v416 = vpop.permute.xlu0 %415
      %419 = vset.pattern.permute.xlu0 0
      %420 = vperm.xlu0 %419, %v394
      %v421 = vpop.permute.xlu0 %420
      %424 = vset.pattern.permute.xlu0 0
      %425 = vperm.xlu0 %424, %v395
      %v426 = vpop.permute.xlu0 %425
      %429 = vset.pattern.permute.xlu0 0
      %430 = vperm.xlu0 %429, %v396
      %v431 = vpop.permute.xlu0 %430
      %434 = vset.pattern.permute.xlu0 0
      %435 = vperm.xlu0 %434, %v397
      %v436 = vpop.permute.xlu0 %435
      %v438 = vadd.f32 %v382, %v401
      %v439 = vadd.f32 %v383, %v406
      %v440 = vadd.f32 %v384, %v411
      %v441 = vadd.f32 %v385, %v416
      %v442 = vadd.f32 %v386, %v421
      %v443 = vadd.f32 %v387, %v426
      %v444 = vadd.f32 %v388, %v431
      %v445 = vadd.f32 %v389, %v436
      %v446 = vld [vmem:[%s1] sm:$0xf]
      %v447 = vld [vmem:[%s1 + $0x4] sm:$0xf]
      %v448 = vld [vmem:[%s1 + $0x8] sm:$0xf]
      %v449 = vld [vmem:[%s1 + $0xc] sm:$0xf]
      %v450 = vpack.c.bf16 %v439, %v438
      %v451 = vpack.c.bf16 %v441, %v440
      %v452 = vpack.c.bf16 %v443, %v442
      %v453 = vpack.c.bf16 %v445, %v444
      %v454 = vld [vmem:[%s2] sm:$0xff]
      %v455 = vld [vmem:[%s2 + $0x8] sm:$0xff]
      %v456 = vld [vmem:[%s2 + $0x10] sm:$0xff]
      %v457 = vld [vmem:[%s2 + $0x18] sm:$0xff]
      %459 = vset.pattern.permute.xlu0 0
      %460 = vperm.xlu0 %459, %v454
      %v461 = vpop.permute.xlu0 %460
      %464 = vset.pattern.permute.xlu0 0
      %465 = vperm.xlu0 %464, %v455
      %v466 = vpop.permute.xlu0 %465
      %469 = vset.pattern.permute.xlu0 0
      %470 = vperm.xlu0 %469, %v456
      %v471 = vpop.permute.xlu0 %470
      %474 = vset.pattern.permute.xlu0 0
      %475 = vperm.xlu0 %474, %v457
      %v476 = vpop.permute.xlu0 %475
      %v482 = vunpack.c.l.b16 %v446
      %v483 = vunpack.c.l.b16 %v447
      %v484 = vunpack.c.l.b16 %v448
      %v485 = vunpack.c.l.b16 %v449
      %v486 = vpack.c.b16 %v483, %v482
      %v487 = vpack.c.b16 %v485, %v484
      %vm488 = vcmask 523264
      %v490 = vsel %vm488, %v486, 0
      %v493 = vsel %vm488, %v487, 0
      %495 = vmatpush.bf16.msra.mxu0 0
      %496 = vmatpush.bf16.msra.mxu0 0
      %497 = vmatpush.bf16.msra.mxu0 0
      %498 = vmatpush.bf16.msra.mxu0 0
      %499 = vmatpush.bf16.msra.mxu0 %v453
      %500 = vmatpush.bf16.msra.mxu0 %v452
      %501 = vmatpush.bf16.msra.mxu0 %v451
      %502 = vmatpush.bf16.msra.mxu0 %v450
      %503 = vmatmul.bf16.gmra.mxu0 %v490
      %v504 = vpop.f32.mrf.mxu0
      %v505 = vadd.f32 %v461, %v504
      %v506 = vpop.f32.mrf.mxu0
      %v507 = vadd.f32 %v466, %v506
      %508 = vmatmul.bf16.gmra.mxu0 %v493
      %v509 = vpop.f32.mrf.mxu0
      %v510 = vadd.f32 %v471, %v509
      %v511 = vpop.f32.mrf.mxu0
      %v512 = vadd.f32 %v476, %v511
      %513 = vdwg.mxu0
      %s514 = smul.u32 %s24, 128
      %v515 = vlaneseq
      %v516 = vand.u32 %v515, 127
      %v517 = vstv %s514
      %v518 = vadd.s32 %v517, %v516
      %vm519 = vcmp.lt.s32.totalorder %v518, 21
      %v520 = vsel %vm519, %v505, 0.0
      %v521 = vsel %vm519, %v507, 0.0
      %v522 = vsel %vm519, %v510, 0.0
      %v523 = vsel %vm519, %v512, 0.0
      %524 = vst [vmem:[%s324] sm:$0xff] %v520
      %525 = vst [vmem:[%s324 + $0x8] sm:$0xff] %v521
      %526 = vst [vmem:[%s324 + $0x10] sm:$0xff] %v522
      %527 = vst [vmem:[%s324 + $0x18] sm:$0xff] %v523
      %p528 = scmp.lt.s32.totalorder %s23, 1
      %s529 = scalar_select %p528, %s23, 1
      %p530 = scmp.lt.s32.totalorder %s24, 0
      %s531 = scalar_select %p530, %s24, 0
      %s532 = smul.addr %s529, 4
      %s533 = sadd.s32 %s531, %s532
      %s534 = smul.addr %s533, 8
      %s535 = scalar_lea.vmem %s6, %s534
      // Predicated region
      $region45: #{convtasnet_separator_forward.17} parent=43 // pred_check
        %p536 = pneg %p194
      $region46: #{convtasnet_separator_forward.17} parent=43 // pred_check_branch
        %538 = sbr.rel (%p536) target = $region48
      $region47: #{convtasnet_separator_forward.17} parent=43 // pred_region
        _
      $region48: #{convtasnet_separator_forward.17} parent=43 // pred_fallthru
        _
    $region44: #{convtasnet_separator_forward.17} parent=5 // pred_fallthru
      _
    %p539 = scmp.le.s32.totalorder 2, %s14
    // Predicated region
    $region49: #{convtasnet_separator_forward.17} parent=5 // pred_check
      %p540 = pneg %p539
    $region50: #{convtasnet_separator_forward.17} parent=5 // pred_check_branch
      %542 = sbr.rel (%p540) target = $region52
    $region51: #{convtasnet_separator_forward.17} parent=5 // pred_region
      %s543 = ssub.s32 %s14, 2
      // Predicated region
      $region53: #{convtasnet_separator_forward.17} parent=51 // pred_check
        %p544 = pneg %p200
      $region54: #{convtasnet_separator_forward.17} parent=51 // pred_check_branch
        %546 = sbr.rel (%p544) target = $region56
      $region55: #{convtasnet_separator_forward.17} parent=51 // pred_region
        %p547 = scmp.lt.s32.totalorder %s25, 1
        %s548 = scalar_select %p547, %s25, 1
        %p549 = scmp.lt.s32.totalorder %s26, 0
        %s550 = scalar_select %p549, %s26, 0
        %s551 = smul.addr %s548, 4
        %s552 = sadd.s32 %s550, %s551
        %s553 = smul.addr %s552, 8
        %s554 = scalar_lea.vmem %s6, %s553
      $region56: #{convtasnet_separator_forward.17} parent=51 // pred_fallthru
        _
    $region52: #{convtasnet_separator_forward.17} parent=5 // pred_fallthru
      _
  $region6: #{convtasnet_separator_forward.17} parent=0 // loop_footer
    %s18 = sadd.s32 1, %s14
  $region7: #{convtasnet_separator_forward.17} parent=0 // loop_footer_branch
    %13 = sbr.rel target = $region3
  $region8: #{convtasnet_separator_forward.17} parent=0 // loop_exit
    _

// kernel: convtasnet_separator_forward.16
$region0: #{convtasnet_separator_forward.16}
  #allocation0 [shape = 'u32[]', space=smem, size = 0x4, offset = 0x4, fixed_abs, tag = 'smem constant byte address 0x4 - core index']
  #allocation1 [shape = 'u32[72,128]{1,0:T(1,128)}', space=vmem, size = 0x9000, scoped, tag = 'internal scratch']
  #allocation2 [shape = 'f32[1,1]{1,0:T(1,128)S(1)}', space=vmem, size = 0x200, scoped, tag = 'scoped memory for convtasnet_separator_forward.16']
  %s0 = inlined_call_operand.vmem [shape: f32[2,16,128], index: 0, kind: input, shape index: {}]
  %s1 = inlined_call_operand.vmem [shape: bf16[64,16], index: 1, kind: input, shape index: {}]
  %s2 = inlined_call_operand.vmem [shape: f32[64,1], index: 2, kind: input, shape index: {}]
  %s3 = inlined_call_operand.vmem [shape: f32[2,16,1], index: 3, kind: input, shape index: {}]
  %s4 = inlined_call_operand.vmem [shape: f32[2,16,1], index: 4, kind: input, shape index: {}]
  %s5 = inlined_call_operand.<no memory space> [shape: f32[1,1], index: 5, kind: input, shape index: {}]
  %s6 = inlined_call_operand.vmem [shape: f32[2,64,128], index: 6, kind: output, shape index: {0}]
  %s7 = inlined_call_operand.vmem [shape: f32[2,2,128], index: 7, kind: output, shape index: {1}]
  %8 = xla_tuple %s6, %s7
  %s9 = sld [smem:[#allocation0]]
  $region73: #{convtasnet_separator_forward.16} parent=0
    _
  %s11 = ssub.s32 1, %s9
  %s12 = scalar_select 0, %s11, %s9
  %v13 = vstv %s5
  %14 = vst [vmem:[#allocation2] sm:$0x1] %v13
  loop: start=0, step=1, limit=4
  $region2: #{convtasnet_separator_forward.16} parent=0 // loop_pre_header
    _
  $region3: #{convtasnet_separator_forward.16} parent=0 // loop_header
    %s16 = sphi 0, %s20
    %p17 = scmp.ge.s32.totalorder %s16, 4
    %s23 = sphi 0, %s35
    %s24 = sphi 0, %s31
    %s25 = sphi 0, %s23
    %s26 = sphi 0, %s24
    %s27 = sphi 0, %s25
    %s28 = sphi 0, %s26
    %s40 = sphi 0, %s42
    %s43 = sphi 0, %s40
    %s44 = sphi 0, %s43
    %s60 = sphi 0, %s44
    %s64 = sphi 0, %s64
    %s66 = sphi 0, %s64
    %s67 = sphi 0, %s66
    %s81 = sphi 0, %s67
    %s85 = sphi 0, %s85
    %s87 = sphi 0, %s85
    %s88 = sphi 0, %s87
    %s102 = sphi 0, %s88
    %s108 = sphi 0, %s110
    %s111 = sphi 0, %s108
    %s112 = sphi 0, %s111
    %s128 = sphi 0, %s112
    %s134 = sphi 0, %s136
    %s137 = sphi 0, %s134
    %s138 = sphi 0, %s137
    %s154 = sphi 0, %s138
    %s158 = sphi 0, %s158
    %s160 = sphi 0, %s158
    %s161 = sphi 0, %s160
    %s175 = sphi 0, %s161
    %s183 = sphi 0, %s185
    %s186 = sphi 0, %s183
    %s187 = sphi 0, %s186
    %s203 = sphi 0, %s187
    %s209 = sphi 0, %s211
    %s212 = sphi 0, %s209
    %s213 = sphi 0, %s212
    %s229 = sphi 0, %s213
  $region4: #{convtasnet_separator_forward.16} parent=0 // loop_header_branch
    %19 = sbr.rel (%p17) target = $region8
  $region5: #{convtasnet_separator_forward.16} parent=0 // loop_body
    %s21 = ssub.s32 %s16, 1
    %s22 = ssub.s32 %s16, 2
    %s29 = sadd.s32 1, %s24
    %p30 = scmp.ge.s32.totalorder %s29, 1
    %s31 = scalar_select %p30, 0, %s29
    %s32 = sadd.s32 1, %s23
    %s33 = scalar_select %p30, %s32, %s23
    %p34 = scmp.ge.s32.totalorder %s33, 2
    %s35 = scalar_select %p34, 0, %s33
    %s36 = ssub.s32 %s23, %s35
    %s37 = ssub.s32 %s24, %s31
    %s38 = sor.u32 %s36, %s37
    %p39 = scmp.eq.s32.totalorder %s38, 0
    %s41 = sadd.s32 %s40, 1
    %s42 = scalar_select %p39, %s40, %s41
    %p45 = pneg %p39
    %p46 = scmp.eq.s32.totalorder %s16, 1
    %p47 = por %p45, %p46
    %p48 = scmp.ne.s32.totalorder %s40, %s43
    %p49 = scmp.eq.s32.totalorder %s16, 0
    %p50 = por %p48, %p49
    %p51 = scmp.ne.s32.totalorder %s40, %s43
    %p52 = scmp.eq.s32.totalorder %s21, 1
    %p53 = por %p51, %p52
    %p54 = scmp.ne.s32.totalorder %s43, %s44
    %p55 = scmp.eq.s32.totalorder %s21, 0
    %p56 = por %p54, %p55
    %p57 = scmp.ne.s32.totalorder %s43, %s44
    %p58 = scmp.eq.s32.totalorder %s22, 1
    %p59 = por %p57, %p58
    %p61 = scmp.ne.s32.totalorder %s44, %s60
    %p62 = scmp.eq.s32.totalorder %s22, 0
    %p63 = por %p61, %p62
    %s65 = sadd.s32 %s64, 1
    %p68 = scmp.eq.s32.totalorder %s16, 1
    %p69 = scmp.ne.s32.totalorder %s64, %s66
    %p70 = scmp.eq.s32.totalorder %s16, 0
    %p71 = por %p69, %p70
    %p72 = scmp.ne.s32.totalorder %s64, %s66
    %p73 = scmp.eq.s32.totalorder %s21, 1
    %p74 = por %p72, %p73
    %p75 = scmp.ne.s32.totalorder %s66, %s67
    %p76 = scmp.eq.s32.totalorder %s21, 0
    %p77 = por %p75, %p76
    %p78 = scmp.ne.s32.totalorder %s66, %s67
    %p79 = scmp.eq.s32.totalorder %s22, 1
    %p80 = por %p78, %p79
    %p82 = scmp.ne.s32.totalorder %s67, %s81
    %p83 = scmp.eq.s32.totalorder %s22, 0
    %p84 = por %p82, %p83
    %s86 = sadd.s32 %s85, 1
    %p89 = scmp.eq.s32.totalorder %s16, 1
    %p90 = scmp.ne.s32.totalorder %s85, %s87
    %p91 = scmp.eq.s32.totalorder %s16, 0
    %p92 = por %p90, %p91
    %p93 = scmp.ne.s32.totalorder %s85, %s87
    %p94 = scmp.eq.s32.totalorder %s21, 1
    %p95 = por %p93, %p94
    %p96 = scmp.ne.s32.totalorder %s87, %s88
    %p97 = scmp.eq.s32.totalorder %s21, 0
    %p98 = por %p96, %p97
    %p99 = scmp.ne.s32.totalorder %s87, %s88
    %p100 = scmp.eq.s32.totalorder %s22, 1
    %p101 = por %p99, %p100
    %p103 = scmp.ne.s32.totalorder %s88, %s102
    %p104 = scmp.eq.s32.totalorder %s22, 0
    %p105 = por %p103, %p104
    %s106 = ssub.s32 %s23, %s35
    %p107 = scmp.eq.s32.totalorder %s106, 0
    %s109 = sadd.s32 %s108, 1
    %s110 = scalar_select %p107, %s108, %s109
    %p113 = pneg %p107
    %p114 = scmp.eq.s32.totalorder %s16, 1
    %p115 = por %p113, %p114
    %p116 = scmp.ne.s32.totalorder %s108, %s111
    %p117 = scmp.eq.s32.totalorder %s16, 0
    %p118 = por %p116, %p117
    %p119 = scmp.ne.s32.totalorder %s108, %s111
    %p120 = scmp.eq.s32.totalorder %s21, 1
    %p121 = por %p119, %p120
    %p122 = scmp.ne.s32.totalorder %s111, %s112
    %p123 = scmp.eq.s32.totalorder %s21, 0
    %p124 = por %p122, %p123
    %p125 = scmp.ne.s32.totalorder %s111, %s112
    %p126 = scmp.eq.s32.totalorder %s22, 1
    %p127 = por %p125, %p126
    %p129 = scmp.ne.s32.totalorder %s112, %s128
    %p130 = scmp.eq.s32.totalorder %s22, 0
    %p131 = por %p129, %p130
    %s132 = ssub.s32 %s23, %s35
    %p133 = scmp.eq.s32.totalorder %s132, 0
    %s135 = sadd.s32 %s134, 1
    %s136 = scalar_select %p133, %s134, %s135
    %p139 = pneg %p133
    %p140 = scmp.eq.s32.totalorder %s16, 1
    %p141 = por %p139, %p140
    %p142 = scmp.ne.s32.totalorder %s134, %s137
    %p143 = scmp.eq.s32.totalorder %s16, 0
    %p144 = por %p142, %p143
    %p145 = scmp.ne.s32.totalorder %s134, %s137
    %p146 = scmp.eq.s32.totalorder %s21, 1
    %p147 = por %p145, %p146
    %p148 = scmp.ne.s32.totalorder %s137, %s138
    %p149 = scmp.eq.s32.totalorder %s21, 0
    %p150 = por %p148, %p149
    %p151 = scmp.ne.s32.totalorder %s137, %s138
    %p152 = scmp.eq.s32.totalorder %s22, 1
    %p153 = por %p151, %p152
    %p155 = scmp.ne.s32.totalorder %s138, %s154
    %p156 = scmp.eq.s32.totalorder %s22, 0
    %p157 = por %p155, %p156
    %s159 = sadd.s32 %s158, 1
    %p162 = scmp.eq.s32.totalorder %s16, 1
    %p163 = scmp.ne.s32.totalorder %s158, %s160
    %p164 = scmp.eq.s32.totalorder %s16, 0
    %p165 = por %p163, %p164
    %p166 = scmp.ne.s32.totalorder %s158, %s160
    %p167 = scmp.eq.s32.totalorder %s21, 1
    %p168 = por %p166, %p167
    %p169 = scmp.ne.s32.totalorder %s160, %s161
    %p170 = scmp.eq.s32.totalorder %s21, 0
    %p171 = por %p169, %p170
    %p172 = scmp.ne.s32.totalorder %s160, %s161
    %p173 = scmp.eq.s32.totalorder %s22, 1
    %p174 = por %p172, %p173
    %p176 = scmp.ne.s32.totalorder %s161, %s175
    %p177 = scmp.eq.s32.totalorder %s22, 0
    %p178 = por %p176, %p177
    %s179 = ssub.s32 %s23, %s35
    %s180 = ssub.s32 %s24, %s31
    %s181 = sor.u32 %s179, %s180
    %p182 = scmp.eq.s32.totalorder %s181, 0
    %s184 = sadd.s32 %s183, 1
    %s185 = scalar_select %p182, %s183, %s184
    %p188 = pneg %p182
    %p189 = scmp.eq.s32.totalorder %s16, 1
    %p190 = por %p188, %p189
    %p191 = scmp.ne.s32.totalorder %s183, %s186
    %p192 = scmp.eq.s32.totalorder %s16, 0
    %p193 = por %p191, %p192
    %p194 = scmp.ne.s32.totalorder %s183, %s186
    %p195 = scmp.eq.s32.totalorder %s21, 1
    %p196 = por %p194, %p195
    %p197 = scmp.ne.s32.totalorder %s186, %s187
    %p198 = scmp.eq.s32.totalorder %s21, 0
    %p199 = por %p197, %p198
    %p200 = scmp.ne.s32.totalorder %s186, %s187
    %p201 = scmp.eq.s32.totalorder %s22, 1
    %p202 = por %p200, %p201
    %p204 = scmp.ne.s32.totalorder %s187, %s203
    %p205 = scmp.eq.s32.totalorder %s22, 0
    %p206 = por %p204, %p205
    %s207 = ssub.s32 %s23, %s35
    %p208 = scmp.eq.s32.totalorder %s207, 0
    %s210 = sadd.s32 %s209, 1
    %s211 = scalar_select %p208, %s209, %s210
    %p214 = pneg %p208
    %p215 = scmp.eq.s32.totalorder %s16, 1
    %p216 = por %p214, %p215
    %p217 = scmp.ne.s32.totalorder %s209, %s212
    %p218 = scmp.eq.s32.totalorder %s16, 0
    %p219 = por %p217, %p218
    %p220 = scmp.ne.s32.totalorder %s209, %s212
    %p221 = scmp.eq.s32.totalorder %s21, 1
    %p222 = por %p220, %p221
    %p223 = scmp.ne.s32.totalorder %s212, %s213
    %p224 = scmp.eq.s32.totalorder %s21, 0
    %p225 = por %p223, %p224
    %p226 = scmp.ne.s32.totalorder %s212, %s213
    %p227 = scmp.eq.s32.totalorder %s22, 1
    %p228 = por %p226, %p227
    %p230 = scmp.ne.s32.totalorder %s213, %s229
    %p231 = scmp.eq.s32.totalorder %s22, 0
    %p232 = por %p230, %p231
    %p233 = scmp.le.s32.totalorder 1, %s16
    %p234 = scmp.lt.s32.totalorder %s16, 3
    %p235 = pnand %p233, %p234
    %p236 = pneg %p235
    // Predicated region
    $region9: #{convtasnet_separator_forward.16} parent=5 // pred_check
      _
    $region10: #{convtasnet_separator_forward.16} parent=5 // pred_check_branch
      %238 = sbr.rel (%p235) target = $region12
    $region11: #{convtasnet_separator_forward.16} parent=5 // pred_region
      %s239 = ssub.s32 %s16, 1
      // Predicated region
      $region13: #{convtasnet_separator_forward.16} parent=11 // pred_check
        %p240 = pneg %p77
      $region14: #{convtasnet_separator_forward.16} parent=11 // pred_check_branch
        %242 = sbr.rel (%p240) target = $region16
      $region15: #{convtasnet_separator_forward.16} parent=11 // pred_region
        _
      $region16: #{convtasnet_separator_forward.16} parent=11 // pred_fallthru
        _
      // Predicated region
      $region17: #{convtasnet_separator_forward.16} parent=11 // pred_check
        %p243 = pneg %p98
      $region18: #{convtasnet_separator_forward.16} parent=11 // pred_check_branch
        %245 = sbr.rel (%p243) target = $region20
      $region19: #{convtasnet_separator_forward.16} parent=11 // pred_region
        _
      $region20: #{convtasnet_separator_forward.16} parent=11 // pred_fallthru
        _
      // Predicated region
      $region21: #{convtasnet_separator_forward.16} parent=11 // pred_check
        %p246 = pneg %p171
      $region22: #{convtasnet_separator_forward.16} parent=11 // pred_check_branch
        %248 = sbr.rel (%p246) target = $region24
      $region23: #{convtasnet_separator_forward.16} parent=11 // pred_region
        _
      $region24: #{convtasnet_separator_forward.16} parent=11 // pred_fallthru
        _
    $region12: #{convtasnet_separator_forward.16} parent=5 // pred_fallthru
      _
    %p249 = scmp.lt.s32.totalorder %s16, 2
    // Predicated region
    $region25: #{convtasnet_separator_forward.16} parent=5 // pred_check
      %p250 = pneg %p249
    $region26: #{convtasnet_separator_forward.16} parent=5 // pred_check_branch
      %252 = sbr.rel (%p250) target = $region28
    $region27: #{convtasnet_separator_forward.16} parent=5 // pred_region
      // Predicated region
      $region29: #{convtasnet_separator_forward.16} parent=27 // pred_check
        %p253 = pneg %p50
      $region30: #{convtasnet_separator_forward.16} parent=27 // pred_check_branch
        %255 = sbr.rel (%p253) target = $region32
      $region31: #{convtasnet_separator_forward.16} parent=27 // pred_region
        %p256 = scmp.lt.s32.totalorder %s23, 1
        %s257 = scalar_select %p256, %s23, 1
        %p258 = scmp.lt.s32.totalorder %s24, 0
        %s259 = scalar_select %p258, %s24, 0
        %s260 = smul.addr %s257, 2
        %s261 = sadd.s32 %s259, %s260
        %s262 = smul.addr %s261, 8
        %s263 = scalar_lea.vmem %s0, %s262
      $region32: #{convtasnet_separator_forward.16} parent=27 // pred_fallthru
        _
      // Predicated region
      $region33: #{convtasnet_separator_forward.16} parent=27 // pred_check
        %p264 = pneg %p118
      $region34: #{convtasnet_separator_forward.16} parent=27 // pred_check_branch
        %266 = sbr.rel (%p264) target = $region36
      $region35: #{convtasnet_separator_forward.16} parent=27 // pred_region
        %p267 = scmp.lt.s32.totalorder %s23, 1
        %s268 = scalar_select %p267, %s23, 1
        %s269 = smul.addr %s268, 2
        %s270 = smul.addr %s269, 8
        %s271 = scalar_lea.vmem %s3, %s270
      $region36: #{convtasnet_separator_forward.16} parent=27 // pred_fallthru
        _
      // Predicated region
      $region37: #{convtasnet_separator_forward.16} parent=27 // pred_check
        %p272 = pneg %p144
      $region38: #{convtasnet_separator_forward.16} parent=27 // pred_check_branch
        %274 = sbr.rel (%p272) target = $region40
      $region39: #{convtasnet_separator_forward.16} parent=27 // pred_region
        %p275 = scmp.lt.s32.totalorder %s23, 1
        %s276 = scalar_select %p275, %s23, 1
        %s277 = smul.addr %s276, 2
        %s278 = smul.addr %s277, 8
        %s279 = scalar_lea.vmem %s4, %s278
      $region40: #{convtasnet_separator_forward.16} parent=27 // pred_fallthru
        _
    $region28: #{convtasnet_separator_forward.16} parent=5 // pred_fallthru
      _
    %p280 = scmp.le.s32.totalorder 1, %s16
    %p281 = scmp.lt.s32.totalorder %s16, 3
    %p282 = pnand %p280, %p281
    %p283 = pneg %p282
    // Predicated region
    $region41: #{convtasnet_separator_forward.16} parent=5 // pred_check
      _
    $region42: #{convtasnet_separator_forward.16} parent=5 // pred_check_branch
      %285 = sbr.rel (%p282) target = $region44
    $region43: #{convtasnet_separator_forward.16} parent=5 // pred_region
      %s286 = ssub.s32 %s16, 1
      %p287 = scmp.lt.s32.totalorder %s25, 1
      %s288 = scalar_select %p287, %s25, 1
      %p289 = scmp.lt.s32.totalorder %s26, 0
      %s290 = scalar_select %p289, %s26, 0
      %s291 = smul.addr %s288, 2
      %s292 = sadd.s32 %s290, %s291
      %s293 = smul.addr %s292, 8
      %s294 = scalar_lea.vmem %s0, %s293
      %p295 = pneg %p56
      %p296 = pneg %p53
      %p297 = pneg %p77
      %p298 = pneg %p74
      %p299 = pneg %p98
      %p300 = pneg %p95
      %p301 = scmp.lt.s32.totalorder %s25, 1
      %s302 = scalar_select %p301, %s25, 1
      %s303 = smul.addr %s302, 2
      %s304 = smul.addr %s303, 8
      %s305 = scalar_lea.vmem %s3, %s304
      %p306 = pneg %p124
      %p307 = pneg %p121
      %p308 = scmp.lt.s32.totalorder %s25, 1
      %s309 = scalar_select %p308, %s25, 1
      %s310 = smul.addr %s309, 2
      %s311 = smul.addr %s310, 8
      %s312 = scalar_lea.vmem %s4, %s311
      %p313 = pneg %p150
      %p314 = pneg %p147
      %p315 = pneg %p171
      %p316 = pneg %p168
      %p317 = pneg %p199
      %p318 = pneg %p196
      %p319 = scmp.lt.s32.totalorder %s25, 1
      %s320 = scalar_select %p319, %s25, 1
      %p321 = scmp.lt.s32.totalorder %s26, 0
      %s322 = scalar_select %p321, %s26, 0
      %s323 = smul.addr %s320, 8
      %s324 = sadd.s32 %s322, %s323
      %s325 = smul.addr %s324, 8
      %s326 = scalar_lea.vmem %s6, %s325
      %p327 = pneg %p225
      %p328 = pneg %p222
      %p329 = scmp.lt.s32.totalorder %s25, 1
      %s330 = scalar_select %p329, %s25, 1
      %s331 = smul.addr %s330, 2
      %s332 = scalar_lea.vmem %s7, %s331
      %p333 = scmp.lt.s32.totalorder %s25, 1
      %s334 = scalar_select %p333, %s25, 1
      %p335 = scmp.lt.s32.totalorder %s26, 0
      %s336 = scalar_select %p335, %s26, 0
      %s337 = smul.addr %s334, 2
      %s338 = sadd.s32 %s336, %s337
      %s339 = smul.addr %s338, 8
      %s340 = scalar_lea.vmem %s0, %s339
      %p341 = scmp.lt.s32.totalorder %s25, 1
      %s342 = scalar_select %p341, %s25, 1
      %s343 = smul.addr %s342, 2
      %s344 = smul.addr %s343, 8
      %s345 = scalar_lea.vmem %s3, %s344
      %p346 = scmp.lt.s32.totalorder %s25, 1
      %s347 = scalar_select %p346, %s25, 1
      %s348 = smul.addr %s347, 2
      %s349 = smul.addr %s348, 8
      %s350 = scalar_lea.vmem %s4, %s349
      %p351 = scmp.lt.s32.totalorder %s25, 1
      %s352 = scalar_select %p351, %s25, 1
      %p353 = scmp.lt.s32.totalorder %s26, 0
      %s354 = scalar_select %p353, %s26, 0
      %s355 = smul.addr %s352, 8
      %s356 = sadd.s32 %s354, %s355
      %s357 = smul.addr %s356, 8
      %s358 = scalar_lea.vmem %s6, %s357
      %p359 = scmp.lt.s32.totalorder %s25, 1
      %s360 = scalar_select %p359, %s25, 1
      %s361 = smul.addr %s360, 2
      %s362 = scalar_lea.vmem %s7, %s361
      %v364 = vld [vmem:[%s340] sm:$0xff]
      %v365 = vld [vmem:[%s340 + $0x8] sm:$0xff]
      %v366 = vld [vmem:[%s1] sm:$0xf]
      %v367 = vld [vmem:[%s1 + $0x4] sm:$0xf]
      %v368 = vld [vmem:[%s1 + $0x8] sm:$0xf]
      %v369 = vld [vmem:[%s1 + $0xc] sm:$0xf]
      %v370 = vld [vmem:[%s1 + $0x10] sm:$0xf]
      %v371 = vld [vmem:[%s1 + $0x14] sm:$0xf]
      %v372 = vld [vmem:[%s1 + $0x18] sm:$0xf]
      %v373 = vld [vmem:[%s1 + $0x1c] sm:$0xf]
      %v374 = vpack.c.bf16 %v365, %v364
      %v375 = vld [vmem:[%s2] sm:$0xff]
      %v376 = vld [vmem:[%s2 + $0x8] sm:$0xff]
      %v377 = vld [vmem:[%s2 + $0x10] sm:$0xff]
      %v378 = vld [vmem:[%s2 + $0x18] sm:$0xff]
      %v379 = vld [vmem:[%s2 + $0x20] sm:$0xff]
      %v380 = vld [vmem:[%s2 + $0x28] sm:$0xff]
      %v381 = vld [vmem:[%s2 + $0x30] sm:$0xff]
      %v382 = vld [vmem:[%s2 + $0x38] sm:$0xff]
      %384 = vset.pattern.permute.xlu0 0
      %385 = vperm.xlu0 %384, %v375
      %v386 = vpop.permute.xlu0 %385
      %389 = vset.pattern.permute.xlu0 0
      %390 = vperm.xlu0 %389, %v376
      %v391 = vpop.permute.xlu0 %390
      %394 = vset.pattern.permute.xlu0 0
      %395 = vperm.xlu0 %394, %v377
      %v396 = vpop.permute.xlu0 %395
      %399 = vset.pattern.permute.xlu0 0
      %400 = vperm.xlu0 %399, %v378
      %v401 = vpop.permute.xlu0 %400
      %404 = vset.pattern.permute.xlu0 0
      %405 = vperm.xlu0 %404, %v379
      %v406 = vpop.permute.xlu0 %405
      %409 = vset.pattern.permute.xlu0 0
      %410 = vperm.xlu0 %409, %v380
      %v411 = vpop.permute.xlu0 %410
      %414 = vset.pattern.permute.xlu0 0
      %415 = vperm.xlu0 %414, %v381
      %v416 = vpop.permute.xlu0 %415
      %419 = vset.pattern.permute.xlu0 0
      %420 = vperm.xlu0 %419, %v382
      %v421 = vpop.permute.xlu0 %420
      %v431 = vunpack.c.l.b16 %v366
      %v432 = vunpack.c.l.b16 %v367
      %v433 = vunpack.c.l.b16 %v368
      %v434 = vunpack.c.l.b16 %v369
      %v435 = vunpack.c.l.b16 %v370
      %v436 = vunpack.c.l.b16 %v371
      %v437 = vunpack.c.l.b16 %v372
      %v438 = vunpack.c.l.b16 %v373
      %v439 = vpack.c.b16 %v432, %v431
      %v440 = vpack.c.b16 %v434, %v433
      %v441 = vpack.c.b16 %v436, %v435
      %v442 = vpack.c.b16 %v438, %v437
      %vm443 = vcmask 130048
      %v445 = vsel %vm443, %v439, 0
      %v448 = vsel %vm443, %v440, 0
      %v451 = vsel %vm443, %v441, 0
      %v454 = vsel %vm443, %v442, 0
      %456 = vmatpush.bf16.msra.mxu0 0
      %457 = vmatpush.bf16.msra.mxu0 0
      %458 = vmatpush.bf16.msra.mxu0 0
      %459 = vmatpush.bf16.msra.mxu0 0
      %460 = vmatpush.bf16.msra.mxu0 0
      %461 = vmatpush.bf16.msra.mxu0 0
      %462 = vmatpush.bf16.msra.mxu0 0
      %463 = vmatpush.bf16.msra.mxu0 %v374
      %464 = vmatmul.bf16.gmra.mxu0 %v445
      %v465 = vpop.f32.mrf.mxu0
      %v466 = vadd.f32 %v386, %v465
      %v467 = vpop.f32.mrf.mxu0
      %v468 = vadd.f32 %v391, %v467
      %469 = vmatmul.bf16.gmra.mxu0 %v448
      %v470 = vpop.f32.mrf.mxu0
      %v471 = vadd.f32 %v396, %v470
      %v472 = vpop.f32.mrf.mxu0
      %v473 = vadd.f32 %v401, %v472
      %474 = vmatmul.bf16.gmra.mxu0 %v451
      %v475 = vpop.f32.mrf.mxu0
      %v476 = vadd.f32 %v406, %v475
      %v477 = vpop.f32.mrf.mxu0
      %v478 = vadd.f32 %v411, %v477
      %479 = vmatmul.bf16.gmra.mxu0 %v454
      %v480 = vpop.f32.mrf.mxu0
      %v481 = vadd.f32 %v416, %v480
      %v482 = vpop.f32.mrf.mxu0
      %v483 = vadd.f32 %v421, %v482
      %484 = vdwg.mxu0
      %s485 = smul.u32 %s26, 128
      %v486 = vlaneseq
      %v487 = vand.u32 %v486, 127
      %v488 = vstv %s485
      %v489 = vadd.s32 %v488, %v487
      %vm490 = vcmp.lt.s32.totalorder %v489, 21
      %v491 = vsel %vm490, %v466, 0.0
      %v492 = vsel %vm490, %v468, 0.0
      %v493 = vsel %vm490, %v471, 0.0
      %v494 = vsel %vm490, %v473, 0.0
      %v495 = vsel %vm490, %v476, 0.0
      %v496 = vsel %vm490, %v478, 0.0
      %v497 = vsel %vm490, %v481, 0.0
      %v498 = vsel %vm490, %v483, 0.0
      %499 = vst [vmem:[%s358] sm:$0xff] %v491
      %500 = vst [vmem:[%s358 + $0x8] sm:$0xff] %v492
      %501 = vst [vmem:[%s358 + $0x10] sm:$0xff] %v493
      %502 = vst [vmem:[%s358 + $0x18] sm:$0xff] %v494
      %503 = vst [vmem:[%s358 + $0x20] sm:$0xff] %v495
      %504 = vst [vmem:[%s358 + $0x28] sm:$0xff] %v496
      %505 = vst [vmem:[%s358 + $0x30] sm:$0xff] %v497
      %506 = vst [vmem:[%s358 + $0x38] sm:$0xff] %v498
      %v507 = vadd.f32 %v491, %v492
      %v508 = vadd.f32 %v507, %v493
      %v509 = vadd.f32 %v508, %v494
      %v510 = vadd.f32 %v509, %v495
      %v511 = vadd.f32 %v510, %v496
      %v512 = vadd.f32 %v511, %v497
      %v513 = vadd.f32 %v512, %v498
      %514 = vadd.xlane.f32.xlu0 %v513
      %v515 = vpop.xlane.xlu0 %514
      %v516 = vrot.slane %v515, 4
      %v517 = vadd.f32 %v515, %v516
      %v518 = vrot.slane %v517, 2
      %v519 = vadd.f32 %v517, %v518
      %v520 = vrot.slane %v519, 1
      %v521 = vadd.f32 %v519, %v520
      %s522 = vtos %v521
      %v523 = vmul.f32 %v491, %v491
      %v524 = vmul.f32 %v492, %v492
      %v525 = vmul.f32 %v493, %v493
      %v526 = vmul.f32 %v494, %v494
      %v527 = vmul.f32 %v495, %v495
      %v528 = vmul.f32 %v496, %v496
      %v529 = vmul.f32 %v497, %v497
      %v530 = vmul.f32 %v498, %v498
      %v531 = vadd.f32 %v523, %v524
      %v532 = vadd.f32 %v531, %v525
      %v533 = vadd.f32 %v532, %v526
      %v534 = vadd.f32 %v533, %v527
      %v535 = vadd.f32 %v534, %v528
      %v536 = vadd.f32 %v535, %v529
      %v537 = vadd.f32 %v536, %v530
      %538 = vadd.xlane.f32.xlu0 %v537
      %v539 = vpop.xlane.xlu0 %538
      %v540 = vrot.slane %v539, 4
      %v541 = vadd.f32 %v539, %v540
      %v542 = vrot.slane %v541, 2
      %v543 = vadd.f32 %v541, %v542
      %v544 = vrot.slane %v543, 1
      %v545 = vadd.f32 %v543, %v544
      %s546 = vtos %v545
      %v547 = vlaneseq
      %v548 = vshrl.u32 %v547, 7
      %vm549 = vcmp.eq.s32.totalorder %v548, 0
      %v550 = vstv %s522
      %v551 = vstv %s546
      %v552 = vsel %vm549, %v550, %v551
      %p553 = scmp.eq.s32.totalorder %s26, 0
      // Predicated region
      $region45: #{convtasnet_separator_forward.16} parent=43 // pred_check
        %p554 = pneg %p553
      $region46: #{convtasnet_separator_forward.16} parent=43 // pred_check_branch
        %556 = sbr.rel (%p554) target = $region48
      $region47: #{convtasnet_separator_forward.16} parent=43 // pred_region
        %557 = vst [vmem:[%s362] sm:$0x3] %v552
      $region48: #{convtasnet_separator_forward.16} parent=43 // pred_fallthru
        _
      %p558 = scmp.gt.s32.totalorder %s26, 0
      // Predicated region
      $region49: #{convtasnet_separator_forward.16} parent=43 // pred_check
        %p559 = pneg %p558
      $region50: #{convtasnet_separator_forward.16} parent=43 // pred_check_branch
        %561 = sbr.rel (%p559) target = $region52
      $region51: #{convtasnet_separator_forward.16} parent=43 // pred_region
        %v562 = vld [vmem:[%s362] sm:$0x3]
        %v563 = vadd.f32 %v562, %v552
        %564 = vst [vmem:[%s362] sm:$0x3] %v563
      $region52: #{convtasnet_separator_forward.16} parent=43 // pred_fallthru
        _
      %p565 = scmp.lt.s32.totalorder %s25, 1
      %s566 = scalar_select %p565, %s25, 1
      %p567 = scmp.lt.s32.totalorder %s26, 0
      %s568 = scalar_select %p567, %s26, 0
      %s569 = smul.addr %s566, 8
      %s570 = sadd.s32 %s568, %s569
      %s571 = smul.addr %s570, 8
      %s572 = scalar_lea.vmem %s6, %s571
      %p573 = scmp.lt.s32.totalorder %s25, 1
      %s574 = scalar_select %p573, %s25, 1
      %s575 = smul.addr %s574, 2
      %s576 = scalar_lea.vmem %s7, %s575
      // Predicated region
      $region53: #{convtasnet_separator_forward.16} parent=43 // pred_check
        %p577 = pneg %p196
      $region54: #{convtasnet_separator_forward.16} parent=43 // pred_check_branch
        %579 = sbr.rel (%p577) target = $region56
      $region55: #{convtasnet_separator_forward.16} parent=43 // pred_region
        _
      $region56: #{convtasnet_separator_forward.16} parent=43 // pred_fallthru
        _
      // Predicated region
      $region57: #{convtasnet_separator_forward.16} parent=43 // pred_check
        %p580 = pneg %p222
      $region58: #{convtasnet_separator_forward.16} parent=43 // pred_check_branch
        %582 = sbr.rel (%p580) target = $region60
      $region59: #{convtasnet_separator_forward.16} parent=43 // pred_region
        _
      $region60: #{convtasnet_separator_forward.16} parent=43 // pred_fallthru
        _
    $region44: #{convtasnet_separator_forward.16} parent=5 // pred_fallthru
      _
    %p583 = scmp.le.s32.totalorder 2, %s16
    // Predicated region
    $region61: #{convtasnet_separator_forward.16} parent=5 // pred_check
      %p584 = pneg %p583
    $region62: #{convtasnet_separator_forward.16} parent=5 // pred_check_branch
      %586 = sbr.rel (%p584) target = $region64
    $region63: #{convtasnet_separator_forward.16} parent=5 // pred_region
      %s587 = ssub.s32 %s16, 2
      // Predicated region
      $region65: #{convtasnet_separator_forward.16} parent=63 // pred_check
        %p588 = pneg %p202
      $region66: #{convtasnet_separator_forward.16} parent=63 // pred_check_branch
        %590 = sbr.rel (%p588) target = $region68
      $region67: #{convtasnet_separator_forward.16} parent=63 // pred_region
        %p591 = scmp.lt.s32.totalorder %s27, 1
        %s592 = scalar_select %p591, %s27, 1
        %p593 = scmp.lt.s32.totalorder %s28, 0
        %s594 = scalar_select %p593, %s28, 0
        %s595 = smul.addr %s592, 8
        %s596 = sadd.s32 %s594, %s595
        %s597 = smul.addr %s596, 8
        %s598 = scalar_lea.vmem %s6, %s597
      $region68: #{convtasnet_separator_forward.16} parent=63 // pred_fallthru
        _
      // Predicated region
      $region69: #{convtasnet_separator_forward.16} parent=63 // pred_check
        %p599 = pneg %p228
      $region70: #{convtasnet_separator_forward.16} parent=63 // pred_check_branch
        %601 = sbr.rel (%p599) target = $region72
      $region71: #{convtasnet_separator_forward.16} parent=63 // pred_region
        %p602 = scmp.lt.s32.totalorder %s27, 1
        %s603 = scalar_select %p602, %s27, 1
        %s604 = smul.addr %s603, 2
        %s605 = scalar_lea.vmem %s7, %s604
      $region72: #{convtasnet_separator_forward.16} parent=63 // pred_fallthru
        _
    $region64: #{convtasnet_separator_forward.16} parent=5 // pred_fallthru
      _
  $region6: #{convtasnet_separator_forward.16} parent=0 // loop_footer
    %s20 = sadd.s32 1, %s16
  $region7: #{convtasnet_separator_forward.16} parent=0 // loop_footer_branch
    %15 = sbr.rel target = $region3
  $region8: #{convtasnet_separator_forward.16} parent=0 // loop_exit
    _

// kernel: convtasnet_separator_forward.18
$region0: #{convtasnet_separator_forward.18}
  #allocation0 [shape = 'u32[]', space=smem, size = 0x4, offset = 0x4, fixed_abs, tag = 'smem constant byte address 0x4 - core index']
  #allocation1 [shape = 'u32[72,128]{1,0:T(1,128)}', space=vmem, size = 0x9000, scoped, tag = 'internal scratch']
  #allocation2 [shape = 'f32[1,1]{1,0:T(1,128)S(1)}', space=vmem, size = 0x200, scoped, tag = 'scoped memory for convtasnet_separator_forward.18']
  %s0 = inlined_call_operand.vmem [shape: f32[2,32,128], index: 0, kind: input, shape index: {}]
  %s1 = inlined_call_operand.vmem [shape: bf16[64,32], index: 1, kind: input, shape index: {}]
  %s2 = inlined_call_operand.vmem [shape: f32[64,1], index: 2, kind: input, shape index: {}]
  %s3 = inlined_call_operand.vmem [shape: f32[2,32,1], index: 3, kind: input, shape index: {}]
  %s4 = inlined_call_operand.vmem [shape: f32[2,32,1], index: 4, kind: input, shape index: {}]
  %s5 = inlined_call_operand.<no memory space> [shape: f32[1,1], index: 5, kind: input, shape index: {}]
  %s6 = inlined_call_operand.vmem [shape: f32[2,64,128], index: 6, kind: output, shape index: {0}]
  %s7 = inlined_call_operand.vmem [shape: f32[2,2,128], index: 7, kind: output, shape index: {1}]
  %8 = xla_tuple %s6, %s7
  %s9 = sld [smem:[#allocation0]]
  $region73: #{convtasnet_separator_forward.18} parent=0
    _
  %s11 = ssub.s32 1, %s9
  %s12 = scalar_select 0, %s11, %s9
  %v13 = vstv %s5
  %14 = vst [vmem:[#allocation2] sm:$0x1] %v13
  loop: start=0, step=1, limit=4
  $region2: #{convtasnet_separator_forward.18} parent=0 // loop_pre_header
    _
  $region3: #{convtasnet_separator_forward.18} parent=0 // loop_header
    %s16 = sphi 0, %s20
    %p17 = scmp.ge.s32.totalorder %s16, 4
    %s23 = sphi 0, %s35
    %s24 = sphi 0, %s31
    %s25 = sphi 0, %s23
    %s26 = sphi 0, %s24
    %s27 = sphi 0, %s25
    %s28 = sphi 0, %s26
    %s40 = sphi 0, %s42
    %s43 = sphi 0, %s40
    %s44 = sphi 0, %s43
    %s60 = sphi 0, %s44
    %s64 = sphi 0, %s64
    %s66 = sphi 0, %s64
    %s67 = sphi 0, %s66
    %s81 = sphi 0, %s67
    %s85 = sphi 0, %s85
    %s87 = sphi 0, %s85
    %s88 = sphi 0, %s87
    %s102 = sphi 0, %s88
    %s108 = sphi 0, %s110
    %s111 = sphi 0, %s108
    %s112 = sphi 0, %s111
    %s128 = sphi 0, %s112
    %s134 = sphi 0, %s136
    %s137 = sphi 0, %s134
    %s138 = sphi 0, %s137
    %s154 = sphi 0, %s138
    %s158 = sphi 0, %s158
    %s160 = sphi 0, %s158
    %s161 = sphi 0, %s160
    %s175 = sphi 0, %s161
    %s183 = sphi 0, %s185
    %s186 = sphi 0, %s183
    %s187 = sphi 0, %s186
    %s203 = sphi 0, %s187
    %s209 = sphi 0, %s211
    %s212 = sphi 0, %s209
    %s213 = sphi 0, %s212
    %s229 = sphi 0, %s213
  $region4: #{convtasnet_separator_forward.18} parent=0 // loop_header_branch
    %19 = sbr.rel (%p17) target = $region8
  $region5: #{convtasnet_separator_forward.18} parent=0 // loop_body
    %s21 = ssub.s32 %s16, 1
    %s22 = ssub.s32 %s16, 2
    %s29 = sadd.s32 1, %s24
    %p30 = scmp.ge.s32.totalorder %s29, 1
    %s31 = scalar_select %p30, 0, %s29
    %s32 = sadd.s32 1, %s23
    %s33 = scalar_select %p30, %s32, %s23
    %p34 = scmp.ge.s32.totalorder %s33, 2
    %s35 = scalar_select %p34, 0, %s33
    %s36 = ssub.s32 %s23, %s35
    %s37 = ssub.s32 %s24, %s31
    %s38 = sor.u32 %s36, %s37
    %p39 = scmp.eq.s32.totalorder %s38, 0
    %s41 = sadd.s32 %s40, 1
    %s42 = scalar_select %p39, %s40, %s41
    %p45 = pneg %p39
    %p46 = scmp.eq.s32.totalorder %s16, 1
    %p47 = por %p45, %p46
    %p48 = scmp.ne.s32.totalorder %s40, %s43
    %p49 = scmp.eq.s32.totalorder %s16, 0
    %p50 = por %p48, %p49
    %p51 = scmp.ne.s32.totalorder %s40, %s43
    %p52 = scmp.eq.s32.totalorder %s21, 1
    %p53 = por %p51, %p52
    %p54 = scmp.ne.s32.totalorder %s43, %s44
    %p55 = scmp.eq.s32.totalorder %s21, 0
    %p56 = por %p54, %p55
    %p57 = scmp.ne.s32.totalorder %s43, %s44
    %p58 = scmp.eq.s32.totalorder %s22, 1
    %p59 = por %p57, %p58
    %p61 = scmp.ne.s32.totalorder %s44, %s60
    %p62 = scmp.eq.s32.totalorder %s22, 0
    %p63 = por %p61, %p62
    %s65 = sadd.s32 %s64, 1
    %p68 = scmp.eq.s32.totalorder %s16, 1
    %p69 = scmp.ne.s32.totalorder %s64, %s66
    %p70 = scmp.eq.s32.totalorder %s16, 0
    %p71 = por %p69, %p70
    %p72 = scmp.ne.s32.totalorder %s64, %s66
    %p73 = scmp.eq.s32.totalorder %s21, 1
    %p74 = por %p72, %p73
    %p75 = scmp.ne.s32.totalorder %s66, %s67
    %p76 = scmp.eq.s32.totalorder %s21, 0
    %p77 = por %p75, %p76
    %p78 = scmp.ne.s32.totalorder %s66, %s67
    %p79 = scmp.eq.s32.totalorder %s22, 1
    %p80 = por %p78, %p79
    %p82 = scmp.ne.s32.totalorder %s67, %s81
    %p83 = scmp.eq.s32.totalorder %s22, 0
    %p84 = por %p82, %p83
    %s86 = sadd.s32 %s85, 1
    %p89 = scmp.eq.s32.totalorder %s16, 1
    %p90 = scmp.ne.s32.totalorder %s85, %s87
    %p91 = scmp.eq.s32.totalorder %s16, 0
    %p92 = por %p90, %p91
    %p93 = scmp.ne.s32.totalorder %s85, %s87
    %p94 = scmp.eq.s32.totalorder %s21, 1
    %p95 = por %p93, %p94
    %p96 = scmp.ne.s32.totalorder %s87, %s88
    %p97 = scmp.eq.s32.totalorder %s21, 0
    %p98 = por %p96, %p97
    %p99 = scmp.ne.s32.totalorder %s87, %s88
    %p100 = scmp.eq.s32.totalorder %s22, 1
    %p101 = por %p99, %p100
    %p103 = scmp.ne.s32.totalorder %s88, %s102
    %p104 = scmp.eq.s32.totalorder %s22, 0
    %p105 = por %p103, %p104
    %s106 = ssub.s32 %s23, %s35
    %p107 = scmp.eq.s32.totalorder %s106, 0
    %s109 = sadd.s32 %s108, 1
    %s110 = scalar_select %p107, %s108, %s109
    %p113 = pneg %p107
    %p114 = scmp.eq.s32.totalorder %s16, 1
    %p115 = por %p113, %p114
    %p116 = scmp.ne.s32.totalorder %s108, %s111
    %p117 = scmp.eq.s32.totalorder %s16, 0
    %p118 = por %p116, %p117
    %p119 = scmp.ne.s32.totalorder %s108, %s111
    %p120 = scmp.eq.s32.totalorder %s21, 1
    %p121 = por %p119, %p120
    %p122 = scmp.ne.s32.totalorder %s111, %s112
    %p123 = scmp.eq.s32.totalorder %s21, 0
    %p124 = por %p122, %p123
    %p125 = scmp.ne.s32.totalorder %s111, %s112
    %p126 = scmp.eq.s32.totalorder %s22, 1
    %p127 = por %p125, %p126
    %p129 = scmp.ne.s32.totalorder %s112, %s128
    %p130 = scmp.eq.s32.totalorder %s22, 0
    %p131 = por %p129, %p130
    %s132 = ssub.s32 %s23, %s35
    %p133 = scmp.eq.s32.totalorder %s132, 0
    %s135 = sadd.s32 %s134, 1
    %s136 = scalar_select %p133, %s134, %s135
    %p139 = pneg %p133
    %p140 = scmp.eq.s32.totalorder %s16, 1
    %p141 = por %p139, %p140
    %p142 = scmp.ne.s32.totalorder %s134, %s137
    %p143 = scmp.eq.s32.totalorder %s16, 0
    %p144 = por %p142, %p143
    %p145 = scmp.ne.s32.totalorder %s134, %s137
    %p146 = scmp.eq.s32.totalorder %s21, 1
    %p147 = por %p145, %p146
    %p148 = scmp.ne.s32.totalorder %s137, %s138
    %p149 = scmp.eq.s32.totalorder %s21, 0
    %p150 = por %p148, %p149
    %p151 = scmp.ne.s32.totalorder %s137, %s138
    %p152 = scmp.eq.s32.totalorder %s22, 1
    %p153 = por %p151, %p152
    %p155 = scmp.ne.s32.totalorder %s138, %s154
    %p156 = scmp.eq.s32.totalorder %s22, 0
    %p157 = por %p155, %p156
    %s159 = sadd.s32 %s158, 1
    %p162 = scmp.eq.s32.totalorder %s16, 1
    %p163 = scmp.ne.s32.totalorder %s158, %s160
    %p164 = scmp.eq.s32.totalorder %s16, 0
    %p165 = por %p163, %p164
    %p166 = scmp.ne.s32.totalorder %s158, %s160
    %p167 = scmp.eq.s32.totalorder %s21, 1
    %p168 = por %p166, %p167
    %p169 = scmp.ne.s32.totalorder %s160, %s161
    %p170 = scmp.eq.s32.totalorder %s21, 0
    %p171 = por %p169, %p170
    %p172 = scmp.ne.s32.totalorder %s160, %s161
    %p173 = scmp.eq.s32.totalorder %s22, 1
    %p174 = por %p172, %p173
    %p176 = scmp.ne.s32.totalorder %s161, %s175
    %p177 = scmp.eq.s32.totalorder %s22, 0
    %p178 = por %p176, %p177
    %s179 = ssub.s32 %s23, %s35
    %s180 = ssub.s32 %s24, %s31
    %s181 = sor.u32 %s179, %s180
    %p182 = scmp.eq.s32.totalorder %s181, 0
    %s184 = sadd.s32 %s183, 1
    %s185 = scalar_select %p182, %s183, %s184
    %p188 = pneg %p182
    %p189 = scmp.eq.s32.totalorder %s16, 1
    %p190 = por %p188, %p189
    %p191 = scmp.ne.s32.totalorder %s183, %s186
    %p192 = scmp.eq.s32.totalorder %s16, 0
    %p193 = por %p191, %p192
    %p194 = scmp.ne.s32.totalorder %s183, %s186
    %p195 = scmp.eq.s32.totalorder %s21, 1
    %p196 = por %p194, %p195
    %p197 = scmp.ne.s32.totalorder %s186, %s187
    %p198 = scmp.eq.s32.totalorder %s21, 0
    %p199 = por %p197, %p198
    %p200 = scmp.ne.s32.totalorder %s186, %s187
    %p201 = scmp.eq.s32.totalorder %s22, 1
    %p202 = por %p200, %p201
    %p204 = scmp.ne.s32.totalorder %s187, %s203
    %p205 = scmp.eq.s32.totalorder %s22, 0
    %p206 = por %p204, %p205
    %s207 = ssub.s32 %s23, %s35
    %p208 = scmp.eq.s32.totalorder %s207, 0
    %s210 = sadd.s32 %s209, 1
    %s211 = scalar_select %p208, %s209, %s210
    %p214 = pneg %p208
    %p215 = scmp.eq.s32.totalorder %s16, 1
    %p216 = por %p214, %p215
    %p217 = scmp.ne.s32.totalorder %s209, %s212
    %p218 = scmp.eq.s32.totalorder %s16, 0
    %p219 = por %p217, %p218
    %p220 = scmp.ne.s32.totalorder %s209, %s212
    %p221 = scmp.eq.s32.totalorder %s21, 1
    %p222 = por %p220, %p221
    %p223 = scmp.ne.s32.totalorder %s212, %s213
    %p224 = scmp.eq.s32.totalorder %s21, 0
    %p225 = por %p223, %p224
    %p226 = scmp.ne.s32.totalorder %s212, %s213
    %p227 = scmp.eq.s32.totalorder %s22, 1
    %p228 = por %p226, %p227
    %p230 = scmp.ne.s32.totalorder %s213, %s229
    %p231 = scmp.eq.s32.totalorder %s22, 0
    %p232 = por %p230, %p231
    %p233 = scmp.le.s32.totalorder 1, %s16
    %p234 = scmp.lt.s32.totalorder %s16, 3
    %p235 = pnand %p233, %p234
    %p236 = pneg %p235
    // Predicated region
    $region9: #{convtasnet_separator_forward.18} parent=5 // pred_check
      _
    $region10: #{convtasnet_separator_forward.18} parent=5 // pred_check_branch
      %238 = sbr.rel (%p235) target = $region12
    $region11: #{convtasnet_separator_forward.18} parent=5 // pred_region
      %s239 = ssub.s32 %s16, 1
      // Predicated region
      $region13: #{convtasnet_separator_forward.18} parent=11 // pred_check
        %p240 = pneg %p77
      $region14: #{convtasnet_separator_forward.18} parent=11 // pred_check_branch
        %242 = sbr.rel (%p240) target = $region16
      $region15: #{convtasnet_separator_forward.18} parent=11 // pred_region
        _
      $region16: #{convtasnet_separator_forward.18} parent=11 // pred_fallthru
        _
      // Predicated region
      $region17: #{convtasnet_separator_forward.18} parent=11 // pred_check
        %p243 = pneg %p98
      $region18: #{convtasnet_separator_forward.18} parent=11 // pred_check_branch
        %245 = sbr.rel (%p243) target = $region20
      $region19: #{convtasnet_separator_forward.18} parent=11 // pred_region
        _
      $region20: #{convtasnet_separator_forward.18} parent=11 // pred_fallthru
        _
      // Predicated region
      $region21: #{convtasnet_separator_forward.18} parent=11 // pred_check
        %p246 = pneg %p171
      $region22: #{convtasnet_separator_forward.18} parent=11 // pred_check_branch
        %248 = sbr.rel (%p246) target = $region24
      $region23: #{convtasnet_separator_forward.18} parent=11 // pred_region
        _
      $region24: #{convtasnet_separator_forward.18} parent=11 // pred_fallthru
        _
    $region12: #{convtasnet_separator_forward.18} parent=5 // pred_fallthru
      _
    %p249 = scmp.lt.s32.totalorder %s16, 2
    // Predicated region
    $region25: #{convtasnet_separator_forward.18} parent=5 // pred_check
      %p250 = pneg %p249
    $region26: #{convtasnet_separator_forward.18} parent=5 // pred_check_branch
      %252 = sbr.rel (%p250) target = $region28
    $region27: #{convtasnet_separator_forward.18} parent=5 // pred_region
      // Predicated region
      $region29: #{convtasnet_separator_forward.18} parent=27 // pred_check
        %p253 = pneg %p50
      $region30: #{convtasnet_separator_forward.18} parent=27 // pred_check_branch
        %255 = sbr.rel (%p253) target = $region32
      $region31: #{convtasnet_separator_forward.18} parent=27 // pred_region
        %p256 = scmp.lt.s32.totalorder %s23, 1
        %s257 = scalar_select %p256, %s23, 1
        %p258 = scmp.lt.s32.totalorder %s24, 0
        %s259 = scalar_select %p258, %s24, 0
        %s260 = smul.addr %s257, 4
        %s261 = sadd.s32 %s259, %s260
        %s262 = smul.addr %s261, 8
        %s263 = scalar_lea.vmem %s0, %s262
      $region32: #{convtasnet_separator_forward.18} parent=27 // pred_fallthru
        _
      // Predicated region
      $region33: #{convtasnet_separator_forward.18} parent=27 // pred_check
        %p264 = pneg %p118
      $region34: #{convtasnet_separator_forward.18} parent=27 // pred_check_branch
        %266 = sbr.rel (%p264) target = $region36
      $region35: #{convtasnet_separator_forward.18} parent=27 // pred_region
        %p267 = scmp.lt.s32.totalorder %s23, 1
        %s268 = scalar_select %p267, %s23, 1
        %s269 = smul.addr %s268, 4
        %s270 = smul.addr %s269, 8
        %s271 = scalar_lea.vmem %s3, %s270
      $region36: #{convtasnet_separator_forward.18} parent=27 // pred_fallthru
        _
      // Predicated region
      $region37: #{convtasnet_separator_forward.18} parent=27 // pred_check
        %p272 = pneg %p144
      $region38: #{convtasnet_separator_forward.18} parent=27 // pred_check_branch
        %274 = sbr.rel (%p272) target = $region40
      $region39: #{convtasnet_separator_forward.18} parent=27 // pred_region
        %p275 = scmp.lt.s32.totalorder %s23, 1
        %s276 = scalar_select %p275, %s23, 1
        %s277 = smul.addr %s276, 4
        %s278 = smul.addr %s277, 8
        %s279 = scalar_lea.vmem %s4, %s278
      $region40: #{convtasnet_separator_forward.18} parent=27 // pred_fallthru
        _
    $region28: #{convtasnet_separator_forward.18} parent=5 // pred_fallthru
      _
    %p280 = scmp.le.s32.totalorder 1, %s16
    %p281 = scmp.lt.s32.totalorder %s16, 3
    %p282 = pnand %p280, %p281
    %p283 = pneg %p282
    // Predicated region
    $region41: #{convtasnet_separator_forward.18} parent=5 // pred_check
      _
    $region42: #{convtasnet_separator_forward.18} parent=5 // pred_check_branch
      %285 = sbr.rel (%p282) target = $region44
    $region43: #{convtasnet_separator_forward.18} parent=5 // pred_region
      %s286 = ssub.s32 %s16, 1
      %p287 = scmp.lt.s32.totalorder %s25, 1
      %s288 = scalar_select %p287, %s25, 1
      %p289 = scmp.lt.s32.totalorder %s26, 0
      %s290 = scalar_select %p289, %s26, 0
      %s291 = smul.addr %s288, 4
      %s292 = sadd.s32 %s290, %s291
      %s293 = smul.addr %s292, 8
      %s294 = scalar_lea.vmem %s0, %s293
      %p295 = pneg %p56
      %p296 = pneg %p53
      %p297 = pneg %p77
      %p298 = pneg %p74
      %p299 = pneg %p98
      %p300 = pneg %p95
      %p301 = scmp.lt.s32.totalorder %s25, 1
      %s302 = scalar_select %p301, %s25, 1
      %s303 = smul.addr %s302, 4
      %s304 = smul.addr %s303, 8
      %s305 = scalar_lea.vmem %s3, %s304
      %p306 = pneg %p124
      %p307 = pneg %p121
      %p308 = scmp.lt.s32.totalorder %s25, 1
      %s309 = scalar_select %p308, %s25, 1
      %s310 = smul.addr %s309, 4
      %s311 = smul.addr %s310, 8
      %s312 = scalar_lea.vmem %s4, %s311
      %p313 = pneg %p150
      %p314 = pneg %p147
      %p315 = pneg %p171
      %p316 = pneg %p168
      %p317 = pneg %p199
      %p318 = pneg %p196
      %p319 = scmp.lt.s32.totalorder %s25, 1
      %s320 = scalar_select %p319, %s25, 1
      %p321 = scmp.lt.s32.totalorder %s26, 0
      %s322 = scalar_select %p321, %s26, 0
      %s323 = smul.addr %s320, 8
      %s324 = sadd.s32 %s322, %s323
      %s325 = smul.addr %s324, 8
      %s326 = scalar_lea.vmem %s6, %s325
      %p327 = pneg %p225
      %p328 = pneg %p222
      %p329 = scmp.lt.s32.totalorder %s25, 1
      %s330 = scalar_select %p329, %s25, 1
      %s331 = smul.addr %s330, 2
      %s332 = scalar_lea.vmem %s7, %s331
      %p333 = scmp.lt.s32.totalorder %s25, 1
      %s334 = scalar_select %p333, %s25, 1
      %p335 = scmp.lt.s32.totalorder %s26, 0
      %s336 = scalar_select %p335, %s26, 0
      %s337 = smul.addr %s334, 4
      %s338 = sadd.s32 %s336, %s337
      %s339 = smul.addr %s338, 8
      %s340 = scalar_lea.vmem %s0, %s339
      %p341 = scmp.lt.s32.totalorder %s25, 1
      %s342 = scalar_select %p341, %s25, 1
      %s343 = smul.addr %s342, 4
      %s344 = smul.addr %s343, 8
      %s345 = scalar_lea.vmem %s3, %s344
      %p346 = scmp.lt.s32.totalorder %s25, 1
      %s347 = scalar_select %p346, %s25, 1
      %s348 = smul.addr %s347, 4
      %s349 = smul.addr %s348, 8
      %s350 = scalar_lea.vmem %s4, %s349
      %p351 = scmp.lt.s32.totalorder %s25, 1
      %s352 = scalar_select %p351, %s25, 1
      %p353 = scmp.lt.s32.totalorder %s26, 0
      %s354 = scalar_select %p353, %s26, 0
      %s355 = smul.addr %s352, 8
      %s356 = sadd.s32 %s354, %s355
      %s357 = smul.addr %s356, 8
      %s358 = scalar_lea.vmem %s6, %s357
      %p359 = scmp.lt.s32.totalorder %s25, 1
      %s360 = scalar_select %p359, %s25, 1
      %s361 = smul.addr %s360, 2
      %s362 = scalar_lea.vmem %s7, %s361
      %v364 = vld [vmem:[%s340] sm:$0xff]
      %v365 = vld [vmem:[%s340 + $0x8] sm:$0xff]
      %v366 = vld [vmem:[%s340 + $0x10] sm:$0xff]
      %v367 = vld [vmem:[%s340 + $0x18] sm:$0xff]
      %v368 = vld [vmem:[%s1] sm:$0xf]
      %v369 = vld [vmem:[%s1 + $0x4] sm:$0xf]
      %v370 = vld [vmem:[%s1 + $0x8] sm:$0xf]
      %v371 = vld [vmem:[%s1 + $0xc] sm:$0xf]
      %v372 = vld [vmem:[%s1 + $0x10] sm:$0xf]
      %v373 = vld [vmem:[%s1 + $0x14] sm:$0xf]
      %v374 = vld [vmem:[%s1 + $0x18] sm:$0xf]
      %v375 = vld [vmem:[%s1 + $0x1c] sm:$0xf]
      %v376 = vpack.c.bf16 %v365, %v364
      %v377 = vpack.c.bf16 %v367, %v366
      %v378 = vld [vmem:[%s2] sm:$0xff]
      %v379 = vld [vmem:[%s2 + $0x8] sm:$0xff]
      %v380 = vld [vmem:[%s2 + $0x10] sm:$0xff]
      %v381 = vld [vmem:[%s2 + $0x18] sm:$0xff]
      %v382 = vld [vmem:[%s2 + $0x20] sm:$0xff]
      %v383 = vld [vmem:[%s2 + $0x28] sm:$0xff]
      %v384 = vld [vmem:[%s2 + $0x30] sm:$0xff]
      %v385 = vld [vmem:[%s2 + $0x38] sm:$0xff]
      %387 = vset.pattern.permute.xlu0 0
      %388 = vperm.xlu0 %387, %v378
      %v389 = vpop.permute.xlu0 %388
      %392 = vset.pattern.permute.xlu0 0
      %393 = vperm.xlu0 %392, %v379
      %v394 = vpop.permute.xlu0 %393
      %397 = vset.pattern.permute.xlu0 0
      %398 = vperm.xlu0 %397, %v380
      %v399 = vpop.permute.xlu0 %398
      %402 = vset.pattern.permute.xlu0 0
      %403 = vperm.xlu0 %402, %v381
      %v404 = vpop.permute.xlu0 %403
      %407 = vset.pattern.permute.xlu0 0
      %408 = vperm.xlu0 %407, %v382
      %v409 = vpop.permute.xlu0 %408
      %412 = vset.pattern.permute.xlu0 0
      %413 = vperm.xlu0 %412, %v383
      %v414 = vpop.permute.xlu0 %413
      %417 = vset.pattern.permute.xlu0 0
      %418 = vperm.xlu0 %417, %v384
      %v419 = vpop.permute.xlu0 %418
      %422 = vset.pattern.permute.xlu0 0
      %423 = vperm.xlu0 %422, %v385
      %v424 = vpop.permute.xlu0 %423
      %v434 = vunpack.c.l.b16 %v368
      %v435 = vunpack.c.l.b16 %v369
      %v436 = vunpack.c.l.b16 %v370
      %v437 = vunpack.c.l.b16 %v371
      %v438 = vunpack.c.l.b16 %v372
      %v439 = vunpack.c.l.b16 %v373
      %v440 = vunpack.c.l.b16 %v374
      %v441 = vunpack.c.l.b16 %v375
      %v442 = vpack.c.b16 %v435, %v434
      %v443 = vpack.c.b16 %v437, %v436
      %v444 = vpack.c.b16 %v439, %v438
      %v445 = vpack.c.b16 %v441, %v440
      %vm446 = vcmask 261120
      %v448 = vsel %vm446, %v442, 0
      %v451 = vsel %vm446, %v443, 0
      %v454 = vsel %vm446, %v444, 0
      %v457 = vsel %vm446, %v445, 0
      %459 = vmatpush.bf16.msra.mxu0 0
      %460 = vmatpush.bf16.msra.mxu0 0
      %461 = vmatpush.bf16.msra.mxu0 0
      %462 = vmatpush.bf16.msra.mxu0 0
      %463 = vmatpush.bf16.msra.mxu0 0
      %464 = vmatpush.bf16.msra.mxu0 0
      %465 = vmatpush.bf16.msra.mxu0 %v377
      %466 = vmatpush.bf16.msra.mxu0 %v376
      %467 = vmatmul.bf16.gmra.mxu0 %v448
      %v468 = vpop.f32.mrf.mxu0
      %v469 = vadd.f32 %v389, %v468
      %v470 = vpop.f32.mrf.mxu0
      %v471 = vadd.f32 %v394, %v470
      %472 = vmatmul.bf16.gmra.mxu0 %v451
      %v473 = vpop.f32.mrf.mxu0
      %v474 = vadd.f32 %v399, %v473
      %v475 = vpop.f32.mrf.mxu0
      %v476 = vadd.f32 %v404, %v475
      %477 = vmatmul.bf16.gmra.mxu0 %v454
      %v478 = vpop.f32.mrf.mxu0
      %v479 = vadd.f32 %v409, %v478
      %v480 = vpop.f32.mrf.mxu0
      %v481 = vadd.f32 %v414, %v480
      %482 = vmatmul.bf16.gmra.mxu0 %v457
      %v483 = vpop.f32.mrf.mxu0
      %v484 = vadd.f32 %v419, %v483
      %v485 = vpop.f32.mrf.mxu0
      %v486 = vadd.f32 %v424, %v485
      %487 = vdwg.mxu0
      %v488 = vld [vmem:[#allocation2] sm:$0x1]
      %vm489 = vcmp.ge.f32.partialorder %v469, 0.0
      %vm490 = vcmp.ge.f32.partialorder %v471, 0.0
      %vm491 = vcmp.ge.f32.partialorder %v474, 0.0
      %vm492 = vcmp.ge.f32.partialorder %v476, 0.0
      %vm493 = vcmp.ge.f32.partialorder %v479, 0.0
      %vm494 = vcmp.ge.f32.partialorder %v481, 0.0
      %vm495 = vcmp.ge.f32.partialorder %v484, 0.0
      %vm496 = vcmp.ge.f32.partialorder %v486, 0.0
      %v498 = vperm.slane %v488, 0
      %499 = vset.pattern.permute.xlu0 0
      %500 = vperm.xlu0 %499, %v498
      %v501 = vpop.permute.xlu0 %500
      %v503 = vmul.f32 %v501, %v469
      %v504 = vmul.f32 %v501, %v471
      %v505 = vmul.f32 %v501, %v474
      %v506 = vmul.f32 %v501, %v476
      %v507 = vmul.f32 %v501, %v479
      %v508 = vmul.f32 %v501, %v481
      %v509 = vmul.f32 %v501, %v484
      %v510 = vmul.f32 %v501, %v486
      %v511 = vsel %vm489, %v469, %v503
      %v512 = vsel %vm490, %v471, %v504
      %v513 = vsel %vm491, %v474, %v505
      %v514 = vsel %vm492, %v476, %v506
      %v515 = vsel %vm493, %v479, %v507
      %v516 = vsel %vm494, %v481, %v508
      %v517 = vsel %vm495, %v484, %v509
      %v518 = vsel %vm496, %v486, %v510
      %s519 = smul.u32 %s26, 128
      %v520 = vlaneseq
      %v521 = vand.u32 %v520, 127
      %v522 = vstv %s519
      %v523 = vadd.s32 %v522, %v521
      %vm524 = vcmp.lt.s32.totalorder %v523, 21
      %v525 = vsel %vm524, %v511, 0.0
      %v526 = vsel %vm524, %v512, 0.0
      %v527 = vsel %vm524, %v513, 0.0
      %v528 = vsel %vm524, %v514, 0.0
      %v529 = vsel %vm524, %v515, 0.0
      %v530 = vsel %vm524, %v516, 0.0
      %v531 = vsel %vm524, %v517, 0.0
      %v532 = vsel %vm524, %v518, 0.0
      %533 = vst [vmem:[%s358] sm:$0xff] %v525
      %534 = vst [vmem:[%s358 + $0x8] sm:$0xff] %v526
      %535 = vst [vmem:[%s358 + $0x10] sm:$0xff] %v527
      %536 = vst [vmem:[%s358 + $0x18] sm:$0xff] %v528
      %537 = vst [vmem:[%s358 + $0x20] sm:$0xff] %v529
      %538 = vst [vmem:[%s358 + $0x28] sm:$0xff] %v530
      %539 = vst [vmem:[%s358 + $0x30] sm:$0xff] %v531
      %540 = vst [vmem:[%s358 + $0x38] sm:$0xff] %v532
      %v541 = vadd.f32 %v525, %v526
      %v542 = vadd.f32 %v541, %v527
      %v543 = vadd.f32 %v542, %v528
      %v544 = vadd.f32 %v543, %v529
      %v545 = vadd.f32 %v544, %v530
      %v546 = vadd.f32 %v545, %v531
      %v547 = vadd.f32 %v546, %v532
      %548 = vadd.xlane.f32.xlu0 %v547
      %v549 = vpop.xlane.xlu0 %548
      %v550 = vrot.slane %v549, 4
      %v551 = vadd.f32 %v549, %v550
      %v552 = vrot.slane %v551, 2
      %v553 = vadd.f32 %v551, %v552
      %v554 = vrot.slane %v553, 1
      %v555 = vadd.f32 %v553, %v554
      %s556 = vtos %v555
      %v557 = vmul.f32 %v525, %v525
      %v558 = vmul.f32 %v526, %v526
      %v559 = vmul.f32 %v527, %v527
      %v560 = vmul.f32 %v528, %v528
      %v561 = vmul.f32 %v529, %v529
      %v562 = vmul.f32 %v530, %v530
      %v563 = vmul.f32 %v531, %v531
      %v564 = vmul.f32 %v532, %v532
      %v565 = vadd.f32 %v557, %v558
      %v566 = vadd.f32 %v565, %v559
      %v567 = vadd.f32 %v566, %v560
      %v568 = vadd.f32 %v567, %v561
      %v569 = vadd.f32 %v568, %v562
      %v570 = vadd.f32 %v569, %v563
      %v571 = vadd.f32 %v570, %v564
      %572 = vadd.xlane.f32.xlu0 %v571
      %v573 = vpop.xlane.xlu0 %572
      %v574 = vrot.slane %v573, 4
      %v575 = vadd.f32 %v573, %v574
      %v576 = vrot.slane %v575, 2
      %v577 = vadd.f32 %v575, %v576
      %v578 = vrot.slane %v577, 1
      %v579 = vadd.f32 %v577, %v578
      %s580 = vtos %v579
      %v581 = vlaneseq
      %v582 = vshrl.u32 %v581, 7
      %vm583 = vcmp.eq.s32.totalorder %v582, 0
      %v584 = vstv %s556
      %v585 = vstv %s580
      %v586 = vsel %vm583, %v584, %v585
      %p587 = scmp.eq.s32.totalorder %s26, 0
      // Predicated region
      $region45: #{convtasnet_separator_forward.18} parent=43 // pred_check
        %p588 = pneg %p587
      $region46: #{convtasnet_separator_forward.18} parent=43 // pred_check_branch
        %590 = sbr.rel (%p588) target = $region48
      $region47: #{convtasnet_separator_forward.18} parent=43 // pred_region
        %591 = vst [vmem:[%s362] sm:$0x3] %v586
      $region48: #{convtasnet_separator_forward.18} parent=43 // pred_fallthru
        _
      %p592 = scmp.gt.s32.totalorder %s26, 0
      // Predicated region
      $region49: #{convtasnet_separator_forward.18} parent=43 // pred_check
        %p593 = pneg %p592
      $region50: #{convtasnet_separator_forward.18} parent=43 // pred_check_branch
        %595 = sbr.rel (%p593) target = $region52
      $region51: #{convtasnet_separator_forward.18} parent=43 // pred_region
        %v596 = vld [vmem:[%s362] sm:$0x3]
        %v597 = vadd.f32 %v596, %v586
        %598 = vst [vmem:[%s362] sm:$0x3] %v597
      $region52: #{convtasnet_separator_forward.18} parent=43 // pred_fallthru
        _
      %p599 = scmp.lt.s32.totalorder %s25, 1
      %s600 = scalar_select %p599, %s25, 1
      %p601 = scmp.lt.s32.totalorder %s26, 0
      %s602 = scalar_select %p601, %s26, 0
      %s603 = smul.addr %s600, 8
      %s604 = sadd.s32 %s602, %s603
      %s605 = smul.addr %s604, 8
      %s606 = scalar_lea.vmem %s6, %s605
      %p607 = scmp.lt.s32.totalorder %s25, 1
      %s608 = scalar_select %p607, %s25, 1
      %s609 = smul.addr %s608, 2
      %s610 = scalar_lea.vmem %s7, %s609
      // Predicated region
      $region53: #{convtasnet_separator_forward.18} parent=43 // pred_check
        %p611 = pneg %p196
      $region54: #{convtasnet_separator_forward.18} parent=43 // pred_check_branch
        %613 = sbr.rel (%p611) target = $region56
      $region55: #{convtasnet_separator_forward.18} parent=43 // pred_region
        _
      $region56: #{convtasnet_separator_forward.18} parent=43 // pred_fallthru
        _
      // Predicated region
      $region57: #{convtasnet_separator_forward.18} parent=43 // pred_check
        %p614 = pneg %p222
      $region58: #{convtasnet_separator_forward.18} parent=43 // pred_check_branch
        %616 = sbr.rel (%p614) target = $region60
      $region59: #{convtasnet_separator_forward.18} parent=43 // pred_region
        _
      $region60: #{convtasnet_separator_forward.18} parent=43 // pred_fallthru
        _
    $region44: #{convtasnet_separator_forward.18} parent=5 // pred_fallthru
      _
    %p617 = scmp.le.s32.totalorder 2, %s16
    // Predicated region
    $region61: #{convtasnet_separator_forward.18} parent=5 // pred_check
      %p618 = pneg %p617
    $region62: #{convtasnet_separator_forward.18} parent=5 // pred_check_branch
      %620 = sbr.rel (%p618) target = $region64
    $region63: #{convtasnet_separator_forward.18} parent=5 // pred_region
      %s621 = ssub.s32 %s16, 2
      // Predicated region
      $region65: #{convtasnet_separator_forward.18} parent=63 // pred_check
        %p622 = pneg %p202
      $region66: #{convtasnet_separator_forward.18} parent=63 // pred_check_branch
        %624 = sbr.rel (%p622) target = $region68
      $region67: #{convtasnet_separator_forward.18} parent=63 // pred_region
        %p625 = scmp.lt.s32.totalorder %s27, 1
        %s626 = scalar_select %p625, %s27, 1
        %p627 = scmp.lt.s32.totalorder %s28, 0
        %s628 = scalar_select %p627, %s28, 0
        %s629 = smul.addr %s626, 8
        %s630 = sadd.s32 %s628, %s629
        %s631 = smul.addr %s630, 8
        %s632 = scalar_lea.vmem %s6, %s631
      $region68: #{convtasnet_separator_forward.18} parent=63 // pred_fallthru
        _
      // Predicated region
      $region69: #{convtasnet_separator_forward.18} parent=63 // pred_check
        %p633 = pneg %p228
      $region70: #{convtasnet_separator_forward.18} parent=63 // pred_check_branch
        %635 = sbr.rel (%p633) target = $region72
      $region71: #{convtasnet_separator_forward.18} parent=63 // pred_region
        %p636 = scmp.lt.s32.totalorder %s27, 1
        %s637 = scalar_select %p636, %s27, 1
        %s638 = smul.addr %s637, 2
        %s639 = scalar_lea.vmem %s7, %s638
      $region72: #{convtasnet_separator_forward.18} parent=63 // pred_fallthru
        _
    $region64: #{convtasnet_separator_forward.18} parent=5 // pred_fallthru
      _
  $region6: #{convtasnet_separator_forward.18} parent=0 // loop_footer
    %s20 = sadd.s32 1, %s16
  $region7: #{convtasnet_separator_forward.18} parent=0 // loop_footer_branch
    %15 = sbr.rel target = $region3
  $region8: #{convtasnet_separator_forward.18} parent=0 // loop_exit
    _

// kernel: convtasnet_separator_forward.19
$region0: #{convtasnet_separator_forward.19}
  #allocation0 [shape = 'u32[]', space=smem, size = 0x4, offset = 0x4, fixed_abs, tag = 'smem constant byte address 0x4 - core index']
  #allocation1 [shape = 'u32[72,128]{1,0:T(1,128)}', space=vmem, size = 0x9000, scoped, tag = 'internal scratch']
  #allocation2 [shape = 'f32[1,1]{1,0:T(1,128)S(1)}', space=vmem, size = 0x200, scoped, tag = 'scoped memory for convtasnet_separator_forward.19']
  %s0 = inlined_call_operand.vmem [shape: f32[2,64,130], index: 0, kind: input, shape index: {}]
  %s1 = inlined_call_operand.vmem [shape: f32[64,3], index: 1, kind: input, shape index: {}]
  %s2 = inlined_call_operand.vmem [shape: f32[64,1], index: 2, kind: input, shape index: {}]
  %s3 = inlined_call_operand.vmem [shape: f32[2,64,1], index: 3, kind: input, shape index: {}]
  %s4 = inlined_call_operand.vmem [shape: f32[2,64,1], index: 4, kind: input, shape index: {}]
  %s5 = inlined_call_operand.<no memory space> [shape: f32[1,1], index: 5, kind: input, shape index: {}]
  %s6 = inlined_call_operand.vmem [shape: f32[2,64,128], index: 6, kind: output, shape index: {0}]
  %s7 = inlined_call_operand.vmem [shape: f32[2,2,128], index: 7, kind: output, shape index: {1}]
  %8 = xla_tuple %s6, %s7
  %s9 = sld [smem:[#allocation0]]
  $region73: #{convtasnet_separator_forward.19} parent=0
    _
  %s11 = ssub.s32 1, %s9
  %s12 = scalar_select 0, %s11, %s9
  %v13 = vstv %s5
  %14 = vst [vmem:[#allocation2] sm:$0x1] %v13
  loop: start=0, step=1, limit=4
  $region2: #{convtasnet_separator_forward.19} parent=0 // loop_pre_header
    _
  $region3: #{convtasnet_separator_forward.19} parent=0 // loop_header
    %s16 = sphi 0, %s20
    %p17 = scmp.ge.s32.totalorder %s16, 4
    %s23 = sphi 0, %s35
    %s24 = sphi 0, %s31
    %s25 = sphi 0, %s23
    %s26 = sphi 0, %s24
    %s27 = sphi 0, %s25
    %s28 = sphi 0, %s26
    %s40 = sphi 0, %s42
    %s43 = sphi 0, %s40
    %s44 = sphi 0, %s43
    %s60 = sphi 0, %s44
    %s66 = sphi 0, %s68
    %s69 = sphi 0, %s66
    %s70 = sphi 0, %s69
    %s86 = sphi 0, %s70
    %s92 = sphi 0, %s94
    %s95 = sphi 0, %s92
    %s96 = sphi 0, %s95
    %s112 = sphi 0, %s96
    %s120 = sphi 0, %s122
    %s123 = sphi 0, %s120
    %s124 = sphi 0, %s123
    %s140 = sphi 0, %s124
    %s148 = sphi 0, %s150
    %s151 = sphi 0, %s148
    %s152 = sphi 0, %s151
    %s168 = sphi 0, %s152
    %s172 = sphi 0, %s172
    %s174 = sphi 0, %s172
    %s175 = sphi 0, %s174
    %s189 = sphi 0, %s175
    %s197 = sphi 0, %s199
    %s200 = sphi 0, %s197
    %s201 = sphi 0, %s200
    %s217 = sphi 0, %s201
    %s223 = sphi 0, %s225
    %s226 = sphi 0, %s223
    %s227 = sphi 0, %s226
    %s243 = sphi 0, %s227
  $region4: #{convtasnet_separator_forward.19} parent=0 // loop_header_branch
    %19 = sbr.rel (%p17) target = $region8
  $region5: #{convtasnet_separator_forward.19} parent=0 // loop_body
    %s21 = ssub.s32 %s16, 1
    %s22 = ssub.s32 %s16, 2
    %s29 = sadd.s32 1, %s24
    %p30 = scmp.ge.s32.totalorder %s29, 1
    %s31 = scalar_select %p30, 0, %s29
    %s32 = sadd.s32 1, %s23
    %s33 = scalar_select %p30, %s32, %s23
    %p34 = scmp.ge.s32.totalorder %s33, 2
    %s35 = scalar_select %p34, 0, %s33
    %s36 = ssub.s32 %s23, %s35
    %s37 = ssub.s32 %s24, %s31
    %s38 = sor.u32 %s36, %s37
    %p39 = scmp.eq.s32.totalorder %s38, 0
    %s41 = sadd.s32 %s40, 1
    %s42 = scalar_select %p39, %s40, %s41
    %p45 = pneg %p39
    %p46 = scmp.eq.s32.totalorder %s16, 1
    %p47 = por %p45, %p46
    %p48 = scmp.ne.s32.totalorder %s40, %s43
    %p49 = scmp.eq.s32.totalorder %s16, 0
    %p50 = por %p48, %p49
    %p51 = scmp.ne.s32.totalorder %s40, %s43
    %p52 = scmp.eq.s32.totalorder %s21, 1
    %p53 = por %p51, %p52
    %p54 = scmp.ne.s32.totalorder %s43, %s44
    %p55 = scmp.eq.s32.totalorder %s21, 0
    %p56 = por %p54, %p55
    %p57 = scmp.ne.s32.totalorder %s43, %s44
    %p58 = scmp.eq.s32.totalorder %s22, 1
    %p59 = por %p57, %p58
    %p61 = scmp.ne.s32.totalorder %s44, %s60
    %p62 = scmp.eq.s32.totalorder %s22, 0
    %p63 = por %p61, %p62
    %s64 = ssub.s32 %s24, %s31
    %p65 = scmp.eq.s32.totalorder %s64, 0
    %s67 = sadd.s32 %s66, 1
    %s68 = scalar_select %p65, %s66, %s67
    %p71 = pneg %p65
    %p72 = scmp.eq.s32.totalorder %s16, 1
    %p73 = por %p71, %p72
    %p74 = scmp.ne.s32.totalorder %s66, %s69
    %p75 = scmp.eq.s32.totalorder %s16, 0
    %p76 = por %p74, %p75
    %p77 = scmp.ne.s32.totalorder %s66, %s69
    %p78 = scmp.eq.s32.totalorder %s21, 1
    %p79 = por %p77, %p78
    %p80 = scmp.ne.s32.totalorder %s69, %s70
    %p81 = scmp.eq.s32.totalorder %s21, 0
    %p82 = por %p80, %p81
    %p83 = scmp.ne.s32.totalorder %s69, %s70
    %p84 = scmp.eq.s32.totalorder %s22, 1
    %p85 = por %p83, %p84
    %p87 = scmp.ne.s32.totalorder %s70, %s86
    %p88 = scmp.eq.s32.totalorder %s22, 0
    %p89 = por %p87, %p88
    %s90 = ssub.s32 %s24, %s31
    %p91 = scmp.eq.s32.totalorder %s90, 0
    %s93 = sadd.s32 %s92, 1
    %s94 = scalar_select %p91, %s92, %s93
    %p97 = pneg %p91
    %p98 = scmp.eq.s32.totalorder %s16, 1
    %p99 = por %p97, %p98
    %p100 = scmp.ne.s32.totalorder %s92, %s95
    %p101 = scmp.eq.s32.totalorder %s16, 0
    %p102 = por %p100, %p101
    %p103 = scmp.ne.s32.totalorder %s92, %s95
    %p104 = scmp.eq.s32.totalorder %s21, 1
    %p105 = por %p103, %p104
    %p106 = scmp.ne.s32.totalorder %s95, %s96
    %p107 = scmp.eq.s32.totalorder %s21, 0
    %p108 = por %p106, %p107
    %p109 = scmp.ne.s32.totalorder %s95, %s96
    %p110 = scmp.eq.s32.totalorder %s22, 1
    %p111 = por %p109, %p110
    %p113 = scmp.ne.s32.totalorder %s96, %s112
    %p114 = scmp.eq.s32.totalorder %s22, 0
    %p115 = por %p113, %p114
    %s116 = ssub.s32 %s23, %s35
    %s117 = ssub.s32 %s24, %s31
    %s118 = sor.u32 %s116, %s117
    %p119 = scmp.eq.s32.totalorder %s118, 0
    %s121 = sadd.s32 %s120, 1
    %s122 = scalar_select %p119, %s120, %s121
    %p125 = pneg %p119
    %p126 = scmp.eq.s32.totalorder %s16, 1
    %p127 = por %p125, %p126
    %p128 = scmp.ne.s32.totalorder %s120, %s123
    %p129 = scmp.eq.s32.totalorder %s16, 0
    %p130 = por %p128, %p129
    %p131 = scmp.ne.s32.totalorder %s120, %s123
    %p132 = scmp.eq.s32.totalorder %s21, 1
    %p133 = por %p131, %p132
    %p134 = scmp.ne.s32.totalorder %s123, %s124
    %p135 = scmp.eq.s32.totalorder %s21, 0
    %p136 = por %p134, %p135
    %p137 = scmp.ne.s32.totalorder %s123, %s124
    %p138 = scmp.eq.s32.totalorder %s22, 1
    %p139 = por %p137, %p138
    %p141 = scmp.ne.s32.totalorder %s124, %s140
    %p142 = scmp.eq.s32.totalorder %s22, 0
    %p143 = por %p141, %p142
    %s144 = ssub.s32 %s23, %s35
    %s145 = ssub.s32 %s24, %s31
    %s146 = sor.u32 %s144, %s145
    %p147 = scmp.eq.s32.totalorder %s146, 0
    %s149 = sadd.s32 %s148, 1
    %s150 = scalar_select %p147, %s148, %s149
    %p153 = pneg %p147
    %p154 = scmp.eq.s32.totalorder %s16, 1
    %p155 = por %p153, %p154
    %p156 = scmp.ne.s32.totalorder %s148, %s151
    %p157 = scmp.eq.s32.totalorder %s16, 0
    %p158 = por %p156, %p157
    %p159 = scmp.ne.s32.totalorder %s148, %s151
    %p160 = scmp.eq.s32.totalorder %s21, 1
    %p161 = por %p159, %p160
    %p162 = scmp.ne.s32.totalorder %s151, %s152
    %p163 = scmp.eq.s32.totalorder %s21, 0
    %p164 = por %p162, %p163
    %p165 = scmp.ne.s32.totalorder %s151, %s152
    %p166 = scmp.eq.s32.totalorder %s22, 1
    %p167 = por %p165, %p166
    %p169 = scmp.ne.s32.totalorder %s152, %s168
    %p170 = scmp.eq.s32.totalorder %s22, 0
    %p171 = por %p169, %p170
    %s173 = sadd.s32 %s172, 1
    %p176 = scmp.eq.s32.totalorder %s16, 1
    %p177 = scmp.ne.s32.totalorder %s172, %s174
    %p178 = scmp.eq.s32.totalorder %s16, 0
    %p179 = por %p177, %p178
    %p180 = scmp.ne.s32.totalorder %s172, %s174
    %p181 = scmp.eq.s32.totalorder %s21, 1
    %p182 = por %p180, %p181
    %p183 = scmp.ne.s32.totalorder %s174, %s175
    %p184 = scmp.eq.s32.totalorder %s21, 0
    %p185 = por %p183, %p184
    %p186 = scmp.ne.s32.totalorder %s174, %s175
    %p187 = scmp.eq.s32.totalorder %s22, 1
    %p188 = por %p186, %p187
    %p190 = scmp.ne.s32.totalorder %s175, %s189
    %p191 = scmp.eq.s32.totalorder %s22, 0
    %p192 = por %p190, %p191
    %s193 = ssub.s32 %s23, %s35
    %s194 = ssub.s32 %s24, %s31
    %s195 = sor.u32 %s193, %s194
    %p196 = scmp.eq.s32.totalorder %s195, 0
    %s198 = sadd.s32 %s197, 1
    %s199 = scalar_select %p196, %s197, %s198
    %p202 = pneg %p196
    %p203 = scmp.eq.s32.totalorder %s16, 1
    %p204 = por %p202, %p203
    %p205 = scmp.ne.s32.totalorder %s197, %s200
    %p206 = scmp.eq.s32.totalorder %s16, 0
    %p207 = por %p205, %p206
    %p208 = scmp.ne.s32.totalorder %s197, %s200
    %p209 = scmp.eq.s32.totalorder %s21, 1
    %p210 = por %p208, %p209
    %p211 = scmp.ne.s32.totalorder %s200, %s201
    %p212 = scmp.eq.s32.totalorder %s21, 0
    %p213 = por %p211, %p212
    %p214 = scmp.ne.s32.totalorder %s200, %s201
    %p215 = scmp.eq.s32.totalorder %s22, 1
    %p216 = por %p214, %p215
    %p218 = scmp.ne.s32.totalorder %s201, %s217
    %p219 = scmp.eq.s32.totalorder %s22, 0
    %p220 = por %p218, %p219
    %s221 = ssub.s32 %s23, %s35
    %p222 = scmp.eq.s32.totalorder %s221, 0
    %s224 = sadd.s32 %s223, 1
    %s225 = scalar_select %p222, %s223, %s224
    %p228 = pneg %p222
    %p229 = scmp.eq.s32.totalorder %s16, 1
    %p230 = por %p228, %p229
    %p231 = scmp.ne.s32.totalorder %s223, %s226
    %p232 = scmp.eq.s32.totalorder %s16, 0
    %p233 = por %p231, %p232
    %p234 = scmp.ne.s32.totalorder %s223, %s226
    %p235 = scmp.eq.s32.totalorder %s21, 1
    %p236 = por %p234, %p235
    %p237 = scmp.ne.s32.totalorder %s226, %s227
    %p238 = scmp.eq.s32.totalorder %s21, 0
    %p239 = por %p237, %p238
    %p240 = scmp.ne.s32.totalorder %s226, %s227
    %p241 = scmp.eq.s32.totalorder %s22, 1
    %p242 = por %p240, %p241
    %p244 = scmp.ne.s32.totalorder %s227, %s243
    %p245 = scmp.eq.s32.totalorder %s22, 0
    %p246 = por %p244, %p245
    %p247 = scmp.le.s32.totalorder 1, %s16
    %p248 = scmp.lt.s32.totalorder %s16, 3
    %p249 = pnand %p247, %p248
    %p250 = pneg %p249
    // Predicated region
    $region9: #{convtasnet_separator_forward.19} parent=5 // pred_check
      _
    $region10: #{convtasnet_separator_forward.19} parent=5 // pred_check_branch
      %252 = sbr.rel (%p249) target = $region12
    $region11: #{convtasnet_separator_forward.19} parent=5 // pred_region
      %s253 = ssub.s32 %s16, 1
      // Predicated region
      $region13: #{convtasnet_separator_forward.19} parent=11 // pred_check
        %p254 = pneg %p82
      $region14: #{convtasnet_separator_forward.19} parent=11 // pred_check_branch
        %256 = sbr.rel (%p254) target = $region16
      $region15: #{convtasnet_separator_forward.19} parent=11 // pred_region
        %s257 = smul.u32 8, %s26
        %p258 = scmp.lt.s32.totalorder %s257, 7
        %s259 = scalar_select %p258, %s257, 7
        %s260 = smul.addr %s259, 8
        %s261 = scalar_lea.vmem %s1, %s260
        %s262 = smul.u32 8, %s26
      $region16: #{convtasnet_separator_forward.19} parent=11 // pred_fallthru
        _
      // Predicated region
      $region17: #{convtasnet_separator_forward.19} parent=11 // pred_check
        %p263 = pneg %p108
      $region18: #{convtasnet_separator_forward.19} parent=11 // pred_check_branch
        %265 = sbr.rel (%p263) target = $region20
      $region19: #{convtasnet_separator_forward.19} parent=11 // pred_region
        %s266 = smul.u32 8, %s26
        %p267 = scmp.lt.s32.totalorder %s266, 7
        %s268 = scalar_select %p267, %s266, 7
        %s269 = smul.addr %s268, 8
        %s270 = scalar_lea.vmem %s2, %s269
        %s271 = smul.u32 8, %s26
      $region20: #{convtasnet_separator_forward.19} parent=11 // pred_fallthru
        _
      // Predicated region
      $region21: #{convtasnet_separator_forward.19} parent=11 // pred_check
        %p272 = pneg %p185
      $region22: #{convtasnet_separator_forward.19} parent=11 // pred_check_branch
        %274 = sbr.rel (%p272) target = $region24
      $region23: #{convtasnet_separator_forward.19} parent=11 // pred_region
        _
      $region24: #{convtasnet_separator_forward.19} parent=11 // pred_fallthru
        _
    $region12: #{convtasnet_separator_forward.19} parent=5 // pred_fallthru
      _
    %p275 = scmp.lt.s32.totalorder %s16, 2
    // Predicated region
    $region25: #{convtasnet_separator_forward.19} parent=5 // pred_check
      %p276 = pneg %p275
    $region26: #{convtasnet_separator_forward.19} parent=5 // pred_check_branch
      %278 = sbr.rel (%p276) target = $region28
    $region27: #{convtasnet_separator_forward.19} parent=5 // pred_region
      // Predicated region
      $region29: #{convtasnet_separator_forward.19} parent=27 // pred_check
        %p279 = pneg %p50
      $region30: #{convtasnet_separator_forward.19} parent=27 // pred_check_branch
        %281 = sbr.rel (%p279) target = $region32
      $region31: #{convtasnet_separator_forward.19} parent=27 // pred_region
        %s282 = smul.u32 8, %s24
        %p283 = scmp.lt.s32.totalorder %s23, 1
        %s284 = scalar_select %p283, %s23, 1
        %p285 = scmp.lt.s32.totalorder %s282, 7
        %s286 = scalar_select %p285, %s282, 7
        %s287 = smul.addr %s286, 2
        %s288 = smul.addr %s284, 16
        %s289 = sadd.s32 %s287, %s288
        %s290 = smul.addr %s289, 8
        %s291 = scalar_lea.vmem %s0, %s290
        %s292 = smul.u32 8, %s24
      $region32: #{convtasnet_separator_forward.19} parent=27 // pred_fallthru
        _
      // Predicated region
      $region33: #{convtasnet_separator_forward.19} parent=27 // pred_check
        %p293 = pneg %p130
      $region34: #{convtasnet_separator_forward.19} parent=27 // pred_check_branch
        %295 = sbr.rel (%p293) target = $region36
      $region35: #{convtasnet_separator_forward.19} parent=27 // pred_region
        %s296 = smul.u32 8, %s24
        %p297 = scmp.lt.s32.totalorder %s23, 1
        %s298 = scalar_select %p297, %s23, 1
        %p299 = scmp.lt.s32.totalorder %s296, 7
        %s300 = scalar_select %p299, %s296, 7
        %s301 = smul.addr %s298, 8
        %s302 = sadd.s32 %s300, %s301
        %s303 = smul.addr %s302, 8
        %s304 = scalar_lea.vmem %s3, %s303
        %s305 = smul.u32 8, %s24
      $region36: #{convtasnet_separator_forward.19} parent=27 // pred_fallthru
        _
      // Predicated region
      $region37: #{convtasnet_separator_forward.19} parent=27 // pred_check
        %p306 = pneg %p158
      $region38: #{convtasnet_separator_forward.19} parent=27 // pred_check_branch
        %308 = sbr.rel (%p306) target = $region40
      $region39: #{convtasnet_separator_forward.19} parent=27 // pred_region
        %s309 = smul.u32 8, %s24
        %p310 = scmp.lt.s32.totalorder %s23, 1
        %s311 = scalar_select %p310, %s23, 1
        %p312 = scmp.lt.s32.totalorder %s309, 7
        %s313 = scalar_select %p312, %s309, 7
        %s314 = smul.addr %s311, 8
        %s315 = sadd.s32 %s313, %s314
        %s316 = smul.addr %s315, 8
        %s317 = scalar_lea.vmem %s4, %s316
        %s318 = smul.u32 8, %s24
      $region40: #{convtasnet_separator_forward.19} parent=27 // pred_fallthru
        _
    $region28: #{convtasnet_separator_forward.19} parent=5 // pred_fallthru
      _
    %p319 = scmp.le.s32.totalorder 1, %s16
    %p320 = scmp.lt.s32.totalorder %s16, 3
    %p321 = pnand %p319, %p320
    %p322 = pneg %p321
    // Predicated region
    $region41: #{convtasnet_separator_forward.19} parent=5 // pred_check
      _
    $region42: #{convtasnet_separator_forward.19} parent=5 // pred_check_branch
      %324 = sbr.rel (%p321) target = $region44
    $region43: #{convtasnet_separator_forward.19} parent=5 // pred_region
      %s325 = ssub.s32 %s16, 1
      %s326 = smul.u32 8, %s26
      %p327 = scmp.lt.s32.totalorder %s25, 1
      %s328 = scalar_select %p327, %s25, 1
      %p329 = scmp.lt.s32.totalorder %s326, 7
      %s330 = scalar_select %p329, %s326, 7
      %s331 = smul.addr %s330, 2
      %s332 = smul.addr %s328, 16
      %s333 = sadd.s32 %s331, %s332
      %s334 = smul.addr %s333, 8
      %s335 = scalar_lea.vmem %s0, %s334
      %p336 = pneg %p56
      %p337 = pneg %p53
      %s338 = smul.u32 8, %s26
      %p339 = scmp.lt.s32.totalorder %s338, 7
      %s340 = scalar_select %p339, %s338, 7
      %s341 = smul.addr %s340, 8
      %s342 = scalar_lea.vmem %s1, %s341
      %p343 = pneg %p82
      %p344 = pneg %p79
      %s345 = smul.u32 8, %s26
      %p346 = scmp.lt.s32.totalorder %s345, 7
      %s347 = scalar_select %p346, %s345, 7
      %s348 = smul.addr %s347, 8
      %s349 = scalar_lea.vmem %s2, %s348
      %p350 = pneg %p108
      %p351 = pneg %p105
      %s352 = smul.u32 8, %s26
      %p353 = scmp.lt.s32.totalorder %s25, 1
      %s354 = scalar_select %p353, %s25, 1
      %p355 = scmp.lt.s32.totalorder %s352, 7
      %s356 = scalar_select %p355, %s352, 7
      %s357 = smul.addr %s354, 8
      %s358 = sadd.s32 %s356, %s357
      %s359 = smul.addr %s358, 8
      %s360 = scalar_lea.vmem %s3, %s359
      %p361 = pneg %p136
      %p362 = pneg %p133
      %s363 = smul.u32 8, %s26
      %p364 = scmp.lt.s32.totalorder %s25, 1
      %s365 = scalar_select %p364, %s25, 1
      %p366 = scmp.lt.s32.totalorder %s363, 7
      %s367 = scalar_select %p366, %s363, 7
      %s368 = smul.addr %s365, 8
      %s369 = sadd.s32 %s367, %s368
      %s370 = smul.addr %s369, 8
      %s371 = scalar_lea.vmem %s4, %s370
      %p372 = pneg %p164
      %p373 = pneg %p161
      %p374 = pneg %p185
      %p375 = pneg %p182
      %p376 = pneg %p213
      %p377 = pneg %p210
      %s378 = smul.u32 8, %s26
      %p379 = scmp.lt.s32.totalorder %s25, 1
      %s380 = scalar_select %p379, %s25, 1
      %p381 = scmp.lt.s32.totalorder %s378, 7
      %s382 = scalar_select %p381, %s378, 7
      %s383 = smul.addr %s380, 8
      %s384 = sadd.s32 %s382, %s383
      %s385 = smul.addr %s384, 8
      %s386 = scalar_lea.vmem %s6, %s385
      %p387 = pneg %p239
      %p388 = pneg %p236
      %p389 = scmp.lt.s32.totalorder %s25, 1
      %s390 = scalar_select %p389, %s25, 1
      %s391 = smul.addr %s390, 2
      %s392 = scalar_lea.vmem %s7, %s391
      %s393 = smul.u32 8, %s26
      %p394 = scmp.lt.s32.totalorder %s25, 1
      %s395 = scalar_select %p394, %s25, 1
      %p396 = scmp.lt.s32.totalorder %s393, 7
      %s397 = scalar_select %p396, %s393, 7
      %s398 = smul.addr %s397, 2
      %s399 = smul.addr %s395, 16
      %s400 = sadd.s32 %s398, %s399
      %s401 = smul.addr %s400, 8
      %s402 = scalar_lea.vmem %s0, %s401
      %s403 = smul.u32 8, %s26
      %s404 = smul.u32 8, %s26
      %p405 = scmp.lt.s32.totalorder %s404, 7
      %s406 = scalar_select %p405, %s404, 7
      %s407 = smul.addr %s406, 8
      %s408 = scalar_lea.vmem %s1, %s407
      %s409 = smul.u32 8, %s26
      %s410 = smul.u32 8, %s26
      %p411 = scmp.lt.s32.totalorder %s410, 7
      %s412 = scalar_select %p411, %s410, 7
      %s413 = smul.addr %s412, 8
      %s414 = scalar_lea.vmem %s2, %s413
      %s415 = smul.u32 8, %s26
      %s416 = smul.u32 8, %s26
      %p417 = scmp.lt.s32.totalorder %s25, 1
      %s418 = scalar_select %p417, %s25, 1
      %p419 = scmp.lt.s32.totalorder %s416, 7
      %s420 = scalar_select %p419, %s416, 7
      %s421 = smul.addr %s418, 8
      %s422 = sadd.s32 %s420, %s421
      %s423 = smul.addr %s422, 8
      %s424 = scalar_lea.vmem %s3, %s423
      %s425 = smul.u32 8, %s26
      %s426 = smul.u32 8, %s26
      %p427 = scmp.lt.s32.totalorder %s25, 1
      %s428 = scalar_select %p427, %s25, 1
      %p429 = scmp.lt.s32.totalorder %s426, 7
      %s430 = scalar_select %p429, %s426, 7
      %s431 = smul.addr %s428, 8
      %s432 = sadd.s32 %s430, %s431
      %s433 = smul.addr %s432, 8
      %s434 = scalar_lea.vmem %s4, %s433
      %s435 = smul.u32 8, %s26
      %s436 = smul.u32 8, %s26
      %p437 = scmp.lt.s32.totalorder %s25, 1
      %s438 = scalar_select %p437, %s25, 1
      %p439 = scmp.lt.s32.totalorder %s436, 7
      %s440 = scalar_select %p439, %s436, 7
      %s441 = smul.addr %s438, 8
      %s442 = sadd.s32 %s440, %s441
      %s443 = smul.addr %s442, 8
      %s444 = scalar_lea.vmem %s6, %s443
      %s445 = smul.u32 8, %s26
      %p446 = scmp.lt.s32.totalorder %s25, 1
      %s447 = scalar_select %p446, %s25, 1
      %s448 = smul.addr %s447, 2
      %s449 = scalar_lea.vmem %s7, %s448
      %v450 = vld [vmem:[%s402] sm:$0xff]
      %v451 = vld [vmem:[%s402 + $0x8] sm:$0xff]
      %v452 = vld [vmem:[%s402 + $0x10] sm:$0xff]
      %v453 = vld [vmem:[%s402 + $0x18] sm:$0xff]
      %v454 = vld [vmem:[%s402 + $0x20] sm:$0xff]
      %v455 = vld [vmem:[%s402 + $0x28] sm:$0xff]
      %v456 = vld [vmem:[%s402 + $0x30] sm:$0xff]
      %v457 = vld [vmem:[%s402 + $0x38] sm:$0xff]
      %v458 = vld [vmem:[%s402 + $0x40] sm:$0xff]
      %v459 = vld [vmem:[%s402 + $0x48] sm:$0xff]
      %v460 = vld [vmem:[%s402 + $0x50] sm:$0xff]
      %v461 = vld [vmem:[%s402 + $0x58] sm:$0xff]
      %v462 = vld [vmem:[%s402 + $0x60] sm:$0xff]
      %v463 = vld [vmem:[%s402 + $0x68] sm:$0xff]
      %v464 = vld [vmem:[%s402 + $0x70] sm:$0xff]
      %v465 = vld [vmem:[%s402 + $0x78] sm:$0xff]
      %v466 = vld [vmem:[%s424] sm:$0xff]
      %v467 = vld [vmem:[%s424 + $0x8] sm:$0xff]
      %v468 = vld [vmem:[%s424 + $0x10] sm:$0xff]
      %v469 = vld [vmem:[%s424 + $0x18] sm:$0xff]
      %v470 = vld [vmem:[%s424 + $0x20] sm:$0xff]
      %v471 = vld [vmem:[%s424 + $0x28] sm:$0xff]
      %v472 = vld [vmem:[%s424 + $0x30] sm:$0xff]
      %v473 = vld [vmem:[%s424 + $0x38] sm:$0xff]
      %475 = vset.pattern.permute.xlu0 0
      %476 = vperm.xlu0 %475, %v466
      %v477 = vpop.permute.xlu0 %476
      %480 = vset.pattern.permute.xlu0 0
      %481 = vperm.xlu0 %480, %v467
      %v482 = vpop.permute.xlu0 %481
      %485 = vset.pattern.permute.xlu0 0
      %486 = vperm.xlu0 %485, %v468
      %v487 = vpop.permute.xlu0 %486
      %490 = vset.pattern.permute.xlu0 0
      %491 = vperm.xlu0 %490, %v469
      %v492 = vpop.permute.xlu0 %491
      %495 = vset.pattern.permute.xlu0 0
      %496 = vperm.xlu0 %495, %v470
      %v497 = vpop.permute.xlu0 %496
      %500 = vset.pattern.permute.xlu0 0
      %501 = vperm.xlu0 %500, %v471
      %v502 = vpop.permute.xlu0 %501
      %505 = vset.pattern.permute.xlu0 0
      %506 = vperm.xlu0 %505, %v472
      %v507 = vpop.permute.xlu0 %506
      %510 = vset.pattern.permute.xlu0 0
      %511 = vperm.xlu0 %510, %v473
      %v512 = vpop.permute.xlu0 %511
      %v514 = vmul.f32 %v450, %v477
      %v515 = vmul.f32 %v451, %v477
      %v516 = vmul.f32 %v452, %v482
      %v517 = vmul.f32 %v453, %v482
      %v518 = vmul.f32 %v454, %v487
      %v519 = vmul.f32 %v455, %v487
      %v520 = vmul.f32 %v456, %v492
      %v521 = vmul.f32 %v457, %v492
      %v522 = vmul.f32 %v458, %v497
      %v523 = vmul.f32 %v459, %v497
      %v524 = vmul.f32 %v460, %v502
      %v525 = vmul.f32 %v461, %v502
      %v526 = vmul.f32 %v462, %v507
      %v527 = vmul.f32 %v463, %v507
      %v528 = vmul.f32 %v464, %v512
      %v529 = vmul.f32 %v465, %v512
      %v530 = vld [vmem:[%s434] sm:$0xff]
      %v531 = vld [vmem:[%s434 + $0x8] sm:$0xff]
      %v532 = vld [vmem:[%s434 + $0x10] sm:$0xff]
      %v533 = vld [vmem:[%s434 + $0x18] sm:$0xff]
      %v534 = vld [vmem:[%s434 + $0x20] sm:$0xff]
      %v535 = vld [vmem:[%s434 + $0x28] sm:$0xff]
      %v536 = vld [vmem:[%s434 + $0x30] sm:$0xff]
      %v537 = vld [vmem:[%s434 + $0x38] sm:$0xff]
      %539 = vset.pattern.permute.xlu0 0
      %540 = vperm.xlu0 %539, %v530
      %v541 = vpop.permute.xlu0 %540
      %544 = vset.pattern.permute.xlu0 0
      %545 = vperm.xlu0 %544, %v531
      %v546 = vpop.permute.xlu0 %545
      %549 = vset.pattern.permute.xlu0 0
      %550 = vperm.xlu0 %549, %v532
      %v551 = vpop.permute.xlu0 %550
      %554 = vset.pattern.permute.xlu0 0
      %555 = vperm.xlu0 %554, %v533
      %v556 = vpop.permute.xlu0 %555
      %559 = vset.pattern.permute.xlu0 0
      %560 = vperm.xlu0 %559, %v534
      %v561 = vpop.permute.xlu0 %560
      %564 = vset.pattern.permute.xlu0 0
      %565 = vperm.xlu0 %564, %v535
      %v566 = vpop.permute.xlu0 %565
      %569 = vset.pattern.permute.xlu0 0
      %570 = vperm.xlu0 %569, %v536
      %v571 = vpop.permute.xlu0 %570
      %574 = vset.pattern.permute.xlu0 0
      %575 = vperm.xlu0 %574, %v537
      %v576 = vpop.permute.xlu0 %575
      %v578 = vadd.f32 %v514, %v541
      %v579 = vadd.f32 %v515, %v541
      %v580 = vadd.f32 %v516, %v546
      %v581 = vadd.f32 %v517, %v546
      %v582 = vadd.f32 %v518, %v551
      %v583 = vadd.f32 %v519, %v551
      %v584 = vadd.f32 %v520, %v556
      %v585 = vadd.f32 %v521, %v556
      %v586 = vadd.f32 %v522, %v561
      %v587 = vadd.f32 %v523, %v561
      %v588 = vadd.f32 %v524, %v566
      %v589 = vadd.f32 %v525, %v566
      %v590 = vadd.f32 %v526, %v571
      %v591 = vadd.f32 %v527, %v571
      %v592 = vadd.f32 %v528, %v576
      %v593 = vadd.f32 %v529, %v576
      %v594 = vlaneseq
      %v595 = vand.u32 %v594, 127
      %v596 = vadd.s32 %v595, 128
      %vm597 = vcmp.ge.s32.totalorder %v595, 1
      %vm598 = vcmp.ge.s32.totalorder %v596, 1
      %vm599 = vcmp.lt.s32.totalorder %v595, 22
      %vm600 = vcmp.lt.s32.totalorder %v596, 22
      %vm601 = vmand %vm597, %vm599
      %vm602 = vmand %vm598, %vm600
      %v603 = vsel %vm601, %v578, 0.0
      %v604 = vsel %vm602, %v579, 0.0
      %v605 = vsel %vm601, %v580, 0.0
      %v606 = vsel %vm602, %v581, 0.0
      %v607 = vsel %vm601, %v582, 0.0
      %v608 = vsel %vm602, %v583, 0.0
      %v609 = vsel %vm601, %v584, 0.0
      %v610 = vsel %vm602, %v585, 0.0
      %v611 = vsel %vm601, %v586, 0.0
      %v612 = vsel %vm602, %v587, 0.0
      %v613 = vsel %vm601, %v588, 0.0
      %v614 = vsel %vm602, %v589, 0.0
      %v615 = vsel %vm601, %v590, 0.0
      %v616 = vsel %vm602, %v591, 0.0
      %v617 = vsel %vm601, %v592, 0.0
      %v618 = vsel %vm602, %v593, 0.0
      %v619 = vld [vmem:[%s408] sm:$0xff]
      %v620 = vld [vmem:[%s408 + $0x8] sm:$0xff]
      %v621 = vld [vmem:[%s408 + $0x10] sm:$0xff]
      %v622 = vld [vmem:[%s408 + $0x18] sm:$0xff]
      %v623 = vld [vmem:[%s408 + $0x20] sm:$0xff]
      %v624 = vld [vmem:[%s408 + $0x28] sm:$0xff]
      %v625 = vld [vmem:[%s408 + $0x30] sm:$0xff]
      %v626 = vld [vmem:[%s408 + $0x38] sm:$0xff]
      %628 = vset.pattern.permute.xlu0 0
      %629 = vperm.xlu0 %628, %v619
      %v630 = vpop.permute.xlu0 %629
      %633 = vset.pattern.permute.xlu0 0
      %634 = vperm.xlu0 %633, %v620
      %v635 = vpop.permute.xlu0 %634
      %638 = vset.pattern.permute.xlu0 0
      %639 = vperm.xlu0 %638, %v621
      %v640 = vpop.permute.xlu0 %639
      %643 = vset.pattern.permute.xlu0 0
      %644 = vperm.xlu0 %643, %v622
      %v645 = vpop.permute.xlu0 %644
      %648 = vset.pattern.permute.xlu0 0
      %649 = vperm.xlu0 %648, %v623
      %v650 = vpop.permute.xlu0 %649
      %653 = vset.pattern.permute.xlu0 0
      %654 = vperm.xlu0 %653, %v624
      %v655 = vpop.permute.xlu0 %654
      %658 = vset.pattern.permute.xlu0 0
      %659 = vperm.xlu0 %658, %v625
      %v660 = vpop.permute.xlu0 %659
      %663 = vset.pattern.permute.xlu0 0
      %664 = vperm.xlu0 %663, %v626
      %v665 = vpop.permute.xlu0 %664
      %v667 = vmul.f32 %v603, %v630
      %v668 = vmul.f32 %v605, %v635
      %v669 = vmul.f32 %v607, %v640
      %v670 = vmul.f32 %v609, %v645
      %v671 = vmul.f32 %v611, %v650
      %v672 = vmul.f32 %v613, %v655
      %v673 = vmul.f32 %v615, %v660
      %v674 = vmul.f32 %v617, %v665
      %675 = vset.pattern.permute.xlu0 1
      %676 = vperm.xlu0 %675, %v619
      %v677 = vpop.permute.xlu0 %676
      %679 = vset.pattern.permute.xlu0 1
      %680 = vperm.xlu0 %679, %v620
      %v681 = vpop.permute.xlu0 %680
      %683 = vset.pattern.permute.xlu0 1
      %684 = vperm.xlu0 %683, %v621
      %v685 = vpop.permute.xlu0 %684
      %687 = vset.pattern.permute.xlu0 1
      %688 = vperm.xlu0 %687, %v622
      %v689 = vpop.permute.xlu0 %688
      %691 = vset.pattern.permute.xlu0 1
      %692 = vperm.xlu0 %691, %v623
      %v693 = vpop.permute.xlu0 %692
      %695 = vset.pattern.permute.xlu0 1
      %696 = vperm.xlu0 %695, %v624
      %v697 = vpop.permute.xlu0 %696
      %699 = vset.pattern.permute.xlu0 1
      %700 = vperm.xlu0 %699, %v625
      %v701 = vpop.permute.xlu0 %700
      %703 = vset.pattern.permute.xlu0 1
      %704 = vperm.xlu0 %703, %v626
      %v705 = vpop.permute.xlu0 %704
      %v707 = vmul.f32 %v603, %v677
      %v708 = vmul.f32 %v604, %v677
      %v709 = vmul.f32 %v605, %v681
      %v710 = vmul.f32 %v606, %v681
      %v711 = vmul.f32 %v607, %v685
      %v712 = vmul.f32 %v608, %v685
      %v713 = vmul.f32 %v609, %v689
      %v714 = vmul.f32 %v610, %v689
      %v715 = vmul.f32 %v611, %v693
      %v716 = vmul.f32 %v612, %v693
      %v717 = vmul.f32 %v613, %v697
      %v718 = vmul.f32 %v614, %v697
      %v719 = vmul.f32 %v615, %v701
      %v720 = vmul.f32 %v616, %v701
      %v721 = vmul.f32 %v617, %v705
      %v722 = vmul.f32 %v618, %v705
      %739 = vrot.lane.b32.xlu0 %v707, 127
      %v740 = vpop.permute.xlu0 %739
      %741 = vrot.lane.b32.xlu0 %v708, 127
      %v742 = vpop.permute.xlu0 %741
      %743 = vrot.lane.b32.xlu0 %v709, 127
      %v744 = vpop.permute.xlu0 %743
      %745 = vrot.lane.b32.xlu0 %v710, 127
      %v746 = vpop.permute.xlu0 %745
      %747 = vrot.lane.b32.xlu0 %v711, 127
      %v748 = vpop.permute.xlu0 %747
      %749 = vrot.lane.b32.xlu0 %v712, 127
      %v750 = vpop.permute.xlu0 %749
      %751 = vrot.lane.b32.xlu0 %v713, 127
      %v752 = vpop.permute.xlu0 %751
      %753 = vrot.lane.b32.xlu0 %v714, 127
      %v754 = vpop.permute.xlu0 %753
      %755 = vrot.lane.b32.xlu0 %v715, 127
      %v756 = vpop.permute.xlu0 %755
      %757 = vrot.lane.b32.xlu0 %v716, 127
      %v758 = vpop.permute.xlu0 %757
      %759 = vrot.lane.b32.xlu0 %v717, 127
      %v760 = vpop.permute.xlu0 %759
      %761 = vrot.lane.b32.xlu0 %v718, 127
      %v762 = vpop.permute.xlu0 %761
      %763 = vrot.lane.b32.xlu0 %v719, 127
      %v764 = vpop.permute.xlu0 %763
      %765 = vrot.lane.b32.xlu0 %v720, 127
      %v766 = vpop.permute.xlu0 %765
      %767 = vrot.lane.b32.xlu0 %v721, 127
      %v768 = vpop.permute.xlu0 %767
      %769 = vrot.lane.b32.xlu0 %v722, 127
      %v770 = vpop.permute.xlu0 %769
      %vm771 = vcmask 1039360
      %v772 = vsel %vm771, %v740, %v742
      %v773 = vsel %vm771, %v744, %v746
      %v774 = vsel %vm771, %v748, %v750
      %v775 = vsel %vm771, %v752, %v754
      %v776 = vsel %vm771, %v756, %v758
      %v777 = vsel %vm771, %v760, %v762
      %v778 = vsel %vm771, %v764, %v766
      %v779 = vsel %vm771, %v768, %v770
      %v788 = vadd.f32 %v667, %v772
      %v789 = vadd.f32 %v668, %v773
      %v790 = vadd.f32 %v669, %v774
      %v791 = vadd.f32 %v670, %v775
      %v792 = vadd.f32 %v671, %v776
      %v793 = vadd.f32 %v672, %v777
      %v794 = vadd.f32 %v673, %v778
      %v795 = vadd.f32 %v674, %v779
      %796 = vset.pattern.permute.xlu0 2
      %797 = vperm.xlu0 %796, %v619
      %v798 = vpop.permute.xlu0 %797
      %800 = vset.pattern.permute.xlu0 2
      %801 = vperm.xlu0 %800, %v620
      %v802 = vpop.permute.xlu0 %801
      %804 = vset.pattern.permute.xlu0 2
      %805 = vperm.xlu0 %804, %v621
      %v806 = vpop.permute.xlu0 %805
      %808 = vset.pattern.permute.xlu0 2
      %809 = vperm.xlu0 %808, %v622
      %v810 = vpop.permute.xlu0 %809
      %812 = vset.pattern.permute.xlu0 2
      %813 = vperm.xlu0 %812, %v623
      %v814 = vpop.permute.xlu0 %813
      %816 = vset.pattern.permute.xlu0 2
      %817 = vperm.xlu0 %816, %v624
      %v818 = vpop.permute.xlu0 %817
      %820 = vset.pattern.permute.xlu0 2
      %821 = vperm.xlu0 %820, %v625
      %v822 = vpop.permute.xlu0 %821
      %824 = vset.pattern.permute.xlu0 2
      %825 = vperm.xlu0 %824, %v626
      %v826 = vpop.permute.xlu0 %825
      %v828 = vmul.f32 %v603, %v798
      %v829 = vmul.f32 %v604, %v798
      %v830 = vmul.f32 %v605, %v802
      %v831 = vmul.f32 %v606, %v802
      %v832 = vmul.f32 %v607, %v806
      %v833 = vmul.f32 %v608, %v806
      %v834 = vmul.f32 %v609, %v810
      %v835 = vmul.f32 %v610, %v810
      %v836 = vmul.f32 %v611, %v814
      %v837 = vmul.f32 %v612, %v814
      %v838 = vmul.f32 %v613, %v818
      %v839 = vmul.f32 %v614, %v818
      %v840 = vmul.f32 %v615, %v822
      %v841 = vmul.f32 %v616, %v822
      %v842 = vmul.f32 %v617, %v826
      %v843 = vmul.f32 %v618, %v826
      %860 = vrot.lane.b32.xlu0 %v828, 126
      %v861 = vpop.permute.xlu0 %860
      %862 = vrot.lane.b32.xlu0 %v829, 126
      %v863 = vpop.permute.xlu0 %862
      %864 = vrot.lane.b32.xlu0 %v830, 126
      %v865 = vpop.permute.xlu0 %864
      %866 = vrot.lane.b32.xlu0 %v831, 126
      %v867 = vpop.permute.xlu0 %866
      %868 = vrot.lane.b32.xlu0 %v832, 126
      %v869 = vpop.permute.xlu0 %868
      %870 = vrot.lane.b32.xlu0 %v833, 126
      %v871 = vpop.permute.xlu0 %870
      %872 = vrot.lane.b32.xlu0 %v834, 126
      %v873 = vpop.permute.xlu0 %872
      %874 = vrot.lane.b32.xlu0 %v835, 126
      %v875 = vpop.permute.xlu0 %874
      %876 = vrot.lane.b32.xlu0 %v836, 126
      %v877 = vpop.permute.xlu0 %876
      %878 = vrot.lane.b32.xlu0 %v837, 126
      %v879 = vpop.permute.xlu0 %878
      %880 = vrot.lane.b32.xlu0 %v838, 126
      %v881 = vpop.permute.xlu0 %880
      %882 = vrot.lane.b32.xlu0 %v839, 126
      %v883 = vpop.permute.xlu0 %882
      %884 = vrot.lane.b32.xlu0 %v840, 126
      %v885 = vpop.permute.xlu0 %884
      %886 = vrot.lane.b32.xlu0 %v841, 126
      %v887 = vpop.permute.xlu0 %886
      %888 = vrot.lane.b32.xlu0 %v842, 126
      %v889 = vpop.permute.xlu0 %888
      %890 = vrot.lane.b32.xlu0 %v843, 126
      %v891 = vpop.permute.xlu0 %890
      %vm892 = vcmask 1031168
      %v893 = vsel %vm892, %v861, %v863
      %v894 = vsel %vm892, %v865, %v867
      %v895 = vsel %vm892, %v869, %v871
      %v896 = vsel %vm892, %v873, %v875
      %v897 = vsel %vm892, %v877, %v879
      %v898 = vsel %vm892, %v881, %v883
      %v899 = vsel %vm892, %v885, %v887
      %v900 = vsel %vm892, %v889, %v891
      %v909 = vadd.f32 %v788, %v893
      %v910 = vadd.f32 %v789, %v894
      %v911 = vadd.f32 %v790, %v895
      %v912 = vadd.f32 %v791, %v896
      %v913 = vadd.f32 %v792, %v897
      %v914 = vadd.f32 %v793, %v898
      %v915 = vadd.f32 %v794, %v899
      %v916 = vadd.f32 %v795, %v900
      %v917 = vld [vmem:[%s414] sm:$0xff]
      %v918 = vld [vmem:[%s414 + $0x8] sm:$0xff]
      %v919 = vld [vmem:[%s414 + $0x10] sm:$0xff]
      %v920 = vld [vmem:[%s414 + $0x18] sm:$0xff]
      %v921 = vld [vmem:[%s414 + $0x20] sm:$0xff]
      %v922 = vld [vmem:[%s414 + $0x28] sm:$0xff]
      %v923 = vld [vmem:[%s414 + $0x30] sm:$0xff]
      %v924 = vld [vmem:[%s414 + $0x38] sm:$0xff]
      %926 = vset.pattern.permute.xlu0 0
      %927 = vperm.xlu0 %926, %v917
      %v928 = vpop.permute.xlu0 %927
      %931 = vset.pattern.permute.xlu0 0
      %932 = vperm.xlu0 %931, %v918
      %v933 = vpop.permute.xlu0 %932
      %936 = vset.pattern.permute.xlu0 0
      %937 = vperm.xlu0 %936, %v919
      %v938 = vpop.permute.xlu0 %937
      %941 = vset.pattern.permute.xlu0 0
      %942 = vperm.xlu0 %941, %v920
      %v943 = vpop.permute.xlu0 %942
      %946 = vset.pattern.permute.xlu0 0
      %947 = vperm.xlu0 %946, %v921
      %v948 = vpop.permute.xlu0 %947
      %951 = vset.pattern.permute.xlu0 0
      %952 = vperm.xlu0 %951, %v922
      %v953 = vpop.permute.xlu0 %952
      %956 = vset.pattern.permute.xlu0 0
      %957 = vperm.xlu0 %956, %v923
      %v958 = vpop.permute.xlu0 %957
      %961 = vset.pattern.permute.xlu0 0
      %962 = vperm.xlu0 %961, %v924
      %v963 = vpop.permute.xlu0 %962
      %v965 = vadd.f32 %v909, %v928
      %v966 = vadd.f32 %v910, %v933
      %v967 = vadd.f32 %v911, %v938
      %v968 = vadd.f32 %v912, %v943
      %v969 = vadd.f32 %v913, %v948
      %v970 = vadd.f32 %v914, %v953
      %v971 = vadd.f32 %v915, %v958
      %v972 = vadd.f32 %v916, %v963
      %v973 = vld [vmem:[#allocation2] sm:$0x1]
      %vm974 = vcmp.ge.f32.partialorder %v965, 0.0
      %vm975 = vcmp.ge.f32.partialorder %v966, 0.0
      %vm976 = vcmp.ge.f32.partialorder %v967, 0.0
      %vm977 = vcmp.ge.f32.partialorder %v968, 0.0
      %vm978 = vcmp.ge.f32.partialorder %v969, 0.0
      %vm979 = vcmp.ge.f32.partialorder %v970, 0.0
      %vm980 = vcmp.ge.f32.partialorder %v971, 0.0
      %vm981 = vcmp.ge.f32.partialorder %v972, 0.0
      %v983 = vperm.slane %v973, 0
      %984 = vset.pattern.permute.xlu0 0
      %985 = vperm.xlu0 %984, %v983
      %v986 = vpop.permute.xlu0 %985
      %v988 = vmul.f32 %v986, %v965
      %v989 = vmul.f32 %v986, %v966
      %v990 = vmul.f32 %v986, %v967
      %v991 = vmul.f32 %v986, %v968
      %v992 = vmul.f32 %v986, %v969
      %v993 = vmul.f32 %v986, %v970
      %v994 = vmul.f32 %v986, %v971
      %v995 = vmul.f32 %v986, %v972
      %v996 = vsel %vm974, %v965, %v988
      %v997 = vsel %vm975, %v966, %v989
      %v998 = vsel %vm976, %v967, %v990
      %v999 = vsel %vm977, %v968, %v991
      %v1000 = vsel %vm978, %v969, %v992
      %v1001 = vsel %vm979, %v970, %v993
      %v1002 = vsel %vm980, %v971, %v994
      %v1003 = vsel %vm981, %v972, %v995
      %vm1004 = vcmp.lt.s32.totalorder %v595, 21
      %v1005 = vsel %vm1004, %v996, 0.0
      %v1006 = vsel %vm1004, %v997, 0.0
      %v1007 = vsel %vm1004, %v998, 0.0
      %v1008 = vsel %vm1004, %v999, 0.0
      %v1009 = vsel %vm1004, %v1000, 0.0
      %v1010 = vsel %vm1004, %v1001, 0.0
      %v1011 = vsel %vm1004, %v1002, 0.0
      %v1012 = vsel %vm1004, %v1003, 0.0
      %1013 = vst [vmem:[%s444] sm:$0xff] %v1005
      %1014 = vst [vmem:[%s444 + $0x8] sm:$0xff] %v1006
      %1015 = vst [vmem:[%s444 + $0x10] sm:$0xff] %v1007
      %1016 = vst [vmem:[%s444 + $0x18] sm:$0xff] %v1008
      %1017 = vst [vmem:[%s444 + $0x20] sm:$0xff] %v1009
      %1018 = vst [vmem:[%s444 + $0x28] sm:$0xff] %v1010
      %1019 = vst [vmem:[%s444 + $0x30] sm:$0xff] %v1011
      %1020 = vst [vmem:[%s444 + $0x38] sm:$0xff] %v1012
      %v1021 = vadd.f32 %v1005, %v1006
      %v1022 = vadd.f32 %v1021, %v1007
      %v1023 = vadd.f32 %v1022, %v1008
      %v1024 = vadd.f32 %v1023, %v1009
      %v1025 = vadd.f32 %v1024, %v1010
      %v1026 = vadd.f32 %v1025, %v1011
      %v1027 = vadd.f32 %v1026, %v1012
      %1028 = vadd.xlane.f32.xlu0 %v1027
      %v1029 = vpop.xlane.xlu0 %1028
      %v1030 = vrot.slane %v1029, 4
      %v1031 = vadd.f32 %v1029, %v1030
      %v1032 = vrot.slane %v1031, 2
      %v1033 = vadd.f32 %v1031, %v1032
      %v1034 = vrot.slane %v1033, 1
      %v1035 = vadd.f32 %v1033, %v1034
      %s1036 = vtos %v1035
      %v1037 = vmul.f32 %v1005, %v1005
      %v1038 = vmul.f32 %v1006, %v1006
      %v1039 = vmul.f32 %v1007, %v1007
      %v1040 = vmul.f32 %v1008, %v1008
      %v1041 = vmul.f32 %v1009, %v1009
      %v1042 = vmul.f32 %v1010, %v1010
      %v1043 = vmul.f32 %v1011, %v1011
      %v1044 = vmul.f32 %v1012, %v1012
      %v1045 = vadd.f32 %v1037, %v1038
      %v1046 = vadd.f32 %v1045, %v1039
      %v1047 = vadd.f32 %v1046, %v1040
      %v1048 = vadd.f32 %v1047, %v1041
      %v1049 = vadd.f32 %v1048, %v1042
      %v1050 = vadd.f32 %v1049, %v1043
      %v1051 = vadd.f32 %v1050, %v1044
      %1052 = vadd.xlane.f32.xlu0 %v1051
      %v1053 = vpop.xlane.xlu0 %1052
      %v1054 = vrot.slane %v1053, 4
      %v1055 = vadd.f32 %v1053, %v1054
      %v1056 = vrot.slane %v1055, 2
      %v1057 = vadd.f32 %v1055, %v1056
      %v1058 = vrot.slane %v1057, 1
      %v1059 = vadd.f32 %v1057, %v1058
      %s1060 = vtos %v1059
      %v1061 = vlaneseq
      %v1062 = vshrl.u32 %v1061, 7
      %vm1063 = vcmp.eq.s32.totalorder %v1062, 0
      %v1064 = vstv %s1036
      %v1065 = vstv %s1060
      %v1066 = vsel %vm1063, %v1064, %v1065
      %p1067 = scmp.eq.s32.totalorder %s26, 0
      // Predicated region
      $region45: #{convtasnet_separator_forward.19} parent=43 // pred_check
        %p1068 = pneg %p1067
      $region46: #{convtasnet_separator_forward.19} parent=43 // pred_check_branch
        %1070 = sbr.rel (%p1068) target = $region48
      $region47: #{convtasnet_separator_forward.19} parent=43 // pred_region
        %1071 = vst [vmem:[%s449] sm:$0x3] %v1066
      $region48: #{convtasnet_separator_forward.19} parent=43 // pred_fallthru
        _
      %p1072 = scmp.gt.s32.totalorder %s26, 0
      // Predicated region
      $region49: #{convtasnet_separator_forward.19} parent=43 // pred_check
        %p1073 = pneg %p1072
      $region50: #{convtasnet_separator_forward.19} parent=43 // pred_check_branch
        %1075 = sbr.rel (%p1073) target = $region52
      $region51: #{convtasnet_separator_forward.19} parent=43 // pred_region
        %v1076 = vld [vmem:[%s449] sm:$0x3]
        %v1077 = vadd.f32 %v1076, %v1066
        %1078 = vst [vmem:[%s449] sm:$0x3] %v1077
      $region52: #{convtasnet_separator_forward.19} parent=43 // pred_fallthru
        _
      %s1079 = smul.u32 8, %s26
      %p1080 = scmp.lt.s32.totalorder %s25, 1
      %s1081 = scalar_select %p1080, %s25, 1
      %p1082 = scmp.lt.s32.totalorder %s1079, 7
      %s1083 = scalar_select %p1082, %s1079, 7
      %s1084 = smul.addr %s1081, 8
      %s1085 = sadd.s32 %s1083, %s1084
      %s1086 = smul.addr %s1085, 8
      %s1087 = scalar_lea.vmem %s6, %s1086
      %p1088 = scmp.lt.s32.totalorder %s25, 1
      %s1089 = scalar_select %p1088, %s25, 1
      %s1090 = smul.addr %s1089, 2
      %s1091 = scalar_lea.vmem %s7, %s1090
      // Predicated region
      $region53: #{convtasnet_separator_forward.19} parent=43 // pred_check
        %p1092 = pneg %p210
      $region54: #{convtasnet_separator_forward.19} parent=43 // pred_check_branch
        %1094 = sbr.rel (%p1092) target = $region56
      $region55: #{convtasnet_separator_forward.19} parent=43 // pred_region
        %s1095 = smul.u32 8, %s26
      $region56: #{convtasnet_separator_forward.19} parent=43 // pred_fallthru
        _
      // Predicated region
      $region57: #{convtasnet_separator_forward.19} parent=43 // pred_check
        %p1096 = pneg %p236
      $region58: #{convtasnet_separator_forward.19} parent=43 // pred_check_branch
        %1098 = sbr.rel (%p1096) target = $region60
      $region59: #{convtasnet_separator_forward.19} parent=43 // pred_region
        _
      $region60: #{convtasnet_separator_forward.19} parent=43 // pred_fallthru
        _
    $region44: #{convtasnet_separator_forward.19} parent=5 // pred_fallthru
      _
    %p1099 = scmp.le.s32.totalorder 2, %s16
    // Predicated region
    $region61: #{convtasnet_separator_forward.19} parent=5 // pred_check
      %p1100 = pneg %p1099
    $region62: #{convtasnet_separator_forward.19} parent=5 // pred_check_branch
      %1102 = sbr.rel (%p1100) target = $region64
    $region63: #{convtasnet_separator_forward.19} parent=5 // pred_region
      %s1103 = ssub.s32 %s16, 2
      // Predicated region
      $region65: #{convtasnet_separator_forward.19} parent=63 // pred_check
        %p1104 = pneg %p216
      $region66: #{convtasnet_separator_forward.19} parent=63 // pred_check_branch
        %1106 = sbr.rel (%p1104) target = $region68
      $region67: #{convtasnet_separator_forward.19} parent=63 // pred_region
        %s1107 = smul.u32 8, %s28
        %p1108 = scmp.lt.s32.totalorder %s27, 1
        %s1109 = scalar_select %p1108, %s27, 1
        %p1110 = scmp.lt.s32.totalorder %s1107, 7
        %s1111 = scalar_select %p1110, %s1107, 7
        %s1112 = smul.addr %s1109, 8
        %s1113 = sadd.s32 %s1111, %s1112
        %s1114 = smul.addr %s1113, 8
        %s1115 = scalar_lea.vmem %s6, %s1114
      $region68: #{convtasnet_separator_forward.19} parent=63 // pred_fallthru
        _
      // Predicated region
      $region69: #{convtasnet_separator_forward.19} parent=63 // pred_check
        %p1116 = pneg %p242
      $region70: #{convtasnet_separator_forward.19} parent=63 // pred_check_branch
        %1118 = sbr.rel (%p1116) target = $region72
      $region71: #{convtasnet_separator_forward.19} parent=63 // pred_region
        %p1119 = scmp.lt.s32.totalorder %s27, 1
        %s1120 = scalar_select %p1119, %s27, 1
        %s1121 = smul.addr %s1120, 2
        %s1122 = scalar_lea.vmem %s7, %s1121
      $region72: #{convtasnet_separator_forward.19} parent=63 // pred_fallthru
        _
    $region64: #{convtasnet_separator_forward.19} parent=5 // pred_fallthru
      _
  $region6: #{convtasnet_separator_forward.19} parent=0 // loop_footer
    %s20 = sadd.s32 1, %s16
  $region7: #{convtasnet_separator_forward.19} parent=0 // loop_footer_branch
    %15 = sbr.rel target = $region3
  $region8: #{convtasnet_separator_forward.19} parent=0 // loop_exit
    _

// kernel: convtasnet_separator_forward.20
$region0: #{convtasnet_separator_forward.20}
  #allocation0 [shape = 'u32[]', space=smem, size = 0x4, offset = 0x4, fixed_abs, tag = 'smem constant byte address 0x4 - core index']
  #allocation1 [shape = 'u32[72,128]{1,0:T(1,128)}', space=vmem, size = 0x9000, scoped, tag = 'internal scratch']
  #allocation2 [shape = 'f32[1,1]{1,0:T(1,128)S(1)}', space=vmem, size = 0x200, scoped, tag = 'scoped memory for convtasnet_separator_forward.20']
  %s0 = inlined_call_operand.vmem [shape: f32[2,64,128], index: 0, kind: input, shape index: {}]
  %s1 = inlined_call_operand.vmem [shape: bf16[64,64], index: 1, kind: input, shape index: {}]
  %s2 = inlined_call_operand.vmem [shape: f32[64,1], index: 2, kind: input, shape index: {}]
  %s3 = inlined_call_operand.vmem [shape: f32[2,64,1], index: 3, kind: input, shape index: {}]
  %s4 = inlined_call_operand.vmem [shape: f32[2,64,1], index: 4, kind: input, shape index: {}]
  %s5 = inlined_call_operand.<no memory space> [shape: f32[1,1], index: 5, kind: input, shape index: {}]
  %s6 = inlined_call_operand.vmem [shape: f32[2,64,128], index: 6, kind: output, shape index: {}]
  %s7 = sld [smem:[#allocation0]]
  $region57: #{convtasnet_separator_forward.20} parent=0
    _
  %s9 = ssub.s32 1, %s7
  %s10 = scalar_select 0, %s9, %s7
  %v11 = vstv %s5
  %12 = vst [vmem:[#allocation2] sm:$0x1] %v11
  loop: start=0, step=1, limit=4
  $region2: #{convtasnet_separator_forward.20} parent=0 // loop_pre_header
    _
  $region3: #{convtasnet_separator_forward.20} parent=0 // loop_header
    %s14 = sphi 0, %s18
    %p15 = scmp.ge.s32.totalorder %s14, 4
    %s21 = sphi 0, %s33
    %s22 = sphi 0, %s29
    %s23 = sphi 0, %s21
    %s24 = sphi 0, %s22
    %s25 = sphi 0, %s23
    %s26 = sphi 0, %s24
    %s38 = sphi 0, %s40
    %s41 = sphi 0, %s38
    %s42 = sphi 0, %s41
    %s58 = sphi 0, %s42
    %s62 = sphi 0, %s62
    %s64 = sphi 0, %s62
    %s65 = sphi 0, %s64
    %s79 = sphi 0, %s65
    %s83 = sphi 0, %s83
    %s85 = sphi 0, %s83
    %s86 = sphi 0, %s85
    %s100 = sphi 0, %s86
    %s106 = sphi 0, %s108
    %s109 = sphi 0, %s106
    %s110 = sphi 0, %s109
    %s126 = sphi 0, %s110
    %s132 = sphi 0, %s134
    %s135 = sphi 0, %s132
    %s136 = sphi 0, %s135
    %s152 = sphi 0, %s136
    %s156 = sphi 0, %s156
    %s158 = sphi 0, %s156
    %s159 = sphi 0, %s158
    %s173 = sphi 0, %s159
    %s181 = sphi 0, %s183
    %s184 = sphi 0, %s181
    %s185 = sphi 0, %s184
    %s201 = sphi 0, %s185
  $region4: #{convtasnet_separator_forward.20} parent=0 // loop_header_branch
    %17 = sbr.rel (%p15) target = $region8
  $region5: #{convtasnet_separator_forward.20} parent=0 // loop_body
    %s19 = ssub.s32 %s14, 1
    %s20 = ssub.s32 %s14, 2
    %s27 = sadd.s32 1, %s22
    %p28 = scmp.ge.s32.totalorder %s27, 1
    %s29 = scalar_select %p28, 0, %s27
    %s30 = sadd.s32 1, %s21
    %s31 = scalar_select %p28, %s30, %s21
    %p32 = scmp.ge.s32.totalorder %s31, 2
    %s33 = scalar_select %p32, 0, %s31
    %s34 = ssub.s32 %s21, %s33
    %s35 = ssub.s32 %s22, %s29
    %s36 = sor.u32 %s34, %s35
    %p37 = scmp.eq.s32.totalorder %s36, 0
    %s39 = sadd.s32 %s38, 1
    %s40 = scalar_select %p37, %s38, %s39
    %p43 = pneg %p37
    %p44 = scmp.eq.s32.totalorder %s14, 1
    %p45 = por %p43, %p44
    %p46 = scmp.ne.s32.totalorder %s38, %s41
    %p47 = scmp.eq.s32.totalorder %s14, 0
    %p48 = por %p46, %p47
    %p49 = scmp.ne.s32.totalorder %s38, %s41
    %p50 = scmp.eq.s32.totalorder %s19, 1
    %p51 = por %p49, %p50
    %p52 = scmp.ne.s32.totalorder %s41, %s42
    %p53 = scmp.eq.s32.totalorder %s19, 0
    %p54 = por %p52, %p53
    %p55 = scmp.ne.s32.totalorder %s41, %s42
    %p56 = scmp.eq.s32.totalorder %s20, 1
    %p57 = por %p55, %p56
    %p59 = scmp.ne.s32.totalorder %s42, %s58
    %p60 = scmp.eq.s32.totalorder %s20, 0
    %p61 = por %p59, %p60
    %s63 = sadd.s32 %s62, 1
    %p66 = scmp.eq.s32.totalorder %s14, 1
    %p67 = scmp.ne.s32.totalorder %s62, %s64
    %p68 = scmp.eq.s32.totalorder %s14, 0
    %p69 = por %p67, %p68
    %p70 = scmp.ne.s32.totalorder %s62, %s64
    %p71 = scmp.eq.s32.totalorder %s19, 1
    %p72 = por %p70, %p71
    %p73 = scmp.ne.s32.totalorder %s64, %s65
    %p74 = scmp.eq.s32.totalorder %s19, 0
    %p75 = por %p73, %p74
    %p76 = scmp.ne.s32.totalorder %s64, %s65
    %p77 = scmp.eq.s32.totalorder %s20, 1
    %p78 = por %p76, %p77
    %p80 = scmp.ne.s32.totalorder %s65, %s79
    %p81 = scmp.eq.s32.totalorder %s20, 0
    %p82 = por %p80, %p81
    %s84 = sadd.s32 %s83, 1
    %p87 = scmp.eq.s32.totalorder %s14, 1
    %p88 = scmp.ne.s32.totalorder %s83, %s85
    %p89 = scmp.eq.s32.totalorder %s14, 0
    %p90 = por %p88, %p89
    %p91 = scmp.ne.s32.totalorder %s83, %s85
    %p92 = scmp.eq.s32.totalorder %s19, 1
    %p93 = por %p91, %p92
    %p94 = scmp.ne.s32.totalorder %s85, %s86
    %p95 = scmp.eq.s32.totalorder %s19, 0
    %p96 = por %p94, %p95
    %p97 = scmp.ne.s32.totalorder %s85, %s86
    %p98 = scmp.eq.s32.totalorder %s20, 1
    %p99 = por %p97, %p98
    %p101 = scmp.ne.s32.totalorder %s86, %s100
    %p102 = scmp.eq.s32.totalorder %s20, 0
    %p103 = por %p101, %p102
    %s104 = ssub.s32 %s21, %s33
    %p105 = scmp.eq.s32.totalorder %s104, 0
    %s107 = sadd.s32 %s106, 1
    %s108 = scalar_select %p105, %s106, %s107
    %p111 = pneg %p105
    %p112 = scmp.eq.s32.totalorder %s14, 1
    %p113 = por %p111, %p112
    %p114 = scmp.ne.s32.totalorder %s106, %s109
    %p115 = scmp.eq.s32.totalorder %s14, 0
    %p116 = por %p114, %p115
    %p117 = scmp.ne.s32.totalorder %s106, %s109
    %p118 = scmp.eq.s32.totalorder %s19, 1
    %p119 = por %p117, %p118
    %p120 = scmp.ne.s32.totalorder %s109, %s110
    %p121 = scmp.eq.s32.totalorder %s19, 0
    %p122 = por %p120, %p121
    %p123 = scmp.ne.s32.totalorder %s109, %s110
    %p124 = scmp.eq.s32.totalorder %s20, 1
    %p125 = por %p123, %p124
    %p127 = scmp.ne.s32.totalorder %s110, %s126
    %p128 = scmp.eq.s32.totalorder %s20, 0
    %p129 = por %p127, %p128
    %s130 = ssub.s32 %s21, %s33
    %p131 = scmp.eq.s32.totalorder %s130, 0
    %s133 = sadd.s32 %s132, 1
    %s134 = scalar_select %p131, %s132, %s133
    %p137 = pneg %p131
    %p138 = scmp.eq.s32.totalorder %s14, 1
    %p139 = por %p137, %p138
    %p140 = scmp.ne.s32.totalorder %s132, %s135
    %p141 = scmp.eq.s32.totalorder %s14, 0
    %p142 = por %p140, %p141
    %p143 = scmp.ne.s32.totalorder %s132, %s135
    %p144 = scmp.eq.s32.totalorder %s19, 1
    %p145 = por %p143, %p144
    %p146 = scmp.ne.s32.totalorder %s135, %s136
    %p147 = scmp.eq.s32.totalorder %s19, 0
    %p148 = por %p146, %p147
    %p149 = scmp.ne.s32.totalorder %s135, %s136
    %p150 = scmp.eq.s32.totalorder %s20, 1
    %p151 = por %p149, %p150
    %p153 = scmp.ne.s32.totalorder %s136, %s152
    %p154 = scmp.eq.s32.totalorder %s20, 0
    %p155 = por %p153, %p154
    %s157 = sadd.s32 %s156, 1
    %p160 = scmp.eq.s32.totalorder %s14, 1
    %p161 = scmp.ne.s32.totalorder %s156, %s158
    %p162 = scmp.eq.s32.totalorder %s14, 0
    %p163 = por %p161, %p162
    %p164 = scmp.ne.s32.totalorder %s156, %s158
    %p165 = scmp.eq.s32.totalorder %s19, 1
    %p166 = por %p164, %p165
    %p167 = scmp.ne.s32.totalorder %s158, %s159
    %p168 = scmp.eq.s32.totalorder %s19, 0
    %p169 = por %p167, %p168
    %p170 = scmp.ne.s32.totalorder %s158, %s159
    %p171 = scmp.eq.s32.totalorder %s20, 1
    %p172 = por %p170, %p171
    %p174 = scmp.ne.s32.totalorder %s159, %s173
    %p175 = scmp.eq.s32.totalorder %s20, 0
    %p176 = por %p174, %p175
    %s177 = ssub.s32 %s21, %s33
    %s178 = ssub.s32 %s22, %s29
    %s179 = sor.u32 %s177, %s178
    %p180 = scmp.eq.s32.totalorder %s179, 0
    %s182 = sadd.s32 %s181, 1
    %s183 = scalar_select %p180, %s181, %s182
    %p186 = pneg %p180
    %p187 = scmp.eq.s32.totalorder %s14, 1
    %p188 = por %p186, %p187
    %p189 = scmp.ne.s32.totalorder %s181, %s184
    %p190 = scmp.eq.s32.totalorder %s14, 0
    %p191 = por %p189, %p190
    %p192 = scmp.ne.s32.totalorder %s181, %s184
    %p193 = scmp.eq.s32.totalorder %s19, 1
    %p194 = por %p192, %p193
    %p195 = scmp.ne.s32.totalorder %s184, %s185
    %p196 = scmp.eq.s32.totalorder %s19, 0
    %p197 = por %p195, %p196
    %p198 = scmp.ne.s32.totalorder %s184, %s185
    %p199 = scmp.eq.s32.totalorder %s20, 1
    %p200 = por %p198, %p199
    %p202 = scmp.ne.s32.totalorder %s185, %s201
    %p203 = scmp.eq.s32.totalorder %s20, 0
    %p204 = por %p202, %p203
    %p205 = scmp.le.s32.totalorder 1, %s14
    %p206 = scmp.lt.s32.totalorder %s14, 3
    %p207 = pnand %p205, %p206
    %p208 = pneg %p207
    // Predicated region
    $region9: #{convtasnet_separator_forward.20} parent=5 // pred_check
      _
    $region10: #{convtasnet_separator_forward.20} parent=5 // pred_check_branch
      %210 = sbr.rel (%p207) target = $region12
    $region11: #{convtasnet_separator_forward.20} parent=5 // pred_region
      %s211 = ssub.s32 %s14, 1
      // Predicated region
      $region13: #{convtasnet_separator_forward.20} parent=11 // pred_check
        %p212 = pneg %p75
      $region14: #{convtasnet_separator_forward.20} parent=11 // pred_check_branch
        %214 = sbr.rel (%p212) target = $region16
      $region15: #{convtasnet_separator_forward.20} parent=11 // pred_region
        _
      $region16: #{convtasnet_separator_forward.20} parent=11 // pred_fallthru
        _
      // Predicated region
      $region17: #{convtasnet_separator_forward.20} parent=11 // pred_check
        %p215 = pneg %p96
      $region18: #{convtasnet_separator_forward.20} parent=11 // pred_check_branch
        %217 = sbr.rel (%p215) target = $region20
      $region19: #{convtasnet_separator_forward.20} parent=11 // pred_region
        _
      $region20: #{convtasnet_separator_forward.20} parent=11 // pred_fallthru
        _
      // Predicated region
      $region21: #{convtasnet_separator_forward.20} parent=11 // pred_check
        %p218 = pneg %p169
      $region22: #{convtasnet_separator_forward.20} parent=11 // pred_check_branch
        %220 = sbr.rel (%p218) target = $region24
      $region23: #{convtasnet_separator_forward.20} parent=11 // pred_region
        _
      $region24: #{convtasnet_separator_forward.20} parent=11 // pred_fallthru
        _
    $region12: #{convtasnet_separator_forward.20} parent=5 // pred_fallthru
      _
    %p221 = scmp.lt.s32.totalorder %s14, 2
    // Predicated region
    $region25: #{convtasnet_separator_forward.20} parent=5 // pred_check
      %p222 = pneg %p221
    $region26: #{convtasnet_separator_forward.20} parent=5 // pred_check_branch
      %224 = sbr.rel (%p222) target = $region28
    $region27: #{convtasnet_separator_forward.20} parent=5 // pred_region
      // Predicated region
      $region29: #{convtasnet_separator_forward.20} parent=27 // pred_check
        %p225 = pneg %p48
      $region30: #{convtasnet_separator_forward.20} parent=27 // pred_check_branch
        %227 = sbr.rel (%p225) target = $region32
      $region31: #{convtasnet_separator_forward.20} parent=27 // pred_region
        %p228 = scmp.lt.s32.totalorder %s21, 1
        %s229 = scalar_select %p228, %s21, 1
        %p230 = scmp.lt.s32.totalorder %s22, 0
        %s231 = scalar_select %p230, %s22, 0
        %s232 = smul.addr %s229, 8
        %s233 = sadd.s32 %s231, %s232
        %s234 = smul.addr %s233, 8
        %s235 = scalar_lea.vmem %s0, %s234
      $region32: #{convtasnet_separator_forward.20} parent=27 // pred_fallthru
        _
      // Predicated region
      $region33: #{convtasnet_separator_forward.20} parent=27 // pred_check
        %p236 = pneg %p116
      $region34: #{convtasnet_separator_forward.20} parent=27 // pred_check_branch
        %238 = sbr.rel (%p236) target = $region36
      $region35: #{convtasnet_separator_forward.20} parent=27 // pred_region
        %p239 = scmp.lt.s32.totalorder %s21, 1
        %s240 = scalar_select %p239, %s21, 1
        %s241 = smul.addr %s240, 8
        %s242 = smul.addr %s241, 8
        %s243 = scalar_lea.vmem %s3, %s242
      $region36: #{convtasnet_separator_forward.20} parent=27 // pred_fallthru
        _
      // Predicated region
      $region37: #{convtasnet_separator_forward.20} parent=27 // pred_check
        %p244 = pneg %p142
      $region38: #{convtasnet_separator_forward.20} parent=27 // pred_check_branch
        %246 = sbr.rel (%p244) target = $region40
      $region39: #{convtasnet_separator_forward.20} parent=27 // pred_region
        %p247 = scmp.lt.s32.totalorder %s21, 1
        %s248 = scalar_select %p247, %s21, 1
        %s249 = smul.addr %s248, 8
        %s250 = smul.addr %s249, 8
        %s251 = scalar_lea.vmem %s4, %s250
      $region40: #{convtasnet_separator_forward.20} parent=27 // pred_fallthru
        _
    $region28: #{convtasnet_separator_forward.20} parent=5 // pred_fallthru
      _
    %p252 = scmp.le.s32.totalorder 1, %s14
    %p253 = scmp.lt.s32.totalorder %s14, 3
    %p254 = pnand %p252, %p253
    %p255 = pneg %p254
    // Predicated region
    $region41: #{convtasnet_separator_forward.20} parent=5 // pred_check
      _
    $region42: #{convtasnet_separator_forward.20} parent=5 // pred_check_branch
      %257 = sbr.rel (%p254) target = $region44
    $region43: #{convtasnet_separator_forward.20} parent=5 // pred_region
      %s258 = ssub.s32 %s14, 1
      %p259 = scmp.lt.s32.totalorder %s23, 1
      %s260 = scalar_select %p259, %s23, 1
      %p261 = scmp.lt.s32.totalorder %s24, 0
      %s262 = scalar_select %p261, %s24, 0
      %s263 = smul.addr %s260, 8
      %s264 = sadd.s32 %s262, %s263
      %s265 = smul.addr %s264, 8
      %s266 = scalar_lea.vmem %s0, %s265
      %p267 = pneg %p54
      %p268 = pneg %p51
      %p269 = pneg %p75
      %p270 = pneg %p72
      %p271 = pneg %p96
      %p272 = pneg %p93
      %p273 = scmp.lt.s32.totalorder %s23, 1
      %s274 = scalar_select %p273, %s23, 1
      %s275 = smul.addr %s274, 8
      %s276 = smul.addr %s275, 8
      %s277 = scalar_lea.vmem %s3, %s276
      %p278 = pneg %p122
      %p279 = pneg %p119
      %p280 = scmp.lt.s32.totalorder %s23, 1
      %s281 = scalar_select %p280, %s23, 1
      %s282 = smul.addr %s281, 8
      %s283 = smul.addr %s282, 8
      %s284 = scalar_lea.vmem %s4, %s283
      %p285 = pneg %p148
      %p286 = pneg %p145
      %p287 = pneg %p169
      %p288 = pneg %p166
      %p289 = pneg %p197
      %p290 = pneg %p194
      %p291 = scmp.lt.s32.totalorder %s23, 1
      %s292 = scalar_select %p291, %s23, 1
      %p293 = scmp.lt.s32.totalorder %s24, 0
      %s294 = scalar_select %p293, %s24, 0
      %s295 = smul.addr %s292, 8
      %s296 = sadd.s32 %s294, %s295
      %s297 = smul.addr %s296, 8
      %s298 = scalar_lea.vmem %s6, %s297
      %p299 = scmp.lt.s32.totalorder %s23, 1
      %s300 = scalar_select %p299, %s23, 1
      %p301 = scmp.lt.s32.totalorder %s24, 0
      %s302 = scalar_select %p301, %s24, 0
      %s303 = smul.addr %s300, 8
      %s304 = sadd.s32 %s302, %s303
      %s305 = smul.addr %s304, 8
      %s306 = scalar_lea.vmem %s0, %s305
      %p307 = scmp.lt.s32.totalorder %s23, 1
      %s308 = scalar_select %p307, %s23, 1
      %s309 = smul.addr %s308, 8
      %s310 = smul.addr %s309, 8
      %s311 = scalar_lea.vmem %s3, %s310
      %p312 = scmp.lt.s32.totalorder %s23, 1
      %s313 = scalar_select %p312, %s23, 1
      %s314 = smul.addr %s313, 8
      %s315 = smul.addr %s314, 8
      %s316 = scalar_lea.vmem %s4, %s315
      %p317 = scmp.lt.s32.totalorder %s23, 1
      %s318 = scalar_select %p317, %s23, 1
      %p319 = scmp.lt.s32.totalorder %s24, 0
      %s320 = scalar_select %p319, %s24, 0
      %s321 = smul.addr %s318, 8
      %s322 = sadd.s32 %s320, %s321
      %s323 = smul.addr %s322, 8
      %s324 = scalar_lea.vmem %s6, %s323
      %v326 = vld [vmem:[%s306] sm:$0xff]
      %v327 = vld [vmem:[%s306 + $0x8] sm:$0xff]
      %v328 = vld [vmem:[%s306 + $0x10] sm:$0xff]
      %v329 = vld [vmem:[%s306 + $0x18] sm:$0xff]
      %v330 = vld [vmem:[%s306 + $0x20] sm:$0xff]
      %v331 = vld [vmem:[%s306 + $0x28] sm:$0xff]
      %v332 = vld [vmem:[%s306 + $0x30] sm:$0xff]
      %v333 = vld [vmem:[%s306 + $0x38] sm:$0xff]
      %v334 = vld [vmem:[%s311] sm:$0xff]
      %v335 = vld [vmem:[%s311 + $0x8] sm:$0xff]
      %v336 = vld [vmem:[%s311 + $0x10] sm:$0xff]
      %v337 = vld [vmem:[%s311 + $0x18] sm:$0xff]
      %v338 = vld [vmem:[%s311 + $0x20] sm:$0xff]
      %v339 = vld [vmem:[%s311 + $0x28] sm:$0xff]
      %v340 = vld [vmem:[%s311 + $0x30] sm:$0xff]
      %v341 = vld [vmem:[%s311 + $0x38] sm:$0xff]
      %343 = vset.pattern.permute.xlu0 0
      %344 = vperm.xlu0 %343, %v334
      %v345 = vpop.permute.xlu0 %344
      %348 = vset.pattern.permute.xlu0 0
      %349 = vperm.xlu0 %348, %v335
      %v350 = vpop.permute.xlu0 %349
      %353 = vset.pattern.permute.xlu0 0
      %354 = vperm.xlu0 %353, %v336
      %v355 = vpop.permute.xlu0 %354
      %358 = vset.pattern.permute.xlu0 0
      %359 = vperm.xlu0 %358, %v337
      %v360 = vpop.permute.xlu0 %359
      %363 = vset.pattern.permute.xlu0 0
      %364 = vperm.xlu0 %363, %v338
      %v365 = vpop.permute.xlu0 %364
      %368 = vset.pattern.permute.xlu0 0
      %369 = vperm.xlu0 %368, %v339
      %v370 = vpop.permute.xlu0 %369
      %373 = vset.pattern.permute.xlu0 0
      %374 = vperm.xlu0 %373, %v340
      %v375 = vpop.permute.xlu0 %374
      %378 = vset.pattern.permute.xlu0 0
      %379 = vperm.xlu0 %378, %v341
      %v380 = vpop.permute.xlu0 %379
      %v382 = vmul.f32 %v326, %v345
      %v383 = vmul.f32 %v327, %v350
      %v384 = vmul.f32 %v328, %v355
      %v385 = vmul.f32 %v329, %v360
      %v386 = vmul.f32 %v330, %v365
      %v387 = vmul.f32 %v331, %v370
      %v388 = vmul.f32 %v332, %v375
      %v389 = vmul.f32 %v333, %v380
      %v390 = vld [vmem:[%s316] sm:$0xff]
      %v391 = vld [vmem:[%s316 + $0x8] sm:$0xff]
      %v392 = vld [vmem:[%s316 + $0x10] sm:$0xff]
      %v393 = vld [vmem:[%s316 + $0x18] sm:$0xff]
      %v394 = vld [vmem:[%s316 + $0x20] sm:$0xff]
      %v395 = vld [vmem:[%s316 + $0x28] sm:$0xff]
      %v396 = vld [vmem:[%s316 + $0x30] sm:$0xff]
      %v397 = vld [vmem:[%s316 + $0x38] sm:$0xff]
      %399 = vset.pattern.permute.xlu0 0
      %400 = vperm.xlu0 %399, %v390
      %v401 = vpop.permute.xlu0 %400
      %404 = vset.pattern.permute.xlu0 0
      %405 = vperm.xlu0 %404, %v391
      %v406 = vpop.permute.xlu0 %405
      %409 = vset.pattern.permute.xlu0 0
      %410 = vperm.xlu0 %409, %v392
      %v411 = vpop.permute.xlu0 %410
      %414 = vset.pattern.permute.xlu0 0
      %415 = vperm.xlu0 %414, %v393
      %v416 = vpop.permute.xlu0 %415
      %419 = vset.pattern.permute.xlu0 0
      %420 = vperm.xlu0 %419, %v394
      %v421 = vpop.permute.xlu0 %420
      %424 = vset.pattern.permute.xlu0 0
      %425 = vperm.xlu0 %424, %v395
      %v426 = vpop.permute.xlu0 %425
      %429 = vset.pattern.permute.xlu0 0
      %430 = vperm.xlu0 %429, %v396
      %v431 = vpop.permute.xlu0 %430
      %434 = vset.pattern.permute.xlu0 0
      %435 = vperm.xlu0 %434, %v397
      %v436 = vpop.permute.xlu0 %435
      %v438 = vadd.f32 %v382, %v401
      %v439 = vadd.f32 %v383, %v406
      %v440 = vadd.f32 %v384, %v411
      %v441 = vadd.f32 %v385, %v416
      %v442 = vadd.f32 %v386, %v421
      %v443 = vadd.f32 %v387, %v426
      %v444 = vadd.f32 %v388, %v431
      %v445 = vadd.f32 %v389, %v436
      %v446 = vld [vmem:[%s1] sm:$0xf]
      %v447 = vld [vmem:[%s1 + $0x4] sm:$0xf]
      %v448 = vld [vmem:[%s1 + $0x8] sm:$0xf]
      %v449 = vld [vmem:[%s1 + $0xc] sm:$0xf]
      %v450 = vld [vmem:[%s1 + $0x10] sm:$0xf]
      %v451 = vld [vmem:[%s1 + $0x14] sm:$0xf]
      %v452 = vld [vmem:[%s1 + $0x18] sm:$0xf]
      %v453 = vld [vmem:[%s1 + $0x1c] sm:$0xf]
      %v454 = vpack.c.bf16 %v439, %v438
      %v455 = vpack.c.bf16 %v441, %v440
      %v456 = vpack.c.bf16 %v443, %v442
      %v457 = vpack.c.bf16 %v445, %v444
      %v458 = vld [vmem:[%s2] sm:$0xff]
      %v459 = vld [vmem:[%s2 + $0x8] sm:$0xff]
      %v460 = vld [vmem:[%s2 + $0x10] sm:$0xff]
      %v461 = vld [vmem:[%s2 + $0x18] sm:$0xff]
      %v462 = vld [vmem:[%s2 + $0x20] sm:$0xff]
      %v463 = vld [vmem:[%s2 + $0x28] sm:$0xff]
      %v464 = vld [vmem:[%s2 + $0x30] sm:$0xff]
      %v465 = vld [vmem:[%s2 + $0x38] sm:$0xff]
      %467 = vset.pattern.permute.xlu0 0
      %468 = vperm.xlu0 %467, %v458
      %v469 = vpop.permute.xlu0 %468
      %472 = vset.pattern.permute.xlu0 0
      %473 = vperm.xlu0 %472, %v459
      %v474 = vpop.permute.xlu0 %473
      %477 = vset.pattern.permute.xlu0 0
      %478 = vperm.xlu0 %477, %v460
      %v479 = vpop.permute.xlu0 %478
      %482 = vset.pattern.permute.xlu0 0
      %483 = vperm.xlu0 %482, %v461
      %v484 = vpop.permute.xlu0 %483
      %487 = vset.pattern.permute.xlu0 0
      %488 = vperm.xlu0 %487, %v462
      %v489 = vpop.permute.xlu0 %488
      %492 = vset.pattern.permute.xlu0 0
      %493 = vperm.xlu0 %492, %v463
      %v494 = vpop.permute.xlu0 %493
      %497 = vset.pattern.permute.xlu0 0
      %498 = vperm.xlu0 %497, %v464
      %v499 = vpop.permute.xlu0 %498
      %502 = vset.pattern.permute.xlu0 0
      %503 = vperm.xlu0 %502, %v465
      %v504 = vpop.permute.xlu0 %503
      %v514 = vunpack.c.l.b16 %v446
      %v515 = vunpack.c.l.b16 %v447
      %v516 = vunpack.c.l.b16 %v448
      %v517 = vunpack.c.l.b16 %v449
      %v518 = vunpack.c.l.b16 %v450
      %v519 = vunpack.c.l.b16 %v451
      %v520 = vunpack.c.l.b16 %v452
      %v521 = vunpack.c.l.b16 %v453
      %v522 = vpack.c.b16 %v515, %v514
      %v523 = vpack.c.b16 %v517, %v516
      %v524 = vpack.c.b16 %v519, %v518
      %v525 = vpack.c.b16 %v521, %v520
      %vm526 = vcmask 523264
      %v528 = vsel %vm526, %v522, 0
      %v531 = vsel %vm526, %v523, 0
      %v534 = vsel %vm526, %v524, 0
      %v537 = vsel %vm526, %v525, 0
      %539 = vmatpush.bf16.msra.mxu0 0
      %540 = vmatpush.bf16.msra.mxu0 0
      %541 = vmatpush.bf16.msra.mxu0 0
      %542 = vmatpush.bf16.msra.mxu0 0
      %543 = vmatpush.bf16.msra.mxu0 %v457
      %544 = vmatpush.bf16.msra.mxu0 %v456
      %545 = vmatpush.bf16.msra.mxu0 %v455
      %546 = vmatpush.bf16.msra.mxu0 %v454
      %547 = vmatmul.bf16.gmra.mxu0 %v528
      %v548 = vpop.f32.mrf.mxu0
      %v549 = vadd.f32 %v469, %v548
      %v550 = vpop.f32.mrf.mxu0
      %v551 = vadd.f32 %v474, %v550
      %552 = vmatmul.bf16.gmra.mxu0 %v531
      %v553 = vpop.f32.mrf.mxu0
      %v554 = vadd.f32 %v479, %v553
      %v555 = vpop.f32.mrf.mxu0
      %v556 = vadd.f32 %v484, %v555
      %557 = vmatmul.bf16.gmra.mxu0 %v534
      %v558 = vpop.f32.mrf.mxu0
      %v559 = vadd.f32 %v489, %v558
      %v560 = vpop.f32.mrf.mxu0
      %v561 = vadd.f32 %v494, %v560
      %562 = vmatmul.bf16.gmra.mxu0 %v537
      %v563 = vpop.f32.mrf.mxu0
      %v564 = vadd.f32 %v499, %v563
      %v565 = vpop.f32.mrf.mxu0
      %v566 = vadd.f32 %v504, %v565
      %567 = vdwg.mxu0
      %s568 = smul.u32 %s24, 128
      %v569 = vlaneseq
      %v570 = vand.u32 %v569, 127
      %v571 = vstv %s568
      %v572 = vadd.s32 %v571, %v570
      %vm573 = vcmp.lt.s32.totalorder %v572, 21
      %v574 = vsel %vm573, %v549, 0.0
      %v575 = vsel %vm573, %v551, 0.0
      %v576 = vsel %vm573, %v554, 0.0
      %v577 = vsel %vm573, %v556, 0.0
      %v578 = vsel %vm573, %v559, 0.0
      %v579 = vsel %vm573, %v561, 0.0
      %v580 = vsel %vm573, %v564, 0.0
      %v581 = vsel %vm573, %v566, 0.0
      %582 = vst [vmem:[%s324] sm:$0xff] %v574
      %583 = vst [vmem:[%s324 + $0x8] sm:$0xff] %v575
      %584 = vst [vmem:[%s324 + $0x10] sm:$0xff] %v576
      %585 = vst [vmem:[%s324 + $0x18] sm:$0xff] %v577
      %586 = vst [vmem:[%s324 + $0x20] sm:$0xff] %v578
      %587 = vst [vmem:[%s324 + $0x28] sm:$0xff] %v579
      %588 = vst [vmem:[%s324 + $0x30] sm:$0xff] %v580
      %589 = vst [vmem:[%s324 + $0x38] sm:$0xff] %v581
      %p590 = scmp.lt.s32.totalorder %s23, 1
      %s591 = scalar_select %p590, %s23, 1
      %p592 = scmp.lt.s32.totalorder %s24, 0
      %s593 = scalar_select %p592, %s24, 0
      %s594 = smul.addr %s591, 8
      %s595 = sadd.s32 %s593, %s594
      %s596 = smul.addr %s595, 8
      %s597 = scalar_lea.vmem %s6, %s596
      // Predicated region
      $region45: #{convtasnet_separator_forward.20} parent=43 // pred_check
        %p598 = pneg %p194
      $region46: #{convtasnet_separator_forward.20} parent=43 // pred_check_branch
        %600 = sbr.rel (%p598) target = $region48
      $region47: #{convtasnet_separator_forward.20} parent=43 // pred_region
        _
      $region48: #{convtasnet_separator_forward.20} parent=43 // pred_fallthru
        _
    $region44: #{convtasnet_separator_forward.20} parent=5 // pred_fallthru
      _
    %p601 = scmp.le.s32.totalorder 2, %s14
    // Predicated region
    $region49: #{convtasnet_separator_forward.20} parent=5 // pred_check
      %p602 = pneg %p601
    $region50: #{convtasnet_separator_forward.20} parent=5 // pred_check_branch
      %604 = sbr.rel (%p602) target = $region52
    $region51: #{convtasnet_separator_forward.20} parent=5 // pred_region
      %s605 = ssub.s32 %s14, 2
      // Predicated region
      $region53: #{convtasnet_separator_forward.20} parent=51 // pred_check
        %p606 = pneg %p200
      $region54: #{convtasnet_separator_forward.20} parent=51 // pred_check_branch
        %608 = sbr.rel (%p606) target = $region56
      $region55: #{convtasnet_separator_forward.20} parent=51 // pred_region
        %p609 = scmp.lt.s32.totalorder %s25, 1
        %s610 = scalar_select %p609, %s25, 1
        %p611 = scmp.lt.s32.totalorder %s26, 0
        %s612 = scalar_select %p611, %s26, 0
        %s613 = smul.addr %s610, 8
        %s614 = sadd.s32 %s612, %s613
        %s615 = smul.addr %s614, 8
        %s616 = scalar_lea.vmem %s6, %s615
      $region56: #{convtasnet_separator_forward.20} parent=51 // pred_fallthru
        _
    $region52: #{convtasnet_separator_forward.20} parent=5 // pred_fallthru
      _
  $region6: #{convtasnet_separator_forward.20} parent=0 // loop_footer
    %s18 = sadd.s32 1, %s14
  $region7: #{convtasnet_separator_forward.20} parent=0 // loop_footer_branch
    %13 = sbr.rel target = $region3
  $region8: #{convtasnet_separator_forward.20} parent=0 // loop_exit
    _

// kernel: convtasnet_separator_forward.22
$region0: #{convtasnet_separator_forward.22}
  #allocation0 [shape = 'u32[]', space=smem, size = 0x4, offset = 0x4, fixed_abs, tag = 'smem constant byte address 0x4 - core index']
  #allocation1 [shape = 'u32[72,128]{1,0:T(1,128)}', space=vmem, size = 0x9000, scoped, tag = 'internal scratch']
  #allocation2 [shape = 'f32[1,1]{1,0:T(1,128)S(1)}', space=vmem, size = 0x200, scoped, tag = 'scoped memory for convtasnet_separator_forward.22']
  %s0 = inlined_call_operand.vmem [shape: f32[2,64,132], index: 0, kind: input, shape index: {}]
  %s1 = inlined_call_operand.vmem [shape: f32[64,3], index: 1, kind: input, shape index: {}]
  %s2 = inlined_call_operand.vmem [shape: f32[64,1], index: 2, kind: input, shape index: {}]
  %s3 = inlined_call_operand.vmem [shape: f32[2,64,1], index: 3, kind: input, shape index: {}]
  %s4 = inlined_call_operand.vmem [shape: f32[2,64,1], index: 4, kind: input, shape index: {}]
  %s5 = inlined_call_operand.<no memory space> [shape: f32[1,1], index: 5, kind: input, shape index: {}]
  %s6 = inlined_call_operand.vmem [shape: f32[2,64,128], index: 6, kind: output, shape index: {0}]
  %s7 = inlined_call_operand.vmem [shape: f32[2,2,128], index: 7, kind: output, shape index: {1}]
  %8 = xla_tuple %s6, %s7
  %s9 = sld [smem:[#allocation0]]
  $region73: #{convtasnet_separator_forward.22} parent=0
    _
  %s11 = ssub.s32 1, %s9
  %s12 = scalar_select 0, %s11, %s9
  %v13 = vstv %s5
  %14 = vst [vmem:[#allocation2] sm:$0x1] %v13
  loop: start=0, step=1, limit=4
  $region2: #{convtasnet_separator_forward.22} parent=0 // loop_pre_header
    _
  $region3: #{convtasnet_separator_forward.22} parent=0 // loop_header
    %s16 = sphi 0, %s20
    %p17 = scmp.ge.s32.totalorder %s16, 4
    %s23 = sphi 0, %s35
    %s24 = sphi 0, %s31
    %s25 = sphi 0, %s23
    %s26 = sphi 0, %s24
    %s27 = sphi 0, %s25
    %s28 = sphi 0, %s26
    %s40 = sphi 0, %s42
    %s43 = sphi 0, %s40
    %s44 = sphi 0, %s43
    %s60 = sphi 0, %s44
    %s66 = sphi 0, %s68
    %s69 = sphi 0, %s66
    %s70 = sphi 0, %s69
    %s86 = sphi 0, %s70
    %s92 = sphi 0, %s94
    %s95 = sphi 0, %s92
    %s96 = sphi 0, %s95
    %s112 = sphi 0, %s96
    %s120 = sphi 0, %s122
    %s123 = sphi 0, %s120
    %s124 = sphi 0, %s123
    %s140 = sphi 0, %s124
    %s148 = sphi 0, %s150
    %s151 = sphi 0, %s148
    %s152 = sphi 0, %s151
    %s168 = sphi 0, %s152
    %s172 = sphi 0, %s172
    %s174 = sphi 0, %s172
    %s175 = sphi 0, %s174
    %s189 = sphi 0, %s175
    %s197 = sphi 0, %s199
    %s200 = sphi 0, %s197
    %s201 = sphi 0, %s200
    %s217 = sphi 0, %s201
    %s223 = sphi 0, %s225
    %s226 = sphi 0, %s223
    %s227 = sphi 0, %s226
    %s243 = sphi 0, %s227
  $region4: #{convtasnet_separator_forward.22} parent=0 // loop_header_branch
    %19 = sbr.rel (%p17) target = $region8
  $region5: #{convtasnet_separator_forward.22} parent=0 // loop_body
    %s21 = ssub.s32 %s16, 1
    %s22 = ssub.s32 %s16, 2
    %s29 = sadd.s32 1, %s24
    %p30 = scmp.ge.s32.totalorder %s29, 1
    %s31 = scalar_select %p30, 0, %s29
    %s32 = sadd.s32 1, %s23
    %s33 = scalar_select %p30, %s32, %s23
    %p34 = scmp.ge.s32.totalorder %s33, 2
    %s35 = scalar_select %p34, 0, %s33
    %s36 = ssub.s32 %s23, %s35
    %s37 = ssub.s32 %s24, %s31
    %s38 = sor.u32 %s36, %s37
    %p39 = scmp.eq.s32.totalorder %s38, 0
    %s41 = sadd.s32 %s40, 1
    %s42 = scalar_select %p39, %s40, %s41
    %p45 = pneg %p39
    %p46 = scmp.eq.s32.totalorder %s16, 1
    %p47 = por %p45, %p46
    %p48 = scmp.ne.s32.totalorder %s40, %s43
    %p49 = scmp.eq.s32.totalorder %s16, 0
    %p50 = por %p48, %p49
    %p51 = scmp.ne.s32.totalorder %s40, %s43
    %p52 = scmp.eq.s32.totalorder %s21, 1
    %p53 = por %p51, %p52
    %p54 = scmp.ne.s32.totalorder %s43, %s44
    %p55 = scmp.eq.s32.totalorder %s21, 0
    %p56 = por %p54, %p55
    %p57 = scmp.ne.s32.totalorder %s43, %s44
    %p58 = scmp.eq.s32.totalorder %s22, 1
    %p59 = por %p57, %p58
    %p61 = scmp.ne.s32.totalorder %s44, %s60
    %p62 = scmp.eq.s32.totalorder %s22, 0
    %p63 = por %p61, %p62
    %s64 = ssub.s32 %s24, %s31
    %p65 = scmp.eq.s32.totalorder %s64, 0
    %s67 = sadd.s32 %s66, 1
    %s68 = scalar_select %p65, %s66, %s67
    %p71 = pneg %p65
    %p72 = scmp.eq.s32.totalorder %s16, 1
    %p73 = por %p71, %p72
    %p74 = scmp.ne.s32.totalorder %s66, %s69
    %p75 = scmp.eq.s32.totalorder %s16, 0
    %p76 = por %p74, %p75
    %p77 = scmp.ne.s32.totalorder %s66, %s69
    %p78 = scmp.eq.s32.totalorder %s21, 1
    %p79 = por %p77, %p78
    %p80 = scmp.ne.s32.totalorder %s69, %s70
    %p81 = scmp.eq.s32.totalorder %s21, 0
    %p82 = por %p80, %p81
    %p83 = scmp.ne.s32.totalorder %s69, %s70
    %p84 = scmp.eq.s32.totalorder %s22, 1
    %p85 = por %p83, %p84
    %p87 = scmp.ne.s32.totalorder %s70, %s86
    %p88 = scmp.eq.s32.totalorder %s22, 0
    %p89 = por %p87, %p88
    %s90 = ssub.s32 %s24, %s31
    %p91 = scmp.eq.s32.totalorder %s90, 0
    %s93 = sadd.s32 %s92, 1
    %s94 = scalar_select %p91, %s92, %s93
    %p97 = pneg %p91
    %p98 = scmp.eq.s32.totalorder %s16, 1
    %p99 = por %p97, %p98
    %p100 = scmp.ne.s32.totalorder %s92, %s95
    %p101 = scmp.eq.s32.totalorder %s16, 0
    %p102 = por %p100, %p101
    %p103 = scmp.ne.s32.totalorder %s92, %s95
    %p104 = scmp.eq.s32.totalorder %s21, 1
    %p105 = por %p103, %p104
    %p106 = scmp.ne.s32.totalorder %s95, %s96
    %p107 = scmp.eq.s32.totalorder %s21, 0
    %p108 = por %p106, %p107
    %p109 = scmp.ne.s32.totalorder %s95, %s96
    %p110 = scmp.eq.s32.totalorder %s22, 1
    %p111 = por %p109, %p110
    %p113 = scmp.ne.s32.totalorder %s96, %s112
    %p114 = scmp.eq.s32.totalorder %s22, 0
    %p115 = por %p113, %p114
    %s116 = ssub.s32 %s23, %s35
    %s117 = ssub.s32 %s24, %s31
    %s118 = sor.u32 %s116, %s117
    %p119 = scmp.eq.s32.totalorder %s118, 0
    %s121 = sadd.s32 %s120, 1
    %s122 = scalar_select %p119, %s120, %s121
    %p125 = pneg %p119
    %p126 = scmp.eq.s32.totalorder %s16, 1
    %p127 = por %p125, %p126
    %p128 = scmp.ne.s32.totalorder %s120, %s123
    %p129 = scmp.eq.s32.totalorder %s16, 0
    %p130 = por %p128, %p129
    %p131 = scmp.ne.s32.totalorder %s120, %s123
    %p132 = scmp.eq.s32.totalorder %s21, 1
    %p133 = por %p131, %p132
    %p134 = scmp.ne.s32.totalorder %s123, %s124
    %p135 = scmp.eq.s32.totalorder %s21, 0
    %p136 = por %p134, %p135
    %p137 = scmp.ne.s32.totalorder %s123, %s124
    %p138 = scmp.eq.s32.totalorder %s22, 1
    %p139 = por %p137, %p138
    %p141 = scmp.ne.s32.totalorder %s124, %s140
    %p142 = scmp.eq.s32.totalorder %s22, 0
    %p143 = por %p141, %p142
    %s144 = ssub.s32 %s23, %s35
    %s145 = ssub.s32 %s24, %s31
    %s146 = sor.u32 %s144, %s145
    %p147 = scmp.eq.s32.totalorder %s146, 0
    %s149 = sadd.s32 %s148, 1
    %s150 = scalar_select %p147, %s148, %s149
    %p153 = pneg %p147
    %p154 = scmp.eq.s32.totalorder %s16, 1
    %p155 = por %p153, %p154
    %p156 = scmp.ne.s32.totalorder %s148, %s151
    %p157 = scmp.eq.s32.totalorder %s16, 0
    %p158 = por %p156, %p157
    %p159 = scmp.ne.s32.totalorder %s148, %s151
    %p160 = scmp.eq.s32.totalorder %s21, 1
    %p161 = por %p159, %p160
    %p162 = scmp.ne.s32.totalorder %s151, %s152
    %p163 = scmp.eq.s32.totalorder %s21, 0
    %p164 = por %p162, %p163
    %p165 = scmp.ne.s32.totalorder %s151, %s152
    %p166 = scmp.eq.s32.totalorder %s22, 1
    %p167 = por %p165, %p166
    %p169 = scmp.ne.s32.totalorder %s152, %s168
    %p170 = scmp.eq.s32.totalorder %s22, 0
    %p171 = por %p169, %p170
    %s173 = sadd.s32 %s172, 1
    %p176 = scmp.eq.s32.totalorder %s16, 1
    %p177 = scmp.ne.s32.totalorder %s172, %s174
    %p178 = scmp.eq.s32.totalorder %s16, 0
    %p179 = por %p177, %p178
    %p180 = scmp.ne.s32.totalorder %s172, %s174
    %p181 = scmp.eq.s32.totalorder %s21, 1
    %p182 = por %p180, %p181
    %p183 = scmp.ne.s32.totalorder %s174, %s175
    %p184 = scmp.eq.s32.totalorder %s21, 0
    %p185 = por %p183, %p184
    %p186 = scmp.ne.s32.totalorder %s174, %s175
    %p187 = scmp.eq.s32.totalorder %s22, 1
    %p188 = por %p186, %p187
    %p190 = scmp.ne.s32.totalorder %s175, %s189
    %p191 = scmp.eq.s32.totalorder %s22, 0
    %p192 = por %p190, %p191
    %s193 = ssub.s32 %s23, %s35
    %s194 = ssub.s32 %s24, %s31
    %s195 = sor.u32 %s193, %s194
    %p196 = scmp.eq.s32.totalorder %s195, 0
    %s198 = sadd.s32 %s197, 1
    %s199 = scalar_select %p196, %s197, %s198
    %p202 = pneg %p196
    %p203 = scmp.eq.s32.totalorder %s16, 1
    %p204 = por %p202, %p203
    %p205 = scmp.ne.s32.totalorder %s197, %s200
    %p206 = scmp.eq.s32.totalorder %s16, 0
    %p207 = por %p205, %p206
    %p208 = scmp.ne.s32.totalorder %s197, %s200
    %p209 = scmp.eq.s32.totalorder %s21, 1
    %p210 = por %p208, %p209
    %p211 = scmp.ne.s32.totalorder %s200, %s201
    %p212 = scmp.eq.s32.totalorder %s21, 0
    %p213 = por %p211, %p212
    %p214 = scmp.ne.s32.totalorder %s200, %s201
    %p215 = scmp.eq.s32.totalorder %s22, 1
    %p216 = por %p214, %p215
    %p218 = scmp.ne.s32.totalorder %s201, %s217
    %p219 = scmp.eq.s32.totalorder %s22, 0
    %p220 = por %p218, %p219
    %s221 = ssub.s32 %s23, %s35
    %p222 = scmp.eq.s32.totalorder %s221, 0
    %s224 = sadd.s32 %s223, 1
    %s225 = scalar_select %p222, %s223, %s224
    %p228 = pneg %p222
    %p229 = scmp.eq.s32.totalorder %s16, 1
    %p230 = por %p228, %p229
    %p231 = scmp.ne.s32.totalorder %s223, %s226
    %p232 = scmp.eq.s32.totalorder %s16, 0
    %p233 = por %p231, %p232
    %p234 = scmp.ne.s32.totalorder %s223, %s226
    %p235 = scmp.eq.s32.totalorder %s21, 1
    %p236 = por %p234, %p235
    %p237 = scmp.ne.s32.totalorder %s226, %s227
    %p238 = scmp.eq.s32.totalorder %s21, 0
    %p239 = por %p237, %p238
    %p240 = scmp.ne.s32.totalorder %s226, %s227
    %p241 = scmp.eq.s32.totalorder %s22, 1
    %p242 = por %p240, %p241
    %p244 = scmp.ne.s32.totalorder %s227, %s243
    %p245 = scmp.eq.s32.totalorder %s22, 0
    %p246 = por %p244, %p245
    %p247 = scmp.le.s32.totalorder 1, %s16
    %p248 = scmp.lt.s32.totalorder %s16, 3
    %p249 = pnand %p247, %p248
    %p250 = pneg %p249
    // Predicated region
    $region9: #{convtasnet_separator_forward.22} parent=5 // pred_check
      _
    $region10: #{convtasnet_separator_forward.22} parent=5 // pred_check_branch
      %252 = sbr.rel (%p249) target = $region12
    $region11: #{convtasnet_separator_forward.22} parent=5 // pred_region
      %s253 = ssub.s32 %s16, 1
      // Predicated region
      $region13: #{convtasnet_separator_forward.22} parent=11 // pred_check
        %p254 = pneg %p82
      $region14: #{convtasnet_separator_forward.22} parent=11 // pred_check_branch
        %256 = sbr.rel (%p254) target = $region16
      $region15: #{convtasnet_separator_forward.22} parent=11 // pred_region
        %s257 = smul.u32 8, %s26
        %p258 = scmp.lt.s32.totalorder %s257, 7
        %s259 = scalar_select %p258, %s257, 7
        %s260 = smul.addr %s259, 8
        %s261 = scalar_lea.vmem %s1, %s260
        %s262 = smul.u32 8, %s26
      $region16: #{convtasnet_separator_forward.22} parent=11 // pred_fallthru
        _
      // Predicated region
      $region17: #{convtasnet_separator_forward.22} parent=11 // pred_check
        %p263 = pneg %p108
      $region18: #{convtasnet_separator_forward.22} parent=11 // pred_check_branch
        %265 = sbr.rel (%p263) target = $region20
      $region19: #{convtasnet_separator_forward.22} parent=11 // pred_region
        %s266 = smul.u32 8, %s26
        %p267 = scmp.lt.s32.totalorder %s266, 7
        %s268 = scalar_select %p267, %s266, 7
        %s269 = smul.addr %s268, 8
        %s270 = scalar_lea.vmem %s2, %s269
        %s271 = smul.u32 8, %s26
      $region20: #{convtasnet_separator_forward.22} parent=11 // pred_fallthru
        _
      // Predicated region
      $region21: #{convtasnet_separator_forward.22} parent=11 // pred_check
        %p272 = pneg %p185
      $region22: #{convtasnet_separator_forward.22} parent=11 // pred_check_branch
        %274 = sbr.rel (%p272) target = $region24
      $region23: #{convtasnet_separator_forward.22} parent=11 // pred_region
        _
      $region24: #{convtasnet_separator_forward.22} parent=11 // pred_fallthru
        _
    $region12: #{convtasnet_separator_forward.22} parent=5 // pred_fallthru
      _
    %p275 = scmp.lt.s32.totalorder %s16, 2
    // Predicated region
    $region25: #{convtasnet_separator_forward.22} parent=5 // pred_check
      %p276 = pneg %p275
    $region26: #{convtasnet_separator_forward.22} parent=5 // pred_check_branch
      %278 = sbr.rel (%p276) target = $region28
    $region27: #{convtasnet_separator_forward.22} parent=5 // pred_region
      // Predicated region
      $region29: #{convtasnet_separator_forward.22} parent=27 // pred_check
        %p279 = pneg %p50
      $region30: #{convtasnet_separator_forward.22} parent=27 // pred_check_branch
        %281 = sbr.rel (%p279) target = $region32
      $region31: #{convtasnet_separator_forward.22} parent=27 // pred_region
        %s282 = smul.u32 8, %s24
        %p283 = scmp.lt.s32.totalorder %s23, 1
        %s284 = scalar_select %p283, %s23, 1
        %p285 = scmp.lt.s32.totalorder %s282, 7
        %s286 = scalar_select %p285, %s282, 7
        %s287 = smul.addr %s286, 2
        %s288 = smul.addr %s284, 16
        %s289 = sadd.s32 %s287, %s288
        %s290 = smul.addr %s289, 8
        %s291 = scalar_lea.vmem %s0, %s290
        %s292 = smul.u32 8, %s24
      $region32: #{convtasnet_separator_forward.22} parent=27 // pred_fallthru
        _
      // Predicated region
      $region33: #{convtasnet_separator_forward.22} parent=27 // pred_check
        %p293 = pneg %p130
      $region34: #{convtasnet_separator_forward.22} parent=27 // pred_check_branch
        %295 = sbr.rel (%p293) target = $region36
      $region35: #{convtasnet_separator_forward.22} parent=27 // pred_region
        %s296 = smul.u32 8, %s24
        %p297 = scmp.lt.s32.totalorder %s23, 1
        %s298 = scalar_select %p297, %s23, 1
        %p299 = scmp.lt.s32.totalorder %s296, 7
        %s300 = scalar_select %p299, %s296, 7
        %s301 = smul.addr %s298, 8
        %s302 = sadd.s32 %s300, %s301
        %s303 = smul.addr %s302, 8
        %s304 = scalar_lea.vmem %s3, %s303
        %s305 = smul.u32 8, %s24
      $region36: #{convtasnet_separator_forward.22} parent=27 // pred_fallthru
        _
      // Predicated region
      $region37: #{convtasnet_separator_forward.22} parent=27 // pred_check
        %p306 = pneg %p158
      $region38: #{convtasnet_separator_forward.22} parent=27 // pred_check_branch
        %308 = sbr.rel (%p306) target = $region40
      $region39: #{convtasnet_separator_forward.22} parent=27 // pred_region
        %s309 = smul.u32 8, %s24
        %p310 = scmp.lt.s32.totalorder %s23, 1
        %s311 = scalar_select %p310, %s23, 1
        %p312 = scmp.lt.s32.totalorder %s309, 7
        %s313 = scalar_select %p312, %s309, 7
        %s314 = smul.addr %s311, 8
        %s315 = sadd.s32 %s313, %s314
        %s316 = smul.addr %s315, 8
        %s317 = scalar_lea.vmem %s4, %s316
        %s318 = smul.u32 8, %s24
      $region40: #{convtasnet_separator_forward.22} parent=27 // pred_fallthru
        _
    $region28: #{convtasnet_separator_forward.22} parent=5 // pred_fallthru
      _
    %p319 = scmp.le.s32.totalorder 1, %s16
    %p320 = scmp.lt.s32.totalorder %s16, 3
    %p321 = pnand %p319, %p320
    %p322 = pneg %p321
    // Predicated region
    $region41: #{convtasnet_separator_forward.22} parent=5 // pred_check
      _
    $region42: #{convtasnet_separator_forward.22} parent=5 // pred_check_branch
      %324 = sbr.rel (%p321) target = $region44
    $region43: #{convtasnet_separator_forward.22} parent=5 // pred_region
      %s325 = ssub.s32 %s16, 1
      %s326 = smul.u32 8, %s26
      %p327 = scmp.lt.s32.totalorder %s25, 1
      %s328 = scalar_select %p327, %s25, 1
      %p329 = scmp.lt.s32.totalorder %s326, 7
      %s330 = scalar_select %p329, %s326, 7
      %s331 = smul.addr %s330, 2
      %s332 = smul.addr %s328, 16
      %s333 = sadd.s32 %s331, %s332
      %s334 = smul.addr %s333, 8
      %s335 = scalar_lea.vmem %s0, %s334
      %p336 = pneg %p56
      %p337 = pneg %p53
      %s338 = smul.u32 8, %s26
      %p339 = scmp.lt.s32.totalorder %s338, 7
      %s340 = scalar_select %p339, %s338, 7
      %s341 = smul.addr %s340, 8
      %s342 = scalar_lea.vmem %s1, %s341
      %p343 = pneg %p82
      %p344 = pneg %p79
      %s345 = smul.u32 8, %s26
      %p346 = scmp.lt.s32.totalorder %s345, 7
      %s347 = scalar_select %p346, %s345, 7
      %s348 = smul.addr %s347, 8
      %s349 = scalar_lea.vmem %s2, %s348
      %p350 = pneg %p108
      %p351 = pneg %p105
      %s352 = smul.u32 8, %s26
      %p353 = scmp.lt.s32.totalorder %s25, 1
      %s354 = scalar_select %p353, %s25, 1
      %p355 = scmp.lt.s32.totalorder %s352, 7
      %s356 = scalar_select %p355, %s352, 7
      %s357 = smul.addr %s354, 8
      %s358 = sadd.s32 %s356, %s357
      %s359 = smul.addr %s358, 8
      %s360 = scalar_lea.vmem %s3, %s359
      %p361 = pneg %p136
      %p362 = pneg %p133
      %s363 = smul.u32 8, %s26
      %p364 = scmp.lt.s32.totalorder %s25, 1
      %s365 = scalar_select %p364, %s25, 1
      %p366 = scmp.lt.s32.totalorder %s363, 7
      %s367 = scalar_select %p366, %s363, 7
      %s368 = smul.addr %s365, 8
      %s369 = sadd.s32 %s367, %s368
      %s370 = smul.addr %s369, 8
      %s371 = scalar_lea.vmem %s4, %s370
      %p372 = pneg %p164
      %p373 = pneg %p161
      %p374 = pneg %p185
      %p375 = pneg %p182
      %p376 = pneg %p213
      %p377 = pneg %p210
      %s378 = smul.u32 8, %s26
      %p379 = scmp.lt.s32.totalorder %s25, 1
      %s380 = scalar_select %p379, %s25, 1
      %p381 = scmp.lt.s32.totalorder %s378, 7
      %s382 = scalar_select %p381, %s378, 7
      %s383 = smul.addr %s380, 8
      %s384 = sadd.s32 %s382, %s383
      %s385 = smul.addr %s384, 8
      %s386 = scalar_lea.vmem %s6, %s385
      %p387 = pneg %p239
      %p388 = pneg %p236
      %p389 = scmp.lt.s32.totalorder %s25, 1
      %s390 = scalar_select %p389, %s25, 1
      %s391 = smul.addr %s390, 2
      %s392 = scalar_lea.vmem %s7, %s391
      %s393 = smul.u32 8, %s26
      %p394 = scmp.lt.s32.totalorder %s25, 1
      %s395 = scalar_select %p394, %s25, 1
      %p396 = scmp.lt.s32.totalorder %s393, 7
      %s397 = scalar_select %p396, %s393, 7
      %s398 = smul.addr %s397, 2
      %s399 = smul.addr %s395, 16
      %s400 = sadd.s32 %s398, %s399
      %s401 = smul.addr %s400, 8
      %s402 = scalar_lea.vmem %s0, %s401
      %s403 = smul.u32 8, %s26
      %s404 = smul.u32 8, %s26
      %p405 = scmp.lt.s32.totalorder %s404, 7
      %s406 = scalar_select %p405, %s404, 7
      %s407 = smul.addr %s406, 8
      %s408 = scalar_lea.vmem %s1, %s407
      %s409 = smul.u32 8, %s26
      %s410 = smul.u32 8, %s26
      %p411 = scmp.lt.s32.totalorder %s410, 7
      %s412 = scalar_select %p411, %s410, 7
      %s413 = smul.addr %s412, 8
      %s414 = scalar_lea.vmem %s2, %s413
      %s415 = smul.u32 8, %s26
      %s416 = smul.u32 8, %s26
      %p417 = scmp.lt.s32.totalorder %s25, 1
      %s418 = scalar_select %p417, %s25, 1
      %p419 = scmp.lt.s32.totalorder %s416, 7
      %s420 = scalar_select %p419, %s416, 7
      %s421 = smul.addr %s418, 8
      %s422 = sadd.s32 %s420, %s421
      %s423 = smul.addr %s422, 8
      %s424 = scalar_lea.vmem %s3, %s423
      %s425 = smul.u32 8, %s26
      %s426 = smul.u32 8, %s26
      %p427 = scmp.lt.s32.totalorder %s25, 1
      %s428 = scalar_select %p427, %s25, 1
      %p429 = scmp.lt.s32.totalorder %s426, 7
      %s430 = scalar_select %p429, %s426, 7
      %s431 = smul.addr %s428, 8
      %s432 = sadd.s32 %s430, %s431
      %s433 = smul.addr %s432, 8
      %s434 = scalar_lea.vmem %s4, %s433
      %s435 = smul.u32 8, %s26
      %s436 = smul.u32 8, %s26
      %p437 = scmp.lt.s32.totalorder %s25, 1
      %s438 = scalar_select %p437, %s25, 1
      %p439 = scmp.lt.s32.totalorder %s436, 7
      %s440 = scalar_select %p439, %s436, 7
      %s441 = smul.addr %s438, 8
      %s442 = sadd.s32 %s440, %s441
      %s443 = smul.addr %s442, 8
      %s444 = scalar_lea.vmem %s6, %s443
      %s445 = smul.u32 8, %s26
      %p446 = scmp.lt.s32.totalorder %s25, 1
      %s447 = scalar_select %p446, %s25, 1
      %s448 = smul.addr %s447, 2
      %s449 = scalar_lea.vmem %s7, %s448
      %v450 = vld [vmem:[%s402] sm:$0xff]
      %v451 = vld [vmem:[%s402 + $0x8] sm:$0xff]
      %v452 = vld [vmem:[%s402 + $0x10] sm:$0xff]
      %v453 = vld [vmem:[%s402 + $0x18] sm:$0xff]
      %v454 = vld [vmem:[%s402 + $0x20] sm:$0xff]
      %v455 = vld [vmem:[%s402 + $0x28] sm:$0xff]
      %v456 = vld [vmem:[%s402 + $0x30] sm:$0xff]
      %v457 = vld [vmem:[%s402 + $0x38] sm:$0xff]
      %v458 = vld [vmem:[%s402 + $0x40] sm:$0xff]
      %v459 = vld [vmem:[%s402 + $0x48] sm:$0xff]
      %v460 = vld [vmem:[%s402 + $0x50] sm:$0xff]
      %v461 = vld [vmem:[%s402 + $0x58] sm:$0xff]
      %v462 = vld [vmem:[%s402 + $0x60] sm:$0xff]
      %v463 = vld [vmem:[%s402 + $0x68] sm:$0xff]
      %v464 = vld [vmem:[%s402 + $0x70] sm:$0xff]
      %v465 = vld [vmem:[%s402 + $0x78] sm:$0xff]
      %v466 = vld [vmem:[%s424] sm:$0xff]
      %v467 = vld [vmem:[%s424 + $0x8] sm:$0xff]
      %v468 = vld [vmem:[%s424 + $0x10] sm:$0xff]
      %v469 = vld [vmem:[%s424 + $0x18] sm:$0xff]
      %v470 = vld [vmem:[%s424 + $0x20] sm:$0xff]
      %v471 = vld [vmem:[%s424 + $0x28] sm:$0xff]
      %v472 = vld [vmem:[%s424 + $0x30] sm:$0xff]
      %v473 = vld [vmem:[%s424 + $0x38] sm:$0xff]
      %475 = vset.pattern.permute.xlu0 0
      %476 = vperm.xlu0 %475, %v466
      %v477 = vpop.permute.xlu0 %476
      %480 = vset.pattern.permute.xlu0 0
      %481 = vperm.xlu0 %480, %v467
      %v482 = vpop.permute.xlu0 %481
      %485 = vset.pattern.permute.xlu0 0
      %486 = vperm.xlu0 %485, %v468
      %v487 = vpop.permute.xlu0 %486
      %490 = vset.pattern.permute.xlu0 0
      %491 = vperm.xlu0 %490, %v469
      %v492 = vpop.permute.xlu0 %491
      %495 = vset.pattern.permute.xlu0 0
      %496 = vperm.xlu0 %495, %v470
      %v497 = vpop.permute.xlu0 %496
      %500 = vset.pattern.permute.xlu0 0
      %501 = vperm.xlu0 %500, %v471
      %v502 = vpop.permute.xlu0 %501
      %505 = vset.pattern.permute.xlu0 0
      %506 = vperm.xlu0 %505, %v472
      %v507 = vpop.permute.xlu0 %506
      %510 = vset.pattern.permute.xlu0 0
      %511 = vperm.xlu0 %510, %v473
      %v512 = vpop.permute.xlu0 %511
      %v514 = vmul.f32 %v450, %v477
      %v515 = vmul.f32 %v451, %v477
      %v516 = vmul.f32 %v452, %v482
      %v517 = vmul.f32 %v453, %v482
      %v518 = vmul.f32 %v454, %v487
      %v519 = vmul.f32 %v455, %v487
      %v520 = vmul.f32 %v456, %v492
      %v521 = vmul.f32 %v457, %v492
      %v522 = vmul.f32 %v458, %v497
      %v523 = vmul.f32 %v459, %v497
      %v524 = vmul.f32 %v460, %v502
      %v525 = vmul.f32 %v461, %v502
      %v526 = vmul.f32 %v462, %v507
      %v527 = vmul.f32 %v463, %v507
      %v528 = vmul.f32 %v464, %v512
      %v529 = vmul.f32 %v465, %v512
      %v530 = vld [vmem:[%s434] sm:$0xff]
      %v531 = vld [vmem:[%s434 + $0x8] sm:$0xff]
      %v532 = vld [vmem:[%s434 + $0x10] sm:$0xff]
      %v533 = vld [vmem:[%s434 + $0x18] sm:$0xff]
      %v534 = vld [vmem:[%s434 + $0x20] sm:$0xff]
      %v535 = vld [vmem:[%s434 + $0x28] sm:$0xff]
      %v536 = vld [vmem:[%s434 + $0x30] sm:$0xff]
      %v537 = vld [vmem:[%s434 + $0x38] sm:$0xff]
      %539 = vset.pattern.permute.xlu0 0
      %540 = vperm.xlu0 %539, %v530
      %v541 = vpop.permute.xlu0 %540
      %544 = vset.pattern.permute.xlu0 0
      %545 = vperm.xlu0 %544, %v531
      %v546 = vpop.permute.xlu0 %545
      %549 = vset.pattern.permute.xlu0 0
      %550 = vperm.xlu0 %549, %v532
      %v551 = vpop.permute.xlu0 %550
      %554 = vset.pattern.permute.xlu0 0
      %555 = vperm.xlu0 %554, %v533
      %v556 = vpop.permute.xlu0 %555
      %559 = vset.pattern.permute.xlu0 0
      %560 = vperm.xlu0 %559, %v534
      %v561 = vpop.permute.xlu0 %560
      %564 = vset.pattern.permute.xlu0 0
      %565 = vperm.xlu0 %564, %v535
      %v566 = vpop.permute.xlu0 %565
      %569 = vset.pattern.permute.xlu0 0
      %570 = vperm.xlu0 %569, %v536
      %v571 = vpop.permute.xlu0 %570
      %574 = vset.pattern.permute.xlu0 0
      %575 = vperm.xlu0 %574, %v537
      %v576 = vpop.permute.xlu0 %575
      %v578 = vadd.f32 %v514, %v541
      %v579 = vadd.f32 %v515, %v541
      %v580 = vadd.f32 %v516, %v546
      %v581 = vadd.f32 %v517, %v546
      %v582 = vadd.f32 %v518, %v551
      %v583 = vadd.f32 %v519, %v551
      %v584 = vadd.f32 %v520, %v556
      %v585 = vadd.f32 %v521, %v556
      %v586 = vadd.f32 %v522, %v561
      %v587 = vadd.f32 %v523, %v561
      %v588 = vadd.f32 %v524, %v566
      %v589 = vadd.f32 %v525, %v566
      %v590 = vadd.f32 %v526, %v571
      %v591 = vadd.f32 %v527, %v571
      %v592 = vadd.f32 %v528, %v576
      %v593 = vadd.f32 %v529, %v576
      %v594 = vlaneseq
      %v595 = vand.u32 %v594, 127
      %v596 = vadd.s32 %v595, 128
      %vm597 = vcmp.ge.s32.totalorder %v595, 2
      %vm598 = vcmp.ge.s32.totalorder %v596, 2
      %vm599 = vcmp.lt.s32.totalorder %v595, 23
      %vm600 = vcmp.lt.s32.totalorder %v596, 23
      %vm601 = vmand %vm597, %vm599
      %vm602 = vmand %vm598, %vm600
      %v603 = vsel %vm601, %v578, 0.0
      %v604 = vsel %vm602, %v579, 0.0
      %v605 = vsel %vm601, %v580, 0.0
      %v606 = vsel %vm602, %v581, 0.0
      %v607 = vsel %vm601, %v582, 0.0
      %v608 = vsel %vm602, %v583, 0.0
      %v609 = vsel %vm601, %v584, 0.0
      %v610 = vsel %vm602, %v585, 0.0
      %v611 = vsel %vm601, %v586, 0.0
      %v612 = vsel %vm602, %v587, 0.0
      %v613 = vsel %vm601, %v588, 0.0
      %v614 = vsel %vm602, %v589, 0.0
      %v615 = vsel %vm601, %v590, 0.0
      %v616 = vsel %vm602, %v591, 0.0
      %v617 = vsel %vm601, %v592, 0.0
      %v618 = vsel %vm602, %v593, 0.0
      %v619 = vld [vmem:[%s408] sm:$0xff]
      %v620 = vld [vmem:[%s408 + $0x8] sm:$0xff]
      %v621 = vld [vmem:[%s408 + $0x10] sm:$0xff]
      %v622 = vld [vmem:[%s408 + $0x18] sm:$0xff]
      %v623 = vld [vmem:[%s408 + $0x20] sm:$0xff]
      %v624 = vld [vmem:[%s408 + $0x28] sm:$0xff]
      %v625 = vld [vmem:[%s408 + $0x30] sm:$0xff]
      %v626 = vld [vmem:[%s408 + $0x38] sm:$0xff]
      %628 = vset.pattern.permute.xlu0 0
      %629 = vperm.xlu0 %628, %v619
      %v630 = vpop.permute.xlu0 %629
      %633 = vset.pattern.permute.xlu0 0
      %634 = vperm.xlu0 %633, %v620
      %v635 = vpop.permute.xlu0 %634
      %638 = vset.pattern.permute.xlu0 0
      %639 = vperm.xlu0 %638, %v621
      %v640 = vpop.permute.xlu0 %639
      %643 = vset.pattern.permute.xlu0 0
      %644 = vperm.xlu0 %643, %v622
      %v645 = vpop.permute.xlu0 %644
      %648 = vset.pattern.permute.xlu0 0
      %649 = vperm.xlu0 %648, %v623
      %v650 = vpop.permute.xlu0 %649
      %653 = vset.pattern.permute.xlu0 0
      %654 = vperm.xlu0 %653, %v624
      %v655 = vpop.permute.xlu0 %654
      %658 = vset.pattern.permute.xlu0 0
      %659 = vperm.xlu0 %658, %v625
      %v660 = vpop.permute.xlu0 %659
      %663 = vset.pattern.permute.xlu0 0
      %664 = vperm.xlu0 %663, %v626
      %v665 = vpop.permute.xlu0 %664
      %v667 = vmul.f32 %v603, %v630
      %v668 = vmul.f32 %v605, %v635
      %v669 = vmul.f32 %v607, %v640
      %v670 = vmul.f32 %v609, %v645
      %v671 = vmul.f32 %v611, %v650
      %v672 = vmul.f32 %v613, %v655
      %v673 = vmul.f32 %v615, %v660
      %v674 = vmul.f32 %v617, %v665
      %675 = vset.pattern.permute.xlu0 1
      %676 = vperm.xlu0 %675, %v619
      %v677 = vpop.permute.xlu0 %676
      %679 = vset.pattern.permute.xlu0 1
      %680 = vperm.xlu0 %679, %v620
      %v681 = vpop.permute.xlu0 %680
      %683 = vset.pattern.permute.xlu0 1
      %684 = vperm.xlu0 %683, %v621
      %v685 = vpop.permute.xlu0 %684
      %687 = vset.pattern.permute.xlu0 1
      %688 = vperm.xlu0 %687, %v622
      %v689 = vpop.permute.xlu0 %688
      %691 = vset.pattern.permute.xlu0 1
      %692 = vperm.xlu0 %691, %v623
      %v693 = vpop.permute.xlu0 %692
      %695 = vset.pattern.permute.xlu0 1
      %696 = vperm.xlu0 %695, %v624
      %v697 = vpop.permute.xlu0 %696
      %699 = vset.pattern.permute.xlu0 1
      %700 = vperm.xlu0 %699, %v625
      %v701 = vpop.permute.xlu0 %700
      %703 = vset.pattern.permute.xlu0 1
      %704 = vperm.xlu0 %703, %v626
      %v705 = vpop.permute.xlu0 %704
      %v707 = vmul.f32 %v603, %v677
      %v708 = vmul.f32 %v604, %v677
      %v709 = vmul.f32 %v605, %v681
      %v710 = vmul.f32 %v606, %v681
      %v711 = vmul.f32 %v607, %v685
      %v712 = vmul.f32 %v608, %v685
      %v713 = vmul.f32 %v609, %v689
      %v714 = vmul.f32 %v610, %v689
      %v715 = vmul.f32 %v611, %v693
      %v716 = vmul.f32 %v612, %v693
      %v717 = vmul.f32 %v613, %v697
      %v718 = vmul.f32 %v614, %v697
      %v719 = vmul.f32 %v615, %v701
      %v720 = vmul.f32 %v616, %v701
      %v721 = vmul.f32 %v617, %v705
      %v722 = vmul.f32 %v618, %v705
      %739 = vrot.lane.b32.xlu0 %v707, 126
      %v740 = vpop.permute.xlu0 %739
      %741 = vrot.lane.b32.xlu0 %v708, 126
      %v742 = vpop.permute.xlu0 %741
      %743 = vrot.lane.b32.xlu0 %v709, 126
      %v744 = vpop.permute.xlu0 %743
      %745 = vrot.lane.b32.xlu0 %v710, 126
      %v746 = vpop.permute.xlu0 %745
      %747 = vrot.lane.b32.xlu0 %v711, 126
      %v748 = vpop.permute.xlu0 %747
      %749 = vrot.lane.b32.xlu0 %v712, 126
      %v750 = vpop.permute.xlu0 %749
      %751 = vrot.lane.b32.xlu0 %v713, 126
      %v752 = vpop.permute.xlu0 %751
      %753 = vrot.lane.b32.xlu0 %v714, 126
      %v754 = vpop.permute.xlu0 %753
      %755 = vrot.lane.b32.xlu0 %v715, 126
      %v756 = vpop.permute.xlu0 %755
      %757 = vrot.lane.b32.xlu0 %v716, 126
      %v758 = vpop.permute.xlu0 %757
      %759 = vrot.lane.b32.xlu0 %v717, 126
      %v760 = vpop.permute.xlu0 %759
      %761 = vrot.lane.b32.xlu0 %v718, 126
      %v762 = vpop.permute.xlu0 %761
      %763 = vrot.lane.b32.xlu0 %v719, 126
      %v764 = vpop.permute.xlu0 %763
      %765 = vrot.lane.b32.xlu0 %v720, 126
      %v766 = vpop.permute.xlu0 %765
      %767 = vrot.lane.b32.xlu0 %v721, 126
      %v768 = vpop.permute.xlu0 %767
      %769 = vrot.lane.b32.xlu0 %v722, 126
      %v770 = vpop.permute.xlu0 %769
      %vm771 = vcmask 1031168
      %v772 = vsel %vm771, %v740, %v742
      %v773 = vsel %vm771, %v744, %v746
      %v774 = vsel %vm771, %v748, %v750
      %v775 = vsel %vm771, %v752, %v754
      %v776 = vsel %vm771, %v756, %v758
      %v777 = vsel %vm771, %v760, %v762
      %v778 = vsel %vm771, %v764, %v766
      %v779 = vsel %vm771, %v768, %v770
      %v788 = vadd.f32 %v667, %v772
      %v789 = vadd.f32 %v668, %v773
      %v790 = vadd.f32 %v669, %v774
      %v791 = vadd.f32 %v670, %v775
      %v792 = vadd.f32 %v671, %v776
      %v793 = vadd.f32 %v672, %v777
      %v794 = vadd.f32 %v673, %v778
      %v795 = vadd.f32 %v674, %v779
      %796 = vset.pattern.permute.xlu0 2
      %797 = vperm.xlu0 %796, %v619
      %v798 = vpop.permute.xlu0 %797
      %800 = vset.pattern.permute.xlu0 2
      %801 = vperm.xlu0 %800, %v620
      %v802 = vpop.permute.xlu0 %801
      %804 = vset.pattern.permute.xlu0 2
      %805 = vperm.xlu0 %804, %v621
      %v806 = vpop.permute.xlu0 %805
      %808 = vset.pattern.permute.xlu0 2
      %809 = vperm.xlu0 %808, %v622
      %v810 = vpop.permute.xlu0 %809
      %812 = vset.pattern.permute.xlu0 2
      %813 = vperm.xlu0 %812, %v623
      %v814 = vpop.permute.xlu0 %813
      %816 = vset.pattern.permute.xlu0 2
      %817 = vperm.xlu0 %816, %v624
      %v818 = vpop.permute.xlu0 %817
      %820 = vset.pattern.permute.xlu0 2
      %821 = vperm.xlu0 %820, %v625
      %v822 = vpop.permute.xlu0 %821
      %824 = vset.pattern.permute.xlu0 2
      %825 = vperm.xlu0 %824, %v626
      %v826 = vpop.permute.xlu0 %825
      %v828 = vmul.f32 %v603, %v798
      %v829 = vmul.f32 %v604, %v798
      %v830 = vmul.f32 %v605, %v802
      %v831 = vmul.f32 %v606, %v802
      %v832 = vmul.f32 %v607, %v806
      %v833 = vmul.f32 %v608, %v806
      %v834 = vmul.f32 %v609, %v810
      %v835 = vmul.f32 %v610, %v810
      %v836 = vmul.f32 %v611, %v814
      %v837 = vmul.f32 %v612, %v814
      %v838 = vmul.f32 %v613, %v818
      %v839 = vmul.f32 %v614, %v818
      %v840 = vmul.f32 %v615, %v822
      %v841 = vmul.f32 %v616, %v822
      %v842 = vmul.f32 %v617, %v826
      %v843 = vmul.f32 %v618, %v826
      %860 = vrot.lane.b32.xlu0 %v828, 124
      %v861 = vpop.permute.xlu0 %860
      %862 = vrot.lane.b32.xlu0 %v829, 124
      %v863 = vpop.permute.xlu0 %862
      %864 = vrot.lane.b32.xlu0 %v830, 124
      %v865 = vpop.permute.xlu0 %864
      %866 = vrot.lane.b32.xlu0 %v831, 124
      %v867 = vpop.permute.xlu0 %866
      %868 = vrot.lane.b32.xlu0 %v832, 124
      %v869 = vpop.permute.xlu0 %868
      %870 = vrot.lane.b32.xlu0 %v833, 124
      %v871 = vpop.permute.xlu0 %870
      %872 = vrot.lane.b32.xlu0 %v834, 124
      %v873 = vpop.permute.xlu0 %872
      %874 = vrot.lane.b32.xlu0 %v835, 124
      %v875 = vpop.permute.xlu0 %874
      %876 = vrot.lane.b32.xlu0 %v836, 124
      %v877 = vpop.permute.xlu0 %876
      %878 = vrot.lane.b32.xlu0 %v837, 124
      %v879 = vpop.permute.xlu0 %878
      %880 = vrot.lane.b32.xlu0 %v838, 124
      %v881 = vpop.permute.xlu0 %880
      %882 = vrot.lane.b32.xlu0 %v839, 124
      %v883 = vpop.permute.xlu0 %882
      %884 = vrot.lane.b32.xlu0 %v840, 124
      %v885 = vpop.permute.xlu0 %884
      %886 = vrot.lane.b32.xlu0 %v841, 124
      %v887 = vpop.permute.xlu0 %886
      %888 = vrot.lane.b32.xlu0 %v842, 124
      %v889 = vpop.permute.xlu0 %888
      %890 = vrot.lane.b32.xlu0 %v843, 124
      %v891 = vpop.permute.xlu0 %890
      %vm892 = vcmask 1014784
      %v893 = vsel %vm892, %v861, %v863
      %v894 = vsel %vm892, %v865, %v867
      %v895 = vsel %vm892, %v869, %v871
      %v896 = vsel %vm892, %v873, %v875
      %v897 = vsel %vm892, %v877, %v879
      %v898 = vsel %vm892, %v881, %v883
      %v899 = vsel %vm892, %v885, %v887
      %v900 = vsel %vm892, %v889, %v891
      %v909 = vadd.f32 %v788, %v893
      %v910 = vadd.f32 %v789, %v894
      %v911 = vadd.f32 %v790, %v895
      %v912 = vadd.f32 %v791, %v896
      %v913 = vadd.f32 %v792, %v897
      %v914 = vadd.f32 %v793, %v898
      %v915 = vadd.f32 %v794, %v899
      %v916 = vadd.f32 %v795, %v900
      %v917 = vld [vmem:[%s414] sm:$0xff]
      %v918 = vld [vmem:[%s414 + $0x8] sm:$0xff]
      %v919 = vld [vmem:[%s414 + $0x10] sm:$0xff]
      %v920 = vld [vmem:[%s414 + $0x18] sm:$0xff]
      %v921 = vld [vmem:[%s414 + $0x20] sm:$0xff]
      %v922 = vld [vmem:[%s414 + $0x28] sm:$0xff]
      %v923 = vld [vmem:[%s414 + $0x30] sm:$0xff]
      %v924 = vld [vmem:[%s414 + $0x38] sm:$0xff]
      %926 = vset.pattern.permute.xlu0 0
      %927 = vperm.xlu0 %926, %v917
      %v928 = vpop.permute.xlu0 %927
      %931 = vset.pattern.permute.xlu0 0
      %932 = vperm.xlu0 %931, %v918
      %v933 = vpop.permute.xlu0 %932
      %936 = vset.pattern.permute.xlu0 0
      %937 = vperm.xlu0 %936, %v919
      %v938 = vpop.permute.xlu0 %937
      %941 = vset.pattern.permute.xlu0 0
      %942 = vperm.xlu0 %941, %v920
      %v943 = vpop.permute.xlu0 %942
      %946 = vset.pattern.permute.xlu0 0
      %947 = vperm.xlu0 %946, %v921
      %v948 = vpop.permute.xlu0 %947
      %951 = vset.pattern.permute.xlu0 0
      %952 = vperm.xlu0 %951, %v922
      %v953 = vpop.permute.xlu0 %952
      %956 = vset.pattern.permute.xlu0 0
      %957 = vperm.xlu0 %956, %v923
      %v958 = vpop.permute.xlu0 %957
      %961 = vset.pattern.permute.xlu0 0
      %962 = vperm.xlu0 %961, %v924
      %v963 = vpop.permute.xlu0 %962
      %v965 = vadd.f32 %v909, %v928
      %v966 = vadd.f32 %v910, %v933
      %v967 = vadd.f32 %v911, %v938
      %v968 = vadd.f32 %v912, %v943
      %v969 = vadd.f32 %v913, %v948
      %v970 = vadd.f32 %v914, %v953
      %v971 = vadd.f32 %v915, %v958
      %v972 = vadd.f32 %v916, %v963
      %v973 = vld [vmem:[#allocation2] sm:$0x1]
      %vm974 = vcmp.ge.f32.partialorder %v965, 0.0
      %vm975 = vcmp.ge.f32.partialorder %v966, 0.0
      %vm976 = vcmp.ge.f32.partialorder %v967, 0.0
      %vm977 = vcmp.ge.f32.partialorder %v968, 0.0
      %vm978 = vcmp.ge.f32.partialorder %v969, 0.0
      %vm979 = vcmp.ge.f32.partialorder %v970, 0.0
      %vm980 = vcmp.ge.f32.partialorder %v971, 0.0
      %vm981 = vcmp.ge.f32.partialorder %v972, 0.0
      %v983 = vperm.slane %v973, 0
      %984 = vset.pattern.permute.xlu0 0
      %985 = vperm.xlu0 %984, %v983
      %v986 = vpop.permute.xlu0 %985
      %v988 = vmul.f32 %v986, %v965
      %v989 = vmul.f32 %v986, %v966
      %v990 = vmul.f32 %v986, %v967
      %v991 = vmul.f32 %v986, %v968
      %v992 = vmul.f32 %v986, %v969
      %v993 = vmul.f32 %v986, %v970
      %v994 = vmul.f32 %v986, %v971
      %v995 = vmul.f32 %v986, %v972
      %v996 = vsel %vm974, %v965, %v988
      %v997 = vsel %vm975, %v966, %v989
      %v998 = vsel %vm976, %v967, %v990
      %v999 = vsel %vm977, %v968, %v991
      %v1000 = vsel %vm978, %v969, %v992
      %v1001 = vsel %vm979, %v970, %v993
      %v1002 = vsel %vm980, %v971, %v994
      %v1003 = vsel %vm981, %v972, %v995
      %vm1004 = vcmp.lt.s32.totalorder %v595, 21
      %v1005 = vsel %vm1004, %v996, 0.0
      %v1006 = vsel %vm1004, %v997, 0.0
      %v1007 = vsel %vm1004, %v998, 0.0
      %v1008 = vsel %vm1004, %v999, 0.0
      %v1009 = vsel %vm1004, %v1000, 0.0
      %v1010 = vsel %vm1004, %v1001, 0.0
      %v1011 = vsel %vm1004, %v1002, 0.0
      %v1012 = vsel %vm1004, %v1003, 0.0
      %1013 = vst [vmem:[%s444] sm:$0xff] %v1005
      %1014 = vst [vmem:[%s444 + $0x8] sm:$0xff] %v1006
      %1015 = vst [vmem:[%s444 + $0x10] sm:$0xff] %v1007
      %1016 = vst [vmem:[%s444 + $0x18] sm:$0xff] %v1008
      %1017 = vst [vmem:[%s444 + $0x20] sm:$0xff] %v1009
      %1018 = vst [vmem:[%s444 + $0x28] sm:$0xff] %v1010
      %1019 = vst [vmem:[%s444 + $0x30] sm:$0xff] %v1011
      %1020 = vst [vmem:[%s444 + $0x38] sm:$0xff] %v1012
      %v1021 = vadd.f32 %v1005, %v1006
      %v1022 = vadd.f32 %v1021, %v1007
      %v1023 = vadd.f32 %v1022, %v1008
      %v1024 = vadd.f32 %v1023, %v1009
      %v1025 = vadd.f32 %v1024, %v1010
      %v1026 = vadd.f32 %v1025, %v1011
      %v1027 = vadd.f32 %v1026, %v1012
      %1028 = vadd.xlane.f32.xlu0 %v1027
      %v1029 = vpop.xlane.xlu0 %1028
      %v1030 = vrot.slane %v1029, 4
      %v1031 = vadd.f32 %v1029, %v1030
      %v1032 = vrot.slane %v1031, 2
      %v1033 = vadd.f32 %v1031, %v1032
      %v1034 = vrot.slane %v1033, 1
      %v1035 = vadd.f32 %v1033, %v1034
      %s1036 = vtos %v1035
      %v1037 = vmul.f32 %v1005, %v1005
      %v1038 = vmul.f32 %v1006, %v1006
      %v1039 = vmul.f32 %v1007, %v1007
      %v1040 = vmul.f32 %v1008, %v1008
      %v1041 = vmul.f32 %v1009, %v1009
      %v1042 = vmul.f32 %v1010, %v1010
      %v1043 = vmul.f32 %v1011, %v1011
      %v1044 = vmul.f32 %v1012, %v1012
      %v1045 = vadd.f32 %v1037, %v1038
      %v1046 = vadd.f32 %v1045, %v1039
      %v1047 = vadd.f32 %v1046, %v1040
      %v1048 = vadd.f32 %v1047, %v1041
      %v1049 = vadd.f32 %v1048, %v1042
      %v1050 = vadd.f32 %v1049, %v1043
      %v1051 = vadd.f32 %v1050, %v1044
      %1052 = vadd.xlane.f32.xlu0 %v1051
      %v1053 = vpop.xlane.xlu0 %1052
      %v1054 = vrot.slane %v1053, 4
      %v1055 = vadd.f32 %v1053, %v1054
      %v1056 = vrot.slane %v1055, 2
      %v1057 = vadd.f32 %v1055, %v1056
      %v1058 = vrot.slane %v1057, 1
      %v1059 = vadd.f32 %v1057, %v1058
      %s1060 = vtos %v1059
      %v1061 = vlaneseq
      %v1062 = vshrl.u32 %v1061, 7
      %vm1063 = vcmp.eq.s32.totalorder %v1062, 0
      %v1064 = vstv %s1036
      %v1065 = vstv %s1060
      %v1066 = vsel %vm1063, %v1064, %v1065
      %p1067 = scmp.eq.s32.totalorder %s26, 0
      // Predicated region
      $region45: #{convtasnet_separator_forward.22} parent=43 // pred_check
        %p1068 = pneg %p1067
      $region46: #{convtasnet_separator_forward.22} parent=43 // pred_check_branch
        %1070 = sbr.rel (%p1068) target = $region48
      $region47: #{convtasnet_separator_forward.22} parent=43 // pred_region
        %1071 = vst [vmem:[%s449] sm:$0x3] %v1066
      $region48: #{convtasnet_separator_forward.22} parent=43 // pred_fallthru
        _
      %p1072 = scmp.gt.s32.totalorder %s26, 0
      // Predicated region
      $region49: #{convtasnet_separator_forward.22} parent=43 // pred_check
        %p1073 = pneg %p1072
      $region50: #{convtasnet_separator_forward.22} parent=43 // pred_check_branch
        %1075 = sbr.rel (%p1073) target = $region52
      $region51: #{convtasnet_separator_forward.22} parent=43 // pred_region
        %v1076 = vld [vmem:[%s449] sm:$0x3]
        %v1077 = vadd.f32 %v1076, %v1066
        %1078 = vst [vmem:[%s449] sm:$0x3] %v1077
      $region52: #{convtasnet_separator_forward.22} parent=43 // pred_fallthru
        _
      %s1079 = smul.u32 8, %s26
      %p1080 = scmp.lt.s32.totalorder %s25, 1
      %s1081 = scalar_select %p1080, %s25, 1
      %p1082 = scmp.lt.s32.totalorder %s1079, 7
      %s1083 = scalar_select %p1082, %s1079, 7
      %s1084 = smul.addr %s1081, 8
      %s1085 = sadd.s32 %s1083, %s1084
      %s1086 = smul.addr %s1085, 8
      %s1087 = scalar_lea.vmem %s6, %s1086
      %p1088 = scmp.lt.s32.totalorder %s25, 1
      %s1089 = scalar_select %p1088, %s25, 1
      %s1090 = smul.addr %s1089, 2
      %s1091 = scalar_lea.vmem %s7, %s1090
      // Predicated region
      $region53: #{convtasnet_separator_forward.22} parent=43 // pred_check
        %p1092 = pneg %p210
      $region54: #{convtasnet_separator_forward.22} parent=43 // pred_check_branch
        %1094 = sbr.rel (%p1092) target = $region56
      $region55: #{convtasnet_separator_forward.22} parent=43 // pred_region
        %s1095 = smul.u32 8, %s26
      $region56: #{convtasnet_separator_forward.22} parent=43 // pred_fallthru
        _
      // Predicated region
      $region57: #{convtasnet_separator_forward.22} parent=43 // pred_check
        %p1096 = pneg %p236
      $region58: #{convtasnet_separator_forward.22} parent=43 // pred_check_branch
        %1098 = sbr.rel (%p1096) target = $region60
      $region59: #{convtasnet_separator_forward.22} parent=43 // pred_region
        _
      $region60: #{convtasnet_separator_forward.22} parent=43 // pred_fallthru
        _
    $region44: #{convtasnet_separator_forward.22} parent=5 // pred_fallthru
      _
    %p1099 = scmp.le.s32.totalorder 2, %s16
    // Predicated region
    $region61: #{convtasnet_separator_forward.22} parent=5 // pred_check
      %p1100 = pneg %p1099
    $region62: #{convtasnet_separator_forward.22} parent=5 // pred_check_branch
      %1102 = sbr.rel (%p1100) target = $region64
    $region63: #{convtasnet_separator_forward.22} parent=5 // pred_region
      %s1103 = ssub.s32 %s16, 2
      // Predicated region
      $region65: #{convtasnet_separator_forward.22} parent=63 // pred_check
        %p1104 = pneg %p216
      $region66: #{convtasnet_separator_forward.22} parent=63 // pred_check_branch
        %1106 = sbr.rel (%p1104) target = $region68
      $region67: #{convtasnet_separator_forward.22} parent=63 // pred_region
        %s1107 = smul.u32 8, %s28
        %p1108 = scmp.lt.s32.totalorder %s27, 1
        %s1109 = scalar_select %p1108, %s27, 1
        %p1110 = scmp.lt.s32.totalorder %s1107, 7
        %s1111 = scalar_select %p1110, %s1107, 7
        %s1112 = smul.addr %s1109, 8
        %s1113 = sadd.s32 %s1111, %s1112
        %s1114 = smul.addr %s1113, 8
        %s1115 = scalar_lea.vmem %s6, %s1114
      $region68: #{convtasnet_separator_forward.22} parent=63 // pred_fallthru
        _
      // Predicated region
      $region69: #{convtasnet_separator_forward.22} parent=63 // pred_check
        %p1116 = pneg %p242
      $region70: #{convtasnet_separator_forward.22} parent=63 // pred_check_branch
        %1118 = sbr.rel (%p1116) target = $region72
      $region71: #{convtasnet_separator_forward.22} parent=63 // pred_region
        %p1119 = scmp.lt.s32.totalorder %s27, 1
        %s1120 = scalar_select %p1119, %s27, 1
        %s1121 = smul.addr %s1120, 2
        %s1122 = scalar_lea.vmem %s7, %s1121
      $region72: #{convtasnet_separator_forward.22} parent=63 // pred_fallthru
        _
    $region64: #{convtasnet_separator_forward.22} parent=5 // pred_fallthru
      _
  $region6: #{convtasnet_separator_forward.22} parent=0 // loop_footer
    %s20 = sadd.s32 1, %s16
  $region7: #{convtasnet_separator_forward.22} parent=0 // loop_footer_branch
    %15 = sbr.rel target = $region3
  $region8: #{convtasnet_separator_forward.22} parent=0 // loop_exit
    _

// kernel: convtasnet_separator_forward.31
$region0: #{convtasnet_separator_forward.31}
  #allocation0 [shape = 'u32[]', space=smem, size = 0x4, offset = 0x4, fixed_abs, tag = 'smem constant byte address 0x4 - core index']
  #allocation1 [shape = 'u32[72,128]{1,0:T(1,128)}', space=vmem, size = 0x9000, scoped, tag = 'internal scratch']
  %s0 = inlined_call_operand.vmem [shape: f32[2,256,128], index: 0, kind: input, shape index: {}]
  %s1 = inlined_call_operand.vmem [shape: f32[2,64,128], index: 1, kind: input, shape index: {}]
  %s2 = inlined_call_operand.vmem [shape: bf16[16,64], index: 2, kind: input, shape index: {}]
  %s3 = inlined_call_operand.vmem [shape: f32[2,64,128], index: 3, kind: output, shape index: {}]
  %s4 = sld [smem:[#allocation0]]
  $region45: #{convtasnet_separator_forward.31} parent=0
    _
  %s6 = ssub.s32 1, %s4
  %s7 = scalar_select 0, %s6, %s4
  loop: start=0, step=1, limit=10
  $region2: #{convtasnet_separator_forward.31} parent=0 // loop_pre_header
    _
  $region3: #{convtasnet_separator_forward.31} parent=0 // loop_header
    %s9 = sphi 0, %s13
    %p10 = scmp.ge.s32.totalorder %s9, 10
    %s16 = sphi 0, %s35
    %s17 = sphi 0, %s31
    %s18 = sphi 0, %s27
    %s19 = sphi 0, %s16
    %s20 = sphi 0, %s17
    %s21 = sphi 0, %s18
    %s22 = sphi 0, %s19
    %s23 = sphi 0, %s20
    %s24 = sphi 0, %s21
    %s42 = sphi 0, %s44
    %s45 = sphi 0, %s42
    %s46 = sphi 0, %s45
    %s62 = sphi 0, %s46
    %s70 = sphi 0, %s72
    %s73 = sphi 0, %s70
    %s74 = sphi 0, %s73
    %s90 = sphi 0, %s74
    %s94 = sphi 0, %s94
    %s96 = sphi 0, %s94
    %s97 = sphi 0, %s96
    %s111 = sphi 0, %s97
    %s121 = sphi 0, %s123
    %s124 = sphi 0, %s121
    %s125 = sphi 0, %s124
    %s141 = sphi 0, %s125
  $region4: #{convtasnet_separator_forward.31} parent=0 // loop_header_branch
    %12 = sbr.rel (%p10) target = $region8
  $region5: #{convtasnet_separator_forward.31} parent=0 // loop_body
    %s14 = ssub.s32 %s9, 1
    %s15 = ssub.s32 %s9, 2
    %s25 = sadd.s32 1, %s18
    %p26 = scmp.ge.s32.totalorder %s25, 1
    %s27 = scalar_select %p26, 0, %s25
    %s28 = sadd.s32 1, %s17
    %s29 = scalar_select %p26, %s28, %s17
    %p30 = scmp.ge.s32.totalorder %s29, 4
    %s31 = scalar_select %p30, 0, %s29
    %s32 = sadd.s32 1, %s16
    %s33 = scalar_select %p30, %s32, %s16
    %p34 = scmp.ge.s32.totalorder %s33, 2
    %s35 = scalar_select %p34, 0, %s33
    %s36 = ssub.s32 %s16, %s35
    %s37 = ssub.s32 %s17, %s31
    %s38 = sor.u32 %s36, %s37
    %s39 = ssub.s32 %s18, %s27
    %s40 = sor.u32 %s38, %s39
    %p41 = scmp.eq.s32.totalorder %s40, 0
    %s43 = sadd.s32 %s42, 1
    %s44 = scalar_select %p41, %s42, %s43
    %p47 = pneg %p41
    %p48 = scmp.eq.s32.totalorder %s9, 7
    %p49 = por %p47, %p48
    %p50 = scmp.ne.s32.totalorder %s42, %s45
    %p51 = scmp.eq.s32.totalorder %s9, 0
    %p52 = por %p50, %p51
    %p53 = scmp.ne.s32.totalorder %s42, %s45
    %p54 = scmp.eq.s32.totalorder %s14, 7
    %p55 = por %p53, %p54
    %p56 = scmp.ne.s32.totalorder %s45, %s46
    %p57 = scmp.eq.s32.totalorder %s14, 0
    %p58 = por %p56, %p57
    %p59 = scmp.ne.s32.totalorder %s45, %s46
    %p60 = scmp.eq.s32.totalorder %s15, 7
    %p61 = por %p59, %p60
    %p63 = scmp.ne.s32.totalorder %s46, %s62
    %p64 = scmp.eq.s32.totalorder %s15, 0
    %p65 = por %p63, %p64
    %s66 = ssub.s32 %s16, %s35
    %s67 = ssub.s32 %s18, %s27
    %s68 = sor.u32 %s66, %s67
    %p69 = scmp.eq.s32.totalorder %s68, 0
    %s71 = sadd.s32 %s70, 1
    %s72 = scalar_select %p69, %s70, %s71
    %p75 = pneg %p69
    %p76 = scmp.eq.s32.totalorder %s9, 7
    %p77 = por %p75, %p76
    %p78 = scmp.ne.s32.totalorder %s70, %s73
    %p79 = scmp.eq.s32.totalorder %s9, 0
    %p80 = por %p78, %p79
    %p81 = scmp.ne.s32.totalorder %s70, %s73
    %p82 = scmp.eq.s32.totalorder %s14, 7
    %p83 = por %p81, %p82
    %p84 = scmp.ne.s32.totalorder %s73, %s74
    %p85 = scmp.eq.s32.totalorder %s14, 0
    %p86 = por %p84, %p85
    %p87 = scmp.ne.s32.totalorder %s73, %s74
    %p88 = scmp.eq.s32.totalorder %s15, 7
    %p89 = por %p87, %p88
    %p91 = scmp.ne.s32.totalorder %s74, %s90
    %p92 = scmp.eq.s32.totalorder %s15, 0
    %p93 = por %p91, %p92
    %s95 = sadd.s32 %s94, 1
    %p98 = scmp.eq.s32.totalorder %s9, 7
    %p99 = scmp.ne.s32.totalorder %s94, %s96
    %p100 = scmp.eq.s32.totalorder %s9, 0
    %p101 = por %p99, %p100
    %p102 = scmp.ne.s32.totalorder %s94, %s96
    %p103 = scmp.eq.s32.totalorder %s14, 7
    %p104 = por %p102, %p103
    %p105 = scmp.ne.s32.totalorder %s96, %s97
    %p106 = scmp.eq.s32.totalorder %s14, 0
    %p107 = por %p105, %p106
    %p108 = scmp.ne.s32.totalorder %s96, %s97
    %p109 = scmp.eq.s32.totalorder %s15, 7
    %p110 = por %p108, %p109
    %p112 = scmp.ne.s32.totalorder %s97, %s111
    %p113 = scmp.eq.s32.totalorder %s15, 0
    %p114 = por %p112, %p113
    %s115 = ssub.s32 %s16, %s35
    %s116 = ssub.s32 %s17, %s31
    %s117 = sor.u32 %s115, %s116
    %s118 = ssub.s32 %s18, %s27
    %s119 = sor.u32 %s117, %s118
    %p120 = scmp.eq.s32.totalorder %s119, 0
    %s122 = sadd.s32 %s121, 1
    %s123 = scalar_select %p120, %s121, %s122
    %p126 = pneg %p120
    %p127 = scmp.eq.s32.totalorder %s9, 7
    %p128 = por %p126, %p127
    %p129 = scmp.ne.s32.totalorder %s121, %s124
    %p130 = scmp.eq.s32.totalorder %s9, 0
    %p131 = por %p129, %p130
    %p132 = scmp.ne.s32.totalorder %s121, %s124
    %p133 = scmp.eq.s32.totalorder %s14, 7
    %p134 = por %p132, %p133
    %p135 = scmp.ne.s32.totalorder %s124, %s125
    %p136 = scmp.eq.s32.totalorder %s14, 0
    %p137 = por %p135, %p136
    %p138 = scmp.ne.s32.totalorder %s124, %s125
    %p139 = scmp.eq.s32.totalorder %s15, 7
    %p140 = por %p138, %p139
    %p142 = scmp.ne.s32.totalorder %s125, %s141
    %p143 = scmp.eq.s32.totalorder %s15, 0
    %p144 = por %p142, %p143
    %p145 = scmp.le.s32.totalorder 1, %s9
    %p146 = scmp.lt.s32.totalorder %s9, 9
    %p147 = pnand %p145, %p146
    %p148 = pneg %p147
    // Predicated region
    $region9: #{convtasnet_separator_forward.31} parent=5 // pred_check
      _
    $region10: #{convtasnet_separator_forward.31} parent=5 // pred_check_branch
      %150 = sbr.rel (%p147) target = $region12
    $region11: #{convtasnet_separator_forward.31} parent=5 // pred_region
      %s151 = ssub.s32 %s9, 1
      // Predicated region
      $region13: #{convtasnet_separator_forward.31} parent=11 // pred_check
        %p152 = pneg %p107
      $region14: #{convtasnet_separator_forward.31} parent=11 // pred_check_branch
        %154 = sbr.rel (%p152) target = $region16
      $region15: #{convtasnet_separator_forward.31} parent=11 // pred_region
        _
      $region16: #{convtasnet_separator_forward.31} parent=11 // pred_fallthru
        _
    $region12: #{convtasnet_separator_forward.31} parent=5 // pred_fallthru
      _
    %p155 = scmp.lt.s32.totalorder %s9, 8
    // Predicated region
    $region17: #{convtasnet_separator_forward.31} parent=5 // pred_check
      %p156 = pneg %p155
    $region18: #{convtasnet_separator_forward.31} parent=5 // pred_check_branch
      %158 = sbr.rel (%p156) target = $region20
    $region19: #{convtasnet_separator_forward.31} parent=5 // pred_region
      // Predicated region
      $region21: #{convtasnet_separator_forward.31} parent=19 // pred_check
        %p159 = pneg %p52
      $region22: #{convtasnet_separator_forward.31} parent=19 // pred_check_branch
        %161 = sbr.rel (%p159) target = $region24
      $region23: #{convtasnet_separator_forward.31} parent=19 // pred_region
        %s162 = smul.u32 8, %s17
        %p163 = scmp.lt.s32.totalorder %s16, 1
        %s164 = scalar_select %p163, %s16, 1
        %p165 = scmp.lt.s32.totalorder %s162, 31
        %s166 = scalar_select %p165, %s162, 31
        %p167 = scmp.lt.s32.totalorder %s18, 0
        %s168 = scalar_select %p167, %s18, 0
        %s169 = sadd.s32 %s168, %s166
        %s170 = smul.addr %s164, 32
        %s171 = sadd.s32 %s169, %s170
        %s172 = smul.addr %s171, 8
        %s173 = scalar_lea.vmem %s0, %s172
        %s174 = smul.u32 8, %s17
      $region24: #{convtasnet_separator_forward.31} parent=19 // pred_fallthru
        _
      // Predicated region
      $region25: #{convtasnet_separator_forward.31} parent=19 // pred_check
        %p175 = pneg %p80
      $region26: #{convtasnet_separator_forward.31} parent=19 // pred_check_branch
        %177 = sbr.rel (%p175) target = $region28
      $region27: #{convtasnet_separator_forward.31} parent=19 // pred_region
        %p178 = scmp.lt.s32.totalorder %s16, 1
        %s179 = scalar_select %p178, %s16, 1
        %p180 = scmp.lt.s32.totalorder %s18, 0
        %s181 = scalar_select %p180, %s18, 0
        %s182 = smul.addr %s179, 8
        %s183 = sadd.s32 %s181, %s182
        %s184 = smul.addr %s183, 8
        %s185 = scalar_lea.vmem %s1, %s184
      $region28: #{convtasnet_separator_forward.31} parent=19 // pred_fallthru
        _
    $region20: #{convtasnet_separator_forward.31} parent=5 // pred_fallthru
      _
    %p186 = scmp.le.s32.totalorder 1, %s9
    %p187 = scmp.lt.s32.totalorder %s9, 9
    %p188 = pnand %p186, %p187
    %p189 = pneg %p188
    // Predicated region
    $region29: #{convtasnet_separator_forward.31} parent=5 // pred_check
      _
    $region30: #{convtasnet_separator_forward.31} parent=5 // pred_check_branch
      %191 = sbr.rel (%p188) target = $region32
    $region31: #{convtasnet_separator_forward.31} parent=5 // pred_region
      %s192 = ssub.s32 %s9, 1
      %s193 = smul.u32 8, %s20
      %p194 = scmp.lt.s32.totalorder %s19, 1
      %s195 = scalar_select %p194, %s19, 1
      %p196 = scmp.lt.s32.totalorder %s193, 31
      %s197 = scalar_select %p196, %s193, 31
      %p198 = scmp.lt.s32.totalorder %s21, 0
      %s199 = scalar_select %p198, %s21, 0
      %s200 = sadd.s32 %s199, %s197
      %s201 = smul.addr %s195, 32
      %s202 = sadd.s32 %s200, %s201
      %s203 = smul.addr %s202, 8
      %s204 = scalar_lea.vmem %s0, %s203
      %p205 = pneg %p58
      %p206 = pneg %p55
      %p207 = scmp.lt.s32.totalorder %s19, 1
      %s208 = scalar_select %p207, %s19, 1
      %p209 = scmp.lt.s32.totalorder %s21, 0
      %s210 = scalar_select %p209, %s21, 0
      %s211 = smul.addr %s208, 8
      %s212 = sadd.s32 %s210, %s211
      %s213 = smul.addr %s212, 8
      %s214 = scalar_lea.vmem %s1, %s213
      %p215 = pneg %p86
      %p216 = pneg %p83
      %p217 = pneg %p107
      %p218 = pneg %p104
      %p219 = pneg %p137
      %p220 = pneg %p134
      %s221 = smul.u32 2, %s20
      %p222 = scmp.lt.s32.totalorder %s19, 1
      %s223 = scalar_select %p222, %s19, 1
      %p224 = scmp.lt.s32.totalorder %s221, 7
      %s225 = scalar_select %p224, %s221, 7
      %p226 = scmp.lt.s32.totalorder %s21, 0
      %s227 = scalar_select %p226, %s21, 0
      %s228 = sadd.s32 %s227, %s225
      %s229 = smul.addr %s223, 8
      %s230 = sadd.s32 %s228, %s229
      %s231 = smul.addr %s230, 8
      %s232 = scalar_lea.vmem %s3, %s231
      %s233 = smul.u32 8, %s20
      %p234 = scmp.lt.s32.totalorder %s19, 1
      %s235 = scalar_select %p234, %s19, 1
      %p236 = scmp.lt.s32.totalorder %s233, 31
      %s237 = scalar_select %p236, %s233, 31
      %p238 = scmp.lt.s32.totalorder %s21, 0
      %s239 = scalar_select %p238, %s21, 0
      %s240 = sadd.s32 %s239, %s237
      %s241 = smul.addr %s235, 32
      %s242 = sadd.s32 %s240, %s241
      %s243 = smul.addr %s242, 8
      %s244 = scalar_lea.vmem %s0, %s243
      %s245 = smul.u32 8, %s20
      %p246 = scmp.lt.s32.totalorder %s19, 1
      %s247 = scalar_select %p246, %s19, 1
      %p248 = scmp.lt.s32.totalorder %s21, 0
      %s249 = scalar_select %p248, %s21, 0
      %s250 = smul.addr %s247, 8
      %s251 = sadd.s32 %s249, %s250
      %s252 = smul.addr %s251, 8
      %s253 = scalar_lea.vmem %s1, %s252
      %s254 = smul.u32 2, %s20
      %p255 = scmp.lt.s32.totalorder %s19, 1
      %s256 = scalar_select %p255, %s19, 1
      %p257 = scmp.lt.s32.totalorder %s254, 7
      %s258 = scalar_select %p257, %s254, 7
      %p259 = scmp.lt.s32.totalorder %s21, 0
      %s260 = scalar_select %p259, %s21, 0
      %s261 = sadd.s32 %s260, %s258
      %s262 = smul.addr %s256, 8
      %s263 = sadd.s32 %s261, %s262
      %s264 = smul.addr %s263, 8
      %s265 = scalar_lea.vmem %s3, %s264
      %s266 = smul.u32 2, %s20
      %v268 = vld [vmem:[%s244] sm:$0xff]
      %v269 = vld [vmem:[%s244 + $0x8] sm:$0xff]
      %v270 = vld [vmem:[%s244 + $0x10] sm:$0xff]
      %v271 = vld [vmem:[%s244 + $0x18] sm:$0xff]
      %v272 = vld [vmem:[%s244 + $0x20] sm:$0xff]
      %v273 = vld [vmem:[%s244 + $0x28] sm:$0xff]
      %v274 = vld [vmem:[%s244 + $0x30] sm:$0xff]
      %v275 = vld [vmem:[%s244 + $0x38] sm:$0xff]
      %v276 = vld [vmem:[%s253] sm:$0xff]
      %v277 = vld [vmem:[%s253 + $0x8] sm:$0xff]
      %v278 = vld [vmem:[%s253 + $0x10] sm:$0xff]
      %v279 = vld [vmem:[%s253 + $0x18] sm:$0xff]
      %v280 = vld [vmem:[%s253 + $0x20] sm:$0xff]
      %v281 = vld [vmem:[%s253 + $0x28] sm:$0xff]
      %v282 = vld [vmem:[%s253 + $0x30] sm:$0xff]
      %v283 = vld [vmem:[%s253 + $0x38] sm:$0xff]
      %v284 = vmul.f32 %v268, %v276
      %v285 = vmul.f32 %v269, %v277
      %v286 = vmul.f32 %v270, %v278
      %v287 = vmul.f32 %v271, %v279
      %v288 = vmul.f32 %v272, %v280
      %v289 = vmul.f32 %v273, %v281
      %v290 = vmul.f32 %v274, %v282
      %v291 = vmul.f32 %v275, %v283
      %v292 = vld [vmem:[%s2] sm:$0xf]
      %v293 = vld [vmem:[%s2 + $0x4] sm:$0xf]
      %v294 = vpack.c.bf16 %v285, %v284
      %v295 = vpack.c.bf16 %v287, %v286
      %v296 = vpack.c.bf16 %v289, %v288
      %v297 = vpack.c.bf16 %v291, %v290
      %v300 = vunpack.c.l.b16 %v292
      %v301 = vunpack.c.l.b16 %v293
      %v302 = vpack.c.b16 %v301, %v300
      %vm303 = vcmask 523264
      %v305 = vsel %vm303, %v302, 0
      %307 = vmatpush.bf16.msra.mxu0 0
      %308 = vmatpush.bf16.msra.mxu0 0
      %309 = vmatpush.bf16.msra.mxu0 0
      %310 = vmatpush.bf16.msra.mxu0 0
      %311 = vmatpush.bf16.msra.mxu0 %v297
      %312 = vmatpush.bf16.msra.mxu0 %v296
      %313 = vmatpush.bf16.msra.mxu0 %v295
      %314 = vmatpush.bf16.msra.mxu0 %v294
      %315 = vmatmul.bf16.gmra.mxu0 %v305
      %v316 = vpop.f32.mrf.mxu0
      %v317 = vadd.f32 0.0, %v316
      %v318 = vpop.f32.mrf.mxu0
      %v319 = vadd.f32 0.0, %v318
      %320 = vdwg.mxu0
      %321 = vst [vmem:[%s265] sm:$0xff] %v317
      %322 = vst [vmem:[%s265 + $0x8] sm:$0xff] %v319
      %s323 = smul.u32 2, %s20
      %p324 = scmp.lt.s32.totalorder %s19, 1
      %s325 = scalar_select %p324, %s19, 1
      %p326 = scmp.lt.s32.totalorder %s323, 7
      %s327 = scalar_select %p326, %s323, 7
      %p328 = scmp.lt.s32.totalorder %s21, 0
      %s329 = scalar_select %p328, %s21, 0
      %s330 = sadd.s32 %s329, %s327
      %s331 = smul.addr %s325, 8
      %s332 = sadd.s32 %s330, %s331
      %s333 = smul.addr %s332, 8
      %s334 = scalar_lea.vmem %s3, %s333
      // Predicated region
      $region33: #{convtasnet_separator_forward.31} parent=31 // pred_check
        %p335 = pneg %p134
      $region34: #{convtasnet_separator_forward.31} parent=31 // pred_check_branch
        %337 = sbr.rel (%p335) target = $region36
      $region35: #{convtasnet_separator_forward.31} parent=31 // pred_region
        %s338 = smul.u32 2, %s20
      $region36: #{convtasnet_separator_forward.31} parent=31 // pred_fallthru
        _
    $region32: #{convtasnet_separator_forward.31} parent=5 // pred_fallthru
      _
    %p339 = scmp.le.s32.totalorder 2, %s9
    // Predicated region
    $region37: #{convtasnet_separator_forward.31} parent=5 // pred_check
      %p340 = pneg %p339
    $region38: #{convtasnet_separator_forward.31} parent=5 // pred_check_branch
      %342 = sbr.rel (%p340) target = $region40
    $region39: #{convtasnet_separator_forward.31} parent=5 // pred_region
      %s343 = ssub.s32 %s9, 2
      // Predicated region
      $region41: #{convtasnet_separator_forward.31} parent=39 // pred_check
        %p344 = pneg %p140
      $region42: #{convtasnet_separator_forward.31} parent=39 // pred_check_branch
        %346 = sbr.rel (%p344) target = $region44
      $region43: #{convtasnet_separator_forward.31} parent=39 // pred_region
        %s347 = smul.u32 2, %s23
        %p348 = scmp.lt.s32.totalorder %s22, 1
        %s349 = scalar_select %p348, %s22, 1
        %p350 = scmp.lt.s32.totalorder %s347, 7
        %s351 = scalar_select %p350, %s347, 7
        %p352 = scmp.lt.s32.totalorder %s24, 0
        %s353 = scalar_select %p352, %s24, 0
        %s354 = sadd.s32 %s353, %s351
        %s355 = smul.addr %s349, 8
        %s356 = sadd.s32 %s354, %s355
        %s357 = smul.addr %s356, 8
        %s358 = scalar_lea.vmem %s3, %s357
      $region44: #{convtasnet_separator_forward.31} parent=39 // pred_fallthru
        _
    $region40: #{convtasnet_separator_forward.31} parent=5 // pred_fallthru
      _
  $region6: #{convtasnet_separator_forward.31} parent=0 // loop_footer
    %s13 = sadd.s32 1, %s9
  $region7: #{convtasnet_separator_forward.31} parent=0 // loop_footer_branch
    %8 = sbr.rel target = $region3
  $region8: #{convtasnet_separator_forward.31} parent=0 // loop_exit
    _

// kernel: convtasnet_separator_forward.30
$region0: #{convtasnet_separator_forward.30}
  #allocation0 [shape = 'u32[]', space=smem, size = 0x4, offset = 0x4, fixed_abs, tag = 'smem constant byte address 0x4 - core index']
  #allocation1 [shape = 'u32[72,128]{1,0:T(1,128)}', space=vmem, size = 0x9000, scoped, tag = 'internal scratch']
  #allocation2 [shape = 'f32[1,1]{1,0:T(1,128)S(1)}', space=vmem, size = 0x200, scoped, tag = 'scoped memory for convtasnet_separator_forward.30']
  %s0 = inlined_call_operand.vmem [shape: f32[2,32,128], index: 0, kind: input, shape index: {}]
  %s1 = inlined_call_operand.vmem [shape: bf16[256,32], index: 1, kind: input, shape index: {}]
  %s2 = inlined_call_operand.vmem [shape: f32[256,1], index: 2, kind: input, shape index: {}]
  %s3 = inlined_call_operand.vmem [shape: f32[2,32,1], index: 3, kind: input, shape index: {}]
  %s4 = inlined_call_operand.vmem [shape: f32[2,32,1], index: 4, kind: input, shape index: {}]
  %s5 = inlined_call_operand.<no memory space> [shape: f32[1,1], index: 5, kind: input, shape index: {}]
  %s6 = inlined_call_operand.vmem [shape: f32[2,256,128], index: 6, kind: output, shape index: {}]
  %s7 = sld [smem:[#allocation0]]
  $region57: #{convtasnet_separator_forward.30} parent=0
    _
  %s9 = ssub.s32 1, %s7
  %s10 = scalar_select 0, %s9, %s7
  %v11 = vstv %s5
  %12 = vst [vmem:[#allocation2] sm:$0x1] %v11
  loop: start=0, step=1, limit=4
  $region2: #{convtasnet_separator_forward.30} parent=0 // loop_pre_header
    _
  $region3: #{convtasnet_separator_forward.30} parent=0 // loop_header
    %s14 = sphi 0, %s18
    %p15 = scmp.ge.s32.totalorder %s14, 4
    %s21 = sphi 0, %s33
    %s22 = sphi 0, %s29
    %s23 = sphi 0, %s21
    %s24 = sphi 0, %s22
    %s25 = sphi 0, %s23
    %s26 = sphi 0, %s24
    %s38 = sphi 0, %s40
    %s41 = sphi 0, %s38
    %s42 = sphi 0, %s41
    %s58 = sphi 0, %s42
    %s62 = sphi 0, %s62
    %s64 = sphi 0, %s62
    %s65 = sphi 0, %s64
    %s79 = sphi 0, %s65
    %s83 = sphi 0, %s83
    %s85 = sphi 0, %s83
    %s86 = sphi 0, %s85
    %s100 = sphi 0, %s86
    %s106 = sphi 0, %s108
    %s109 = sphi 0, %s106
    %s110 = sphi 0, %s109
    %s126 = sphi 0, %s110
    %s132 = sphi 0, %s134
    %s135 = sphi 0, %s132
    %s136 = sphi 0, %s135
    %s152 = sphi 0, %s136
    %s156 = sphi 0, %s156
    %s158 = sphi 0, %s156
    %s159 = sphi 0, %s158
    %s173 = sphi 0, %s159
    %s181 = sphi 0, %s183
    %s184 = sphi 0, %s181
    %s185 = sphi 0, %s184
    %s201 = sphi 0, %s185
  $region4: #{convtasnet_separator_forward.30} parent=0 // loop_header_branch
    %17 = sbr.rel (%p15) target = $region8
  $region5: #{convtasnet_separator_forward.30} parent=0 // loop_body
    %s19 = ssub.s32 %s14, 1
    %s20 = ssub.s32 %s14, 2
    %s27 = sadd.s32 1, %s22
    %p28 = scmp.ge.s32.totalorder %s27, 1
    %s29 = scalar_select %p28, 0, %s27
    %s30 = sadd.s32 1, %s21
    %s31 = scalar_select %p28, %s30, %s21
    %p32 = scmp.ge.s32.totalorder %s31, 2
    %s33 = scalar_select %p32, 0, %s31
    %s34 = ssub.s32 %s21, %s33
    %s35 = ssub.s32 %s22, %s29
    %s36 = sor.u32 %s34, %s35
    %p37 = scmp.eq.s32.totalorder %s36, 0
    %s39 = sadd.s32 %s38, 1
    %s40 = scalar_select %p37, %s38, %s39
    %p43 = pneg %p37
    %p44 = scmp.eq.s32.totalorder %s14, 1
    %p45 = por %p43, %p44
    %p46 = scmp.ne.s32.totalorder %s38, %s41
    %p47 = scmp.eq.s32.totalorder %s14, 0
    %p48 = por %p46, %p47
    %p49 = scmp.ne.s32.totalorder %s38, %s41
    %p50 = scmp.eq.s32.totalorder %s19, 1
    %p51 = por %p49, %p50
    %p52 = scmp.ne.s32.totalorder %s41, %s42
    %p53 = scmp.eq.s32.totalorder %s19, 0
    %p54 = por %p52, %p53
    %p55 = scmp.ne.s32.totalorder %s41, %s42
    %p56 = scmp.eq.s32.totalorder %s20, 1
    %p57 = por %p55, %p56
    %p59 = scmp.ne.s32.totalorder %s42, %s58
    %p60 = scmp.eq.s32.totalorder %s20, 0
    %p61 = por %p59, %p60
    %s63 = sadd.s32 %s62, 1
    %p66 = scmp.eq.s32.totalorder %s14, 1
    %p67 = scmp.ne.s32.totalorder %s62, %s64
    %p68 = scmp.eq.s32.totalorder %s14, 0
    %p69 = por %p67, %p68
    %p70 = scmp.ne.s32.totalorder %s62, %s64
    %p71 = scmp.eq.s32.totalorder %s19, 1
    %p72 = por %p70, %p71
    %p73 = scmp.ne.s32.totalorder %s64, %s65
    %p74 = scmp.eq.s32.totalorder %s19, 0
    %p75 = por %p73, %p74
    %p76 = scmp.ne.s32.totalorder %s64, %s65
    %p77 = scmp.eq.s32.totalorder %s20, 1
    %p78 = por %p76, %p77
    %p80 = scmp.ne.s32.totalorder %s65, %s79
    %p81 = scmp.eq.s32.totalorder %s20, 0
    %p82 = por %p80, %p81
    %s84 = sadd.s32 %s83, 1
    %p87 = scmp.eq.s32.totalorder %s14, 1
    %p88 = scmp.ne.s32.totalorder %s83, %s85
    %p89 = scmp.eq.s32.totalorder %s14, 0
    %p90 = por %p88, %p89
    %p91 = scmp.ne.s32.totalorder %s83, %s85
    %p92 = scmp.eq.s32.totalorder %s19, 1
    %p93 = por %p91, %p92
    %p94 = scmp.ne.s32.totalorder %s85, %s86
    %p95 = scmp.eq.s32.totalorder %s19, 0
    %p96 = por %p94, %p95
    %p97 = scmp.ne.s32.totalorder %s85, %s86
    %p98 = scmp.eq.s32.totalorder %s20, 1
    %p99 = por %p97, %p98
    %p101 = scmp.ne.s32.totalorder %s86, %s100
    %p102 = scmp.eq.s32.totalorder %s20, 0
    %p103 = por %p101, %p102
    %s104 = ssub.s32 %s21, %s33
    %p105 = scmp.eq.s32.totalorder %s104, 0
    %s107 = sadd.s32 %s106, 1
    %s108 = scalar_select %p105, %s106, %s107
    %p111 = pneg %p105
    %p112 = scmp.eq.s32.totalorder %s14, 1
    %p113 = por %p111, %p112
    %p114 = scmp.ne.s32.totalorder %s106, %s109
    %p115 = scmp.eq.s32.totalorder %s14, 0
    %p116 = por %p114, %p115
    %p117 = scmp.ne.s32.totalorder %s106, %s109
    %p118 = scmp.eq.s32.totalorder %s19, 1
    %p119 = por %p117, %p118
    %p120 = scmp.ne.s32.totalorder %s109, %s110
    %p121 = scmp.eq.s32.totalorder %s19, 0
    %p122 = por %p120, %p121
    %p123 = scmp.ne.s32.totalorder %s109, %s110
    %p124 = scmp.eq.s32.totalorder %s20, 1
    %p125 = por %p123, %p124
    %p127 = scmp.ne.s32.totalorder %s110, %s126
    %p128 = scmp.eq.s32.totalorder %s20, 0
    %p129 = por %p127, %p128
    %s130 = ssub.s32 %s21, %s33
    %p131 = scmp.eq.s32.totalorder %s130, 0
    %s133 = sadd.s32 %s132, 1
    %s134 = scalar_select %p131, %s132, %s133
    %p137 = pneg %p131
    %p138 = scmp.eq.s32.totalorder %s14, 1
    %p139 = por %p137, %p138
    %p140 = scmp.ne.s32.totalorder %s132, %s135
    %p141 = scmp.eq.s32.totalorder %s14, 0
    %p142 = por %p140, %p141
    %p143 = scmp.ne.s32.totalorder %s132, %s135
    %p144 = scmp.eq.s32.totalorder %s19, 1
    %p145 = por %p143, %p144
    %p146 = scmp.ne.s32.totalorder %s135, %s136
    %p147 = scmp.eq.s32.totalorder %s19, 0
    %p148 = por %p146, %p147
    %p149 = scmp.ne.s32.totalorder %s135, %s136
    %p150 = scmp.eq.s32.totalorder %s20, 1
    %p151 = por %p149, %p150
    %p153 = scmp.ne.s32.totalorder %s136, %s152
    %p154 = scmp.eq.s32.totalorder %s20, 0
    %p155 = por %p153, %p154
    %s157 = sadd.s32 %s156, 1
    %p160 = scmp.eq.s32.totalorder %s14, 1
    %p161 = scmp.ne.s32.totalorder %s156, %s158
    %p162 = scmp.eq.s32.totalorder %s14, 0
    %p163 = por %p161, %p162
    %p164 = scmp.ne.s32.totalorder %s156, %s158
    %p165 = scmp.eq.s32.totalorder %s19, 1
    %p166 = por %p164, %p165
    %p167 = scmp.ne.s32.totalorder %s158, %s159
    %p168 = scmp.eq.s32.totalorder %s19, 0
    %p169 = por %p167, %p168
    %p170 = scmp.ne.s32.totalorder %s158, %s159
    %p171 = scmp.eq.s32.totalorder %s20, 1
    %p172 = por %p170, %p171
    %p174 = scmp.ne.s32.totalorder %s159, %s173
    %p175 = scmp.eq.s32.totalorder %s20, 0
    %p176 = por %p174, %p175
    %s177 = ssub.s32 %s21, %s33
    %s178 = ssub.s32 %s22, %s29
    %s179 = sor.u32 %s177, %s178
    %p180 = scmp.eq.s32.totalorder %s179, 0
    %s182 = sadd.s32 %s181, 1
    %s183 = scalar_select %p180, %s181, %s182
    %p186 = pneg %p180
    %p187 = scmp.eq.s32.totalorder %s14, 1
    %p188 = por %p186, %p187
    %p189 = scmp.ne.s32.totalorder %s181, %s184
    %p190 = scmp.eq.s32.totalorder %s14, 0
    %p191 = por %p189, %p190
    %p192 = scmp.ne.s32.totalorder %s181, %s184
    %p193 = scmp.eq.s32.totalorder %s19, 1
    %p194 = por %p192, %p193
    %p195 = scmp.ne.s32.totalorder %s184, %s185
    %p196 = scmp.eq.s32.totalorder %s19, 0
    %p197 = por %p195, %p196
    %p198 = scmp.ne.s32.totalorder %s184, %s185
    %p199 = scmp.eq.s32.totalorder %s20, 1
    %p200 = por %p198, %p199
    %p202 = scmp.ne.s32.totalorder %s185, %s201
    %p203 = scmp.eq.s32.totalorder %s20, 0
    %p204 = por %p202, %p203
    %p205 = scmp.le.s32.totalorder 1, %s14
    %p206 = scmp.lt.s32.totalorder %s14, 3
    %p207 = pnand %p205, %p206
    %p208 = pneg %p207
    // Predicated region
    $region9: #{convtasnet_separator_forward.30} parent=5 // pred_check
      _
    $region10: #{convtasnet_separator_forward.30} parent=5 // pred_check_branch
      %210 = sbr.rel (%p207) target = $region12
    $region11: #{convtasnet_separator_forward.30} parent=5 // pred_region
      %s211 = ssub.s32 %s14, 1
      // Predicated region
      $region13: #{convtasnet_separator_forward.30} parent=11 // pred_check
        %p212 = pneg %p75
      $region14: #{convtasnet_separator_forward.30} parent=11 // pred_check_branch
        %214 = sbr.rel (%p212) target = $region16
      $region15: #{convtasnet_separator_forward.30} parent=11 // pred_region
        _
      $region16: #{convtasnet_separator_forward.30} parent=11 // pred_fallthru
        _
      // Predicated region
      $region17: #{convtasnet_separator_forward.30} parent=11 // pred_check
        %p215 = pneg %p96
      $region18: #{convtasnet_separator_forward.30} parent=11 // pred_check_branch
        %217 = sbr.rel (%p215) target = $region20
      $region19: #{convtasnet_separator_forward.30} parent=11 // pred_region
        _
      $region20: #{convtasnet_separator_forward.30} parent=11 // pred_fallthru
        _
      // Predicated region
      $region21: #{convtasnet_separator_forward.30} parent=11 // pred_check
        %p218 = pneg %p169
      $region22: #{convtasnet_separator_forward.30} parent=11 // pred_check_branch
        %220 = sbr.rel (%p218) target = $region24
      $region23: #{convtasnet_separator_forward.30} parent=11 // pred_region
        _
      $region24: #{convtasnet_separator_forward.30} parent=11 // pred_fallthru
        _
    $region12: #{convtasnet_separator_forward.30} parent=5 // pred_fallthru
      _
    %p221 = scmp.lt.s32.totalorder %s14, 2
    // Predicated region
    $region25: #{convtasnet_separator_forward.30} parent=5 // pred_check
      %p222 = pneg %p221
    $region26: #{convtasnet_separator_forward.30} parent=5 // pred_check_branch
      %224 = sbr.rel (%p222) target = $region28
    $region27: #{convtasnet_separator_forward.30} parent=5 // pred_region
      // Predicated region
      $region29: #{convtasnet_separator_forward.30} parent=27 // pred_check
        %p225 = pneg %p48
      $region30: #{convtasnet_separator_forward.30} parent=27 // pred_check_branch
        %227 = sbr.rel (%p225) target = $region32
      $region31: #{convtasnet_separator_forward.30} parent=27 // pred_region
        %p228 = scmp.lt.s32.totalorder %s21, 1
        %s229 = scalar_select %p228, %s21, 1
        %p230 = scmp.lt.s32.totalorder %s22, 0
        %s231 = scalar_select %p230, %s22, 0
        %s232 = smul.addr %s229, 4
        %s233 = sadd.s32 %s231, %s232
        %s234 = smul.addr %s233, 8
        %s235 = scalar_lea.vmem %s0, %s234
      $region32: #{convtasnet_separator_forward.30} parent=27 // pred_fallthru
        _
      // Predicated region
      $region33: #{convtasnet_separator_forward.30} parent=27 // pred_check
        %p236 = pneg %p116
      $region34: #{convtasnet_separator_forward.30} parent=27 // pred_check_branch
        %238 = sbr.rel (%p236) target = $region36
      $region35: #{convtasnet_separator_forward.30} parent=27 // pred_region
        %p239 = scmp.lt.s32.totalorder %s21, 1
        %s240 = scalar_select %p239, %s21, 1
        %s241 = smul.addr %s240, 4
        %s242 = smul.addr %s241, 8
        %s243 = scalar_lea.vmem %s3, %s242
      $region36: #{convtasnet_separator_forward.30} parent=27 // pred_fallthru
        _
      // Predicated region
      $region37: #{convtasnet_separator_forward.30} parent=27 // pred_check
        %p244 = pneg %p142
      $region38: #{convtasnet_separator_forward.30} parent=27 // pred_check_branch
        %246 = sbr.rel (%p244) target = $region40
      $region39: #{convtasnet_separator_forward.30} parent=27 // pred_region
        %p247 = scmp.lt.s32.totalorder %s21, 1
        %s248 = scalar_select %p247, %s21, 1
        %s249 = smul.addr %s248, 4
        %s250 = smul.addr %s249, 8
        %s251 = scalar_lea.vmem %s4, %s250
      $region40: #{convtasnet_separator_forward.30} parent=27 // pred_fallthru
        _
    $region28: #{convtasnet_separator_forward.30} parent=5 // pred_fallthru
      _
    %p252 = scmp.le.s32.totalorder 1, %s14
    %p253 = scmp.lt.s32.totalorder %s14, 3
    %p254 = pnand %p252, %p253
    %p255 = pneg %p254
    // Predicated region
    $region41: #{convtasnet_separator_forward.30} parent=5 // pred_check
      _
    $region42: #{convtasnet_separator_forward.30} parent=5 // pred_check_branch
      %257 = sbr.rel (%p254) target = $region44
    $region43: #{convtasnet_separator_forward.30} parent=5 // pred_region
      %s258 = ssub.s32 %s14, 1
      %p259 = scmp.lt.s32.totalorder %s23, 1
      %s260 = scalar_select %p259, %s23, 1
      %p261 = scmp.lt.s32.totalorder %s24, 0
      %s262 = scalar_select %p261, %s24, 0
      %s263 = smul.addr %s260, 4
      %s264 = sadd.s32 %s262, %s263
      %s265 = smul.addr %s264, 8
      %s266 = scalar_lea.vmem %s0, %s265
      %p267 = pneg %p54
      %p268 = pneg %p51
      %p269 = pneg %p75
      %p270 = pneg %p72
      %p271 = pneg %p96
      %p272 = pneg %p93
      %p273 = scmp.lt.s32.totalorder %s23, 1
      %s274 = scalar_select %p273, %s23, 1
      %s275 = smul.addr %s274, 4
      %s276 = smul.addr %s275, 8
      %s277 = scalar_lea.vmem %s3, %s276
      %p278 = pneg %p122
      %p279 = pneg %p119
      %p280 = scmp.lt.s32.totalorder %s23, 1
      %s281 = scalar_select %p280, %s23, 1
      %s282 = smul.addr %s281, 4
      %s283 = smul.addr %s282, 8
      %s284 = scalar_lea.vmem %s4, %s283
      %p285 = pneg %p148
      %p286 = pneg %p145
      %p287 = pneg %p169
      %p288 = pneg %p166
      %p289 = pneg %p197
      %p290 = pneg %p194
      %p291 = scmp.lt.s32.totalorder %s23, 1
      %s292 = scalar_select %p291, %s23, 1
      %p293 = scmp.lt.s32.totalorder %s24, 0
      %s294 = scalar_select %p293, %s24, 0
      %s295 = smul.addr %s292, 32
      %s296 = sadd.s32 %s294, %s295
      %s297 = smul.addr %s296, 8
      %s298 = scalar_lea.vmem %s6, %s297
      %p299 = scmp.lt.s32.totalorder %s23, 1
      %s300 = scalar_select %p299, %s23, 1
      %p301 = scmp.lt.s32.totalorder %s24, 0
      %s302 = scalar_select %p301, %s24, 0
      %s303 = smul.addr %s300, 4
      %s304 = sadd.s32 %s302, %s303
      %s305 = smul.addr %s304, 8
      %s306 = scalar_lea.vmem %s0, %s305
      %p307 = scmp.lt.s32.totalorder %s23, 1
      %s308 = scalar_select %p307, %s23, 1
      %s309 = smul.addr %s308, 4
      %s310 = smul.addr %s309, 8
      %s311 = scalar_lea.vmem %s3, %s310
      %p312 = scmp.lt.s32.totalorder %s23, 1
      %s313 = scalar_select %p312, %s23, 1
      %s314 = smul.addr %s313, 4
      %s315 = smul.addr %s314, 8
      %s316 = scalar_lea.vmem %s4, %s315
      %p317 = scmp.lt.s32.totalorder %s23, 1
      %s318 = scalar_select %p317, %s23, 1
      %p319 = scmp.lt.s32.totalorder %s24, 0
      %s320 = scalar_select %p319, %s24, 0
      %s321 = smul.addr %s318, 32
      %s322 = sadd.s32 %s320, %s321
      %s323 = smul.addr %s322, 8
      %s324 = scalar_lea.vmem %s6, %s323
      %v326 = vld [vmem:[%s306] sm:$0xff]
      %v327 = vld [vmem:[%s306 + $0x8] sm:$0xff]
      %v328 = vld [vmem:[%s306 + $0x10] sm:$0xff]
      %v329 = vld [vmem:[%s306 + $0x18] sm:$0xff]
      %v330 = vld [vmem:[#allocation2] sm:$0x1]
      %vm331 = vcmp.ge.f32.partialorder %v326, 0.0
      %vm332 = vcmp.ge.f32.partialorder %v327, 0.0
      %vm333 = vcmp.ge.f32.partialorder %v328, 0.0
      %vm334 = vcmp.ge.f32.partialorder %v329, 0.0
      %v336 = vperm.slane %v330, 0
      %337 = vset.pattern.permute.xlu0 0
      %338 = vperm.xlu0 %337, %v336
      %v339 = vpop.permute.xlu0 %338
      %v341 = vmul.f32 %v339, %v326
      %v342 = vmul.f32 %v339, %v327
      %v343 = vmul.f32 %v339, %v328
      %v344 = vmul.f32 %v339, %v329
      %v345 = vsel %vm331, %v326, %v341
      %v346 = vsel %vm332, %v327, %v342
      %v347 = vsel %vm333, %v328, %v343
      %v348 = vsel %vm334, %v329, %v344
      %v349 = vld [vmem:[%s1] sm:$0xf]
      %v350 = vld [vmem:[%s1 + $0x4] sm:$0xf]
      %v351 = vld [vmem:[%s1 + $0x8] sm:$0xf]
      %v352 = vld [vmem:[%s1 + $0xc] sm:$0xf]
      %v353 = vld [vmem:[%s1 + $0x10] sm:$0xf]
      %v354 = vld [vmem:[%s1 + $0x14] sm:$0xf]
      %v355 = vld [vmem:[%s1 + $0x18] sm:$0xf]
      %v356 = vld [vmem:[%s1 + $0x1c] sm:$0xf]
      %v357 = vld [vmem:[%s1 + $0x20] sm:$0xf]
      %v358 = vld [vmem:[%s1 + $0x24] sm:$0xf]
      %v359 = vld [vmem:[%s1 + $0x28] sm:$0xf]
      %v360 = vld [vmem:[%s1 + $0x2c] sm:$0xf]
      %v361 = vld [vmem:[%s1 + $0x30] sm:$0xf]
      %v362 = vld [vmem:[%s1 + $0x34] sm:$0xf]
      %v363 = vld [vmem:[%s1 + $0x38] sm:$0xf]
      %v364 = vld [vmem:[%s1 + $0x3c] sm:$0xf]
      %v365 = vld [vmem:[%s1 + $0x40] sm:$0xf]
      %v366 = vld [vmem:[%s1 + $0x44] sm:$0xf]
      %v367 = vld [vmem:[%s1 + $0x48] sm:$0xf]
      %v368 = vld [vmem:[%s1 + $0x4c] sm:$0xf]
      %v369 = vld [vmem:[%s1 + $0x50] sm:$0xf]
      %v370 = vld [vmem:[%s1 + $0x54] sm:$0xf]
      %v371 = vld [vmem:[%s1 + $0x58] sm:$0xf]
      %v372 = vld [vmem:[%s1 + $0x5c] sm:$0xf]
      %v373 = vld [vmem:[%s1 + $0x60] sm:$0xf]
      %v374 = vld [vmem:[%s1 + $0x64] sm:$0xf]
      %v375 = vld [vmem:[%s1 + $0x68] sm:$0xf]
      %v376 = vld [vmem:[%s1 + $0x6c] sm:$0xf]
      %v377 = vld [vmem:[%s1 + $0x70] sm:$0xf]
      %v378 = vld [vmem:[%s1 + $0x74] sm:$0xf]
      %v379 = vld [vmem:[%s1 + $0x78] sm:$0xf]
      %v380 = vld [vmem:[%s1 + $0x7c] sm:$0xf]
      %v381 = vpack.c.bf16 %v346, %v345
      %v382 = vpack.c.bf16 %v348, %v347
      %v383 = vld [vmem:[%s2] sm:$0xff]
      %v384 = vld [vmem:[%s2 + $0x8] sm:$0xff]
      %v385 = vld [vmem:[%s2 + $0x10] sm:$0xff]
      %v386 = vld [vmem:[%s2 + $0x18] sm:$0xff]
      %v387 = vld [vmem:[%s2 + $0x20] sm:$0xff]
      %v388 = vld [vmem:[%s2 + $0x28] sm:$0xff]
      %v389 = vld [vmem:[%s2 + $0x30] sm:$0xff]
      %v390 = vld [vmem:[%s2 + $0x38] sm:$0xff]
      %v391 = vld [vmem:[%s2 + $0x40] sm:$0xff]
      %v392 = vld [vmem:[%s2 + $0x48] sm:$0xff]
      %v393 = vld [vmem:[%s2 + $0x50] sm:$0xff]
      %v394 = vld [vmem:[%s2 + $0x58] sm:$0xff]
      %v395 = vld [vmem:[%s2 + $0x60] sm:$0xff]
      %v396 = vld [vmem:[%s2 + $0x68] sm:$0xff]
      %v397 = vld [vmem:[%s2 + $0x70] sm:$0xff]
      %v398 = vld [vmem:[%s2 + $0x78] sm:$0xff]
      %v399 = vld [vmem:[%s2 + $0x80] sm:$0xff]
      %v400 = vld [vmem:[%s2 + $0x88] sm:$0xff]
      %v401 = vld [vmem:[%s2 + $0x90] sm:$0xff]
      %v402 = vld [vmem:[%s2 + $0x98] sm:$0xff]
      %v403 = vld [vmem:[%s2 + $0xa0] sm:$0xff]
      %v404 = vld [vmem:[%s2 + $0xa8] sm:$0xff]
      %v405 = vld [vmem:[%s2 + $0xb0] sm:$0xff]
      %v406 = vld [vmem:[%s2 + $0xb8] sm:$0xff]
      %v407 = vld [vmem:[%s2 + $0xc0] sm:$0xff]
      %v408 = vld [vmem:[%s2 + $0xc8] sm:$0xff]
      %v409 = vld [vmem:[%s2 + $0xd0] sm:$0xff]
      %v410 = vld [vmem:[%s2 + $0xd8] sm:$0xff]
      %v411 = vld [vmem:[%s2 + $0xe0] sm:$0xff]
      %v412 = vld [vmem:[%s2 + $0xe8] sm:$0xff]
      %v413 = vld [vmem:[%s2 + $0xf0] sm:$0xff]
      %v414 = vld [vmem:[%s2 + $0xf8] sm:$0xff]
      %416 = vset.pattern.permute.xlu0 0
      %417 = vperm.xlu0 %416, %v383
      %v418 = vpop.permute.xlu0 %417
      %421 = vset.pattern.permute.xlu0 0
      %422 = vperm.xlu0 %421, %v384
      %v423 = vpop.permute.xlu0 %422
      %426 = vset.pattern.permute.xlu0 0
      %427 = vperm.xlu0 %426, %v385
      %v428 = vpop.permute.xlu0 %427
      %431 = vset.pattern.permute.xlu0 0
      %432 = vperm.xlu0 %431, %v386
      %v433 = vpop.permute.xlu0 %432
      %436 = vset.pattern.permute.xlu0 0
      %437 = vperm.xlu0 %436, %v387
      %v438 = vpop.permute.xlu0 %437
      %441 = vset.pattern.permute.xlu0 0
      %442 = vperm.xlu0 %441, %v388
      %v443 = vpop.permute.xlu0 %442
      %446 = vset.pattern.permute.xlu0 0
      %447 = vperm.xlu0 %446, %v389
      %v448 = vpop.permute.xlu0 %447
      %451 = vset.pattern.permute.xlu0 0
      %452 = vperm.xlu0 %451, %v390
      %v453 = vpop.permute.xlu0 %452
      %456 = vset.pattern.permute.xlu0 0
      %457 = vperm.xlu0 %456, %v391
      %v458 = vpop.permute.xlu0 %457
      %461 = vset.pattern.permute.xlu0 0
      %462 = vperm.xlu0 %461, %v392
      %v463 = vpop.permute.xlu0 %462
      %466 = vset.pattern.permute.xlu0 0
      %467 = vperm.xlu0 %466, %v393
      %v468 = vpop.permute.xlu0 %467
      %471 = vset.pattern.permute.xlu0 0
      %472 = vperm.xlu0 %471, %v394
      %v473 = vpop.permute.xlu0 %472
      %476 = vset.pattern.permute.xlu0 0
      %477 = vperm.xlu0 %476, %v395
      %v478 = vpop.permute.xlu0 %477
      %481 = vset.pattern.permute.xlu0 0
      %482 = vperm.xlu0 %481, %v396
      %v483 = vpop.permute.xlu0 %482
      %486 = vset.pattern.permute.xlu0 0
      %487 = vperm.xlu0 %486, %v397
      %v488 = vpop.permute.xlu0 %487
      %491 = vset.pattern.permute.xlu0 0
      %492 = vperm.xlu0 %491, %v398
      %v493 = vpop.permute.xlu0 %492
      %496 = vset.pattern.permute.xlu0 0
      %497 = vperm.xlu0 %496, %v399
      %v498 = vpop.permute.xlu0 %497
      %501 = vset.pattern.permute.xlu0 0
      %502 = vperm.xlu0 %501, %v400
      %v503 = vpop.permute.xlu0 %502
      %506 = vset.pattern.permute.xlu0 0
      %507 = vperm.xlu0 %506, %v401
      %v508 = vpop.permute.xlu0 %507
      %511 = vset.pattern.permute.xlu0 0
      %512 = vperm.xlu0 %511, %v402
      %v513 = vpop.permute.xlu0 %512
      %516 = vset.pattern.permute.xlu0 0
      %517 = vperm.xlu0 %516, %v403
      %v518 = vpop.permute.xlu0 %517
      %521 = vset.pattern.permute.xlu0 0
      %522 = vperm.xlu0 %521, %v404
      %v523 = vpop.permute.xlu0 %522
      %526 = vset.pattern.permute.xlu0 0
      %527 = vperm.xlu0 %526, %v405
      %v528 = vpop.permute.xlu0 %527
      %531 = vset.pattern.permute.xlu0 0
      %532 = vperm.xlu0 %531, %v406
      %v533 = vpop.permute.xlu0 %532
      %536 = vset.pattern.permute.xlu0 0
      %537 = vperm.xlu0 %536, %v407
      %v538 = vpop.permute.xlu0 %537
      %541 = vset.pattern.permute.xlu0 0
      %542 = vperm.xlu0 %541, %v408
      %v543 = vpop.permute.xlu0 %542
      %546 = vset.pattern.permute.xlu0 0
      %547 = vperm.xlu0 %546, %v409
      %v548 = vpop.permute.xlu0 %547
      %551 = vset.pattern.permute.xlu0 0
      %552 = vperm.xlu0 %551, %v410
      %v553 = vpop.permute.xlu0 %552
      %556 = vset.pattern.permute.xlu0 0
      %557 = vperm.xlu0 %556, %v411
      %v558 = vpop.permute.xlu0 %557
      %561 = vset.pattern.permute.xlu0 0
      %562 = vperm.xlu0 %561, %v412
      %v563 = vpop.permute.xlu0 %562
      %566 = vset.pattern.permute.xlu0 0
      %567 = vperm.xlu0 %566, %v413
      %v568 = vpop.permute.xlu0 %567
      %571 = vset.pattern.permute.xlu0 0
      %572 = vperm.xlu0 %571, %v414
      %v573 = vpop.permute.xlu0 %572
      %v607 = vunpack.c.l.b16 %v349
      %v608 = vunpack.c.l.b16 %v350
      %v609 = vunpack.c.l.b16 %v351
      %v610 = vunpack.c.l.b16 %v352
      %v611 = vunpack.c.l.b16 %v353
      %v612 = vunpack.c.l.b16 %v354
      %v613 = vunpack.c.l.b16 %v355
      %v614 = vunpack.c.l.b16 %v356
      %v615 = vunpack.c.l.b16 %v357
      %v616 = vunpack.c.l.b16 %v358
      %v617 = vunpack.c.l.b16 %v359
      %v618 = vunpack.c.l.b16 %v360
      %v619 = vunpack.c.l.b16 %v361
      %v620 = vunpack.c.l.b16 %v362
      %v621 = vunpack.c.l.b16 %v363
      %v622 = vunpack.c.l.b16 %v364
      %v623 = vunpack.c.l.b16 %v365
      %v624 = vunpack.c.l.b16 %v366
      %v625 = vunpack.c.l.b16 %v367
      %v626 = vunpack.c.l.b16 %v368
      %v627 = vunpack.c.l.b16 %v369
      %v628 = vunpack.c.l.b16 %v370
      %v629 = vunpack.c.l.b16 %v371
      %v630 = vunpack.c.l.b16 %v372
      %v631 = vunpack.c.l.b16 %v373
      %v632 = vunpack.c.l.b16 %v374
      %v633 = vunpack.c.l.b16 %v375
      %v634 = vunpack.c.l.b16 %v376
      %v635 = vunpack.c.l.b16 %v377
      %v636 = vunpack.c.l.b16 %v378
      %v637 = vunpack.c.l.b16 %v379
      %v638 = vunpack.c.l.b16 %v380
      %v639 = vpack.c.b16 %v608, %v607
      %v640 = vpack.c.b16 %v610, %v609
      %v641 = vpack.c.b16 %v612, %v611
      %v642 = vpack.c.b16 %v614, %v613
      %v643 = vpack.c.b16 %v616, %v615
      %v644 = vpack.c.b16 %v618, %v617
      %v645 = vpack.c.b16 %v620, %v619
      %v646 = vpack.c.b16 %v622, %v621
      %v647 = vpack.c.b16 %v624, %v623
      %v648 = vpack.c.b16 %v626, %v625
      %v649 = vpack.c.b16 %v628, %v627
      %v650 = vpack.c.b16 %v630, %v629
      %v651 = vpack.c.b16 %v632, %v631
      %v652 = vpack.c.b16 %v634, %v633
      %v653 = vpack.c.b16 %v636, %v635
      %v654 = vpack.c.b16 %v638, %v637
      %vm655 = vcmask 261120
      %v657 = vsel %vm655, %v639, 0
      %v660 = vsel %vm655, %v640, 0
      %v663 = vsel %vm655, %v641, 0
      %v666 = vsel %vm655, %v642, 0
      %v669 = vsel %vm655, %v643, 0
      %v672 = vsel %vm655, %v644, 0
      %v675 = vsel %vm655, %v645, 0
      %v678 = vsel %vm655, %v646, 0
      %v681 = vsel %vm655, %v647, 0
      %v684 = vsel %vm655, %v648, 0
      %v687 = vsel %vm655, %v649, 0
      %v690 = vsel %vm655, %v650, 0
      %v693 = vsel %vm655, %v651, 0
      %v696 = vsel %vm655, %v652, 0
      %v699 = vsel %vm655, %v653, 0
      %v702 = vsel %vm655, %v654, 0
      %704 = vmatpush.bf16.msra.mxu0 0
      %705 = vmatpush.bf16.msra.mxu0 0
      %706 = vmatpush.bf16.msra.mxu0 0
      %707 = vmatpush.bf16.msra.mxu0 0
      %708 = vmatpush.bf16.msra.mxu0 0
      %709 = vmatpush.bf16.msra.mxu0 0
      %710 = vmatpush.bf16.msra.mxu0 %v382
      %711 = vmatpush.bf16.msra.mxu0 %v381
      %712 = vmatmul.bf16.gmra.mxu0 %v657
      %v713 = vpop.f32.mrf.mxu0
      %v714 = vadd.f32 %v418, %v713
      %v715 = vpop.f32.mrf.mxu0
      %v716 = vadd.f32 %v423, %v715
      %717 = vmatmul.bf16.gmra.mxu0 %v660
      %v718 = vpop.f32.mrf.mxu0
      %v719 = vadd.f32 %v428, %v718
      %v720 = vpop.f32.mrf.mxu0
      %v721 = vadd.f32 %v433, %v720
      %722 = vmatmul.bf16.gmra.mxu0 %v663
      %v723 = vpop.f32.mrf.mxu0
      %v724 = vadd.f32 %v438, %v723
      %v725 = vpop.f32.mrf.mxu0
      %v726 = vadd.f32 %v443, %v725
      %727 = vmatmul.bf16.gmra.mxu0 %v666
      %v728 = vpop.f32.mrf.mxu0
      %v729 = vadd.f32 %v448, %v728
      %v730 = vpop.f32.mrf.mxu0
      %v731 = vadd.f32 %v453, %v730
      %732 = vmatmul.bf16.gmra.mxu0 %v669
      %v733 = vpop.f32.mrf.mxu0
      %v734 = vadd.f32 %v458, %v733
      %v735 = vpop.f32.mrf.mxu0
      %v736 = vadd.f32 %v463, %v735
      %737 = vmatmul.bf16.gmra.mxu0 %v672
      %v738 = vpop.f32.mrf.mxu0
      %v739 = vadd.f32 %v468, %v738
      %v740 = vpop.f32.mrf.mxu0
      %v741 = vadd.f32 %v473, %v740
      %742 = vmatmul.bf16.gmra.mxu0 %v675
      %v743 = vpop.f32.mrf.mxu0
      %v744 = vadd.f32 %v478, %v743
      %v745 = vpop.f32.mrf.mxu0
      %v746 = vadd.f32 %v483, %v745
      %747 = vmatmul.bf16.gmra.mxu0 %v678
      %v748 = vpop.f32.mrf.mxu0
      %v749 = vadd.f32 %v488, %v748
      %v750 = vpop.f32.mrf.mxu0
      %v751 = vadd.f32 %v493, %v750
      %752 = vmatmul.bf16.gmra.mxu0 %v681
      %v753 = vpop.f32.mrf.mxu0
      %v754 = vadd.f32 %v498, %v753
      %v755 = vpop.f32.mrf.mxu0
      %v756 = vadd.f32 %v503, %v755
      %757 = vmatmul.bf16.gmra.mxu0 %v684
      %v758 = vpop.f32.mrf.mxu0
      %v759 = vadd.f32 %v508, %v758
      %v760 = vpop.f32.mrf.mxu0
      %v761 = vadd.f32 %v513, %v760
      %762 = vmatmul.bf16.gmra.mxu0 %v687
      %v763 = vpop.f32.mrf.mxu0
      %v764 = vadd.f32 %v518, %v763
      %v765 = vpop.f32.mrf.mxu0
      %v766 = vadd.f32 %v523, %v765
      %767 = vmatmul.bf16.gmra.mxu0 %v690
      %v768 = vpop.f32.mrf.mxu0
      %v769 = vadd.f32 %v528, %v768
      %v770 = vpop.f32.mrf.mxu0
      %v771 = vadd.f32 %v533, %v770
      %772 = vmatmul.bf16.gmra.mxu0 %v693
      %v773 = vpop.f32.mrf.mxu0
      %v774 = vadd.f32 %v538, %v773
      %v775 = vpop.f32.mrf.mxu0
      %v776 = vadd.f32 %v543, %v775
      %777 = vmatmul.bf16.gmra.mxu0 %v696
      %v778 = vpop.f32.mrf.mxu0
      %v779 = vadd.f32 %v548, %v778
      %v780 = vpop.f32.mrf.mxu0
      %v781 = vadd.f32 %v553, %v780
      %782 = vmatmul.bf16.gmra.mxu0 %v699
      %v783 = vpop.f32.mrf.mxu0
      %v784 = vadd.f32 %v558, %v783
      %v785 = vpop.f32.mrf.mxu0
      %v786 = vadd.f32 %v563, %v785
      %787 = vmatmul.bf16.gmra.mxu0 %v702
      %v788 = vpop.f32.mrf.mxu0
      %v789 = vadd.f32 %v568, %v788
      %v790 = vpop.f32.mrf.mxu0
      %v791 = vadd.f32 %v573, %v790
      %792 = vdwg.mxu0
      %v793 = vxor.u32 %v714, 2147483648
      %v794 = vxor.u32 %v716, 2147483648
      %v795 = vxor.u32 %v719, 2147483648
      %v796 = vxor.u32 %v721, 2147483648
      %v797 = vxor.u32 %v724, 2147483648
      %v798 = vxor.u32 %v726, 2147483648
      %v799 = vxor.u32 %v729, 2147483648
      %v800 = vxor.u32 %v731, 2147483648
      %v801 = vxor.u32 %v734, 2147483648
      %v802 = vxor.u32 %v736, 2147483648
      %v803 = vxor.u32 %v739, 2147483648
      %v804 = vxor.u32 %v741, 2147483648
      %v805 = vxor.u32 %v744, 2147483648
      %v806 = vxor.u32 %v746, 2147483648
      %v807 = vxor.u32 %v749, 2147483648
      %v808 = vxor.u32 %v751, 2147483648
      %v809 = vxor.u32 %v754, 2147483648
      %v810 = vxor.u32 %v756, 2147483648
      %v811 = vxor.u32 %v759, 2147483648
      %v812 = vxor.u32 %v761, 2147483648
      %v813 = vxor.u32 %v764, 2147483648
      %v814 = vxor.u32 %v766, 2147483648
      %v815 = vxor.u32 %v769, 2147483648
      %v816 = vxor.u32 %v771, 2147483648
      %v817 = vxor.u32 %v774, 2147483648
      %v818 = vxor.u32 %v776, 2147483648
      %v819 = vxor.u32 %v779, 2147483648
      %v820 = vxor.u32 %v781, 2147483648
      %v821 = vxor.u32 %v784, 2147483648
      %v822 = vxor.u32 %v786, 2147483648
      %v823 = vxor.u32 %v789, 2147483648
      %v824 = vxor.u32 %v791, 2147483648
      %v825 = vmul.f32 %v793, 1.442695
      %v826 = vpow.pop %v825
      %v827 = vmul.f32 %v794, 1.442695
      %v828 = vpow.pop %v827
      %v829 = vmul.f32 %v795, 1.442695
      %v830 = vpow.pop %v829
      %v831 = vmul.f32 %v796, 1.442695
      %v832 = vpow.pop %v831
      %v833 = vmul.f32 %v797, 1.442695
      %v834 = vpow.pop %v833
      %v835 = vmul.f32 %v798, 1.442695
      %v836 = vpow.pop %v835
      %v837 = vmul.f32 %v799, 1.442695
      %v838 = vpow.pop %v837
      %v839 = vmul.f32 %v800, 1.442695
      %v840 = vpow.pop %v839
      %v841 = vmul.f32 %v801, 1.442695
      %v842 = vpow.pop %v841
      %v843 = vmul.f32 %v802, 1.442695
      %v844 = vpow.pop %v843
      %v845 = vmul.f32 %v803, 1.442695
      %v846 = vpow.pop %v845
      %v847 = vmul.f32 %v804, 1.442695
      %v848 = vpow.pop %v847
      %v849 = vmul.f32 %v805, 1.442695
      %v850 = vpow.pop %v849
      %v851 = vmul.f32 %v806, 1.442695
      %v852 = vpow.pop %v851
      %v853 = vmul.f32 %v807, 1.442695
      %v854 = vpow.pop %v853
      %v855 = vmul.f32 %v808, 1.442695
      %v856 = vpow.pop %v855
      %v857 = vmul.f32 %v809, 1.442695
      %v858 = vpow.pop %v857
      %v859 = vmul.f32 %v810, 1.442695
      %v860 = vpow.pop %v859
      %v861 = vmul.f32 %v811, 1.442695
      %v862 = vpow.pop %v861
      %v863 = vmul.f32 %v812, 1.442695
      %v864 = vpow.pop %v863
      %v865 = vmul.f32 %v813, 1.442695
      %v866 = vpow.pop %v865
      %v867 = vmul.f32 %v814, 1.442695
      %v868 = vpow.pop %v867
      %v869 = vmul.f32 %v815, 1.442695
      %v870 = vpow.pop %v869
      %v871 = vmul.f32 %v816, 1.442695
      %v872 = vpow.pop %v871
      %v873 = vmul.f32 %v817, 1.442695
      %v874 = vpow.pop %v873
      %v875 = vmul.f32 %v818, 1.442695
      %v876 = vpow.pop %v875
      %v877 = vmul.f32 %v819, 1.442695
      %v878 = vpow.pop %v877
      %v879 = vmul.f32 %v820, 1.442695
      %v880 = vpow.pop %v879
      %v881 = vmul.f32 %v821, 1.442695
      %v882 = vpow.pop %v881
      %v883 = vmul.f32 %v822, 1.442695
      %v884 = vpow.pop %v883
      %v885 = vmul.f32 %v823, 1.442695
      %v886 = vpow.pop %v885
      %v887 = vmul.f32 %v824, 1.442695
      %v888 = vpow.pop %v887
      %v889 = vadd.f32 %v826, 1.0
      %v890 = vadd.f32 %v828, 1.0
      %v891 = vadd.f32 %v830, 1.0
      %v892 = vadd.f32 %v832, 1.0
      %v893 = vadd.f32 %v834, 1.0
      %v894 = vadd.f32 %v836, 1.0
      %v895 = vadd.f32 %v838, 1.0
      %v896 = vadd.f32 %v840, 1.0
      %v897 = vadd.f32 %v842, 1.0
      %v898 = vadd.f32 %v844, 1.0
      %v899 = vadd.f32 %v846, 1.0
      %v900 = vadd.f32 %v848, 1.0
      %v901 = vadd.f32 %v850, 1.0
      %v902 = vadd.f32 %v852, 1.0
      %v903 = vadd.f32 %v854, 1.0
      %v904 = vadd.f32 %v856, 1.0
      %v905 = vadd.f32 %v858, 1.0
      %v906 = vadd.f32 %v860, 1.0
      %v907 = vadd.f32 %v862, 1.0
      %v908 = vadd.f32 %v864, 1.0
      %v909 = vadd.f32 %v866, 1.0
      %v910 = vadd.f32 %v868, 1.0
      %v911 = vadd.f32 %v870, 1.0
      %v912 = vadd.f32 %v872, 1.0
      %v913 = vadd.f32 %v874, 1.0
      %v914 = vadd.f32 %v876, 1.0
      %v915 = vadd.f32 %v878, 1.0
      %v916 = vadd.f32 %v880, 1.0
      %v917 = vadd.f32 %v882, 1.0
      %v918 = vadd.f32 %v884, 1.0
      %v919 = vadd.f32 %v886, 1.0
      %v920 = vadd.f32 %v888, 1.0
      %v921 = vrcp.pop %v889
      %v922 = vmul.f32 %v889, %v921
      %v923 = vsub.f32 1.0, %v922
      %v924 = vmul.f32 %v921, %v923
      %v925 = vadd.f32 %v921, %v924
      %vm926 = vweird.f32 %v889
      %vm927 = vweird.f32 %v921
      %vm928 = vmor %vm926, %vm927
      %v929 = vsel %vm928, %v921, %v925
      %v930 = vand.u32 2147483647, %v889
      %vm931 = vcmp.eq.f32.partialorder %v930, 8.507059e+37
      %v932 = vand.u32 %v889, 2147483648
      %v933 = vor.u32 1.1754944e-38, %v932
      %v934 = vsel %vm931, %v933, %v929
      %v935 = vmul.f32 1.0, %v934
      %v936 = vrcp.pop %v890
      %v937 = vmul.f32 %v890, %v936
      %v938 = vsub.f32 1.0, %v937
      %v939 = vmul.f32 %v936, %v938
      %v940 = vadd.f32 %v936, %v939
      %vm941 = vweird.f32 %v890
      %vm942 = vweird.f32 %v936
      %vm943 = vmor %vm941, %vm942
      %v944 = vsel %vm943, %v936, %v940
      %v945 = vand.u32 2147483647, %v890
      %vm946 = vcmp.eq.f32.partialorder %v945, 8.507059e+37
      %v947 = vand.u32 %v890, 2147483648
      %v948 = vor.u32 1.1754944e-38, %v947
      %v949 = vsel %vm946, %v948, %v944
      %v950 = vmul.f32 1.0, %v949
      %v951 = vrcp.pop %v891
      %v952 = vmul.f32 %v891, %v951
      %v953 = vsub.f32 1.0, %v952
      %v954 = vmul.f32 %v951, %v953
      %v955 = vadd.f32 %v951, %v954
      %vm956 = vweird.f32 %v891
      %vm957 = vweird.f32 %v951
      %vm958 = vmor %vm956, %vm957
      %v959 = vsel %vm958, %v951, %v955
      %v960 = vand.u32 2147483647, %v891
      %vm961 = vcmp.eq.f32.partialorder %v960, 8.507059e+37
      %v962 = vand.u32 %v891, 2147483648
      %v963 = vor.u32 1.1754944e-38, %v962
      %v964 = vsel %vm961, %v963, %v959
      %v965 = vmul.f32 1.0, %v964
      %v966 = vrcp.pop %v892
      %v967 = vmul.f32 %v892, %v966
      %v968 = vsub.f32 1.0, %v967
      %v969 = vmul.f32 %v966, %v968
      %v970 = vadd.f32 %v966, %v969
      %vm971 = vweird.f32 %v892
      %vm972 = vweird.f32 %v966
      %vm973 = vmor %vm971, %vm972
      %v974 = vsel %vm973, %v966, %v970
      %v975 = vand.u32 2147483647, %v892
      %vm976 = vcmp.eq.f32.partialorder %v975, 8.507059e+37
      %v977 = vand.u32 %v892, 2147483648
      %v978 = vor.u32 1.1754944e-38, %v977
      %v979 = vsel %vm976, %v978, %v974
      %v980 = vmul.f32 1.0, %v979
      %v981 = vrcp.pop %v893
      %v982 = vmul.f32 %v893, %v981
      %v983 = vsub.f32 1.0, %v982
      %v984 = vmul.f32 %v981, %v983
      %v985 = vadd.f32 %v981, %v984
      %vm986 = vweird.f32 %v893
      %vm987 = vweird.f32 %v981
      %vm988 = vmor %vm986, %vm987
      %v989 = vsel %vm988, %v981, %v985
      %v990 = vand.u32 2147483647, %v893
      %vm991 = vcmp.eq.f32.partialorder %v990, 8.507059e+37
      %v992 = vand.u32 %v893, 2147483648
      %v993 = vor.u32 1.1754944e-38, %v992
      %v994 = vsel %vm991, %v993, %v989
      %v995 = vmul.f32 1.0, %v994
      %v996 = vrcp.pop %v894
      %v997 = vmul.f32 %v894, %v996
      %v998 = vsub.f32 1.0, %v997
      %v999 = vmul.f32 %v996, %v998
      %v1000 = vadd.f32 %v996, %v999
      %vm1001 = vweird.f32 %v894
      %vm1002 = vweird.f32 %v996
      %vm1003 = vmor %vm1001, %vm1002
      %v1004 = vsel %vm1003, %v996, %v1000
      %v1005 = vand.u32 2147483647, %v894
      %vm1006 = vcmp.eq.f32.partialorder %v1005, 8.507059e+37
      %v1007 = vand.u32 %v894, 2147483648
      %v1008 = vor.u32 1.1754944e-38, %v1007
      %v1009 = vsel %vm1006, %v1008, %v1004
      %v1010 = vmul.f32 1.0, %v1009
      %v1011 = vrcp.pop %v895
      %v1012 = vmul.f32 %v895, %v1011
      %v1013 = vsub.f32 1.0, %v1012
      %v1014 = vmul.f32 %v1011, %v1013
      %v1015 = vadd.f32 %v1011, %v1014
      %vm1016 = vweird.f32 %v895
      %vm1017 = vweird.f32 %v1011
      %vm1018 = vmor %vm1016, %vm1017
      %v1019 = vsel %vm1018, %v1011, %v1015
      %v1020 = vand.u32 2147483647, %v895
      %vm1021 = vcmp.eq.f32.partialorder %v1020, 8.507059e+37
      %v1022 = vand.u32 %v895, 2147483648
      %v1023 = vor.u32 1.1754944e-38, %v1022
      %v1024 = vsel %vm1021, %v1023, %v1019
      %v1025 = vmul.f32 1.0, %v1024
      %v1026 = vrcp.pop %v896
      %v1027 = vmul.f32 %v896, %v1026
      %v1028 = vsub.f32 1.0, %v1027
      %v1029 = vmul.f32 %v1026, %v1028
      %v1030 = vadd.f32 %v1026, %v1029
      %vm1031 = vweird.f32 %v896
      %vm1032 = vweird.f32 %v1026
      %vm1033 = vmor %vm1031, %vm1032
      %v1034 = vsel %vm1033, %v1026, %v1030
      %v1035 = vand.u32 2147483647, %v896
      %vm1036 = vcmp.eq.f32.partialorder %v1035, 8.507059e+37
      %v1037 = vand.u32 %v896, 2147483648
      %v1038 = vor.u32 1.1754944e-38, %v1037
      %v1039 = vsel %vm1036, %v1038, %v1034
      %v1040 = vmul.f32 1.0, %v1039
      %v1041 = vrcp.pop %v897
      %v1042 = vmul.f32 %v897, %v1041
      %v1043 = vsub.f32 1.0, %v1042
      %v1044 = vmul.f32 %v1041, %v1043
      %v1045 = vadd.f32 %v1041, %v1044
      %vm1046 = vweird.f32 %v897
      %vm1047 = vweird.f32 %v1041
      %vm1048 = vmor %vm1046, %vm1047
      %v1049 = vsel %vm1048, %v1041, %v1045
      %v1050 = vand.u32 2147483647, %v897
      %vm1051 = vcmp.eq.f32.partialorder %v1050, 8.507059e+37
      %v1052 = vand.u32 %v897, 2147483648
      %v1053 = vor.u32 1.1754944e-38, %v1052
      %v1054 = vsel %vm1051, %v1053, %v1049
      %v1055 = vmul.f32 1.0, %v1054
      %v1056 = vrcp.pop %v898
      %v1057 = vmul.f32 %v898, %v1056
      %v1058 = vsub.f32 1.0, %v1057
      %v1059 = vmul.f32 %v1056, %v1058
      %v1060 = vadd.f32 %v1056, %v1059
      %vm1061 = vweird.f32 %v898
      %vm1062 = vweird.f32 %v1056
      %vm1063 = vmor %vm1061, %vm1062
      %v1064 = vsel %vm1063, %v1056, %v1060
      %v1065 = vand.u32 2147483647, %v898
      %vm1066 = vcmp.eq.f32.partialorder %v1065, 8.507059e+37
      %v1067 = vand.u32 %v898, 2147483648
      %v1068 = vor.u32 1.1754944e-38, %v1067
      %v1069 = vsel %vm1066, %v1068, %v1064
      %v1070 = vmul.f32 1.0, %v1069
      %v1071 = vrcp.pop %v899
      %v1072 = vmul.f32 %v899, %v1071
      %v1073 = vsub.f32 1.0, %v1072
      %v1074 = vmul.f32 %v1071, %v1073
      %v1075 = vadd.f32 %v1071, %v1074
      %vm1076 = vweird.f32 %v899
      %vm1077 = vweird.f32 %v1071
      %vm1078 = vmor %vm1076, %vm1077
      %v1079 = vsel %vm1078, %v1071, %v1075
      %v1080 = vand.u32 2147483647, %v899
      %vm1081 = vcmp.eq.f32.partialorder %v1080, 8.507059e+37
      %v1082 = vand.u32 %v899, 2147483648
      %v1083 = vor.u32 1.1754944e-38, %v1082
      %v1084 = vsel %vm1081, %v1083, %v1079
      %v1085 = vmul.f32 1.0, %v1084
      %v1086 = vrcp.pop %v900
      %v1087 = vmul.f32 %v900, %v1086
      %v1088 = vsub.f32 1.0, %v1087
      %v1089 = vmul.f32 %v1086, %v1088
      %v1090 = vadd.f32 %v1086, %v1089
      %vm1091 = vweird.f32 %v900
      %vm1092 = vweird.f32 %v1086
      %vm1093 = vmor %vm1091, %vm1092
      %v1094 = vsel %vm1093, %v1086, %v1090
      %v1095 = vand.u32 2147483647, %v900
      %vm1096 = vcmp.eq.f32.partialorder %v1095, 8.507059e+37
      %v1097 = vand.u32 %v900, 2147483648
      %v1098 = vor.u32 1.1754944e-38, %v1097
      %v1099 = vsel %vm1096, %v1098, %v1094
      %v1100 = vmul.f32 1.0, %v1099
      %v1101 = vrcp.pop %v901
      %v1102 = vmul.f32 %v901, %v1101
      %v1103 = vsub.f32 1.0, %v1102
      %v1104 = vmul.f32 %v1101, %v1103
      %v1105 = vadd.f32 %v1101, %v1104
      %vm1106 = vweird.f32 %v901
      %vm1107 = vweird.f32 %v1101
      %vm1108 = vmor %vm1106, %vm1107
      %v1109 = vsel %vm1108, %v1101, %v1105
      %v1110 = vand.u32 2147483647, %v901
      %vm1111 = vcmp.eq.f32.partialorder %v1110, 8.507059e+37
      %v1112 = vand.u32 %v901, 2147483648
      %v1113 = vor.u32 1.1754944e-38, %v1112
      %v1114 = vsel %vm1111, %v1113, %v1109
      %v1115 = vmul.f32 1.0, %v1114
      %v1116 = vrcp.pop %v902
      %v1117 = vmul.f32 %v902, %v1116
      %v1118 = vsub.f32 1.0, %v1117
      %v1119 = vmul.f32 %v1116, %v1118
      %v1120 = vadd.f32 %v1116, %v1119
      %vm1121 = vweird.f32 %v902
      %vm1122 = vweird.f32 %v1116
      %vm1123 = vmor %vm1121, %vm1122
      %v1124 = vsel %vm1123, %v1116, %v1120
      %v1125 = vand.u32 2147483647, %v902
      %vm1126 = vcmp.eq.f32.partialorder %v1125, 8.507059e+37
      %v1127 = vand.u32 %v902, 2147483648
      %v1128 = vor.u32 1.1754944e-38, %v1127
      %v1129 = vsel %vm1126, %v1128, %v1124
      %v1130 = vmul.f32 1.0, %v1129
      %v1131 = vrcp.pop %v903
      %v1132 = vmul.f32 %v903, %v1131
      %v1133 = vsub.f32 1.0, %v1132
      %v1134 = vmul.f32 %v1131, %v1133
      %v1135 = vadd.f32 %v1131, %v1134
      %vm1136 = vweird.f32 %v903
      %vm1137 = vweird.f32 %v1131
      %vm1138 = vmor %vm1136, %vm1137
      %v1139 = vsel %vm1138, %v1131, %v1135
      %v1140 = vand.u32 2147483647, %v903
      %vm1141 = vcmp.eq.f32.partialorder %v1140, 8.507059e+37
      %v1142 = vand.u32 %v903, 2147483648
      %v1143 = vor.u32 1.1754944e-38, %v1142
      %v1144 = vsel %vm1141, %v1143, %v1139
      %v1145 = vmul.f32 1.0, %v1144
      %v1146 = vrcp.pop %v904
      %v1147 = vmul.f32 %v904, %v1146
      %v1148 = vsub.f32 1.0, %v1147
      %v1149 = vmul.f32 %v1146, %v1148
      %v1150 = vadd.f32 %v1146, %v1149
      %vm1151 = vweird.f32 %v904
      %vm1152 = vweird.f32 %v1146
      %vm1153 = vmor %vm1151, %vm1152
      %v1154 = vsel %vm1153, %v1146, %v1150
      %v1155 = vand.u32 2147483647, %v904
      %vm1156 = vcmp.eq.f32.partialorder %v1155, 8.507059e+37
      %v1157 = vand.u32 %v904, 2147483648
      %v1158 = vor.u32 1.1754944e-38, %v1157
      %v1159 = vsel %vm1156, %v1158, %v1154
      %v1160 = vmul.f32 1.0, %v1159
      %v1161 = vrcp.pop %v905
      %v1162 = vmul.f32 %v905, %v1161
      %v1163 = vsub.f32 1.0, %v1162
      %v1164 = vmul.f32 %v1161, %v1163
      %v1165 = vadd.f32 %v1161, %v1164
      %vm1166 = vweird.f32 %v905
      %vm1167 = vweird.f32 %v1161
      %vm1168 = vmor %vm1166, %vm1167
      %v1169 = vsel %vm1168, %v1161, %v1165
      %v1170 = vand.u32 2147483647, %v905
      %vm1171 = vcmp.eq.f32.partialorder %v1170, 8.507059e+37
      %v1172 = vand.u32 %v905, 2147483648
      %v1173 = vor.u32 1.1754944e-38, %v1172
      %v1174 = vsel %vm1171, %v1173, %v1169
      %v1175 = vmul.f32 1.0, %v1174
      %v1176 = vrcp.pop %v906
      %v1177 = vmul.f32 %v906, %v1176
      %v1178 = vsub.f32 1.0, %v1177
      %v1179 = vmul.f32 %v1176, %v1178
      %v1180 = vadd.f32 %v1176, %v1179
      %vm1181 = vweird.f32 %v906
      %vm1182 = vweird.f32 %v1176
      %vm1183 = vmor %vm1181, %vm1182
      %v1184 = vsel %vm1183, %v1176, %v1180
      %v1185 = vand.u32 2147483647, %v906
      %vm1186 = vcmp.eq.f32.partialorder %v1185, 8.507059e+37
      %v1187 = vand.u32 %v906, 2147483648
      %v1188 = vor.u32 1.1754944e-38, %v1187
      %v1189 = vsel %vm1186, %v1188, %v1184
      %v1190 = vmul.f32 1.0, %v1189
      %v1191 = vrcp.pop %v907
      %v1192 = vmul.f32 %v907, %v1191
      %v1193 = vsub.f32 1.0, %v1192
      %v1194 = vmul.f32 %v1191, %v1193
      %v1195 = vadd.f32 %v1191, %v1194
      %vm1196 = vweird.f32 %v907
      %vm1197 = vweird.f32 %v1191
      %vm1198 = vmor %vm1196, %vm1197
      %v1199 = vsel %vm1198, %v1191, %v1195
      %v1200 = vand.u32 2147483647, %v907
      %vm1201 = vcmp.eq.f32.partialorder %v1200, 8.507059e+37
      %v1202 = vand.u32 %v907, 2147483648
      %v1203 = vor.u32 1.1754944e-38, %v1202
      %v1204 = vsel %vm1201, %v1203, %v1199
      %v1205 = vmul.f32 1.0, %v1204
      %v1206 = vrcp.pop %v908
      %v1207 = vmul.f32 %v908, %v1206
      %v1208 = vsub.f32 1.0, %v1207
      %v1209 = vmul.f32 %v1206, %v1208
      %v1210 = vadd.f32 %v1206, %v1209
      %vm1211 = vweird.f32 %v908
      %vm1212 = vweird.f32 %v1206
      %vm1213 = vmor %vm1211, %vm1212
      %v1214 = vsel %vm1213, %v1206, %v1210
      %v1215 = vand.u32 2147483647, %v908
      %vm1216 = vcmp.eq.f32.partialorder %v1215, 8.507059e+37
      %v1217 = vand.u32 %v908, 2147483648
      %v1218 = vor.u32 1.1754944e-38, %v1217
      %v1219 = vsel %vm1216, %v1218, %v1214
      %v1220 = vmul.f32 1.0, %v1219
      %v1221 = vrcp.pop %v909
      %v1222 = vmul.f32 %v909, %v1221
      %v1223 = vsub.f32 1.0, %v1222
      %v1224 = vmul.f32 %v1221, %v1223
      %v1225 = vadd.f32 %v1221, %v1224
      %vm1226 = vweird.f32 %v909
      %vm1227 = vweird.f32 %v1221
      %vm1228 = vmor %vm1226, %vm1227
      %v1229 = vsel %vm1228, %v1221, %v1225
      %v1230 = vand.u32 2147483647, %v909
      %vm1231 = vcmp.eq.f32.partialorder %v1230, 8.507059e+37
      %v1232 = vand.u32 %v909, 2147483648
      %v1233 = vor.u32 1.1754944e-38, %v1232
      %v1234 = vsel %vm1231, %v1233, %v1229
      %v1235 = vmul.f32 1.0, %v1234
      %v1236 = vrcp.pop %v910
      %v1237 = vmul.f32 %v910, %v1236
      %v1238 = vsub.f32 1.0, %v1237
      %v1239 = vmul.f32 %v1236, %v1238
      %v1240 = vadd.f32 %v1236, %v1239
      %vm1241 = vweird.f32 %v910
      %vm1242 = vweird.f32 %v1236
      %vm1243 = vmor %vm1241, %vm1242
      %v1244 = vsel %vm1243, %v1236, %v1240
      %v1245 = vand.u32 2147483647, %v910
      %vm1246 = vcmp.eq.f32.partialorder %v1245, 8.507059e+37
      %v1247 = vand.u32 %v910, 2147483648
      %v1248 = vor.u32 1.1754944e-38, %v1247
      %v1249 = vsel %vm1246, %v1248, %v1244
      %v1250 = vmul.f32 1.0, %v1249
      %v1251 = vrcp.pop %v911
      %v1252 = vmul.f32 %v911, %v1251
      %v1253 = vsub.f32 1.0, %v1252
      %v1254 = vmul.f32 %v1251, %v1253
      %v1255 = vadd.f32 %v1251, %v1254
      %vm1256 = vweird.f32 %v911
      %vm1257 = vweird.f32 %v1251
      %vm1258 = vmor %vm1256, %vm1257
      %v1259 = vsel %vm1258, %v1251, %v1255
      %v1260 = vand.u32 2147483647, %v911
      %vm1261 = vcmp.eq.f32.partialorder %v1260, 8.507059e+37
      %v1262 = vand.u32 %v911, 2147483648
      %v1263 = vor.u32 1.1754944e-38, %v1262
      %v1264 = vsel %vm1261, %v1263, %v1259
      %v1265 = vmul.f32 1.0, %v1264
      %v1266 = vrcp.pop %v912
      %v1267 = vmul.f32 %v912, %v1266
      %v1268 = vsub.f32 1.0, %v1267
      %v1269 = vmul.f32 %v1266, %v1268
      %v1270 = vadd.f32 %v1266, %v1269
      %vm1271 = vweird.f32 %v912
      %vm1272 = vweird.f32 %v1266
      %vm1273 = vmor %vm1271, %vm1272
      %v1274 = vsel %vm1273, %v1266, %v1270
      %v1275 = vand.u32 2147483647, %v912
      %vm1276 = vcmp.eq.f32.partialorder %v1275, 8.507059e+37
      %v1277 = vand.u32 %v912, 2147483648
      %v1278 = vor.u32 1.1754944e-38, %v1277
      %v1279 = vsel %vm1276, %v1278, %v1274
      %v1280 = vmul.f32 1.0, %v1279
      %v1281 = vrcp.pop %v913
      %v1282 = vmul.f32 %v913, %v1281
      %v1283 = vsub.f32 1.0, %v1282
      %v1284 = vmul.f32 %v1281, %v1283
      %v1285 = vadd.f32 %v1281, %v1284
      %vm1286 = vweird.f32 %v913
      %vm1287 = vweird.f32 %v1281
      %vm1288 = vmor %vm1286, %vm1287
      %v1289 = vsel %vm1288, %v1281, %v1285
      %v1290 = vand.u32 2147483647, %v913
      %vm1291 = vcmp.eq.f32.partialorder %v1290, 8.507059e+37
      %v1292 = vand.u32 %v913, 2147483648
      %v1293 = vor.u32 1.1754944e-38, %v1292
      %v1294 = vsel %vm1291, %v1293, %v1289
      %v1295 = vmul.f32 1.0, %v1294
      %v1296 = vrcp.pop %v914
      %v1297 = vmul.f32 %v914, %v1296
      %v1298 = vsub.f32 1.0, %v1297
      %v1299 = vmul.f32 %v1296, %v1298
      %v1300 = vadd.f32 %v1296, %v1299
      %vm1301 = vweird.f32 %v914
      %vm1302 = vweird.f32 %v1296
      %vm1303 = vmor %vm1301, %vm1302
      %v1304 = vsel %vm1303, %v1296, %v1300
      %v1305 = vand.u32 2147483647, %v914
      %vm1306 = vcmp.eq.f32.partialorder %v1305, 8.507059e+37
      %v1307 = vand.u32 %v914, 2147483648
      %v1308 = vor.u32 1.1754944e-38, %v1307
      %v1309 = vsel %vm1306, %v1308, %v1304
      %v1310 = vmul.f32 1.0, %v1309
      %v1311 = vrcp.pop %v915
      %v1312 = vmul.f32 %v915, %v1311
      %v1313 = vsub.f32 1.0, %v1312
      %v1314 = vmul.f32 %v1311, %v1313
      %v1315 = vadd.f32 %v1311, %v1314
      %vm1316 = vweird.f32 %v915
      %vm1317 = vweird.f32 %v1311
      %vm1318 = vmor %vm1316, %vm1317
      %v1319 = vsel %vm1318, %v1311, %v1315
      %v1320 = vand.u32 2147483647, %v915
      %vm1321 = vcmp.eq.f32.partialorder %v1320, 8.507059e+37
      %v1322 = vand.u32 %v915, 2147483648
      %v1323 = vor.u32 1.1754944e-38, %v1322
      %v1324 = vsel %vm1321, %v1323, %v1319
      %v1325 = vmul.f32 1.0, %v1324
      %v1326 = vrcp.pop %v916
      %v1327 = vmul.f32 %v916, %v1326
      %v1328 = vsub.f32 1.0, %v1327
      %v1329 = vmul.f32 %v1326, %v1328
      %v1330 = vadd.f32 %v1326, %v1329
      %vm1331 = vweird.f32 %v916
      %vm1332 = vweird.f32 %v1326
      %vm1333 = vmor %vm1331, %vm1332
      %v1334 = vsel %vm1333, %v1326, %v1330
      %v1335 = vand.u32 2147483647, %v916
      %vm1336 = vcmp.eq.f32.partialorder %v1335, 8.507059e+37
      %v1337 = vand.u32 %v916, 2147483648
      %v1338 = vor.u32 1.1754944e-38, %v1337
      %v1339 = vsel %vm1336, %v1338, %v1334
      %v1340 = vmul.f32 1.0, %v1339
      %v1341 = vrcp.pop %v917
      %v1342 = vmul.f32 %v917, %v1341
      %v1343 = vsub.f32 1.0, %v1342
      %v1344 = vmul.f32 %v1341, %v1343
      %v1345 = vadd.f32 %v1341, %v1344
      %vm1346 = vweird.f32 %v917
      %vm1347 = vweird.f32 %v1341
      %vm1348 = vmor %vm1346, %vm1347
      %v1349 = vsel %vm1348, %v1341, %v1345
      %v1350 = vand.u32 2147483647, %v917
      %vm1351 = vcmp.eq.f32.partialorder %v1350, 8.507059e+37
      %v1352 = vand.u32 %v917, 2147483648
      %v1353 = vor.u32 1.1754944e-38, %v1352
      %v1354 = vsel %vm1351, %v1353, %v1349
      %v1355 = vmul.f32 1.0, %v1354
      %v1356 = vrcp.pop %v918
      %v1357 = vmul.f32 %v918, %v1356
      %v1358 = vsub.f32 1.0, %v1357
      %v1359 = vmul.f32 %v1356, %v1358
      %v1360 = vadd.f32 %v1356, %v1359
      %vm1361 = vweird.f32 %v918
      %vm1362 = vweird.f32 %v1356
      %vm1363 = vmor %vm1361, %vm1362
      %v1364 = vsel %vm1363, %v1356, %v1360
      %v1365 = vand.u32 2147483647, %v918
      %vm1366 = vcmp.eq.f32.partialorder %v1365, 8.507059e+37
      %v1367 = vand.u32 %v918, 2147483648
      %v1368 = vor.u32 1.1754944e-38, %v1367
      %v1369 = vsel %vm1366, %v1368, %v1364
      %v1370 = vmul.f32 1.0, %v1369
      %v1371 = vrcp.pop %v919
      %v1372 = vmul.f32 %v919, %v1371
      %v1373 = vsub.f32 1.0, %v1372
      %v1374 = vmul.f32 %v1371, %v1373
      %v1375 = vadd.f32 %v1371, %v1374
      %vm1376 = vweird.f32 %v919
      %vm1377 = vweird.f32 %v1371
      %vm1378 = vmor %vm1376, %vm1377
      %v1379 = vsel %vm1378, %v1371, %v1375
      %v1380 = vand.u32 2147483647, %v919
      %vm1381 = vcmp.eq.f32.partialorder %v1380, 8.507059e+37
      %v1382 = vand.u32 %v919, 2147483648
      %v1383 = vor.u32 1.1754944e-38, %v1382
      %v1384 = vsel %vm1381, %v1383, %v1379
      %v1385 = vmul.f32 1.0, %v1384
      %v1386 = vrcp.pop %v920
      %v1387 = vmul.f32 %v920, %v1386
      %v1388 = vsub.f32 1.0, %v1387
      %v1389 = vmul.f32 %v1386, %v1388
      %v1390 = vadd.f32 %v1386, %v1389
      %vm1391 = vweird.f32 %v920
      %vm1392 = vweird.f32 %v1386
      %vm1393 = vmor %vm1391, %vm1392
      %v1394 = vsel %vm1393, %v1386, %v1390
      %v1395 = vand.u32 2147483647, %v920
      %vm1396 = vcmp.eq.f32.partialorder %v1395, 8.507059e+37
      %v1397 = vand.u32 %v920, 2147483648
      %v1398 = vor.u32 1.1754944e-38, %v1397
      %v1399 = vsel %vm1396, %v1398, %v1394
      %v1400 = vmul.f32 1.0, %v1399
      %s1401 = smul.u32 %s24, 128
      %v1402 = vlaneseq
      %v1403 = vand.u32 %v1402, 127
      %v1404 = vstv %s1401
      %v1405 = vadd.s32 %v1404, %v1403
      %vm1406 = vcmp.lt.s32.totalorder %v1405, 21
      %v1407 = vsel %vm1406, %v935, 0.0
      %v1408 = vsel %vm1406, %v950, 0.0
      %v1409 = vsel %vm1406, %v965, 0.0
      %v1410 = vsel %vm1406, %v980, 0.0
      %v1411 = vsel %vm1406, %v995, 0.0
      %v1412 = vsel %vm1406, %v1010, 0.0
      %v1413 = vsel %vm1406, %v1025, 0.0
      %v1414 = vsel %vm1406, %v1040, 0.0
      %v1415 = vsel %vm1406, %v1055, 0.0
      %v1416 = vsel %vm1406, %v1070, 0.0
      %v1417 = vsel %vm1406, %v1085, 0.0
      %v1418 = vsel %vm1406, %v1100, 0.0
      %v1419 = vsel %vm1406, %v1115, 0.0
      %v1420 = vsel %vm1406, %v1130, 0.0
      %v1421 = vsel %vm1406, %v1145, 0.0
      %v1422 = vsel %vm1406, %v1160, 0.0
      %v1423 = vsel %vm1406, %v1175, 0.0
      %v1424 = vsel %vm1406, %v1190, 0.0
      %v1425 = vsel %vm1406, %v1205, 0.0
      %v1426 = vsel %vm1406, %v1220, 0.0
      %v1427 = vsel %vm1406, %v1235, 0.0
      %v1428 = vsel %vm1406, %v1250, 0.0
      %v1429 = vsel %vm1406, %v1265, 0.0
      %v1430 = vsel %vm1406, %v1280, 0.0
      %v1431 = vsel %vm1406, %v1295, 0.0
      %v1432 = vsel %vm1406, %v1310, 0.0
      %v1433 = vsel %vm1406, %v1325, 0.0
      %v1434 = vsel %vm1406, %v1340, 0.0
      %v1435 = vsel %vm1406, %v1355, 0.0
      %v1436 = vsel %vm1406, %v1370, 0.0
      %v1437 = vsel %vm1406, %v1385, 0.0
      %v1438 = vsel %vm1406, %v1400, 0.0
      %1439 = vst [vmem:[%s324] sm:$0xff] %v1407
      %1440 = vst [vmem:[%s324 + $0x8] sm:$0xff] %v1408
      %1441 = vst [vmem:[%s324 + $0x10] sm:$0xff] %v1409
      %1442 = vst [vmem:[%s324 + $0x18] sm:$0xff] %v1410
      %1443 = vst [vmem:[%s324 + $0x20] sm:$0xff] %v1411
      %1444 = vst [vmem:[%s324 + $0x28] sm:$0xff] %v1412
      %1445 = vst [vmem:[%s324 + $0x30] sm:$0xff] %v1413
      %1446 = vst [vmem:[%s324 + $0x38] sm:$0xff] %v1414
      %1447 = vst [vmem:[%s324 + $0x40] sm:$0xff] %v1415
      %1448 = vst [vmem:[%s324 + $0x48] sm:$0xff] %v1416
      %1449 = vst [vmem:[%s324 + $0x50] sm:$0xff] %v1417
      %1450 = vst [vmem:[%s324 + $0x58] sm:$0xff] %v1418
      %1451 = vst [vmem:[%s324 + $0x60] sm:$0xff] %v1419
      %1452 = vst [vmem:[%s324 + $0x68] sm:$0xff] %v1420
      %1453 = vst [vmem:[%s324 + $0x70] sm:$0xff] %v1421
      %1454 = vst [vmem:[%s324 + $0x78] sm:$0xff] %v1422
      %1455 = vst [vmem:[%s324 + $0x80] sm:$0xff] %v1423
      %1456 = vst [vmem:[%s324 + $0x88] sm:$0xff] %v1424
      %1457 = vst [vmem:[%s324 + $0x90] sm:$0xff] %v1425
      %1458 = vst [vmem:[%s324 + $0x98] sm:$0xff] %v1426
      %1459 = vst [vmem:[%s324 + $0xa0] sm:$0xff] %v1427
      %1460 = vst [vmem:[%s324 + $0xa8] sm:$0xff] %v1428
      %1461 = vst [vmem:[%s324 + $0xb0] sm:$0xff] %v1429
      %1462 = vst [vmem:[%s324 + $0xb8] sm:$0xff] %v1430
      %1463 = vst [vmem:[%s324 + $0xc0] sm:$0xff] %v1431
      %1464 = vst [vmem:[%s324 + $0xc8] sm:$0xff] %v1432
      %1465 = vst [vmem:[%s324 + $0xd0] sm:$0xff] %v1433
      %1466 = vst [vmem:[%s324 + $0xd8] sm:$0xff] %v1434
      %1467 = vst [vmem:[%s324 + $0xe0] sm:$0xff] %v1435
      %1468 = vst [vmem:[%s324 + $0xe8] sm:$0xff] %v1436
      %1469 = vst [vmem:[%s324 + $0xf0] sm:$0xff] %v1437
      %1470 = vst [vmem:[%s324 + $0xf8] sm:$0xff] %v1438
      %p1471 = scmp.lt.s32.totalorder %s23, 1
      %s1472 = scalar_select %p1471, %s23, 1
      %p1473 = scmp.lt.s32.totalorder %s24, 0
      %s1474 = scalar_select %p1473, %s24, 0
      %s1475 = smul.addr %s1472, 32
      %s1476 = sadd.s32 %s1474, %s1475
      %s1477 = smul.addr %s1476, 8
      %s1478 = scalar_lea.vmem %s6, %s1477
      // Predicated region
      $region45: #{convtasnet_separator_forward.30} parent=43 // pred_check
        %p1479 = pneg %p194
      $region46: #{convtasnet_separator_forward.30} parent=43 // pred_check_branch
        %1481 = sbr.rel (%p1479) target = $region48
      $region47: #{convtasnet_separator_forward.30} parent=43 // pred_region
        _
      $region48: #{convtasnet_separator_forward.30} parent=43 // pred_fallthru
        _
    $region44: #{convtasnet_separator_forward.30} parent=5 // pred_fallthru
      _
    %p1482 = scmp.le.s32.totalorder 2, %s14
    // Predicated region
    $region49: #{convtasnet_separator_forward.30} parent=5 // pred_check
      %p1483 = pneg %p1482
    $region50: #{convtasnet_separator_forward.30} parent=5 // pred_check_branch
      %1485 = sbr.rel (%p1483) target = $region52
    $region51: #{convtasnet_separator_forward.30} parent=5 // pred_region
      %s1486 = ssub.s32 %s14, 2
      // Predicated region
      $region53: #{convtasnet_separator_forward.30} parent=51 // pred_check
        %p1487 = pneg %p200
      $region54: #{convtasnet_separator_forward.30} parent=51 // pred_check_branch
        %1489 = sbr.rel (%p1487) target = $region56
      $region55: #{convtasnet_separator_forward.30} parent=51 // pred_region
        %p1490 = scmp.lt.s32.totalorder %s25, 1
        %s1491 = scalar_select %p1490, %s25, 1
        %p1492 = scmp.lt.s32.totalorder %s26, 0
        %s1493 = scalar_select %p1492, %s26, 0
        %s1494 = smul.addr %s1491, 32
        %s1495 = sadd.s32 %s1493, %s1494
        %s1496 = smul.addr %s1495, 8
        %s1497 = scalar_lea.vmem %s6, %s1496
      $region56: #{convtasnet_separator_forward.30} parent=51 // pred_fallthru
        _
    $region52: #{convtasnet_separator_forward.30} parent=5 // pred_fallthru
      _
  $region6: #{convtasnet_separator_forward.30} parent=0 // loop_footer
    %s18 = sadd.s32 1, %s14
  $region7: #{convtasnet_separator_forward.30} parent=0 // loop_footer_branch
    %13 = sbr.rel target = $region3
  $region8: #{convtasnet_separator_forward.30} parent=0 // loop_exit
    _

</llo_original>
